<compile_context>
chip_gen: v6e
topology: v6e:2x2x1
jax: 0.10.0
libtpu: 0.0.40
codegen_flags: <defaults>
</compile_context>

<pallas_src>
import math

import jax
import jax.numpy as jnp
from jax.experimental import pallas as pl
from jax.experimental.pallas import tpu as pltpu


def _round_up(x, m):
    return ((x + m - 1) // m) * m


# --------------------------------------------------------------------------
# Fused SSIM + PSNR + L1 (lane-batched maps, per-map partial sums)
# --------------------------------------------------------------------------

_WIN = 11
_SIGMA = 1.5


def _gaussian_1d(size, sigma):
    coords = jnp.arange(size, dtype=jnp.float32) - size // 2
    g = jnp.exp(-(coords ** 2) / (2.0 * sigma * sigma))
    return g / jnp.sum(g)


def _band_matrix(n_out, n_in, g):
    """band[i, j] = g[j-i] for 0 <= j-i < len(g) else 0 (iota mask, no scatter loop)."""
    rows = jnp.arange(n_out, dtype=jnp.int32)[:, None]
    cols = jnp.arange(n_in, dtype=jnp.int32)[None, :]
    idx = cols - rows
    valid = (idx >= 0) & (idx < g.shape[0])
    vals = g[jnp.clip(idx, 0, g.shape[0] - 1)]
    return jnp.where(valid, vals, 0.0).astype(jnp.float32)


def _make_ssim_psnr_kernel(c1, c2, gwo):
    def kernel(x_ref, y_ref, gr_ref, gd_ref, ssim_ref, ab_ref, sq_ref):
        # x_ref/y_ref: (H, G*W) — G maps lane-concatenated, values in [-1, 1]
        x = x_ref[...] * 0.5 + 0.5
        y = y_ref[...] * 0.5 + 0.5

        # Fused PSNR/L1 partial sums (per lane-column; per-map finalize in JAX).
        d = y - x
        ab_ref[0] = jnp.sum(jnp.abs(d), axis=0, keepdims=True)
        sq_ref[0] = jnp.sum(d * d, axis=0, keepdims=True)

        # 5 filter inputs lane-concatenated -> ONE row-filter matmul,
        # then ONE block-diagonal column-filter matmul (lane-dense output).
        z = jnp.concatenate([x, y, x * x, y * y, x * y], axis=1)          # (H, 5GW)
        t = jnp.dot(gr_ref[...], z, preferred_element_type=jnp.float32)   # (Ho, 5GW)
        f = jnp.dot(t, gd_ref[...], preferred_element_type=jnp.float32)   # (Ho, 5GWo)

        mu1 = f[:, :gwo]
        mu2 = f[:, gwo:2 * gwo]
        exx = f[:, 2 * gwo:3 * gwo]
        eyy = f[:, 3 * gwo:4 * gwo]
        exy = f[:, 4 * gwo:5 * gwo]
        mu1_sq = mu1 * mu1
        mu2_sq = mu2 * mu2
        mu12 = mu1 * mu2
        cs = (2.0 * (exy - mu12) + c2) / ((exx - mu1_sq) + (eyy - mu2_sq) + c2)
        ssim_map = ((2.0 * mu12 + c1) / (mu1_sq + mu2_sq + c1)) * cs
        ssim_ref[0] = jnp.sum(ssim_map, axis=0, keepdims=True)            # (1, GWo)

    return kernel


def _pick_group(n, W, Wo):
    """Number of maps lane-batched per grid step (G*W lane-aligned when tiled)."""
    g_unit = 128 // math.gcd(W, 128)
    # Small problems: one grid step covering all maps (block == full array).
    if 5 * n * W <= 4096 and (5 * n * W) * (5 * n * Wo) * 4 <= (16 << 20):
        return n
    G = _round_up(max(1, 512 // W), g_unit)
    return max(g_unit, min(G, _round_up(n, g_unit)))


def ssim_psnr_l1_metrics(recon, target, data_range=1.0):
    """Returns (mean PSNR, mean SSIM, mean L1) matching the torch reference.

    SSIM is pytorch_msssim-style (valid 11x11 gaussian window, size_average=False
    -> per-image mean over channels, then mean over batch). PSNR uses max=255 on
    the [0,1]-rescaled images; L1 is the global mean abs diff of the rescaled
    images.
    """
    B, C, H, W = recon.shape
    n = B * C
    Ho, Wo = H - _WIN + 1, W - _WIN + 1
    g = _gaussian_1d(_WIN, _SIGMA)
    Gr = _band_matrix(Ho, H, g)           # (Ho, H)   row filter
    Gct = _band_matrix(Wo, W, g).T        # (W, Wo)   column filter (transposed)
    K1, K2 = 0.01, 0.03
    c1 = float((K1 * data_range) ** 2)
    c2 = float((K2 * data_range) ** 2)

    G = _pick_group(n, W, Wo)
    n_pad = _round_up(n, G)
    steps = n_pad // G
    GW, GWo = G * W, G * Wo

    x = recon.reshape(n, H, W).astype(jnp.float32)
    y = target.reshape(n, H, W).astype(jnp.float32)
    if n_pad > n:
        x = jnp.pad(x, ((0, n_pad - n), (0, 0), (0, 0)))
        y = jnp.pad(y, ((0, n_pad - n), (0, 0), (0, 0)))
    # Layout plumbing: maps along lanes -> (H, n_pad*W).
    x_l = jnp.transpose(x, (1, 0, 2)).reshape(H, n_pad * W)
    y_l = jnp.transpose(y, (1, 0, 2)).reshape(H, n_pad * W)
    # Block-diagonal column-filter weight across the 5 terms x G maps.
    GdB = jnp.kron(jnp.eye(5 * G, dtype=jnp.float32), Gct)     # (5GW, 5GWo)

    # TODO(synk): for very large images (>~512^2) add row-band tiling with a
    #   10-row halo so the per-step working set stays inside v7x's 64 MiB VMEM.
    ssim_s, ab_s, sq_s = pl.pallas_call(
        _make_ssim_psnr_kernel(c1, c2, GWo),
        out_shape=(jax.ShapeDtypeStruct((steps, 1, GWo), jnp.float32),
                   jax.ShapeDtypeStruct((steps, 1, GW), jnp.float32),
                   jax.ShapeDtypeStruct((steps, 1, GW), jnp.float32)),
        grid=(steps,),
        in_specs=[pl.BlockSpec((H, GW), lambda i: (0, i)),
                  pl.BlockSpec((H, GW), lambda i: (0, i)),
                  pl.BlockSpec((Ho, H), lambda i: (0, 0)),
                  pl.BlockSpec((5 * GW, 5 * GWo), lambda i: (0, 0))],
        out_specs=(pl.BlockSpec((1, 1, GWo), lambda i: (i, 0, 0)),
                   pl.BlockSpec((1, 1, GW), lambda i: (i, 0, 0)),
                   pl.BlockSpec((1, 1, GW), lambda i: (i, 0, 0))),
        compiler_params=pltpu.CompilerParams(
            dimension_semantics=("parallel",)),
    )(x_l, y_l, Gr, GdB)

    # --- finalize in JAX (tiny tensors) ---
    ssim_map_sum = ssim_s.reshape(steps * G, Wo).sum(axis=-1)[:n]
    ssim_per_im = (ssim_map_sum / float(Ho * Wo)).reshape(B, C).mean(axis=1)

    inv_chw = 1.0 / float(C * H * W)
    ab_map = ab_s.reshape(steps * G, W).sum(axis=-1)[:n]
    sq_map = sq_s.reshape(steps * G, W).sum(axis=-1)[:n]
    l1_per_im = ab_map.reshape(B, C).sum(axis=1) * inv_chw
    mse01_per_im = sq_map.reshape(B, C).sum(axis=1) * inv_chw
    # PSNR on 255-scaled images: 10*log10(255^2 / (255^2 * mse01)) = -10*log10(mse01)
    psnr_per_im = -10.0 * jnp.log10(mse01_per_im)

    return jnp.mean(psnr_per_im), jnp.mean(ssim_per_im), jnp.mean(l1_per_im)


# --------------------------------------------------------------------------
# LPIPS backbone conv (NHWC im2col in bf16 + tiled MXU matmul, bf16 features)
# --------------------------------------------------------------------------

_TM_MAX = 512
_COUT_PAD = 128


def _matmul_bias_relu_kernel(x_ref, w_ref, b_ref, o_ref):
    acc = jnp.dot(x_ref[...], w_ref[...], preferred_element_type=jnp.float32)
    o_ref[...] = jnp.maximum(acc + b_ref[...], 0.0).astype(o_ref.dtype)


def _im2col_nhwc(x, k, stride, pad):
    """x: (B, H, W, C) -> patches (B, Ho*Wo, k*k*C) with tap order (kh, kw, C)."""
    B, H, W, C = x.shape
    xp = jnp.pad(x, ((0, 0), (pad, pad), (pad, pad), (0, 0)))
    Ho = (H + 2 * pad - k) // stride + 1
    Wo = (W + 2 * pad - k) // stride + 1
    cols = []
    for i in range(k):
        for j in range(k):
            cols.append(xp[:, i:i + stride * Ho:stride, j:j + stride * Wo:stride, :])
    patches = jnp.stack(cols, axis=3)                   # (B, Ho, Wo, k*k, C)
    patches = patches.reshape(B, Ho * Wo, k * k * C)
    return patches, Ho, Wo


def conv2d_relu(x_nhwc, w, b, stride, pad):
    """NHWC conv + bias + ReLU via bf16 im2col + Pallas MXU matmul (f32 acc).
    Returns (channel-padded bf16 (B, Ho*Wo, 128), bf16 NHWC (B, Ho, Wo, Cout))."""
    # TODO(synk): patch extraction is still materialized in HBM (now bf16);
    #   fusing it into the kernel (halo DMA + shifted slices) would remove the
    #   remaining k*k x HBM traffic blow-up.
    B, H, W, Cin = x_nhwc.shape
    Cout, _, k, _ = w.shape
    patches, Ho, Wo = _im2col_nhwc(x_nhwc.astype(jnp.bfloat16), k, stride, pad)
    M = B * Ho * Wo
    K = Cin * k * k
    tm = min(_TM_MAX, _round_up(M, 16))
    M_pad = _round_up(M, tm)
    cp = _round_up(Cout, _COUT_PAD)

    xm = patches.reshape(M, K)
    if M_pad > M:
        xm = jnp.pad(xm, ((0, M_pad - M), (0, 0)))
    # weight tap order (kh, kw, Cin) to match the NHWC patches (torch layout is (Cout,Cin,kh,kw))
    wm = jnp.transpose(w, (0, 2, 3, 1)).reshape(Cout, K).T        # (K, Cout)
    wm = jnp.pad(wm, ((0, 0), (0, cp - Cout))).astype(jnp.bfloat16)
    bm = jnp.pad(b.reshape(1, Cout), ((0, 0), (0, cp - Cout))).astype(jnp.float32)

    out = pl.pallas_call(
        _matmul_bias_relu_kernel,
        out_shape=jax.ShapeDtypeStruct((M_pad, cp), jnp.bfloat16),
        grid=(M_pad // tm,),
        in_specs=[pl.BlockSpec((tm, K), lambda i: (i, 0)),
                  pl.BlockSpec((K, cp), lambda i: (0, 0)),
                  pl.BlockSpec((1, cp), lambda i: (0, 0))],
        out_specs=pl.BlockSpec((tm, cp), lambda i: (i, 0)),
        compiler_params=pltpu.CompilerParams(
            dimension_semantics=("parallel",)),
    )(xm, wm, bm)

    feat_cl = out[:M].reshape(B, Ho * Wo, cp)             # lane-dense channel-padded features
    feat_nhwc = out[:M, :Cout].reshape(B, Ho, Wo, Cout)   # next layer's (unpadded) input
    return feat_cl, feat_nhwc


# --------------------------------------------------------------------------
# LPIPS distance
# --------------------------------------------------------------------------

_LPIPS_SHIFT = jnp.array([-0.030, -0.088, -0.188], jnp.float32).reshape(1, 3, 1, 1)
_LPIPS_SCALE = jnp.array([0.458, 0.448, 0.450], jnp.float32).reshape(1, 3, 1, 1)

# (Cin, Cout, k, stride, pad) — small synthetic backbone for 16x16 inputs
_LPIPS_SPECS = [(3, 16, 3, 1, 1), (16, 32, 3, 2, 1), (32, 64, 3, 2, 1)]


def init_lpips_params(key):
    params = {"convs": [], "lins": []}
    for cin, cout, k, _, _ in _LPIPS_SPECS:
        key, kw, kb, kl = jax.random.split(key, 4)
        w = jax.random.normal(kw, (cout, cin, k, k), jnp.float32) * math.sqrt(2.0 / (cin * k * k))
        b = 0.01 * jax.random.normal(kb, (cout,), jnp.float32)
        lin = jnp.abs(jax.random.normal(kl, (cout,), jnp.float32)) / cout
        params["convs"].append((w, b))
        params["lins"].append(lin)
    return params


def _lpips_layer_kernel(f0_ref, f1_ref, w_ref, o_ref):
    @pl.when(pl.program_id(1) == 0)
    def _():
        o_ref[...] = jnp.zeros_like(o_ref)

    eps = 1e-10
    f0 = f0_ref[...].astype(jnp.float32)                  # (B, tS, Cp)
    f1 = f1_ref[...].astype(jnp.float32)
    # eps sits outside the sqrt (real LPIPS normalize_tensor); reciprocal on the
    # (B, tS, 1) tensor goes to the EUP instead of dividing the full tensors.
    inv0 = pl.reciprocal(jnp.sqrt(jnp.sum(f0 * f0, axis=-1, keepdims=True)) + eps, approx=True)
    inv1 = pl.reciprocal(jnp.sqrt(jnp.sum(f1 * f1, axis=-1, keepdims=True)) + eps, approx=True)
    d = f0 * inv0 - f1 * inv1
    wd = jnp.sum(d * d * w_ref[...], axis=-1)             # (B, tS)
    o_ref[...] += jnp.sum(wd, axis=-1, keepdims=True)[None]


def _lpips_layer_distance(feat_cl, lin, n_img):
    """feat_cl: (2*n_img, S, Cp) bf16 channel-padded features (recon half, then
    target half); halves are selected inside the BlockSpec index_map. A leading
    'parallel' shard axis splits the spatial reduce across TensorCores on v7x;
    partial sums are combined in JAX. Returns (n_img, 1)."""
    _, S, Cp = feat_cl.shape
    w = jnp.pad(lin, (0, Cp - lin.shape[0])).reshape(1, 1, Cp).astype(jnp.float32)
    tS = min(2048, _round_up(S, 16))
    shards = 2 if pl.cdiv(S, tS) >= 2 else 1
    s_pad = _round_up(S, shards * tS)
    per = (s_pad // tS) // shards
    if s_pad > S:
        feat_cl = jnp.pad(feat_cl, ((0, 0), (0, s_pad - S), (0, 0)))

    partial = pl.pallas_call(
        _lpips_layer_kernel,
        out_shape=jax.ShapeDtypeStruct((shards, n_img, 1), jnp.float32),
        grid=(shards, per),
        in_specs=[pl.BlockSpec((n_img, tS, Cp), lambda p, s: (0, p * per + s, 0)),   # recon half
                  pl.BlockSpec((n_img, tS, Cp), lambda p, s: (1, p * per + s, 0)),   # target half
                  pl.BlockSpec((1, 1, Cp), lambda p, s: (0, 0, 0))],
        out_specs=pl.BlockSpec((1, n_img, 1), lambda p, s: (p, 0, 0)),
        compiler_params=pltpu.CompilerParams(
            dimension_semantics=("parallel", "arbitrary")),
    )(feat_cl, feat_cl, w)

    return (jnp.sum(partial[:, :, 0], axis=0) / float(S)).reshape(n_img, 1)


def lpips_distance(recon_pm1, target_pm1, params):
    """LPIPS(x01, y01, normalize=True)-style distance -> (B, 1).

    The module rescales to [0,1] and LPIPS(normalize=True) maps back to [-1,1];
    the two cancel, so the original [-1,1] images feed the ScalingLayer directly.
    """
    B = recon_pm1.shape[0]
    x = jnp.concatenate([recon_pm1, target_pm1], axis=0)    # (2B, C, H, W), [-1,1]
    x = (x - _LPIPS_SHIFT) / _LPIPS_SCALE                   # ScalingLayer
    feat = jnp.transpose(x, (0, 2, 3, 1)).astype(jnp.bfloat16)   # NHWC, bf16 end-to-end
    total = jnp.zeros((B, 1), jnp.float32)
    for (w, b), lin, (_, _, _, stride, pad) in zip(params["convs"], params["lins"], _LPIPS_SPECS):
        feat_cl, feat = conv2d_relu(feat, w, b, stride, pad)
        total = total + _lpips_layer_distance(feat_cl, lin, B)
    return total


# --------------------------- ImageMetrics forward --------------------------

@jax.jit
def _image_metrics_impl(recon_im, target_im, lpips_params):
    metric_psnr, metric_ssim, metric_l1 = ssim_psnr_l1_metrics(
        recon_im, target_im, data_range=1.0)
    metric_lpips = jnp.mean(lpips_distance(recon_im, target_im, lpips_params))
    return metric_psnr, metric_ssim, metric_lpips, metric_l1


def image_metrics(data_dict, lpips_params, suffix=None,
                  rec="recon_im", target="input_im"):
    suffix = "" if suffix is None else "_" + suffix
    recon_im = data_dict[rec][0]
    target_im = data_dict[target]
    p, s, lp, l1 = _image_metrics_impl(recon_im, target_im, lpips_params)
    return {
        f"PSNR{suffix}": p,
        f"SSIM{suffix}": s,
        f"LPIPS{suffix}": lp,
        f"L1{suffix}": l1,
    }


# --------------------------------------------------------------------------

if __name__ == "__main__":
    key = jax.random.PRNGKey(0)
    k_t, k_n = jax.random.split(key)
    B, C, H, W = 2, 3, 16, 16
    target_im = jax.random.uniform(k_t, (B, C, H, W), jnp.float32, -1.0, 1.0)
    recon_im = jnp.clip(
        target_im + 0.1 * jax.random.normal(k_n, (B, C, H, W), jnp.float32),
        -1.0, 1.0)

    lpips_params = init_lpips_params(jax.random.PRNGKey(42))

    data_dict = {"recon_im": [recon_im], "input_im": target_im}
    metrics = image_metrics(data_dict, lpips_params)
    metrics = jax.block_until_ready(metrics)

    assert all(bool(jnp.isfinite(v)) for v in metrics.values())
    print("KERNEL_OK")
</pallas_src>

<mosaic_0001>
module attributes {stable_mosaic.version = 11 : i64} {
  func.func @_matmul_bias_relu_kernel(%arg0: i32, %arg1: memref<512x27xbf16, #tpu.memory_space<vmem>>, %arg2: memref<27x128xbf16, #tpu.memory_space<vmem>>, %arg3: memref<1x128xf32, #tpu.memory_space<vmem>>, %arg4: memref<512x128xbf16, #tpu.memory_space<vmem>>) attributes {dimension_semantics = [#tpu.dimension_semantics<parallel>], iteration_bounds = array<i64: 2>, scalar_prefetch = 0 : i64, scratch_operands = 0 : i64, tpu.core_type = #tpu.core_type<tc>, window_params = [{transform_indices = @transform_0, window_bounds = array<i64: 512, 27>}, {pipeline_mode = #tpu.pipeline_mode<synchronous>, transform_indices = @transform_1, window_bounds = array<i64: 27, 128>}, {pipeline_mode = #tpu.pipeline_mode<synchronous>, transform_indices = @transform_2, window_bounds = array<i64: 1, 128>}, {transform_indices = @transform_3, window_bounds = array<i64: 512, 128>}]} {
    %c0 = arith.constant 0 : index
    %c0_0 = arith.constant 0 : index
    %0 = vector.load %arg1[%c0, %c0_0] : memref<512x27xbf16, #tpu.memory_space<vmem>>, vector<512x27xbf16>
    %c0_1 = arith.constant 0 : index
    %c0_2 = arith.constant 0 : index
    %1 = vector.load %arg2[%c0_1, %c0_2] : memref<27x128xbf16, #tpu.memory_space<vmem>>, vector<27x128xbf16>
    %cst = arith.constant dense<0.000000e+00> : vector<512x128xf32>
    %2 = tpu.matmul %0, %1, %cst {dimension_numbers = #tpu.dot_dimension_numbers<[1], [0], [0], [1], [0, 0, 1, 1], [], []>} : vector<512x27xbf16>, vector<27x128xbf16>, vector<512x128xf32> -> vector<512x128xf32>
    %c0_3 = arith.constant 0 : index
    %c0_4 = arith.constant 0 : index
    %3 = vector.load %arg3[%c0_3, %c0_4] : memref<1x128xf32, #tpu.memory_space<vmem>>, vector<1x128xf32>
    %4 = vector.broadcast %3 : vector<1x128xf32> to vector<512x128xf32>
    %5 = arith.addf %2, %4 : vector<512x128xf32>
    %cst_5 = arith.constant 0.000000e+00 : f32
    %6 = vector.broadcast %cst_5 : f32 to vector<512x128xf32>
    %7 = arith.maximumf %5, %6 : vector<512x128xf32>
    %8 = arith.truncf %7 : vector<512x128xf32> to vector<512x128xbf16>
    %c0_6 = arith.constant 0 : index
    %c0_7 = arith.constant 0 : index
    %9 = vector.load %arg4[%c0_6, %c0_7] : memref<512x128xbf16, #tpu.memory_space<vmem>>, vector<512x128xbf16>
    tpu.vector_store %arg4[%c0_6, %c0_7], %8 {strides = array<i32>} : memref<512x128xbf16, #tpu.memory_space<vmem>>, vector<512x128xbf16>,
    return
  }
  func.func @transform_0(%arg0: i32) -> (i32, i32) {
    %c0_i32 = arith.constant 0 : i32
    %c0_i32_0 = arith.constant 0 : i32
    return %arg0, %c0_i32 : i32, i32
  }
  func.func @transform_1(%arg0: i32) -> (i32, i32) {
    %c0_i32 = arith.constant 0 : i32
    %c0_i32_0 = arith.constant 0 : i32
    %c0_i32_1 = arith.constant 0 : i32
    return %c0_i32, %c0_i32_0 : i32, i32
  }
  func.func @transform_2(%arg0: i32) -> (i32, i32) {
    %c0_i32 = arith.constant 0 : i32
    %c0_i32_0 = arith.constant 0 : i32
    %c0_i32_1 = arith.constant 0 : i32
    return %c0_i32, %c0_i32_0 : i32, i32
  }
  func.func @transform_3(%arg0: i32) -> (i32, i32) {
    %c0_i32 = arith.constant 0 : i32
    %c0_i32_0 = arith.constant 0 : i32
    return %arg0, %c0_i32 : i32, i32
  }
}

module attributes {stable_mosaic.version = 11 : i64} {
  func.func @_matmul_bias_relu_kernel(%arg0: i32, %arg1: memref<256x144xbf16, #tpu.memory_space<vmem>>, %arg2: memref<144x128xbf16, #tpu.memory_space<vmem>>, %arg3: memref<1x128xf32, #tpu.memory_space<vmem>>, %arg4: memref<256x128xbf16, #tpu.memory_space<vmem>>) attributes {dimension_semantics = [#tpu.dimension_semantics<parallel>], iteration_bounds = array<i64: 1>, scalar_prefetch = 0 : i64, scratch_operands = 0 : i64, tpu.core_type = #tpu.core_type<tc>, window_params = [{transform_indices = @transform_0, window_bounds = array<i64: 256, 144>}, {pipeline_mode = #tpu.pipeline_mode<synchronous>, transform_indices = @transform_1, window_bounds = array<i64: 144, 128>}, {pipeline_mode = #tpu.pipeline_mode<synchronous>, transform_indices = @transform_2, window_bounds = array<i64: 1, 128>}, {transform_indices = @transform_3, window_bounds = array<i64: 256, 128>}]} {
    %c0 = arith.constant 0 : index
    %c0_0 = arith.constant 0 : index
    %0 = vector.load %arg1[%c0, %c0_0] : memref<256x144xbf16, #tpu.memory_space<vmem>>, vector<256x144xbf16>
    %c0_1 = arith.constant 0 : index
    %c0_2 = arith.constant 0 : index
    %1 = vector.load %arg2[%c0_1, %c0_2] : memref<144x128xbf16, #tpu.memory_space<vmem>>, vector<144x128xbf16>
    %cst = arith.constant dense<0.000000e+00> : vector<256x128xf32>
    %2 = tpu.matmul %0, %1, %cst {dimension_numbers = #tpu.dot_dimension_numbers<[1], [0], [0], [1], [0, 0, 1, 1], [], []>} : vector<256x144xbf16>, vector<144x128xbf16>, vector<256x128xf32> -> vector<256x128xf32>
    %c0_3 = arith.constant 0 : index
    %c0_4 = arith.constant 0 : index
    %3 = vector.load %arg3[%c0_3, %c0_4] : memref<1x128xf32, #tpu.memory_space<vmem>>, vector<1x128xf32>
    %4 = vector.broadcast %3 : vector<1x128xf32> to vector<256x128xf32>
    %5 = arith.addf %2, %4 : vector<256x128xf32>
    %cst_5 = arith.constant 0.000000e+00 : f32
    %6 = vector.broadcast %cst_5 : f32 to vector<256x128xf32>
    %7 = arith.maximumf %5, %6 : vector<256x128xf32>
    %8 = arith.truncf %7 : vector<256x128xf32> to vector<256x128xbf16>
    %c0_6 = arith.constant 0 : index
    %c0_7 = arith.constant 0 : index
    %9 = vector.load %arg4[%c0_6, %c0_7] : memref<256x128xbf16, #tpu.memory_space<vmem>>, vector<256x128xbf16>
    tpu.vector_store %arg4[%c0_6, %c0_7], %8 {strides = array<i32>} : memref<256x128xbf16, #tpu.memory_space<vmem>>, vector<256x128xbf16>,
    return
  }
  func.func @transform_0(%arg0: i32) -> (i32, i32) {
    %c0_i32 = arith.constant 0 : i32
    %c0_i32_0 = arith.constant 0 : i32
    return %arg0, %c0_i32 : i32, i32
  }
  func.func @transform_1(%arg0: i32) -> (i32, i32) {
    %c0_i32 = arith.constant 0 : i32
    %c0_i32_0 = arith.constant 0 : i32
    %c0_i32_1 = arith.constant 0 : i32
    return %c0_i32, %c0_i32_0 : i32, i32
  }
  func.func @transform_2(%arg0: i32) -> (i32, i32) {
    %c0_i32 = arith.constant 0 : i32
    %c0_i32_0 = arith.constant 0 : i32
    %c0_i32_1 = arith.constant 0 : i32
    return %c0_i32, %c0_i32_0 : i32, i32
  }
  func.func @transform_3(%arg0: i32) -> (i32, i32) {
    %c0_i32 = arith.constant 0 : i32
    %c0_i32_0 = arith.constant 0 : i32
    return %arg0, %c0_i32 : i32, i32
  }
}

module attributes {stable_mosaic.version = 11 : i64} {
  func.func @_matmul_bias_relu_kernel(%arg0: i32, %arg1: memref<64x288xbf16, #tpu.memory_space<vmem>>, %arg2: memref<288x128xbf16, #tpu.memory_space<vmem>>, %arg3: memref<1x128xf32, #tpu.memory_space<vmem>>, %arg4: memref<64x128xbf16, #tpu.memory_space<vmem>>) attributes {dimension_semantics = [#tpu.dimension_semantics<parallel>], iteration_bounds = array<i64: 1>, scalar_prefetch = 0 : i64, scratch_operands = 0 : i64, tpu.core_type = #tpu.core_type<tc>, window_params = [{transform_indices = @transform_0, window_bounds = array<i64: 64, 288>}, {pipeline_mode = #tpu.pipeline_mode<synchronous>, transform_indices = @transform_1, window_bounds = array<i64: 288, 128>}, {pipeline_mode = #tpu.pipeline_mode<synchronous>, transform_indices = @transform_2, window_bounds = array<i64: 1, 128>}, {transform_indices = @transform_3, window_bounds = array<i64: 64, 128>}]} {
    %c0 = arith.constant 0 : index
    %c0_0 = arith.constant 0 : index
    %0 = vector.load %arg1[%c0, %c0_0] : memref<64x288xbf16, #tpu.memory_space<vmem>>, vector<64x288xbf16>
    %c0_1 = arith.constant 0 : index
    %c0_2 = arith.constant 0 : index
    %1 = vector.load %arg2[%c0_1, %c0_2] : memref<288x128xbf16, #tpu.memory_space<vmem>>, vector<288x128xbf16>
    %cst = arith.constant dense<0.000000e+00> : vector<64x128xf32>
    %2 = tpu.matmul %0, %1, %cst {dimension_numbers = #tpu.dot_dimension_numbers<[1], [0], [0], [1], [0, 0, 1, 1], [], []>} : vector<64x288xbf16>, vector<288x128xbf16>, vector<64x128xf32> -> vector<64x128xf32>
    %c0_3 = arith.constant 0 : index
    %c0_4 = arith.constant 0 : index
    %3 = vector.load %arg3[%c0_3, %c0_4] : memref<1x128xf32, #tpu.memory_space<vmem>>, vector<1x128xf32>
    %4 = vector.broadcast %3 : vector<1x128xf32> to vector<64x128xf32>
    %5 = arith.addf %2, %4 : vector<64x128xf32>
    %cst_5 = arith.constant 0.000000e+00 : f32
    %6 = vector.broadcast %cst_5 : f32 to vector<64x128xf32>
    %7 = arith.maximumf %5, %6 : vector<64x128xf32>
    %8 = arith.truncf %7 : vector<64x128xf32> to vector<64x128xbf16>
    %c0_6 = arith.constant 0 : index
    %c0_7 = arith.constant 0 : index
    %9 = vector.load %arg4[%c0_6, %c0_7] : memref<64x128xbf16, #tpu.memory_space<vmem>>, vector<64x128xbf16>
    tpu.vector_store %arg4[%c0_6, %c0_7], %8 {strides = array<i32>} : memref<64x128xbf16, #tpu.memory_space<vmem>>, vector<64x128xbf16>,
    return
  }
  func.func @transform_0(%arg0: i32) -> (i32, i32) {
    %c0_i32 = arith.constant 0 : i32
    %c0_i32_0 = arith.constant 0 : i32
    return %arg0, %c0_i32 : i32, i32
  }
  func.func @transform_1(%arg0: i32) -> (i32, i32) {
    %c0_i32 = arith.constant 0 : i32
    %c0_i32_0 = arith.constant 0 : i32
    %c0_i32_1 = arith.constant 0 : i32
    return %c0_i32, %c0_i32_0 : i32, i32
  }
  func.func @transform_2(%arg0: i32) -> (i32, i32) {
    %c0_i32 = arith.constant 0 : i32
    %c0_i32_0 = arith.constant 0 : i32
    %c0_i32_1 = arith.constant 0 : i32
    return %c0_i32, %c0_i32_0 : i32, i32
  }
  func.func @transform_3(%arg0: i32) -> (i32, i32) {
    %c0_i32 = arith.constant 0 : i32
    %c0_i32_0 = arith.constant 0 : i32
    return %arg0, %c0_i32 : i32, i32
  }
}

module attributes {stable_mosaic.version = 11 : i64} {
  func.func @_lpips_layer_kernel(%arg0: i32, %arg1: i32, %arg2: memref<2x64x128xbf16, #tpu.memory_space<vmem>>, %arg3: memref<2x64x128xbf16, #tpu.memory_space<vmem>>, %arg4: memref<1x1x128xf32, #tpu.memory_space<vmem>>, %arg5: memref<1x2x1xf32, #tpu.memory_space<vmem>>) attributes {dimension_semantics = [#tpu.dimension_semantics<parallel>, #tpu.dimension_semantics<arbitrary>], iteration_bounds = array<i64: 1, 1>, scalar_prefetch = 0 : i64, scratch_operands = 0 : i64, tpu.core_type = #tpu.core_type<tc>, window_params = [{transform_indices = @transform_0, window_bounds = array<i64: 2, 64, 128>}, {transform_indices = @transform_1, window_bounds = array<i64: 2, 64, 128>}, {pipeline_mode = #tpu.pipeline_mode<synchronous>, transform_indices = @transform_2, window_bounds = array<i64: 1, 1, 128>}, {transform_indices = @transform_3, window_bounds = array<i64: 1, 2, 1>}]} {
    %c0_i32 = arith.constant 0 : i32
    %0 = arith.cmpi eq, %arg1, %c0_i32 : i32
    %1 = arith.extui %0 : i1 to i32
    %c0_i32_0 = arith.constant 0 : i32
    %2 = arith.cmpi ne, %1, %c0_i32_0 : i32
    scf.if %2 {
      %cst_20 = arith.constant 0.000000e+00 : f32
      %37 = vector.broadcast %cst_20 : f32 to vector<1x2x1xf32>
      %c0_21 = arith.constant 0 : index
      %c0_22 = arith.constant 0 : index
      %c0_23 = arith.constant 0 : index
      %38 = vector.load %arg5[%c0_21, %c0_22, %c0_23] : memref<1x2x1xf32, #tpu.memory_space<vmem>>, vector<1x2x1xf32>
      tpu.vector_store %arg5[%c0_21, %c0_22, %c0_23], %37 {strides = array<i32>} : memref<1x2x1xf32, #tpu.memory_space<vmem>>, vector<1x2x1xf32>,
    } else {
    }
    %c0 = arith.constant 0 : index
    %c0_1 = arith.constant 0 : index
    %c0_2 = arith.constant 0 : index
    %3 = vector.load %arg2[%c0, %c0_1, %c0_2] : memref<2x64x128xbf16, #tpu.memory_space<vmem>>, vector<2x64x128xbf16>
    %4 = arith.extf %3 : vector<2x64x128xbf16> to vector<2x64x128xf32>
    %c0_3 = arith.constant 0 : index
    %c0_4 = arith.constant 0 : index
    %c0_5 = arith.constant 0 : index
    %5 = vector.load %arg3[%c0_3, %c0_4, %c0_5] : memref<2x64x128xbf16, #tpu.memory_space<vmem>>, vector<2x64x128xbf16>
    %6 = arith.extf %5 : vector<2x64x128xbf16> to vector<2x64x128xf32>
    %7 = arith.mulf %4, %4 : vector<2x64x128xf32>
    %cst = arith.constant dense<0.000000e+00> : vector<2x64xf32>
    %8 = vector.multi_reduction <add>, %7, %cst [2] : vector<2x64x128xf32> to vector<2x64xf32>
    %9 = vector.shape_cast %8 : vector<2x64xf32> to vector<2x64x1xf32>
    %10 = math.sqrt %9 : vector<2x64x1xf32>
    %cst_6 = arith.constant 1.000000e-10 : f32
    %11 = vector.broadcast %cst_6 : f32 to vector<2x64x1xf32>
    %12 = arith.addf %10, %11 : vector<2x64x1xf32>
    %13 = tpu.reciprocal %12 {approx = true} : vector<2x64x1xf32> -> vector<2x64x1xf32>
    %14 = arith.mulf %6, %6 : vector<2x64x128xf32>
    %cst_7 = arith.constant dense<0.000000e+00> : vector<2x64xf32>
    %15 = vector.multi_reduction <add>, %14, %cst_7 [2] : vector<2x64x128xf32> to vector<2x64xf32>
    %16 = vector.shape_cast %15 : vector<2x64xf32> to vector<2x64x1xf32>
    %17 = math.sqrt %16 : vector<2x64x1xf32>
    %cst_8 = arith.constant 1.000000e-10 : f32
    %18 = vector.broadcast %cst_8 : f32 to vector<2x64x1xf32>
    %19 = arith.addf %17, %18 : vector<2x64x1xf32>
    %20 = tpu.reciprocal %19 {approx = true} : vector<2x64x1xf32> -> vector<2x64x1xf32>
    %21 = vector.broadcast %13 : vector<2x64x1xf32> to vector<2x64x128xf32>
    %22 = arith.mulf %4, %21 : vector<2x64x128xf32>
    %23 = vector.broadcast %20 : vector<2x64x1xf32> to vector<2x64x128xf32>
    %24 = arith.mulf %6, %23 : vector<2x64x128xf32>
    %25 = arith.subf %22, %24 : vector<2x64x128xf32>
    %26 = arith.mulf %25, %25 : vector<2x64x128xf32>
    %c0_9 = arith.constant 0 : index
    %c0_10 = arith.constant 0 : index
    %c0_11 = arith.constant 0 : index
    %27 = vector.load %arg4[%c0_9, %c0_10, %c0_11] : memref<1x1x128xf32, #tpu.memory_space<vmem>>, vector<1x1x128xf32>
    %28 = vector.broadcast %27 : vector<1x1x128xf32> to vector<2x64x128xf32>
    %29 = arith.mulf %26, %28 : vector<2x64x128xf32>
    %cst_12 = arith.constant dense<0.000000e+00> : vector<2x64xf32>
    %30 = vector.multi_reduction <add>, %29, %cst_12 [2] : vector<2x64x128xf32> to vector<2x64xf32>
    %c0_13 = arith.constant 0 : index
    %c0_14 = arith.constant 0 : index
    %c0_15 = arith.constant 0 : index
    %31 = vector.load %arg5[%c0_13, %c0_14, %c0_15] : memref<1x2x1xf32, #tpu.memory_space<vmem>>, vector<1x2x1xf32>
    %cst_16 = arith.constant dense<0.000000e+00> : vector<2xf32>
    %32 = vector.multi_reduction <add>, %30, %cst_16 [1] : vector<2x64xf32> to vector<2xf32>
    %33 = vector.shape_cast %32 : vector<2xf32> to vector<2x1xf32>
    %34 = vector.shape_cast %33 : vector<2x1xf32> to vector<1x2x1xf32>
    %35 = arith.addf %31, %34 : vector<1x2x1xf32>
    %c0_17 = arith.constant 0 : index
    %c0_18 = arith.constant 0 : index
    %c0_19 = arith.constant 0 : index
    %36 = vector.load %arg5[%c0_17, %c0_18, %c0_19] : memref<1x2x1xf32, #tpu.memory_space<vmem>>, vector<1x2x1xf32>
    tpu.vector_store %arg5[%c0_17, %c0_18, %c0_19], %35 {strides = array<i32>} : memref<1x2x1xf32, #tpu.memory_space<vmem>>, vector<1x2x1xf32>,
    return
  }
  func.func @transform_0(%arg0: i32, %arg1: i32) -> (i32, i32, i32) {
    %c1_i32 = arith.constant 1 : i32
    %0 = arith.muli %arg0, %c1_i32 : i32
    %1 = arith.addi %0, %arg1 : i32
    %c0_i32 = arith.constant 0 : i32
    %c0_i32_0 = arith.constant 0 : i32
    %c0_i32_1 = arith.constant 0 : i32
    return %c0_i32, %1, %c0_i32_0 : i32, i32, i32
  }
  func.func @transform_1(%arg0: i32, %arg1: i32) -> (i32, i32, i32) {
    %c1_i32 = arith.constant 1 : i32
    %0 = arith.muli %arg0, %c1_i32 : i32
    %1 = arith.addi %0, %arg1 : i32
    %c1_i32_0 = arith.constant 1 : i32
    %c0_i32 = arith.constant 0 : i32
    %c0_i32_1 = arith.constant 0 : i32
    return %c1_i32_0, %1, %c0_i32 : i32, i32, i32
  }
  func.func @transform_2(%arg0: i32, %arg1: i32) -> (i32, i32, i32) {
    %c0_i32 = arith.constant 0 : i32
    %c0_i32_0 = arith.constant 0 : i32
    %c0_i32_1 = arith.constant 0 : i32
    %c0_i32_2 = arith.constant 0 : i32
    return %c0_i32, %c0_i32_0, %c0_i32_1 : i32, i32, i32
  }
  func.func @transform_3(%arg0: i32, %arg1: i32) -> (i32, i32, i32) {
    %c0_i32 = arith.constant 0 : i32
    %c0_i32_0 = arith.constant 0 : i32
    %c0_i32_1 = arith.constant 0 : i32
    return %arg0, %c0_i32, %c0_i32_0 : i32, i32, i32
  }
}

module attributes {stable_mosaic.version = 11 : i64} {
  func.func @_lpips_layer_kernel(%arg0: i32, %arg1: i32, %arg2: memref<2x16x128xbf16, #tpu.memory_space<vmem>>, %arg3: memref<2x16x128xbf16, #tpu.memory_space<vmem>>, %arg4: memref<1x1x128xf32, #tpu.memory_space<vmem>>, %arg5: memref<1x2x1xf32, #tpu.memory_space<vmem>>) attributes {dimension_semantics = [#tpu.dimension_semantics<parallel>, #tpu.dimension_semantics<arbitrary>], iteration_bounds = array<i64: 1, 1>, scalar_prefetch = 0 : i64, scratch_operands = 0 : i64, tpu.core_type = #tpu.core_type<tc>, window_params = [{transform_indices = @transform_0, window_bounds = array<i64: 2, 16, 128>}, {transform_indices = @transform_1, window_bounds = array<i64: 2, 16, 128>}, {pipeline_mode = #tpu.pipeline_mode<synchronous>, transform_indices = @transform_2, window_bounds = array<i64: 1, 1, 128>}, {transform_indices = @transform_3, window_bounds = array<i64: 1, 2, 1>}]} {
    %c0_i32 = arith.constant 0 : i32
    %0 = arith.cmpi eq, %arg1, %c0_i32 : i32
    %1 = arith.extui %0 : i1 to i32
    %c0_i32_0 = arith.constant 0 : i32
    %2 = arith.cmpi ne, %1, %c0_i32_0 : i32
    scf.if %2 {
      %cst_20 = arith.constant 0.000000e+00 : f32
      %37 = vector.broadcast %cst_20 : f32 to vector<1x2x1xf32>
      %c0_21 = arith.constant 0 : index
      %c0_22 = arith.constant 0 : index
      %c0_23 = arith.constant 0 : index
      %38 = vector.load %arg5[%c0_21, %c0_22, %c0_23] : memref<1x2x1xf32, #tpu.memory_space<vmem>>, vector<1x2x1xf32>
      tpu.vector_store %arg5[%c0_21, %c0_22, %c0_23], %37 {strides = array<i32>} : memref<1x2x1xf32, #tpu.memory_space<vmem>>, vector<1x2x1xf32>,
    } else {
    }
    %c0 = arith.constant 0 : index
    %c0_1 = arith.constant 0 : index
    %c0_2 = arith.constant 0 : index
    %3 = vector.load %arg2[%c0, %c0_1, %c0_2] : memref<2x16x128xbf16, #tpu.memory_space<vmem>>, vector<2x16x128xbf16>
    %4 = arith.extf %3 : vector<2x16x128xbf16> to vector<2x16x128xf32>
    %c0_3 = arith.constant 0 : index
    %c0_4 = arith.constant 0 : index
    %c0_5 = arith.constant 0 : index
    %5 = vector.load %arg3[%c0_3, %c0_4, %c0_5] : memref<2x16x128xbf16, #tpu.memory_space<vmem>>, vector<2x16x128xbf16>
    %6 = arith.extf %5 : vector<2x16x128xbf16> to vector<2x16x128xf32>
    %7 = arith.mulf %4, %4 : vector<2x16x128xf32>
    %cst = arith.constant dense<0.000000e+00> : vector<2x16xf32>
    %8 = vector.multi_reduction <add>, %7, %cst [2] : vector<2x16x128xf32> to vector<2x16xf32>
    %9 = vector.shape_cast %8 : vector<2x16xf32> to vector<2x16x1xf32>
    %10 = math.sqrt %9 : vector<2x16x1xf32>
    %cst_6 = arith.constant 1.000000e-10 : f32
    %11 = vector.broadcast %cst_6 : f32 to vector<2x16x1xf32>
    %12 = arith.addf %10, %11 : vector<2x16x1xf32>
    %13 = tpu.reciprocal %12 {approx = true} : vector<2x16x1xf32> -> vector<2x16x1xf32>
    %14 = arith.mulf %6, %6 : vector<2x16x128xf32>
    %cst_7 = arith.constant dense<0.000000e+00> : vector<2x16xf32>
    %15 = vector.multi_reduction <add>, %14, %cst_7 [2] : vector<2x16x128xf32> to vector<2x16xf32>
    %16 = vector.shape_cast %15 : vector<2x16xf32> to vector<2x16x1xf32>
    %17 = math.sqrt %16 : vector<2x16x1xf32>
    %cst_8 = arith.constant 1.000000e-10 : f32
    %18 = vector.broadcast %cst_8 : f32 to vector<2x16x1xf32>
    %19 = arith.addf %17, %18 : vector<2x16x1xf32>
    %20 = tpu.reciprocal %19 {approx = true} : vector<2x16x1xf32> -> vector<2x16x1xf32>
    %21 = vector.broadcast %13 : vector<2x16x1xf32> to vector<2x16x128xf32>
    %22 = arith.mulf %4, %21 : vector<2x16x128xf32>
    %23 = vector.broadcast %20 : vector<2x16x1xf32> to vector<2x16x128xf32>
    %24 = arith.mulf %6, %23 : vector<2x16x128xf32>
    %25 = arith.subf %22, %24 : vector<2x16x128xf32>
    %26 = arith.mulf %25, %25 : vector<2x16x128xf32>
    %c0_9 = arith.constant 0 : index
    %c0_10 = arith.constant 0 : index
    %c0_11 = arith.constant 0 : index
    %27 = vector.load %arg4[%c0_9, %c0_10, %c0_11] : memref<1x1x128xf32, #tpu.memory_space<vmem>>, vector<1x1x128xf32>
    %28 = vector.broadcast %27 : vector<1x1x128xf32> to vector<2x16x128xf32>
    %29 = arith.mulf %26, %28 : vector<2x16x128xf32>
    %cst_12 = arith.constant dense<0.000000e+00> : vector<2x16xf32>
    %30 = vector.multi_reduction <add>, %29, %cst_12 [2] : vector<2x16x128xf32> to vector<2x16xf32>
    %c0_13 = arith.constant 0 : index
    %c0_14 = arith.constant 0 : index
    %c0_15 = arith.constant 0 : index
    %31 = vector.load %arg5[%c0_13, %c0_14, %c0_15] : memref<1x2x1xf32, #tpu.memory_space<vmem>>, vector<1x2x1xf32>
    %cst_16 = arith.constant dense<0.000000e+00> : vector<2xf32>
    %32 = vector.multi_reduction <add>, %30, %cst_16 [1] : vector<2x16xf32> to vector<2xf32>
    %33 = vector.shape_cast %32 : vector<2xf32> to vector<2x1xf32>
    %34 = vector.shape_cast %33 : vector<2x1xf32> to vector<1x2x1xf32>
    %35 = arith.addf %31, %34 : vector<1x2x1xf32>
    %c0_17 = arith.constant 0 : index
    %c0_18 = arith.constant 0 : index
    %c0_19 = arith.constant 0 : index
    %36 = vector.load %arg5[%c0_17, %c0_18, %c0_19] : memref<1x2x1xf32, #tpu.memory_space<vmem>>, vector<1x2x1xf32>
    tpu.vector_store %arg5[%c0_17, %c0_18, %c0_19], %35 {strides = array<i32>} : memref<1x2x1xf32, #tpu.memory_space<vmem>>, vector<1x2x1xf32>,
    return
  }
  func.func @transform_0(%arg0: i32, %arg1: i32) -> (i32, i32, i32) {
    %c1_i32 = arith.constant 1 : i32
    %0 = arith.muli %arg0, %c1_i32 : i32
    %1 = arith.addi %0, %arg1 : i32
    %c0_i32 = arith.constant 0 : i32
    %c0_i32_0 = arith.constant 0 : i32
    %c0_i32_1 = arith.constant 0 : i32
    return %c0_i32, %1, %c0_i32_0 : i32, i32, i32
  }
  func.func @transform_1(%arg0: i32, %arg1: i32) -> (i32, i32, i32) {
    %c1_i32 = arith.constant 1 : i32
    %0 = arith.muli %arg0, %c1_i32 : i32
    %1 = arith.addi %0, %arg1 : i32
    %c1_i32_0 = arith.constant 1 : i32
    %c0_i32 = arith.constant 0 : i32
    %c0_i32_1 = arith.constant 0 : i32
    return %c1_i32_0, %1, %c0_i32 : i32, i32, i32
  }
  func.func @transform_2(%arg0: i32, %arg1: i32) -> (i32, i32, i32) {
    %c0_i32 = arith.constant 0 : i32
    %c0_i32_0 = arith.constant 0 : i32
    %c0_i32_1 = arith.constant 0 : i32
    %c0_i32_2 = arith.constant 0 : i32
    return %c0_i32, %c0_i32_0, %c0_i32_1 : i32, i32, i32
  }
  func.func @transform_3(%arg0: i32, %arg1: i32) -> (i32, i32, i32) {
    %c0_i32 = arith.constant 0 : i32
    %c0_i32_0 = arith.constant 0 : i32
    %c0_i32_1 = arith.constant 0 : i32
    return %arg0, %c0_i32, %c0_i32_0 : i32, i32, i32
  }
}

module attributes {stable_mosaic.version = 11 : i64} {
  func.func @_lpips_layer_kernel(%arg0: i32, %arg1: i32, %arg2: memref<2x256x128xbf16, #tpu.memory_space<vmem>>, %arg3: memref<2x256x128xbf16, #tpu.memory_space<vmem>>, %arg4: memref<1x1x128xf32, #tpu.memory_space<vmem>>, %arg5: memref<1x2x1xf32, #tpu.memory_space<vmem>>) attributes {dimension_semantics = [#tpu.dimension_semantics<parallel>, #tpu.dimension_semantics<arbitrary>], iteration_bounds = array<i64: 1, 1>, scalar_prefetch = 0 : i64, scratch_operands = 0 : i64, tpu.core_type = #tpu.core_type<tc>, window_params = [{transform_indices = @transform_0, window_bounds = array<i64: 2, 256, 128>}, {transform_indices = @transform_1, window_bounds = array<i64: 2, 256, 128>}, {pipeline_mode = #tpu.pipeline_mode<synchronous>, transform_indices = @transform_2, window_bounds = array<i64: 1, 1, 128>}, {transform_indices = @transform_3, window_bounds = array<i64: 1, 2, 1>}]} {
    %c0_i32 = arith.constant 0 : i32
    %0 = arith.cmpi eq, %arg1, %c0_i32 : i32
    %1 = arith.extui %0 : i1 to i32
    %c0_i32_0 = arith.constant 0 : i32
    %2 = arith.cmpi ne, %1, %c0_i32_0 : i32
    scf.if %2 {
      %cst_20 = arith.constant 0.000000e+00 : f32
      %37 = vector.broadcast %cst_20 : f32 to vector<1x2x1xf32>
      %c0_21 = arith.constant 0 : index
      %c0_22 = arith.constant 0 : index
      %c0_23 = arith.constant 0 : index
      %38 = vector.load %arg5[%c0_21, %c0_22, %c0_23] : memref<1x2x1xf32, #tpu.memory_space<vmem>>, vector<1x2x1xf32>
      tpu.vector_store %arg5[%c0_21, %c0_22, %c0_23], %37 {strides = array<i32>} : memref<1x2x1xf32, #tpu.memory_space<vmem>>, vector<1x2x1xf32>,
    } else {
    }
    %c0 = arith.constant 0 : index
    %c0_1 = arith.constant 0 : index
    %c0_2 = arith.constant 0 : index
    %3 = vector.load %arg2[%c0, %c0_1, %c0_2] : memref<2x256x128xbf16, #tpu.memory_space<vmem>>, vector<2x256x128xbf16>
    %4 = arith.extf %3 : vector<2x256x128xbf16> to vector<2x256x128xf32>
    %c0_3 = arith.constant 0 : index
    %c0_4 = arith.constant 0 : index
    %c0_5 = arith.constant 0 : index
    %5 = vector.load %arg3[%c0_3, %c0_4, %c0_5] : memref<2x256x128xbf16, #tpu.memory_space<vmem>>, vector<2x256x128xbf16>
    %6 = arith.extf %5 : vector<2x256x128xbf16> to vector<2x256x128xf32>
    %7 = arith.mulf %4, %4 : vector<2x256x128xf32>
    %cst = arith.constant dense<0.000000e+00> : vector<2x256xf32>
    %8 = vector.multi_reduction <add>, %7, %cst [2] : vector<2x256x128xf32> to vector<2x256xf32>
    %9 = vector.shape_cast %8 : vector<2x256xf32> to vector<2x256x1xf32>
    %10 = math.sqrt %9 : vector<2x256x1xf32>
    %cst_6 = arith.constant 1.000000e-10 : f32
    %11 = vector.broadcast %cst_6 : f32 to vector<2x256x1xf32>
    %12 = arith.addf %10, %11 : vector<2x256x1xf32>
    %13 = tpu.reciprocal %12 {approx = true} : vector<2x256x1xf32> -> vector<2x256x1xf32>
    %14 = arith.mulf %6, %6 : vector<2x256x128xf32>
    %cst_7 = arith.constant dense<0.000000e+00> : vector<2x256xf32>
    %15 = vector.multi_reduction <add>, %14, %cst_7 [2] : vector<2x256x128xf32> to vector<2x256xf32>
    %16 = vector.shape_cast %15 : vector<2x256xf32> to vector<2x256x1xf32>
    %17 = math.sqrt %16 : vector<2x256x1xf32>
    %cst_8 = arith.constant 1.000000e-10 : f32
    %18 = vector.broadcast %cst_8 : f32 to vector<2x256x1xf32>
    %19 = arith.addf %17, %18 : vector<2x256x1xf32>
    %20 = tpu.reciprocal %19 {approx = true} : vector<2x256x1xf32> -> vector<2x256x1xf32>
    %21 = vector.broadcast %13 : vector<2x256x1xf32> to vector<2x256x128xf32>
    %22 = arith.mulf %4, %21 : vector<2x256x128xf32>
    %23 = vector.broadcast %20 : vector<2x256x1xf32> to vector<2x256x128xf32>
    %24 = arith.mulf %6, %23 : vector<2x256x128xf32>
    %25 = arith.subf %22, %24 : vector<2x256x128xf32>
    %26 = arith.mulf %25, %25 : vector<2x256x128xf32>
    %c0_9 = arith.constant 0 : index
    %c0_10 = arith.constant 0 : index
    %c0_11 = arith.constant 0 : index
    %27 = vector.load %arg4[%c0_9, %c0_10, %c0_11] : memref<1x1x128xf32, #tpu.memory_space<vmem>>, vector<1x1x128xf32>
    %28 = vector.broadcast %27 : vector<1x1x128xf32> to vector<2x256x128xf32>
    %29 = arith.mulf %26, %28 : vector<2x256x128xf32>
    %cst_12 = arith.constant dense<0.000000e+00> : vector<2x256xf32>
    %30 = vector.multi_reduction <add>, %29, %cst_12 [2] : vector<2x256x128xf32> to vector<2x256xf32>
    %c0_13 = arith.constant 0 : index
    %c0_14 = arith.constant 0 : index
    %c0_15 = arith.constant 0 : index
    %31 = vector.load %arg5[%c0_13, %c0_14, %c0_15] : memref<1x2x1xf32, #tpu.memory_space<vmem>>, vector<1x2x1xf32>
    %cst_16 = arith.constant dense<0.000000e+00> : vector<2xf32>
    %32 = vector.multi_reduction <add>, %30, %cst_16 [1] : vector<2x256xf32> to vector<2xf32>
    %33 = vector.shape_cast %32 : vector<2xf32> to vector<2x1xf32>
    %34 = vector.shape_cast %33 : vector<2x1xf32> to vector<1x2x1xf32>
    %35 = arith.addf %31, %34 : vector<1x2x1xf32>
    %c0_17 = arith.constant 0 : index
    %c0_18 = arith.constant 0 : index
    %c0_19 = arith.constant 0 : index
    %36 = vector.load %arg5[%c0_17, %c0_18, %c0_19] : memref<1x2x1xf32, #tpu.memory_space<vmem>>, vector<1x2x1xf32>
    tpu.vector_store %arg5[%c0_17, %c0_18, %c0_19], %35 {strides = array<i32>} : memref<1x2x1xf32, #tpu.memory_space<vmem>>, vector<1x2x1xf32>,
    return
  }
  func.func @transform_0(%arg0: i32, %arg1: i32) -> (i32, i32, i32) {
    %c1_i32 = arith.constant 1 : i32
    %0 = arith.muli %arg0, %c1_i32 : i32
    %1 = arith.addi %0, %arg1 : i32
    %c0_i32 = arith.constant 0 : i32
    %c0_i32_0 = arith.constant 0 : i32
    %c0_i32_1 = arith.constant 0 : i32
    return %c0_i32, %1, %c0_i32_0 : i32, i32, i32
  }
  func.func @transform_1(%arg0: i32, %arg1: i32) -> (i32, i32, i32) {
    %c1_i32 = arith.constant 1 : i32
    %0 = arith.muli %arg0, %c1_i32 : i32
    %1 = arith.addi %0, %arg1 : i32
    %c1_i32_0 = arith.constant 1 : i32
    %c0_i32 = arith.constant 0 : i32
    %c0_i32_1 = arith.constant 0 : i32
    return %c1_i32_0, %1, %c0_i32 : i32, i32, i32
  }
  func.func @transform_2(%arg0: i32, %arg1: i32) -> (i32, i32, i32) {
    %c0_i32 = arith.constant 0 : i32
    %c0_i32_0 = arith.constant 0 : i32
    %c0_i32_1 = arith.constant 0 : i32
    %c0_i32_2 = arith.constant 0 : i32
    return %c0_i32, %c0_i32_0, %c0_i32_1 : i32, i32, i32
  }
  func.func @transform_3(%arg0: i32, %arg1: i32) -> (i32, i32, i32) {
    %c0_i32 = arith.constant 0 : i32
    %c0_i32_0 = arith.constant 0 : i32
    %c0_i32_1 = arith.constant 0 : i32
    return %arg0, %c0_i32, %c0_i32_0 : i32, i32, i32
  }
}

module attributes {stable_mosaic.version = 11 : i64} {
  func.func @kernel(%arg0: i32, %arg1: memref<16x96xf32, #tpu.memory_space<vmem>>, %arg2: memref<16x96xf32, #tpu.memory_space<vmem>>, %arg3: memref<6x16xf32, #tpu.memory_space<vmem>>, %arg4: memref<480x180xf32, #tpu.memory_space<vmem>>, %arg5: memref<1x1x36xf32, #tpu.memory_space<vmem>>, %arg6: memref<1x1x96xf32, #tpu.memory_space<vmem>>, %arg7: memref<1x1x96xf32, #tpu.memory_space<vmem>>) attributes {dimension_semantics = [#tpu.dimension_semantics<parallel>], iteration_bounds = array<i64: 1>, scalar_prefetch = 0 : i64, scratch_operands = 0 : i64, tpu.core_type = #tpu.core_type<tc>, window_params = [{transform_indices = @transform_0, window_bounds = array<i64: 16, 96>}, {transform_indices = @transform_1, window_bounds = array<i64: 16, 96>}, {pipeline_mode = #tpu.pipeline_mode<synchronous>, transform_indices = @transform_2, window_bounds = array<i64: 6, 16>}, {pipeline_mode = #tpu.pipeline_mode<synchronous>, transform_indices = @transform_3, window_bounds = array<i64: 480, 180>}, {transform_indices = @transform_4, window_bounds = array<i64: 1, 1, 36>}, {transform_indices = @transform_5, window_bounds = array<i64: 1, 1, 96>}, {transform_indices = @transform_6, window_bounds = array<i64: 1, 1, 96>}]} {
    %c0 = arith.constant 0 : index
    %c0_0 = arith.constant 0 : index
    %0 = vector.load %arg1[%c0, %c0_0] : memref<16x96xf32, #tpu.memory_space<vmem>>, vector<16x96xf32>
    %cst = arith.constant 5.000000e-01 : f32
    %1 = vector.broadcast %cst : f32 to vector<16x96xf32>
    %2 = arith.mulf %0, %1 : vector<16x96xf32>
    %cst_1 = arith.constant 5.000000e-01 : f32
    %3 = vector.broadcast %cst_1 : f32 to vector<16x96xf32>
    %4 = arith.addf %2, %3 : vector<16x96xf32>
    %c0_2 = arith.constant 0 : index
    %c0_3 = arith.constant 0 : index
    %5 = vector.load %arg2[%c0_2, %c0_3] : memref<16x96xf32, #tpu.memory_space<vmem>>, vector<16x96xf32>
    %cst_4 = arith.constant 5.000000e-01 : f32
    %6 = vector.broadcast %cst_4 : f32 to vector<16x96xf32>
    %7 = arith.mulf %5, %6 : vector<16x96xf32>
    %cst_5 = arith.constant 5.000000e-01 : f32
    %8 = vector.broadcast %cst_5 : f32 to vector<16x96xf32>
    %9 = arith.addf %7, %8 : vector<16x96xf32>
    %10 = arith.subf %9, %4 : vector<16x96xf32>
    %11 = math.absf %10 : vector<16x96xf32>
    %cst_6 = arith.constant dense<0.000000e+00> : vector<96xf32>
    %12 = vector.multi_reduction <add>, %11, %cst_6 [0] : vector<16x96xf32> to vector<96xf32>
    %13 = vector.shape_cast %12 : vector<96xf32> to vector<1x96xf32>
    %c0_7 = arith.constant 0 : index
    %c0_8 = arith.constant 0 : index
    %c0_9 = arith.constant 0 : index
    %14 = vector.load %arg6[%c0_7, %c0_8, %c0_9] : memref<1x1x96xf32, #tpu.memory_space<vmem>>, vector<1x1x96xf32>
    %15 = vector.shape_cast %14 : vector<1x1x96xf32> to vector<1x96xf32>
    %16 = vector.shape_cast %13 : vector<1x96xf32> to vector<1x1x96xf32>
    tpu.vector_store %arg6[%c0_7, %c0_8, %c0_9], %16 {strides = array<i32>} : memref<1x1x96xf32, #tpu.memory_space<vmem>>, vector<1x1x96xf32>,
    %17 = arith.mulf %10, %10 : vector<16x96xf32>
    %cst_10 = arith.constant dense<0.000000e+00> : vector<96xf32>
    %18 = vector.multi_reduction <add>, %17, %cst_10 [0] : vector<16x96xf32> to vector<96xf32>
    %19 = vector.shape_cast %18 : vector<96xf32> to vector<1x96xf32>
    %c0_11 = arith.constant 0 : index
    %c0_12 = arith.constant 0 : index
    %c0_13 = arith.constant 0 : index
    %20 = vector.load %arg7[%c0_11, %c0_12, %c0_13] : memref<1x1x96xf32, #tpu.memory_space<vmem>>, vector<1x1x96xf32>
    %21 = vector.shape_cast %20 : vector<1x1x96xf32> to vector<1x96xf32>
    %22 = vector.shape_cast %19 : vector<1x96xf32> to vector<1x1x96xf32>
    tpu.vector_store %arg7[%c0_11, %c0_12, %c0_13], %22 {strides = array<i32>} : memref<1x1x96xf32, #tpu.memory_space<vmem>>, vector<1x1x96xf32>,
    %23 = arith.mulf %4, %4 : vector<16x96xf32>
    %24 = arith.mulf %9, %9 : vector<16x96xf32>
    %25 = arith.mulf %4, %9 : vector<16x96xf32>
    %26 = tpu.concatenate %4, %9, %23, %24, %25 in 1 : vector<16x96xf32>, vector<16x96xf32>, vector<16x96xf32>, vector<16x96xf32>, vector<16x96xf32> -> vector<16x480xf32>
    %c0_14 = arith.constant 0 : index
    %c0_15 = arith.constant 0 : index
    %27 = vector.load %arg3[%c0_14, %c0_15] : memref<6x16xf32, #tpu.memory_space<vmem>>, vector<6x16xf32>
    %cst_16 = arith.constant dense<0.000000e+00> : vector<6x480xf32>
    %28 = tpu.matmul %27, %26, %cst_16 {dimension_numbers = #tpu.dot_dimension_numbers<[1], [0], [0], [1], [0, 0, 1, 1], [], []>} : vector<6x16xf32>, vector<16x480xf32>, vector<6x480xf32> -> vector<6x480xf32>
    %c0_17 = arith.constant 0 : index
    %c0_18 = arith.constant 0 : index
    %29 = vector.load %arg4[%c0_17, %c0_18] : memref<480x180xf32, #tpu.memory_space<vmem>>, vector<480x180xf32>
    %cst_19 = arith.constant dense<0.000000e+00> : vector<6x180xf32>
    %30 = tpu.matmul %28, %29, %cst_19 {dimension_numbers = #tpu.dot_dimension_numbers<[1], [0], [0], [1], [0, 0, 1, 1], [], []>} : vector<6x480xf32>, vector<480x180xf32>, vector<6x180xf32> -> vector<6x180xf32>
    %31 = vector.extract_strided_slice %30 {offsets = [0, 0], sizes = [6, 36], strides = [1, 1]} : vector<6x180xf32> to vector<6x36xf32>
    %32 = vector.extract_strided_slice %30 {offsets = [0, 36], sizes = [6, 36], strides = [1, 1]} : vector<6x180xf32> to vector<6x36xf32>
    %33 = vector.extract_strided_slice %30 {offsets = [0, 72], sizes = [6, 36], strides = [1, 1]} : vector<6x180xf32> to vector<6x36xf32>
    %34 = vector.extract_strided_slice %30 {offsets = [0, 108], sizes = [6, 36], strides = [1, 1]} : vector<6x180xf32> to vector<6x36xf32>
    %35 = vector.extract_strided_slice %30 {offsets = [0, 144], sizes = [6, 36], strides = [1, 1]} : vector<6x180xf32> to vector<6x36xf32>
    %36 = arith.mulf %31, %31 : vector<6x36xf32>
    %37 = arith.mulf %32, %32 : vector<6x36xf32>
    %38 = arith.mulf %31, %32 : vector<6x36xf32>
    %39 = arith.subf %35, %38 : vector<6x36xf32>
    %cst_20 = arith.constant 2.000000e+00 : f32
    %40 = vector.broadcast %cst_20 : f32 to vector<6x36xf32>
    %41 = arith.mulf %40, %39 : vector<6x36xf32>
    %cst_21 = arith.constant 8.99999984E-4 : f32
    %42 = vector.broadcast %cst_21 : f32 to vector<6x36xf32>
    %43 = arith.addf %41, %42 : vector<6x36xf32>
    %44 = arith.subf %33, %36 : vector<6x36xf32>
    %45 = arith.subf %34, %37 : vector<6x36xf32>
    %46 = arith.addf %44, %45 : vector<6x36xf32>
    %cst_22 = arith.constant 8.99999984E-4 : f32
    %47 = vector.broadcast %cst_22 : f32 to vector<6x36xf32>
    %48 = arith.addf %46, %47 : vector<6x36xf32>
    %49 = arith.divf %43, %48 : vector<6x36xf32>
    %cst_23 = arith.constant 2.000000e+00 : f32
    %50 = vector.broadcast %cst_23 : f32 to vector<6x36xf32>
    %51 = arith.mulf %50, %38 : vector<6x36xf32>
    %cst_24 = arith.constant 9.99999974E-5 : f32
    %52 = vector.broadcast %cst_24 : f32 to vector<6x36xf32>
    %53 = arith.addf %51, %52 : vector<6x36xf32>
    %54 = arith.addf %36, %37 : vector<6x36xf32>
    %cst_25 = arith.constant 9.99999974E-5 : f32
    %55 = vector.broadcast %cst_25 : f32 to vector<6x36xf32>
    %56 = arith.addf %54, %55 : vector<6x36xf32>
    %57 = arith.divf %53, %56 : vector<6x36xf32>
    %58 = arith.mulf %57, %49 : vector<6x36xf32>
    %cst_26 = arith.constant dense<0.000000e+00> : vector<36xf32>
    %59 = vector.multi_reduction <add>, %58, %cst_26 [0] : vector<6x36xf32> to vector<36xf32>
    %60 = vector.shape_cast %59 : vector<36xf32> to vector<1x36xf32>
    %c0_27 = arith.constant 0 : index
    %c0_28 = arith.constant 0 : index
    %c0_29 = arith.constant 0 : index
    %61 = vector.load %arg5[%c0_27, %c0_28, %c0_29] : memref<1x1x36xf32, #tpu.memory_space<vmem>>, vector<1x1x36xf32>
    %62 = vector.shape_cast %61 : vector<1x1x36xf32> to vector<1x36xf32>
    %63 = vector.shape_cast %60 : vector<1x36xf32> to vector<1x1x36xf32>
    tpu.vector_store %arg5[%c0_27, %c0_28, %c0_29], %63 {strides = array<i32>} : memref<1x1x36xf32, #tpu.memory_space<vmem>>, vector<1x1x36xf32>,
    return
  }
  func.func @transform_0(%arg0: i32) -> (i32, i32) {
    %c0_i32 = arith.constant 0 : i32
    %c0_i32_0 = arith.constant 0 : i32
    return %c0_i32, %arg0 : i32, i32
  }
  func.func @transform_1(%arg0: i32) -> (i32, i32) {
    %c0_i32 = arith.constant 0 : i32
    %c0_i32_0 = arith.constant 0 : i32
    return %c0_i32, %arg0 : i32, i32
  }
  func.func @transform_2(%arg0: i32) -> (i32, i32) {
    %c0_i32 = arith.constant 0 : i32
    %c0_i32_0 = arith.constant 0 : i32
    %c0_i32_1 = arith.constant 0 : i32
    return %c0_i32, %c0_i32_0 : i32, i32
  }
  func.func @transform_3(%arg0: i32) -> (i32, i32) {
    %c0_i32 = arith.constant 0 : i32
    %c0_i32_0 = arith.constant 0 : i32
    %c0_i32_1 = arith.constant 0 : i32
    return %c0_i32, %c0_i32_0 : i32, i32
  }
  func.func @transform_4(%arg0: i32) -> (i32, i32, i32) {
    %c0_i32 = arith.constant 0 : i32
    %c0_i32_0 = arith.constant 0 : i32
    %c0_i32_1 = arith.constant 0 : i32
    return %arg0, %c0_i32, %c0_i32_0 : i32, i32, i32
  }
  func.func @transform_5(%arg0: i32) -> (i32, i32, i32) {
    %c0_i32 = arith.constant 0 : i32
    %c0_i32_0 = arith.constant 0 : i32
    %c0_i32_1 = arith.constant 0 : i32
    return %arg0, %c0_i32, %c0_i32_0 : i32, i32, i32
  }
  func.func @transform_6(%arg0: i32) -> (i32, i32, i32) {
    %c0_i32 = arith.constant 0 : i32
    %c0_i32_0 = arith.constant 0 : i32
    %c0_i32_1 = arith.constant 0 : i32
    return %arg0, %c0_i32, %c0_i32_0 : i32, i32, i32
  }
}

</mosaic_0001>

<llo_original>
// kernel: _image_metrics_impl.8
$region0: #{_image_metrics_impl.8}
  #allocation0 [shape = 'u32[]', space=smem, size = 0x4, offset = 0x4, fixed_abs, tag = 'smem constant byte address 0x4 - core index']
  #allocation1 [shape = 'u32[144,128]{1,0:T(1,128)}', space=vmem, size = 0x12000, scoped, tag = 'internal scratch']
  %s0 = inlined_call_operand.vmem [shape: bf16[1024,27], index: 0, kind: input, shape index: {}]
  %s1 = inlined_call_operand.vmem [shape: bf16[27,128], index: 1, kind: input, shape index: {}]
  %s2 = inlined_call_operand.vmem [shape: f32[1,128], index: 2, kind: input, shape index: {}]
  %s3 = inlined_call_operand.vmem [shape: bf16[1024,128], index: 3, kind: output, shape index: {}]
  %s4 = sld [smem:[#allocation0]]
  $region45: #{_image_metrics_impl.8} parent=0
    _
  %s6 = ssub.s32 1, %s4
  %s7 = scalar_select 0, %s6, %s4
  loop: start=0, step=1, limit=4
  $region2: #{_image_metrics_impl.8} parent=0 // loop_pre_header
    _
  $region3: #{_image_metrics_impl.8} parent=0 // loop_header
    %s9 = sphi 0, %s13
    %p10 = scmp.ge.s32.totalorder %s9, 4
    %s19 = sphi 0, %s21
    %s22 = sphi 0, %s19
    %s23 = sphi 0, %s22
    %s39 = sphi 0, %s23
    %s43 = sphi 0, %s43
    %s45 = sphi 0, %s43
    %s46 = sphi 0, %s45
    %s60 = sphi 0, %s46
    %s64 = sphi 0, %s64
    %s66 = sphi 0, %s64
    %s67 = sphi 0, %s66
    %s81 = sphi 0, %s67
    %s87 = sphi 0, %s89
    %s90 = sphi 0, %s87
    %s91 = sphi 0, %s90
    %s107 = sphi 0, %s91
  $region4: #{_image_metrics_impl.8} parent=0 // loop_header_branch
    %12 = sbr.rel (%p10) target = $region8
  $region5: #{_image_metrics_impl.8} parent=0 // loop_body
    %s14 = ssub.s32 %s9, 1
    %s15 = ssub.s32 %s9, 2
    %s16 = sadd.s32 %s9, 1
    %s17 = ssub.s32 %s9, %s16
    %p18 = scmp.eq.s32.totalorder %s17, 0
    %s20 = sadd.s32 %s19, 1
    %s21 = scalar_select %p18, %s19, %s20
    %p24 = pneg %p18
    %p25 = scmp.eq.s32.totalorder %s9, 1
    %p26 = por %p24, %p25
    %p27 = scmp.ne.s32.totalorder %s19, %s22
    %p28 = scmp.eq.s32.totalorder %s9, 0
    %p29 = por %p27, %p28
    %p30 = scmp.ne.s32.totalorder %s19, %s22
    %p31 = scmp.eq.s32.totalorder %s14, 1
    %p32 = por %p30, %p31
    %p33 = scmp.ne.s32.totalorder %s22, %s23
    %p34 = scmp.eq.s32.totalorder %s14, 0
    %p35 = por %p33, %p34
    %p36 = scmp.ne.s32.totalorder %s22, %s23
    %p37 = scmp.eq.s32.totalorder %s15, 1
    %p38 = por %p36, %p37
    %p40 = scmp.ne.s32.totalorder %s23, %s39
    %p41 = scmp.eq.s32.totalorder %s15, 0
    %p42 = por %p40, %p41
    %s44 = sadd.s32 %s43, 1
    %p47 = scmp.eq.s32.totalorder %s9, 1
    %p48 = scmp.ne.s32.totalorder %s43, %s45
    %p49 = scmp.eq.s32.totalorder %s9, 0
    %p50 = por %p48, %p49
    %p51 = scmp.ne.s32.totalorder %s43, %s45
    %p52 = scmp.eq.s32.totalorder %s14, 1
    %p53 = por %p51, %p52
    %p54 = scmp.ne.s32.totalorder %s45, %s46
    %p55 = scmp.eq.s32.totalorder %s14, 0
    %p56 = por %p54, %p55
    %p57 = scmp.ne.s32.totalorder %s45, %s46
    %p58 = scmp.eq.s32.totalorder %s15, 1
    %p59 = por %p57, %p58
    %p61 = scmp.ne.s32.totalorder %s46, %s60
    %p62 = scmp.eq.s32.totalorder %s15, 0
    %p63 = por %p61, %p62
    %s65 = sadd.s32 %s64, 1
    %p68 = scmp.eq.s32.totalorder %s9, 1
    %p69 = scmp.ne.s32.totalorder %s64, %s66
    %p70 = scmp.eq.s32.totalorder %s9, 0
    %p71 = por %p69, %p70
    %p72 = scmp.ne.s32.totalorder %s64, %s66
    %p73 = scmp.eq.s32.totalorder %s14, 1
    %p74 = por %p72, %p73
    %p75 = scmp.ne.s32.totalorder %s66, %s67
    %p76 = scmp.eq.s32.totalorder %s14, 0
    %p77 = por %p75, %p76
    %p78 = scmp.ne.s32.totalorder %s66, %s67
    %p79 = scmp.eq.s32.totalorder %s15, 1
    %p80 = por %p78, %p79
    %p82 = scmp.ne.s32.totalorder %s67, %s81
    %p83 = scmp.eq.s32.totalorder %s15, 0
    %p84 = por %p82, %p83
    %s85 = ssub.s32 %s9, %s16
    %p86 = scmp.eq.s32.totalorder %s85, 0
    %s88 = sadd.s32 %s87, 1
    %s89 = scalar_select %p86, %s87, %s88
    %p92 = pneg %p86
    %p93 = scmp.eq.s32.totalorder %s9, 1
    %p94 = por %p92, %p93
    %p95 = scmp.ne.s32.totalorder %s87, %s90
    %p96 = scmp.eq.s32.totalorder %s9, 0
    %p97 = por %p95, %p96
    %p98 = scmp.ne.s32.totalorder %s87, %s90
    %p99 = scmp.eq.s32.totalorder %s14, 1
    %p100 = por %p98, %p99
    %p101 = scmp.ne.s32.totalorder %s90, %s91
    %p102 = scmp.eq.s32.totalorder %s14, 0
    %p103 = por %p101, %p102
    %p104 = scmp.ne.s32.totalorder %s90, %s91
    %p105 = scmp.eq.s32.totalorder %s15, 1
    %p106 = por %p104, %p105
    %p108 = scmp.ne.s32.totalorder %s91, %s107
    %p109 = scmp.eq.s32.totalorder %s15, 0
    %p110 = por %p108, %p109
    %p111 = scmp.le.s32.totalorder 1, %s9
    %p112 = scmp.lt.s32.totalorder %s9, 3
    %p113 = pnand %p111, %p112
    %p114 = pneg %p113
    // Predicated region
    $region9: #{_image_metrics_impl.8} parent=5 // pred_check
      _
    $region10: #{_image_metrics_impl.8} parent=5 // pred_check_branch
      %116 = sbr.rel (%p113) target = $region12
    $region11: #{_image_metrics_impl.8} parent=5 // pred_region
      %s117 = ssub.s32 %s9, 1
      // Predicated region
      $region13: #{_image_metrics_impl.8} parent=11 // pred_check
        %p118 = pneg %p56
      $region14: #{_image_metrics_impl.8} parent=11 // pred_check_branch
        %120 = sbr.rel (%p118) target = $region16
      $region15: #{_image_metrics_impl.8} parent=11 // pred_region
        _
      $region16: #{_image_metrics_impl.8} parent=11 // pred_fallthru
        _
      // Predicated region
      $region17: #{_image_metrics_impl.8} parent=11 // pred_check
        %p121 = pneg %p77
      $region18: #{_image_metrics_impl.8} parent=11 // pred_check_branch
        %123 = sbr.rel (%p121) target = $region20
      $region19: #{_image_metrics_impl.8} parent=11 // pred_region
        _
      $region20: #{_image_metrics_impl.8} parent=11 // pred_fallthru
        _
    $region12: #{_image_metrics_impl.8} parent=5 // pred_fallthru
      _
    %p124 = scmp.lt.s32.totalorder %s9, 2
    // Predicated region
    $region21: #{_image_metrics_impl.8} parent=5 // pred_check
      %p125 = pneg %p124
    $region22: #{_image_metrics_impl.8} parent=5 // pred_check_branch
      %127 = sbr.rel (%p125) target = $region24
    $region23: #{_image_metrics_impl.8} parent=5 // pred_region
      // Predicated region
      $region25: #{_image_metrics_impl.8} parent=23 // pred_check
        %p128 = pneg %p29
      $region26: #{_image_metrics_impl.8} parent=23 // pred_check_branch
        %130 = sbr.rel (%p128) target = $region28
      $region27: #{_image_metrics_impl.8} parent=23 // pred_region
        %s131 = smul.u32 64, %s9
        %p132 = scmp.lt.s32.totalorder %s131, 127
        %s133 = scalar_select %p132, %s131, 127
        %s134 = smul.addr %s133, 4
        %s135 = scalar_lea.vmem %s0, %s134
        %s136 = smul.u32 64, %s9
      $region28: #{_image_metrics_impl.8} parent=23 // pred_fallthru
        _
    $region24: #{_image_metrics_impl.8} parent=5 // pred_fallthru
      _
    %p137 = scmp.le.s32.totalorder 1, %s9
    %p138 = scmp.lt.s32.totalorder %s9, 3
    %p139 = pnand %p137, %p138
    %p140 = pneg %p139
    // Predicated region
    $region29: #{_image_metrics_impl.8} parent=5 // pred_check
      _
    $region30: #{_image_metrics_impl.8} parent=5 // pred_check_branch
      %142 = sbr.rel (%p139) target = $region32
    $region31: #{_image_metrics_impl.8} parent=5 // pred_region
      %s143 = ssub.s32 %s9, 1
      %s144 = smul.u32 64, %s14
      %p145 = scmp.lt.s32.totalorder %s144, 127
      %s146 = scalar_select %p145, %s144, 127
      %s147 = smul.addr %s146, 4
      %s148 = scalar_lea.vmem %s0, %s147
      %p149 = pneg %p35
      %p150 = pneg %p32
      %p151 = pneg %p56
      %p152 = pneg %p53
      %p153 = pneg %p77
      %p154 = pneg %p74
      %p155 = pneg %p103
      %p156 = pneg %p100
      %s157 = smul.u32 64, %s14
      %p158 = scmp.lt.s32.totalorder %s157, 127
      %s159 = scalar_select %p158, %s157, 127
      %s160 = smul.addr %s159, 4
      %s161 = scalar_lea.vmem %s3, %s160
      %s162 = smul.u32 64, %s14
      %p163 = scmp.lt.s32.totalorder %s162, 127
      %s164 = scalar_select %p163, %s162, 127
      %s165 = smul.addr %s164, 4
      %s166 = scalar_lea.vmem %s0, %s165
      %s167 = smul.u32 64, %s14
      %s168 = smul.u32 64, %s14
      %p169 = scmp.lt.s32.totalorder %s168, 127
      %s170 = scalar_select %p169, %s168, 127
      %s171 = smul.addr %s170, 4
      %s172 = scalar_lea.vmem %s3, %s171
      %s173 = smul.u32 64, %s14
      %v175 = vld [vmem:[%s166] sm:$0xf]
      %v176 = vld [vmem:[%s166 + $0x4] sm:$0xf]
      %v177 = vld [vmem:[%s166 + $0x8] sm:$0xf]
      %v178 = vld [vmem:[%s166 + $0xc] sm:$0xf]
      %v179 = vld [vmem:[%s166 + $0x10] sm:$0xf]
      %v180 = vld [vmem:[%s166 + $0x14] sm:$0xf]
      %v181 = vld [vmem:[%s166 + $0x18] sm:$0xf]
      %v182 = vld [vmem:[%s166 + $0x1c] sm:$0xf]
      %v183 = vld [vmem:[%s166 + $0x20] sm:$0xf]
      %v184 = vld [vmem:[%s166 + $0x24] sm:$0xf]
      %v185 = vld [vmem:[%s166 + $0x28] sm:$0xf]
      %v186 = vld [vmem:[%s166 + $0x2c] sm:$0xf]
      %v187 = vld [vmem:[%s166 + $0x30] sm:$0xf]
      %v188 = vld [vmem:[%s166 + $0x34] sm:$0xf]
      %v189 = vld [vmem:[%s166 + $0x38] sm:$0xf]
      %v190 = vld [vmem:[%s166 + $0x3c] sm:$0xf]
      %v191 = vld [vmem:[%s166 + $0x40] sm:$0xf]
      %v192 = vld [vmem:[%s166 + $0x44] sm:$0xf]
      %v193 = vld [vmem:[%s166 + $0x48] sm:$0xf]
      %v194 = vld [vmem:[%s166 + $0x4c] sm:$0xf]
      %v195 = vld [vmem:[%s166 + $0x50] sm:$0xf]
      %v196 = vld [vmem:[%s166 + $0x54] sm:$0xf]
      %v197 = vld [vmem:[%s166 + $0x58] sm:$0xf]
      %v198 = vld [vmem:[%s166 + $0x5c] sm:$0xf]
      %v199 = vld [vmem:[%s166 + $0x60] sm:$0xf]
      %v200 = vld [vmem:[%s166 + $0x64] sm:$0xf]
      %v201 = vld [vmem:[%s166 + $0x68] sm:$0xf]
      %v202 = vld [vmem:[%s166 + $0x6c] sm:$0xf]
      %v203 = vld [vmem:[%s166 + $0x70] sm:$0xf]
      %v204 = vld [vmem:[%s166 + $0x74] sm:$0xf]
      %v205 = vld [vmem:[%s166 + $0x78] sm:$0xf]
      %v206 = vld [vmem:[%s166 + $0x7c] sm:$0xf]
      %v207 = vld [vmem:[%s166 + $0x80] sm:$0xf]
      %v208 = vld [vmem:[%s166 + $0x84] sm:$0xf]
      %v209 = vld [vmem:[%s166 + $0x88] sm:$0xf]
      %v210 = vld [vmem:[%s166 + $0x8c] sm:$0xf]
      %v211 = vld [vmem:[%s166 + $0x90] sm:$0xf]
      %v212 = vld [vmem:[%s166 + $0x94] sm:$0xf]
      %v213 = vld [vmem:[%s166 + $0x98] sm:$0xf]
      %v214 = vld [vmem:[%s166 + $0x9c] sm:$0xf]
      %v215 = vld [vmem:[%s166 + $0xa0] sm:$0xf]
      %v216 = vld [vmem:[%s166 + $0xa4] sm:$0xf]
      %v217 = vld [vmem:[%s166 + $0xa8] sm:$0xf]
      %v218 = vld [vmem:[%s166 + $0xac] sm:$0xf]
      %v219 = vld [vmem:[%s166 + $0xb0] sm:$0xf]
      %v220 = vld [vmem:[%s166 + $0xb4] sm:$0xf]
      %v221 = vld [vmem:[%s166 + $0xb8] sm:$0xf]
      %v222 = vld [vmem:[%s166 + $0xbc] sm:$0xf]
      %v223 = vld [vmem:[%s166 + $0xc0] sm:$0xf]
      %v224 = vld [vmem:[%s166 + $0xc4] sm:$0xf]
      %v225 = vld [vmem:[%s166 + $0xc8] sm:$0xf]
      %v226 = vld [vmem:[%s166 + $0xcc] sm:$0xf]
      %v227 = vld [vmem:[%s166 + $0xd0] sm:$0xf]
      %v228 = vld [vmem:[%s166 + $0xd4] sm:$0xf]
      %v229 = vld [vmem:[%s166 + $0xd8] sm:$0xf]
      %v230 = vld [vmem:[%s166 + $0xdc] sm:$0xf]
      %v231 = vld [vmem:[%s166 + $0xe0] sm:$0xf]
      %v232 = vld [vmem:[%s166 + $0xe4] sm:$0xf]
      %v233 = vld [vmem:[%s166 + $0xe8] sm:$0xf]
      %v234 = vld [vmem:[%s166 + $0xec] sm:$0xf]
      %v235 = vld [vmem:[%s166 + $0xf0] sm:$0xf]
      %v236 = vld [vmem:[%s166 + $0xf4] sm:$0xf]
      %v237 = vld [vmem:[%s166 + $0xf8] sm:$0xf]
      %v238 = vld [vmem:[%s166 + $0xfc] sm:$0xf]
      %v239 = vld [vmem:[%s1] sm:$0xf]
      %v240 = vld [vmem:[%s1 + $0x4] sm:$0xf]
      %v241 = vld [vmem:[%s1 + $0x8] sm:$0xf]
      %v242 = vld [vmem:[%s1 + $0xc] sm:$0x3]
      %v243 = vld [vmem:[%s2] sm:$0x1]
      %v245 = vlaneseq
      %v246 = vshrl.u32 %v245, 7
      %v247 = vsub.s32 0, %v246
      %v248 = vrot.slane %v243, %v247
      %v314 = vunpack.c.l.b16 %v175
      %v315 = vunpack.c.l.b16 %v176
      %v316 = vunpack.c.l.b16 %v177
      %v317 = vunpack.c.l.b16 %v178
      %v318 = vunpack.c.l.b16 %v179
      %v319 = vunpack.c.l.b16 %v180
      %v320 = vunpack.c.l.b16 %v181
      %v321 = vunpack.c.l.b16 %v182
      %v322 = vunpack.c.l.b16 %v183
      %v323 = vunpack.c.l.b16 %v184
      %v324 = vunpack.c.l.b16 %v185
      %v325 = vunpack.c.l.b16 %v186
      %v326 = vunpack.c.l.b16 %v187
      %v327 = vunpack.c.l.b16 %v188
      %v328 = vunpack.c.l.b16 %v189
      %v329 = vunpack.c.l.b16 %v190
      %v330 = vunpack.c.l.b16 %v191
      %v331 = vunpack.c.l.b16 %v192
      %v332 = vunpack.c.l.b16 %v193
      %v333 = vunpack.c.l.b16 %v194
      %v334 = vunpack.c.l.b16 %v195
      %v335 = vunpack.c.l.b16 %v196
      %v336 = vunpack.c.l.b16 %v197
      %v337 = vunpack.c.l.b16 %v198
      %v338 = vunpack.c.l.b16 %v199
      %v339 = vunpack.c.l.b16 %v200
      %v340 = vunpack.c.l.b16 %v201
      %v341 = vunpack.c.l.b16 %v202
      %v342 = vunpack.c.l.b16 %v203
      %v343 = vunpack.c.l.b16 %v204
      %v344 = vunpack.c.l.b16 %v205
      %v345 = vunpack.c.l.b16 %v206
      %v346 = vunpack.c.l.b16 %v207
      %v347 = vunpack.c.l.b16 %v208
      %v348 = vunpack.c.l.b16 %v209
      %v349 = vunpack.c.l.b16 %v210
      %v350 = vunpack.c.l.b16 %v211
      %v351 = vunpack.c.l.b16 %v212
      %v352 = vunpack.c.l.b16 %v213
      %v353 = vunpack.c.l.b16 %v214
      %v354 = vunpack.c.l.b16 %v215
      %v355 = vunpack.c.l.b16 %v216
      %v356 = vunpack.c.l.b16 %v217
      %v357 = vunpack.c.l.b16 %v218
      %v358 = vunpack.c.l.b16 %v219
      %v359 = vunpack.c.l.b16 %v220
      %v360 = vunpack.c.l.b16 %v221
      %v361 = vunpack.c.l.b16 %v222
      %v362 = vunpack.c.l.b16 %v223
      %v363 = vunpack.c.l.b16 %v224
      %v364 = vunpack.c.l.b16 %v225
      %v365 = vunpack.c.l.b16 %v226
      %v366 = vunpack.c.l.b16 %v227
      %v367 = vunpack.c.l.b16 %v228
      %v368 = vunpack.c.l.b16 %v229
      %v369 = vunpack.c.l.b16 %v230
      %v370 = vunpack.c.l.b16 %v231
      %v371 = vunpack.c.l.b16 %v232
      %v372 = vunpack.c.l.b16 %v233
      %v373 = vunpack.c.l.b16 %v234
      %v374 = vunpack.c.l.b16 %v235
      %v375 = vunpack.c.l.b16 %v236
      %v376 = vunpack.c.l.b16 %v237
      %v377 = vunpack.c.l.b16 %v238
      %v378 = vpack.c.b16 %v315, %v314
      %v379 = vpack.c.b16 %v317, %v316
      %v380 = vpack.c.b16 %v319, %v318
      %v381 = vpack.c.b16 %v321, %v320
      %v382 = vpack.c.b16 %v323, %v322
      %v383 = vpack.c.b16 %v325, %v324
      %v384 = vpack.c.b16 %v327, %v326
      %v385 = vpack.c.b16 %v329, %v328
      %v386 = vpack.c.b16 %v331, %v330
      %v387 = vpack.c.b16 %v333, %v332
      %v388 = vpack.c.b16 %v335, %v334
      %v389 = vpack.c.b16 %v337, %v336
      %v390 = vpack.c.b16 %v339, %v338
      %v391 = vpack.c.b16 %v341, %v340
      %v392 = vpack.c.b16 %v343, %v342
      %v393 = vpack.c.b16 %v345, %v344
      %v394 = vpack.c.b16 %v347, %v346
      %v395 = vpack.c.b16 %v349, %v348
      %v396 = vpack.c.b16 %v351, %v350
      %v397 = vpack.c.b16 %v353, %v352
      %v398 = vpack.c.b16 %v355, %v354
      %v399 = vpack.c.b16 %v357, %v356
      %v400 = vpack.c.b16 %v359, %v358
      %v401 = vpack.c.b16 %v361, %v360
      %v402 = vpack.c.b16 %v363, %v362
      %v403 = vpack.c.b16 %v365, %v364
      %v404 = vpack.c.b16 %v367, %v366
      %v405 = vpack.c.b16 %v369, %v368
      %v406 = vpack.c.b16 %v371, %v370
      %v407 = vpack.c.b16 %v373, %v372
      %v408 = vpack.c.b16 %v375, %v374
      %v409 = vpack.c.b16 %v377, %v376
      %v414 = vunpack.c.l.b16 %v239
      %v415 = vunpack.c.l.b16 %v240
      %v416 = vunpack.c.l.b16 %v241
      %v417 = vunpack.c.l.b16 %v242
      %v418 = vpack.c.b16 %v415, %v414
      %v419 = vpack.c.b16 %v417, %v416
      %vm421 = vcmask 220160
      %v423 = vsel %vm421, %v378, 0
      %v426 = vsel %vm421, %v379, 0
      %v429 = vsel %vm421, %v380, 0
      %v432 = vsel %vm421, %v381, 0
      %v435 = vsel %vm421, %v382, 0
      %v438 = vsel %vm421, %v383, 0
      %v441 = vsel %vm421, %v384, 0
      %v444 = vsel %vm421, %v385, 0
      %v447 = vsel %vm421, %v386, 0
      %v450 = vsel %vm421, %v387, 0
      %v453 = vsel %vm421, %v388, 0
      %v456 = vsel %vm421, %v389, 0
      %v459 = vsel %vm421, %v390, 0
      %v462 = vsel %vm421, %v391, 0
      %v465 = vsel %vm421, %v392, 0
      %v468 = vsel %vm421, %v393, 0
      %v471 = vsel %vm421, %v394, 0
      %v474 = vsel %vm421, %v395, 0
      %v477 = vsel %vm421, %v396, 0
      %v480 = vsel %vm421, %v397, 0
      %v483 = vsel %vm421, %v398, 0
      %v486 = vsel %vm421, %v399, 0
      %v489 = vsel %vm421, %v400, 0
      %v492 = vsel %vm421, %v401, 0
      %v495 = vsel %vm421, %v402, 0
      %v498 = vsel %vm421, %v403, 0
      %v501 = vsel %vm421, %v404, 0
      %v504 = vsel %vm421, %v405, 0
      %v507 = vsel %vm421, %v406, 0
      %v510 = vsel %vm421, %v407, 0
      %v513 = vsel %vm421, %v408, 0
      %v516 = vsel %vm421, %v409, 0
      %vm518 = vcmask 1044480
      %vm519 = vcmask 1045504
      %v520 = vsel %vm518, 4294967295, 65535
      %v521 = vsel %vm519, %v520, 0
      %v523 = vand.u32 %v419, %v521
      %525 = vmatprep.subr.bf16.mxu0 0
      %526 = vmatpush1.bf16.msra.mxu0 0
      %527 = vmatprep.subr.bf16.mxu0 0
      %528 = vmatpush1.bf16.msra.mxu0 0
      %529 = vmatprep.subr.bf16.mxu0 0
      %530 = vmatpush1.bf16.msra.mxu0 0
      %531 = vmatprep.subr.bf16.mxu0 0
      %532 = vmatpush1.bf16.msra.mxu0 0
      %533 = vmatprep.subr.bf16.mxu0 0
      %534 = vmatpush1.bf16.msra.mxu0 0
      %535 = vmatprep.subr.bf16.mxu0 0
      %536 = vmatpush1.bf16.msra.mxu0 0
      %537 = vmatprep.subr.bf16.mxu0 0
      %538 = vmatpush1.bf16.msra.mxu0 %v523
      %539 = vmatprep.subr.bf16.mxu0 0
      %540 = vmatpush1.bf16.msra.mxu0 %v418
      %541 = vmatprep.subr.bf16.mxu0 0
      %542 = vmatpush2.bf16.msra.mxu0 0
      %543 = vmatprep.subr.bf16.mxu0 0
      %544 = vmatpush2.bf16.msra.mxu0 0
      %545 = vmatprep.subr.bf16.mxu0 0
      %546 = vmatpush2.bf16.msra.mxu0 0
      %547 = vmatprep.subr.bf16.mxu0 0
      %548 = vmatpush2.bf16.msra.mxu0 0
      %549 = vmatprep.subr.bf16.mxu0 0
      %550 = vmatpush2.bf16.msra.mxu0 0
      %551 = vmatprep.subr.bf16.mxu0 0
      %552 = vmatpush2.bf16.msra.mxu0 0
      %553 = vmatprep.subr.bf16.mxu0 0
      %554 = vmatpush2.bf16.msra.mxu0 0
      %555 = vmatprep.subr.bf16.mxu0 0
      %556 = vmatpush2.bf16.msra.mxu0 0
      %557 = vmatprep.mubr.bf16.mxu0 0
      %558 = vmatmul.mubr.bf16.gmra.mxu0 %v423
      %v559 = vpop.f32.mrf.mxu0
      %v560 = vadd.f32 %v248, %v559
      %v561 = vpop.f32.mrf.mxu0
      %v562 = vpop.f32.mrf.mxu0
      %v563 = vadd.f32 %v248, %v562
      %v564 = vpop.f32.mrf.mxu0
      %565 = vmatprep.mubr.bf16.mxu0 0
      %566 = vmatmul.mubr.bf16.gmra.mxu0 %v426
      %v567 = vpop.f32.mrf.mxu0
      %v568 = vadd.f32 %v248, %v567
      %v569 = vpop.f32.mrf.mxu0
      %v570 = vpop.f32.mrf.mxu0
      %v571 = vadd.f32 %v248, %v570
      %v572 = vpop.f32.mrf.mxu0
      %573 = vmatprep.mubr.bf16.mxu0 0
      %574 = vmatmul.mubr.bf16.gmra.mxu0 %v429
      %v575 = vpop.f32.mrf.mxu0
      %v576 = vadd.f32 %v248, %v575
      %v577 = vpop.f32.mrf.mxu0
      %v578 = vpop.f32.mrf.mxu0
      %v579 = vadd.f32 %v248, %v578
      %v580 = vpop.f32.mrf.mxu0
      %581 = vmatprep.mubr.bf16.mxu0 0
      %582 = vmatmul.mubr.bf16.gmra.mxu0 %v432
      %v583 = vpop.f32.mrf.mxu0
      %v584 = vadd.f32 %v248, %v583
      %v585 = vpop.f32.mrf.mxu0
      %v586 = vpop.f32.mrf.mxu0
      %v587 = vadd.f32 %v248, %v586
      %v588 = vpop.f32.mrf.mxu0
      %589 = vmatprep.mubr.bf16.mxu0 0
      %590 = vmatmul.mubr.bf16.gmra.mxu0 %v435
      %v591 = vpop.f32.mrf.mxu0
      %v592 = vadd.f32 %v248, %v591
      %v593 = vpop.f32.mrf.mxu0
      %v594 = vpop.f32.mrf.mxu0
      %v595 = vadd.f32 %v248, %v594
      %v596 = vpop.f32.mrf.mxu0
      %597 = vmatprep.mubr.bf16.mxu0 0
      %598 = vmatmul.mubr.bf16.gmra.mxu0 %v438
      %v599 = vpop.f32.mrf.mxu0
      %v600 = vadd.f32 %v248, %v599
      %v601 = vpop.f32.mrf.mxu0
      %v602 = vpop.f32.mrf.mxu0
      %v603 = vadd.f32 %v248, %v602
      %v604 = vpop.f32.mrf.mxu0
      %605 = vmatprep.mubr.bf16.mxu0 0
      %606 = vmatmul.mubr.bf16.gmra.mxu0 %v441
      %v607 = vpop.f32.mrf.mxu0
      %v608 = vadd.f32 %v248, %v607
      %v609 = vpop.f32.mrf.mxu0
      %v610 = vpop.f32.mrf.mxu0
      %v611 = vadd.f32 %v248, %v610
      %v612 = vpop.f32.mrf.mxu0
      %613 = vmatprep.mubr.bf16.mxu0 0
      %614 = vmatmul.mubr.bf16.gmra.mxu0 %v444
      %v615 = vpop.f32.mrf.mxu0
      %v616 = vadd.f32 %v248, %v615
      %v617 = vpop.f32.mrf.mxu0
      %v618 = vpop.f32.mrf.mxu0
      %v619 = vadd.f32 %v248, %v618
      %v620 = vpop.f32.mrf.mxu0
      %621 = vmatprep.mubr.bf16.mxu0 0
      %622 = vmatmul.mubr.bf16.gmra.mxu0 %v447
      %v623 = vpop.f32.mrf.mxu0
      %v624 = vadd.f32 %v248, %v623
      %v625 = vpop.f32.mrf.mxu0
      %v626 = vpop.f32.mrf.mxu0
      %v627 = vadd.f32 %v248, %v626
      %v628 = vpop.f32.mrf.mxu0
      %629 = vmatprep.mubr.bf16.mxu0 0
      %630 = vmatmul.mubr.bf16.gmra.mxu0 %v450
      %v631 = vpop.f32.mrf.mxu0
      %v632 = vadd.f32 %v248, %v631
      %v633 = vpop.f32.mrf.mxu0
      %v634 = vpop.f32.mrf.mxu0
      %v635 = vadd.f32 %v248, %v634
      %v636 = vpop.f32.mrf.mxu0
      %637 = vmatprep.mubr.bf16.mxu0 0
      %638 = vmatmul.mubr.bf16.gmra.mxu0 %v453
      %v639 = vpop.f32.mrf.mxu0
      %v640 = vadd.f32 %v248, %v639
      %v641 = vpop.f32.mrf.mxu0
      %v642 = vpop.f32.mrf.mxu0
      %v643 = vadd.f32 %v248, %v642
      %v644 = vpop.f32.mrf.mxu0
      %645 = vmatprep.mubr.bf16.mxu0 0
      %646 = vmatmul.mubr.bf16.gmra.mxu0 %v456
      %v647 = vpop.f32.mrf.mxu0
      %v648 = vadd.f32 %v248, %v647
      %v649 = vpop.f32.mrf.mxu0
      %v650 = vpop.f32.mrf.mxu0
      %v651 = vadd.f32 %v248, %v650
      %v652 = vpop.f32.mrf.mxu0
      %653 = vmatprep.mubr.bf16.mxu0 0
      %654 = vmatmul.mubr.bf16.gmra.mxu0 %v459
      %v655 = vpop.f32.mrf.mxu0
      %v656 = vadd.f32 %v248, %v655
      %v657 = vpop.f32.mrf.mxu0
      %v658 = vpop.f32.mrf.mxu0
      %v659 = vadd.f32 %v248, %v658
      %v660 = vpop.f32.mrf.mxu0
      %661 = vmatprep.mubr.bf16.mxu0 0
      %662 = vmatmul.mubr.bf16.gmra.mxu0 %v462
      %v663 = vpop.f32.mrf.mxu0
      %v664 = vadd.f32 %v248, %v663
      %v665 = vpop.f32.mrf.mxu0
      %v666 = vpop.f32.mrf.mxu0
      %v667 = vadd.f32 %v248, %v666
      %v668 = vpop.f32.mrf.mxu0
      %669 = vmatprep.mubr.bf16.mxu0 0
      %670 = vmatmul.mubr.bf16.gmra.mxu0 %v465
      %v671 = vpop.f32.mrf.mxu0
      %v672 = vadd.f32 %v248, %v671
      %v673 = vpop.f32.mrf.mxu0
      %v674 = vpop.f32.mrf.mxu0
      %v675 = vadd.f32 %v248, %v674
      %v676 = vpop.f32.mrf.mxu0
      %677 = vmatprep.mubr.bf16.mxu0 0
      %678 = vmatmul.mubr.bf16.gmra.mxu0 %v468
      %v679 = vpop.f32.mrf.mxu0
      %v680 = vadd.f32 %v248, %v679
      %v681 = vpop.f32.mrf.mxu0
      %v682 = vpop.f32.mrf.mxu0
      %v683 = vadd.f32 %v248, %v682
      %v684 = vpop.f32.mrf.mxu0
      %685 = vmatprep.mubr.bf16.mxu0 0
      %686 = vmatmul.mubr.bf16.gmra.mxu0 %v471
      %v687 = vpop.f32.mrf.mxu0
      %v688 = vadd.f32 %v248, %v687
      %v689 = vpop.f32.mrf.mxu0
      %v690 = vpop.f32.mrf.mxu0
      %v691 = vadd.f32 %v248, %v690
      %v692 = vpop.f32.mrf.mxu0
      %693 = vmatprep.mubr.bf16.mxu0 0
      %694 = vmatmul.mubr.bf16.gmra.mxu0 %v474
      %v695 = vpop.f32.mrf.mxu0
      %v696 = vadd.f32 %v248, %v695
      %v697 = vpop.f32.mrf.mxu0
      %v698 = vpop.f32.mrf.mxu0
      %v699 = vadd.f32 %v248, %v698
      %v700 = vpop.f32.mrf.mxu0
      %701 = vmatprep.mubr.bf16.mxu0 0
      %702 = vmatmul.mubr.bf16.gmra.mxu0 %v477
      %v703 = vpop.f32.mrf.mxu0
      %v704 = vadd.f32 %v248, %v703
      %v705 = vpop.f32.mrf.mxu0
      %v706 = vpop.f32.mrf.mxu0
      %v707 = vadd.f32 %v248, %v706
      %v708 = vpop.f32.mrf.mxu0
      %709 = vmatprep.mubr.bf16.mxu0 0
      %710 = vmatmul.mubr.bf16.gmra.mxu0 %v480
      %v711 = vpop.f32.mrf.mxu0
      %v712 = vadd.f32 %v248, %v711
      %v713 = vpop.f32.mrf.mxu0
      %v714 = vpop.f32.mrf.mxu0
      %v715 = vadd.f32 %v248, %v714
      %v716 = vpop.f32.mrf.mxu0
      %717 = vmatprep.mubr.bf16.mxu0 0
      %718 = vmatmul.mubr.bf16.gmra.mxu0 %v483
      %v719 = vpop.f32.mrf.mxu0
      %v720 = vadd.f32 %v248, %v719
      %v721 = vpop.f32.mrf.mxu0
      %v722 = vpop.f32.mrf.mxu0
      %v723 = vadd.f32 %v248, %v722
      %v724 = vpop.f32.mrf.mxu0
      %725 = vmatprep.mubr.bf16.mxu0 0
      %726 = vmatmul.mubr.bf16.gmra.mxu0 %v486
      %v727 = vpop.f32.mrf.mxu0
      %v728 = vadd.f32 %v248, %v727
      %v729 = vpop.f32.mrf.mxu0
      %v730 = vpop.f32.mrf.mxu0
      %v731 = vadd.f32 %v248, %v730
      %v732 = vpop.f32.mrf.mxu0
      %733 = vmatprep.mubr.bf16.mxu0 0
      %734 = vmatmul.mubr.bf16.gmra.mxu0 %v489
      %v735 = vpop.f32.mrf.mxu0
      %v736 = vadd.f32 %v248, %v735
      %v737 = vpop.f32.mrf.mxu0
      %v738 = vpop.f32.mrf.mxu0
      %v739 = vadd.f32 %v248, %v738
      %v740 = vpop.f32.mrf.mxu0
      %741 = vmatprep.mubr.bf16.mxu0 0
      %742 = vmatmul.mubr.bf16.gmra.mxu0 %v492
      %v743 = vpop.f32.mrf.mxu0
      %v744 = vadd.f32 %v248, %v743
      %v745 = vpop.f32.mrf.mxu0
      %v746 = vpop.f32.mrf.mxu0
      %v747 = vadd.f32 %v248, %v746
      %v748 = vpop.f32.mrf.mxu0
      %749 = vmatprep.mubr.bf16.mxu0 0
      %750 = vmatmul.mubr.bf16.gmra.mxu0 %v495
      %v751 = vpop.f32.mrf.mxu0
      %v752 = vadd.f32 %v248, %v751
      %v753 = vpop.f32.mrf.mxu0
      %v754 = vpop.f32.mrf.mxu0
      %v755 = vadd.f32 %v248, %v754
      %v756 = vpop.f32.mrf.mxu0
      %757 = vmatprep.mubr.bf16.mxu0 0
      %758 = vmatmul.mubr.bf16.gmra.mxu0 %v498
      %v759 = vpop.f32.mrf.mxu0
      %v760 = vadd.f32 %v248, %v759
      %v761 = vpop.f32.mrf.mxu0
      %v762 = vpop.f32.mrf.mxu0
      %v763 = vadd.f32 %v248, %v762
      %v764 = vpop.f32.mrf.mxu0
      %765 = vmatprep.mubr.bf16.mxu0 0
      %766 = vmatmul.mubr.bf16.gmra.mxu0 %v501
      %v767 = vpop.f32.mrf.mxu0
      %v768 = vadd.f32 %v248, %v767
      %v769 = vpop.f32.mrf.mxu0
      %v770 = vpop.f32.mrf.mxu0
      %v771 = vadd.f32 %v248, %v770
      %v772 = vpop.f32.mrf.mxu0
      %773 = vmatprep.mubr.bf16.mxu0 0
      %774 = vmatmul.mubr.bf16.gmra.mxu0 %v504
      %v775 = vpop.f32.mrf.mxu0
      %v776 = vadd.f32 %v248, %v775
      %v777 = vpop.f32.mrf.mxu0
      %v778 = vpop.f32.mrf.mxu0
      %v779 = vadd.f32 %v248, %v778
      %v780 = vpop.f32.mrf.mxu0
      %781 = vmatprep.mubr.bf16.mxu0 0
      %782 = vmatmul.mubr.bf16.gmra.mxu0 %v507
      %v783 = vpop.f32.mrf.mxu0
      %v784 = vadd.f32 %v248, %v783
      %v785 = vpop.f32.mrf.mxu0
      %v786 = vpop.f32.mrf.mxu0
      %v787 = vadd.f32 %v248, %v786
      %v788 = vpop.f32.mrf.mxu0
      %789 = vmatprep.mubr.bf16.mxu0 0
      %790 = vmatmul.mubr.bf16.gmra.mxu0 %v510
      %v791 = vpop.f32.mrf.mxu0
      %v792 = vadd.f32 %v248, %v791
      %v793 = vpop.f32.mrf.mxu0
      %v794 = vpop.f32.mrf.mxu0
      %v795 = vadd.f32 %v248, %v794
      %v796 = vpop.f32.mrf.mxu0
      %797 = vmatprep.mubr.bf16.mxu0 0
      %798 = vmatmul.mubr.bf16.gmra.mxu0 %v513
      %v799 = vpop.f32.mrf.mxu0
      %v800 = vadd.f32 %v248, %v799
      %v801 = vpop.f32.mrf.mxu0
      %v802 = vpop.f32.mrf.mxu0
      %v803 = vadd.f32 %v248, %v802
      %v804 = vpop.f32.mrf.mxu0
      %805 = vmatprep.mubr.bf16.mxu0 0
      %806 = vmatmul.mubr.bf16.gmra.mxu0 %v516
      %v807 = vpop.f32.mrf.mxu0
      %v808 = vadd.f32 %v248, %v807
      %v809 = vpop.f32.mrf.mxu0
      %v810 = vpop.f32.mrf.mxu0
      %v811 = vadd.f32 %v248, %v810
      %v812 = vpop.f32.mrf.mxu0
      %813 = vdwg.mxu0
      %v814 = vmax.f32 %v560, 0.0
      %v815 = vmax.f32 %v563, 0.0
      %v816 = vmax.f32 %v568, 0.0
      %v817 = vmax.f32 %v571, 0.0
      %v818 = vmax.f32 %v576, 0.0
      %v819 = vmax.f32 %v579, 0.0
      %v820 = vmax.f32 %v584, 0.0
      %v821 = vmax.f32 %v587, 0.0
      %v822 = vmax.f32 %v592, 0.0
      %v823 = vmax.f32 %v595, 0.0
      %v824 = vmax.f32 %v600, 0.0
      %v825 = vmax.f32 %v603, 0.0
      %v826 = vmax.f32 %v608, 0.0
      %v827 = vmax.f32 %v611, 0.0
      %v828 = vmax.f32 %v616, 0.0
      %v829 = vmax.f32 %v619, 0.0
      %v830 = vmax.f32 %v624, 0.0
      %v831 = vmax.f32 %v627, 0.0
      %v832 = vmax.f32 %v632, 0.0
      %v833 = vmax.f32 %v635, 0.0
      %v834 = vmax.f32 %v640, 0.0
      %v835 = vmax.f32 %v643, 0.0
      %v836 = vmax.f32 %v648, 0.0
      %v837 = vmax.f32 %v651, 0.0
      %v838 = vmax.f32 %v656, 0.0
      %v839 = vmax.f32 %v659, 0.0
      %v840 = vmax.f32 %v664, 0.0
      %v841 = vmax.f32 %v667, 0.0
      %v842 = vmax.f32 %v672, 0.0
      %v843 = vmax.f32 %v675, 0.0
      %v844 = vmax.f32 %v680, 0.0
      %v845 = vmax.f32 %v683, 0.0
      %v846 = vmax.f32 %v688, 0.0
      %v847 = vmax.f32 %v691, 0.0
      %v848 = vmax.f32 %v696, 0.0
      %v849 = vmax.f32 %v699, 0.0
      %v850 = vmax.f32 %v704, 0.0
      %v851 = vmax.f32 %v707, 0.0
      %v852 = vmax.f32 %v712, 0.0
      %v853 = vmax.f32 %v715, 0.0
      %v854 = vmax.f32 %v720, 0.0
      %v855 = vmax.f32 %v723, 0.0
      %v856 = vmax.f32 %v728, 0.0
      %v857 = vmax.f32 %v731, 0.0
      %v858 = vmax.f32 %v736, 0.0
      %v859 = vmax.f32 %v739, 0.0
      %v860 = vmax.f32 %v744, 0.0
      %v861 = vmax.f32 %v747, 0.0
      %v862 = vmax.f32 %v752, 0.0
      %v863 = vmax.f32 %v755, 0.0
      %v864 = vmax.f32 %v760, 0.0
      %v865 = vmax.f32 %v763, 0.0
      %v866 = vmax.f32 %v768, 0.0
      %v867 = vmax.f32 %v771, 0.0
      %v868 = vmax.f32 %v776, 0.0
      %v869 = vmax.f32 %v779, 0.0
      %v870 = vmax.f32 %v784, 0.0
      %v871 = vmax.f32 %v787, 0.0
      %v872 = vmax.f32 %v792, 0.0
      %v873 = vmax.f32 %v795, 0.0
      %v874 = vmax.f32 %v800, 0.0
      %v875 = vmax.f32 %v803, 0.0
      %v876 = vmax.f32 %v808, 0.0
      %v877 = vmax.f32 %v811, 0.0
      %v878 = vpack.c.bf16 %v815, %v814
      %v879 = vpack.c.bf16 %v817, %v816
      %v880 = vpack.c.bf16 %v819, %v818
      %v881 = vpack.c.bf16 %v821, %v820
      %v882 = vpack.c.bf16 %v823, %v822
      %v883 = vpack.c.bf16 %v825, %v824
      %v884 = vpack.c.bf16 %v827, %v826
      %v885 = vpack.c.bf16 %v829, %v828
      %v886 = vpack.c.bf16 %v831, %v830
      %v887 = vpack.c.bf16 %v833, %v832
      %v888 = vpack.c.bf16 %v835, %v834
      %v889 = vpack.c.bf16 %v837, %v836
      %v890 = vpack.c.bf16 %v839, %v838
      %v891 = vpack.c.bf16 %v841, %v840
      %v892 = vpack.c.bf16 %v843, %v842
      %v893 = vpack.c.bf16 %v845, %v844
      %v894 = vpack.c.bf16 %v847, %v846
      %v895 = vpack.c.bf16 %v849, %v848
      %v896 = vpack.c.bf16 %v851, %v850
      %v897 = vpack.c.bf16 %v853, %v852
      %v898 = vpack.c.bf16 %v855, %v854
      %v899 = vpack.c.bf16 %v857, %v856
      %v900 = vpack.c.bf16 %v859, %v858
      %v901 = vpack.c.bf16 %v861, %v860
      %v902 = vpack.c.bf16 %v863, %v862
      %v903 = vpack.c.bf16 %v865, %v864
      %v904 = vpack.c.bf16 %v867, %v866
      %v905 = vpack.c.bf16 %v869, %v868
      %v906 = vpack.c.bf16 %v871, %v870
      %v907 = vpack.c.bf16 %v873, %v872
      %v908 = vpack.c.bf16 %v875, %v874
      %v909 = vpack.c.bf16 %v877, %v876
      %v942 = vunpack.c.l.b16 %v878
      %v943 = vunpack.c.h.b16 %v878
      %v944 = vunpack.c.l.b16 %v879
      %v945 = vunpack.c.h.b16 %v879
      %v946 = vunpack.c.l.b16 %v880
      %v947 = vunpack.c.h.b16 %v880
      %v948 = vunpack.c.l.b16 %v881
      %v949 = vunpack.c.h.b16 %v881
      %v950 = vunpack.c.l.b16 %v882
      %v951 = vunpack.c.h.b16 %v882
      %v952 = vunpack.c.l.b16 %v883
      %v953 = vunpack.c.h.b16 %v883
      %v954 = vunpack.c.l.b16 %v884
      %v955 = vunpack.c.h.b16 %v884
      %v956 = vunpack.c.l.b16 %v885
      %v957 = vunpack.c.h.b16 %v885
      %v958 = vunpack.c.l.b16 %v886
      %v959 = vunpack.c.h.b16 %v886
      %v960 = vunpack.c.l.b16 %v887
      %v961 = vunpack.c.h.b16 %v887
      %v962 = vunpack.c.l.b16 %v888
      %v963 = vunpack.c.h.b16 %v888
      %v964 = vunpack.c.l.b16 %v889
      %v965 = vunpack.c.h.b16 %v889
      %v966 = vunpack.c.l.b16 %v890
      %v967 = vunpack.c.h.b16 %v890
      %v968 = vunpack.c.l.b16 %v891
      %v969 = vunpack.c.h.b16 %v891
      %v970 = vunpack.c.l.b16 %v892
      %v971 = vunpack.c.h.b16 %v892
      %v972 = vunpack.c.l.b16 %v893
      %v973 = vunpack.c.h.b16 %v893
      %v974 = vunpack.c.l.b16 %v894
      %v975 = vunpack.c.h.b16 %v894
      %v976 = vunpack.c.l.b16 %v895
      %v977 = vunpack.c.h.b16 %v895
      %v978 = vunpack.c.l.b16 %v896
      %v979 = vunpack.c.h.b16 %v896
      %v980 = vunpack.c.l.b16 %v897
      %v981 = vunpack.c.h.b16 %v897
      %v982 = vunpack.c.l.b16 %v898
      %v983 = vunpack.c.h.b16 %v898
      %v984 = vunpack.c.l.b16 %v899
      %v985 = vunpack.c.h.b16 %v899
      %v986 = vunpack.c.l.b16 %v900
      %v987 = vunpack.c.h.b16 %v900
      %v988 = vunpack.c.l.b16 %v901
      %v989 = vunpack.c.h.b16 %v901
      %v990 = vunpack.c.l.b16 %v902
      %v991 = vunpack.c.h.b16 %v902
      %v992 = vunpack.c.l.b16 %v903
      %v993 = vunpack.c.h.b16 %v903
      %v994 = vunpack.c.l.b16 %v904
      %v995 = vunpack.c.h.b16 %v904
      %v996 = vunpack.c.l.b16 %v905
      %v997 = vunpack.c.h.b16 %v905
      %v998 = vunpack.c.l.b16 %v906
      %v999 = vunpack.c.h.b16 %v906
      %v1000 = vunpack.c.l.b16 %v907
      %v1001 = vunpack.c.h.b16 %v907
      %v1002 = vunpack.c.l.b16 %v908
      %v1003 = vunpack.c.h.b16 %v908
      %v1004 = vunpack.c.l.b16 %v909
      %v1005 = vunpack.c.h.b16 %v909
      %v1006 = vpack.c.b16 %v942, %v942
      %v1007 = vpack.c.b16 %v943, %v943
      %v1008 = vpack.c.b16 %v944, %v944
      %v1009 = vpack.c.b16 %v945, %v945
      %v1010 = vpack.c.b16 %v946, %v946
      %v1011 = vpack.c.b16 %v947, %v947
      %v1012 = vpack.c.b16 %v948, %v948
      %v1013 = vpack.c.b16 %v949, %v949
      %v1014 = vpack.c.b16 %v950, %v950
      %v1015 = vpack.c.b16 %v951, %v951
      %v1016 = vpack.c.b16 %v952, %v952
      %v1017 = vpack.c.b16 %v953, %v953
      %v1018 = vpack.c.b16 %v954, %v954
      %v1019 = vpack.c.b16 %v955, %v955
      %v1020 = vpack.c.b16 %v956, %v956
      %v1021 = vpack.c.b16 %v957, %v957
      %v1022 = vpack.c.b16 %v958, %v958
      %v1023 = vpack.c.b16 %v959, %v959
      %v1024 = vpack.c.b16 %v960, %v960
      %v1025 = vpack.c.b16 %v961, %v961
      %v1026 = vpack.c.b16 %v962, %v962
      %v1027 = vpack.c.b16 %v963, %v963
      %v1028 = vpack.c.b16 %v964, %v964
      %v1029 = vpack.c.b16 %v965, %v965
      %v1030 = vpack.c.b16 %v966, %v966
      %v1031 = vpack.c.b16 %v967, %v967
      %v1032 = vpack.c.b16 %v968, %v968
      %v1033 = vpack.c.b16 %v969, %v969
      %v1034 = vpack.c.b16 %v970, %v970
      %v1035 = vpack.c.b16 %v971, %v971
      %v1036 = vpack.c.b16 %v972, %v972
      %v1037 = vpack.c.b16 %v973, %v973
      %v1038 = vpack.c.b16 %v974, %v974
      %v1039 = vpack.c.b16 %v975, %v975
      %v1040 = vpack.c.b16 %v976, %v976
      %v1041 = vpack.c.b16 %v977, %v977
      %v1042 = vpack.c.b16 %v978, %v978
      %v1043 = vpack.c.b16 %v979, %v979
      %v1044 = vpack.c.b16 %v980, %v980
      %v1045 = vpack.c.b16 %v981, %v981
      %v1046 = vpack.c.b16 %v982, %v982
      %v1047 = vpack.c.b16 %v983, %v983
      %v1048 = vpack.c.b16 %v984, %v984
      %v1049 = vpack.c.b16 %v985, %v985
      %v1050 = vpack.c.b16 %v986, %v986
      %v1051 = vpack.c.b16 %v987, %v987
      %v1052 = vpack.c.b16 %v988, %v988
      %v1053 = vpack.c.b16 %v989, %v989
      %v1054 = vpack.c.b16 %v990, %v990
      %v1055 = vpack.c.b16 %v991, %v991
      %v1056 = vpack.c.b16 %v992, %v992
      %v1057 = vpack.c.b16 %v993, %v993
      %v1058 = vpack.c.b16 %v994, %v994
      %v1059 = vpack.c.b16 %v995, %v995
      %v1060 = vpack.c.b16 %v996, %v996
      %v1061 = vpack.c.b16 %v997, %v997
      %v1062 = vpack.c.b16 %v998, %v998
      %v1063 = vpack.c.b16 %v999, %v999
      %v1064 = vpack.c.b16 %v1000, %v1000
      %v1065 = vpack.c.b16 %v1001, %v1001
      %v1066 = vpack.c.b16 %v1002, %v1002
      %v1067 = vpack.c.b16 %v1003, %v1003
      %v1068 = vpack.c.b16 %v1004, %v1004
      %v1069 = vpack.c.b16 %v1005, %v1005
      %1134 = vst [vmem:[%s172] sm:$0xf] %v1006
      %1135 = vst [vmem:[%s172 + $0x4] sm:$0xf] %v1007
      %1136 = vst [vmem:[%s172 + $0x8] sm:$0xf] %v1008
      %1137 = vst [vmem:[%s172 + $0xc] sm:$0xf] %v1009
      %1138 = vst [vmem:[%s172 + $0x10] sm:$0xf] %v1010
      %1139 = vst [vmem:[%s172 + $0x14] sm:$0xf] %v1011
      %1140 = vst [vmem:[%s172 + $0x18] sm:$0xf] %v1012
      %1141 = vst [vmem:[%s172 + $0x1c] sm:$0xf] %v1013
      %1142 = vst [vmem:[%s172 + $0x20] sm:$0xf] %v1014
      %1143 = vst [vmem:[%s172 + $0x24] sm:$0xf] %v1015
      %1144 = vst [vmem:[%s172 + $0x28] sm:$0xf] %v1016
      %1145 = vst [vmem:[%s172 + $0x2c] sm:$0xf] %v1017
      %1146 = vst [vmem:[%s172 + $0x30] sm:$0xf] %v1018
      %1147 = vst [vmem:[%s172 + $0x34] sm:$0xf] %v1019
      %1148 = vst [vmem:[%s172 + $0x38] sm:$0xf] %v1020
      %1149 = vst [vmem:[%s172 + $0x3c] sm:$0xf] %v1021
      %1150 = vst [vmem:[%s172 + $0x40] sm:$0xf] %v1022
      %1151 = vst [vmem:[%s172 + $0x44] sm:$0xf] %v1023
      %1152 = vst [vmem:[%s172 + $0x48] sm:$0xf] %v1024
      %1153 = vst [vmem:[%s172 + $0x4c] sm:$0xf] %v1025
      %1154 = vst [vmem:[%s172 + $0x50] sm:$0xf] %v1026
      %1155 = vst [vmem:[%s172 + $0x54] sm:$0xf] %v1027
      %1156 = vst [vmem:[%s172 + $0x58] sm:$0xf] %v1028
      %1157 = vst [vmem:[%s172 + $0x5c] sm:$0xf] %v1029
      %1158 = vst [vmem:[%s172 + $0x60] sm:$0xf] %v1030
      %1159 = vst [vmem:[%s172 + $0x64] sm:$0xf] %v1031
      %1160 = vst [vmem:[%s172 + $0x68] sm:$0xf] %v1032
      %1161 = vst [vmem:[%s172 + $0x6c] sm:$0xf] %v1033
      %1162 = vst [vmem:[%s172 + $0x70] sm:$0xf] %v1034
      %1163 = vst [vmem:[%s172 + $0x74] sm:$0xf] %v1035
      %1164 = vst [vmem:[%s172 + $0x78] sm:$0xf] %v1036
      %1165 = vst [vmem:[%s172 + $0x7c] sm:$0xf] %v1037
      %1166 = vst [vmem:[%s172 + $0x80] sm:$0xf] %v1038
      %1167 = vst [vmem:[%s172 + $0x84] sm:$0xf] %v1039
      %1168 = vst [vmem:[%s172 + $0x88] sm:$0xf] %v1040
      %1169 = vst [vmem:[%s172 + $0x8c] sm:$0xf] %v1041
      %1170 = vst [vmem:[%s172 + $0x90] sm:$0xf] %v1042
      %1171 = vst [vmem:[%s172 + $0x94] sm:$0xf] %v1043
      %1172 = vst [vmem:[%s172 + $0x98] sm:$0xf] %v1044
      %1173 = vst [vmem:[%s172 + $0x9c] sm:$0xf] %v1045
      %1174 = vst [vmem:[%s172 + $0xa0] sm:$0xf] %v1046
      %1175 = vst [vmem:[%s172 + $0xa4] sm:$0xf] %v1047
      %1176 = vst [vmem:[%s172 + $0xa8] sm:$0xf] %v1048
      %1177 = vst [vmem:[%s172 + $0xac] sm:$0xf] %v1049
      %1178 = vst [vmem:[%s172 + $0xb0] sm:$0xf] %v1050
      %1179 = vst [vmem:[%s172 + $0xb4] sm:$0xf] %v1051
      %1180 = vst [vmem:[%s172 + $0xb8] sm:$0xf] %v1052
      %1181 = vst [vmem:[%s172 + $0xbc] sm:$0xf] %v1053
      %1182 = vst [vmem:[%s172 + $0xc0] sm:$0xf] %v1054
      %1183 = vst [vmem:[%s172 + $0xc4] sm:$0xf] %v1055
      %1184 = vst [vmem:[%s172 + $0xc8] sm:$0xf] %v1056
      %1185 = vst [vmem:[%s172 + $0xcc] sm:$0xf] %v1057
      %1186 = vst [vmem:[%s172 + $0xd0] sm:$0xf] %v1058
      %1187 = vst [vmem:[%s172 + $0xd4] sm:$0xf] %v1059
      %1188 = vst [vmem:[%s172 + $0xd8] sm:$0xf] %v1060
      %1189 = vst [vmem:[%s172 + $0xdc] sm:$0xf] %v1061
      %1190 = vst [vmem:[%s172 + $0xe0] sm:$0xf] %v1062
      %1191 = vst [vmem:[%s172 + $0xe4] sm:$0xf] %v1063
      %1192 = vst [vmem:[%s172 + $0xe8] sm:$0xf] %v1064
      %1193 = vst [vmem:[%s172 + $0xec] sm:$0xf] %v1065
      %1194 = vst [vmem:[%s172 + $0xf0] sm:$0xf] %v1066
      %1195 = vst [vmem:[%s172 + $0xf4] sm:$0xf] %v1067
      %1196 = vst [vmem:[%s172 + $0xf8] sm:$0xf] %v1068
      %1197 = vst [vmem:[%s172 + $0xfc] sm:$0xf] %v1069
      %s1198 = smul.u32 64, %s14
      %p1199 = scmp.lt.s32.totalorder %s1198, 127
      %s1200 = scalar_select %p1199, %s1198, 127
      %s1201 = smul.addr %s1200, 4
      %s1202 = scalar_lea.vmem %s3, %s1201
      // Predicated region
      $region33: #{_image_metrics_impl.8} parent=31 // pred_check
        %p1203 = pneg %p100
      $region34: #{_image_metrics_impl.8} parent=31 // pred_check_branch
        %1205 = sbr.rel (%p1203) target = $region36
      $region35: #{_image_metrics_impl.8} parent=31 // pred_region
        %s1206 = smul.u32 64, %s14
      $region36: #{_image_metrics_impl.8} parent=31 // pred_fallthru
        _
    $region32: #{_image_metrics_impl.8} parent=5 // pred_fallthru
      _
    %p1207 = scmp.le.s32.totalorder 2, %s9
    // Predicated region
    $region37: #{_image_metrics_impl.8} parent=5 // pred_check
      %p1208 = pneg %p1207
    $region38: #{_image_metrics_impl.8} parent=5 // pred_check_branch
      %1210 = sbr.rel (%p1208) target = $region40
    $region39: #{_image_metrics_impl.8} parent=5 // pred_region
      %s1211 = ssub.s32 %s9, 2
      // Predicated region
      $region41: #{_image_metrics_impl.8} parent=39 // pred_check
        %p1212 = pneg %p106
      $region42: #{_image_metrics_impl.8} parent=39 // pred_check_branch
        %1214 = sbr.rel (%p1212) target = $region44
      $region43: #{_image_metrics_impl.8} parent=39 // pred_region
        %s1215 = smul.u32 64, %s15
        %p1216 = scmp.lt.s32.totalorder %s1215, 127
        %s1217 = scalar_select %p1216, %s1215, 127
        %s1218 = smul.addr %s1217, 4
        %s1219 = scalar_lea.vmem %s3, %s1218
      $region44: #{_image_metrics_impl.8} parent=39 // pred_fallthru
        _
    $region40: #{_image_metrics_impl.8} parent=5 // pred_fallthru
      _
  $region6: #{_image_metrics_impl.8} parent=0 // loop_footer
    %s13 = sadd.s32 1, %s9
  $region7: #{_image_metrics_impl.8} parent=0 // loop_footer_branch
    %8 = sbr.rel target = $region3
  $region8: #{_image_metrics_impl.8} parent=0 // loop_exit
    _

// kernel: _image_metrics_impl.10
$region0: #{_image_metrics_impl.10}
  #allocation0 [shape = 'u32[]', space=smem, size = 0x4, offset = 0x4, fixed_abs, tag = 'smem constant byte address 0x4 - core index']
  #allocation1 [shape = 'u32[144,128]{1,0:T(1,128)}', space=vmem, size = 0x12000, scoped, tag = 'internal scratch']
  %s0 = inlined_call_operand.vmem [shape: bf16[256,144], index: 0, kind: input, shape index: {}]
  %s1 = inlined_call_operand.vmem [shape: bf16[144,128], index: 1, kind: input, shape index: {}]
  %s2 = inlined_call_operand.vmem [shape: f32[1,128], index: 2, kind: input, shape index: {}]
  %s3 = inlined_call_operand.vmem [shape: bf16[256,128], index: 3, kind: output, shape index: {}]
  %s4 = sld [smem:[#allocation0]]
  $region22: #{_image_metrics_impl.10} parent=0
    _
  %s6 = ssub.s32 1, %s4
  %s7 = scalar_select 0, %s6, %s4
  // Predicated region
  $region2: #{_image_metrics_impl.10} parent=0 // pred_check
    _
  $region3: #{_image_metrics_impl.10} parent=0 // pred_check_branch
    %9 = sbr.rel (0) target = $region5
  $region4: #{_image_metrics_impl.10} parent=0 // pred_region
    _
  $region5: #{_image_metrics_impl.10} parent=0 // pred_fallthru
    _
  // Predicated region
  $region6: #{_image_metrics_impl.10} parent=0 // pred_check
    _
  $region7: #{_image_metrics_impl.10} parent=0 // pred_check_branch
    %11 = sbr.rel (0) target = $region9
  $region8: #{_image_metrics_impl.10} parent=0 // pred_region
    _
  $region9: #{_image_metrics_impl.10} parent=0 // pred_fallthru
    _
  // Predicated region
  $region10: #{_image_metrics_impl.10} parent=0 // pred_check
    _
  $region11: #{_image_metrics_impl.10} parent=0 // pred_check_branch
    %13 = sbr.rel (0) target = $region13
  $region12: #{_image_metrics_impl.10} parent=0 // pred_region
    _
  $region13: #{_image_metrics_impl.10} parent=0 // pred_fallthru
    _
  %v15 = vld [vmem:[%s0] sm:$0xff]
  %v16 = vld [vmem:[%s0 + $0x8] sm:$0xff]
  %v17 = vld [vmem:[%s0 + $0x10] sm:$0xff]
  %v18 = vld [vmem:[%s0 + $0x18] sm:$0xff]
  %v19 = vld [vmem:[%s0 + $0x20] sm:$0xff]
  %v20 = vld [vmem:[%s0 + $0x28] sm:$0xff]
  %v21 = vld [vmem:[%s0 + $0x30] sm:$0xff]
  %v22 = vld [vmem:[%s0 + $0x38] sm:$0xff]
  %v23 = vld [vmem:[%s0 + $0x40] sm:$0xff]
  %v24 = vld [vmem:[%s0 + $0x48] sm:$0xff]
  %v25 = vld [vmem:[%s0 + $0x50] sm:$0xff]
  %v26 = vld [vmem:[%s0 + $0x58] sm:$0xff]
  %v27 = vld [vmem:[%s0 + $0x60] sm:$0xff]
  %v28 = vld [vmem:[%s0 + $0x68] sm:$0xff]
  %v29 = vld [vmem:[%s0 + $0x70] sm:$0xff]
  %v30 = vld [vmem:[%s0 + $0x78] sm:$0xff]
  %v31 = vld [vmem:[%s0 + $0x80] sm:$0xff]
  %v32 = vld [vmem:[%s0 + $0x88] sm:$0xff]
  %v33 = vld [vmem:[%s0 + $0x90] sm:$0xff]
  %v34 = vld [vmem:[%s0 + $0x98] sm:$0xff]
  %v35 = vld [vmem:[%s0 + $0xa0] sm:$0xff]
  %v36 = vld [vmem:[%s0 + $0xa8] sm:$0xff]
  %v37 = vld [vmem:[%s0 + $0xb0] sm:$0xff]
  %v38 = vld [vmem:[%s0 + $0xb8] sm:$0xff]
  %v39 = vld [vmem:[%s0 + $0xc0] sm:$0xff]
  %v40 = vld [vmem:[%s0 + $0xc8] sm:$0xff]
  %v41 = vld [vmem:[%s0 + $0xd0] sm:$0xff]
  %v42 = vld [vmem:[%s0 + $0xd8] sm:$0xff]
  %v43 = vld [vmem:[%s0 + $0xe0] sm:$0xff]
  %v44 = vld [vmem:[%s0 + $0xe8] sm:$0xff]
  %v45 = vld [vmem:[%s0 + $0xf0] sm:$0xff]
  %v46 = vld [vmem:[%s0 + $0xf8] sm:$0xff]
  %v47 = vld [vmem:[%s1] sm:$0xf]
  %v48 = vld [vmem:[%s1 + $0x4] sm:$0xf]
  %v49 = vld [vmem:[%s1 + $0x8] sm:$0xf]
  %v50 = vld [vmem:[%s1 + $0xc] sm:$0xf]
  %v51 = vld [vmem:[%s1 + $0x10] sm:$0xf]
  %v52 = vld [vmem:[%s1 + $0x14] sm:$0xf]
  %v53 = vld [vmem:[%s1 + $0x18] sm:$0xf]
  %v54 = vld [vmem:[%s1 + $0x1c] sm:$0xf]
  %v55 = vld [vmem:[%s1 + $0x20] sm:$0xf]
  %v56 = vld [vmem:[%s1 + $0x24] sm:$0xf]
  %v57 = vld [vmem:[%s1 + $0x28] sm:$0xf]
  %v58 = vld [vmem:[%s1 + $0x2c] sm:$0xf]
  %v59 = vld [vmem:[%s1 + $0x30] sm:$0xf]
  %v60 = vld [vmem:[%s1 + $0x34] sm:$0xf]
  %v61 = vld [vmem:[%s1 + $0x38] sm:$0xf]
  %v62 = vld [vmem:[%s1 + $0x3c] sm:$0xf]
  %v63 = vld [vmem:[%s1 + $0x40] sm:$0xf]
  %v64 = vld [vmem:[%s1 + $0x44] sm:$0xf]
  %v65 = vld [vmem:[%s2] sm:$0x1]
  %v67 = vlaneseq
  %v68 = vshrl.u32 %v67, 7
  %v69 = vsub.s32 0, %v68
  %v70 = vrot.slane %v65, %v69
  %v104 = vunpack.c.l.b16 %v15
  %v105 = vunpack.c.h.b16 %v15
  %v106 = vunpack.c.l.b16 %v16
  %v107 = vunpack.c.h.b16 %v16
  %v108 = vunpack.c.l.b16 %v17
  %v109 = vunpack.c.h.b16 %v17
  %v110 = vunpack.c.l.b16 %v18
  %v111 = vunpack.c.h.b16 %v18
  %v112 = vunpack.c.l.b16 %v19
  %v113 = vunpack.c.h.b16 %v19
  %v114 = vunpack.c.l.b16 %v20
  %v115 = vunpack.c.h.b16 %v20
  %v116 = vunpack.c.l.b16 %v21
  %v117 = vunpack.c.h.b16 %v21
  %v118 = vunpack.c.l.b16 %v22
  %v119 = vunpack.c.h.b16 %v22
  %v120 = vunpack.c.l.b16 %v23
  %v121 = vunpack.c.h.b16 %v23
  %v122 = vunpack.c.l.b16 %v24
  %v123 = vunpack.c.h.b16 %v24
  %v124 = vunpack.c.l.b16 %v25
  %v125 = vunpack.c.h.b16 %v25
  %v126 = vunpack.c.l.b16 %v26
  %v127 = vunpack.c.h.b16 %v26
  %v128 = vunpack.c.l.b16 %v27
  %v129 = vunpack.c.h.b16 %v27
  %v130 = vunpack.c.l.b16 %v28
  %v131 = vunpack.c.h.b16 %v28
  %v132 = vunpack.c.l.b16 %v29
  %v133 = vunpack.c.h.b16 %v29
  %v134 = vunpack.c.l.b16 %v30
  %v135 = vunpack.c.h.b16 %v30
  %v136 = vunpack.c.l.b16 %v31
  %v137 = vunpack.c.h.b16 %v31
  %v138 = vunpack.c.l.b16 %v32
  %v139 = vunpack.c.h.b16 %v32
  %v140 = vunpack.c.l.b16 %v33
  %v141 = vunpack.c.h.b16 %v33
  %v142 = vunpack.c.l.b16 %v34
  %v143 = vunpack.c.h.b16 %v34
  %v144 = vunpack.c.l.b16 %v35
  %v145 = vunpack.c.h.b16 %v35
  %v146 = vunpack.c.l.b16 %v36
  %v147 = vunpack.c.h.b16 %v36
  %v148 = vunpack.c.l.b16 %v37
  %v149 = vunpack.c.h.b16 %v37
  %v150 = vunpack.c.l.b16 %v38
  %v151 = vunpack.c.h.b16 %v38
  %v152 = vunpack.c.l.b16 %v39
  %v153 = vunpack.c.h.b16 %v39
  %v154 = vunpack.c.l.b16 %v40
  %v155 = vunpack.c.h.b16 %v40
  %v156 = vunpack.c.l.b16 %v41
  %v157 = vunpack.c.h.b16 %v41
  %v158 = vunpack.c.l.b16 %v42
  %v159 = vunpack.c.h.b16 %v42
  %v160 = vunpack.c.l.b16 %v43
  %v161 = vunpack.c.h.b16 %v43
  %v162 = vunpack.c.l.b16 %v44
  %v163 = vunpack.c.h.b16 %v44
  %v164 = vunpack.c.l.b16 %v45
  %v165 = vunpack.c.h.b16 %v45
  %v166 = vunpack.c.l.b16 %v46
  %v167 = vunpack.c.h.b16 %v46
  %v168 = vpack.c.b16 %v106, %v104
  %v169 = vpack.c.b16 %v107, %v105
  %v170 = vpack.c.b16 %v110, %v108
  %v171 = vpack.c.b16 %v111, %v109
  %v172 = vpack.c.b16 %v114, %v112
  %v173 = vpack.c.b16 %v115, %v113
  %v174 = vpack.c.b16 %v118, %v116
  %v175 = vpack.c.b16 %v119, %v117
  %v176 = vpack.c.b16 %v122, %v120
  %v177 = vpack.c.b16 %v123, %v121
  %v178 = vpack.c.b16 %v126, %v124
  %v179 = vpack.c.b16 %v127, %v125
  %v180 = vpack.c.b16 %v130, %v128
  %v181 = vpack.c.b16 %v131, %v129
  %v182 = vpack.c.b16 %v134, %v132
  %v183 = vpack.c.b16 %v135, %v133
  %v184 = vpack.c.b16 %v138, %v136
  %v185 = vpack.c.b16 %v139, %v137
  %v186 = vpack.c.b16 %v142, %v140
  %v187 = vpack.c.b16 %v143, %v141
  %v188 = vpack.c.b16 %v146, %v144
  %v189 = vpack.c.b16 %v147, %v145
  %v190 = vpack.c.b16 %v150, %v148
  %v191 = vpack.c.b16 %v151, %v149
  %v192 = vpack.c.b16 %v154, %v152
  %v193 = vpack.c.b16 %v155, %v153
  %v194 = vpack.c.b16 %v158, %v156
  %v195 = vpack.c.b16 %v159, %v157
  %v196 = vpack.c.b16 %v162, %v160
  %v197 = vpack.c.b16 %v163, %v161
  %v198 = vpack.c.b16 %v166, %v164
  %v199 = vpack.c.b16 %v167, %v165
  %v234 = vunpack.c.l.b16 %v47
  %v235 = vunpack.c.l.b16 %v48
  %v236 = vunpack.c.l.b16 %v49
  %v237 = vunpack.c.l.b16 %v50
  %v238 = vunpack.c.l.b16 %v51
  %v239 = vunpack.c.l.b16 %v52
  %v240 = vunpack.c.l.b16 %v53
  %v241 = vunpack.c.l.b16 %v54
  %v242 = vunpack.c.l.b16 %v55
  %v243 = vunpack.c.l.b16 %v56
  %v244 = vunpack.c.l.b16 %v57
  %v245 = vunpack.c.l.b16 %v58
  %v246 = vunpack.c.l.b16 %v59
  %v247 = vunpack.c.l.b16 %v60
  %v248 = vunpack.c.l.b16 %v61
  %v249 = vunpack.c.l.b16 %v62
  %v250 = vunpack.c.l.b16 %v63
  %v251 = vunpack.c.l.b16 %v64
  %v252 = vpack.c.b16 %v235, %v234
  %v253 = vpack.c.b16 %v237, %v236
  %v254 = vpack.c.b16 %v239, %v238
  %v255 = vpack.c.b16 %v241, %v240
  %v256 = vpack.c.b16 %v243, %v242
  %v257 = vpack.c.b16 %v245, %v244
  %v258 = vpack.c.b16 %v247, %v246
  %v259 = vpack.c.b16 %v249, %v248
  %v260 = vpack.c.b16 %v251, %v250
  %vm270 = vcmask 130048
  %v272 = vsel %vm270, %v169, 0
  %v275 = vsel %vm270, %v171, 0
  %v278 = vsel %vm270, %v173, 0
  %v281 = vsel %vm270, %v175, 0
  %v284 = vsel %vm270, %v177, 0
  %v287 = vsel %vm270, %v179, 0
  %v290 = vsel %vm270, %v181, 0
  %v293 = vsel %vm270, %v183, 0
  %v296 = vsel %vm270, %v185, 0
  %v299 = vsel %vm270, %v187, 0
  %v302 = vsel %vm270, %v189, 0
  %v305 = vsel %vm270, %v191, 0
  %v308 = vsel %vm270, %v193, 0
  %v311 = vsel %vm270, %v195, 0
  %v314 = vsel %vm270, %v197, 0
  %v317 = vsel %vm270, %v199, 0
  %319 = vmatprep.subr.bf16.mxu0 0
  %320 = vmatpush1.bf16.msra.mxu0 %v259
  %321 = vmatprep.subr.bf16.mxu0 0
  %322 = vmatpush1.bf16.msra.mxu0 %v258
  %323 = vmatprep.subr.bf16.mxu0 0
  %324 = vmatpush1.bf16.msra.mxu0 %v257
  %325 = vmatprep.subr.bf16.mxu0 0
  %326 = vmatpush1.bf16.msra.mxu0 %v256
  %327 = vmatprep.subr.bf16.mxu0 0
  %328 = vmatpush1.bf16.msra.mxu0 %v255
  %329 = vmatprep.subr.bf16.mxu0 0
  %330 = vmatpush1.bf16.msra.mxu0 %v254
  %331 = vmatprep.subr.bf16.mxu0 0
  %332 = vmatpush1.bf16.msra.mxu0 %v253
  %333 = vmatprep.subr.bf16.mxu0 0
  %334 = vmatpush1.bf16.msra.mxu0 %v252
  %335 = vmatprep.subr.bf16.mxu0 0
  %336 = vmatpush2.bf16.msra.mxu0 0
  %337 = vmatprep.subr.bf16.mxu0 0
  %338 = vmatpush2.bf16.msra.mxu0 0
  %339 = vmatprep.subr.bf16.mxu0 0
  %340 = vmatpush2.bf16.msra.mxu0 0
  %341 = vmatprep.subr.bf16.mxu0 0
  %342 = vmatpush2.bf16.msra.mxu0 0
  %343 = vmatprep.subr.bf16.mxu0 0
  %344 = vmatpush2.bf16.msra.mxu0 0
  %345 = vmatprep.subr.bf16.mxu0 0
  %346 = vmatpush2.bf16.msra.mxu0 0
  %347 = vmatprep.subr.bf16.mxu0 0
  %348 = vmatpush2.bf16.msra.mxu0 0
  %349 = vmatprep.subr.bf16.mxu0 0
  %350 = vmatpush2.bf16.msra.mxu0 %v260
  %351 = vmatprep.mubr.bf16.mxu0 %v272
  %352 = vmatmul.mubr.bf16.gmra.mxu0 %v168
  %v353 = vpop.f32.mrf.mxu0
  %v354 = vadd.f32 %v70, %v353
  %v355 = vpop.f32.mrf.mxu0
  %v356 = vpop.f32.mrf.mxu0
  %v357 = vadd.f32 %v70, %v356
  %v358 = vpop.f32.mrf.mxu0
  %359 = vmatprep.mubr.bf16.mxu0 %v275
  %360 = vmatmul.mubr.bf16.gmra.mxu0 %v170
  %v361 = vpop.f32.mrf.mxu0
  %v362 = vadd.f32 %v70, %v361
  %v363 = vpop.f32.mrf.mxu0
  %v364 = vpop.f32.mrf.mxu0
  %v365 = vadd.f32 %v70, %v364
  %v366 = vpop.f32.mrf.mxu0
  %367 = vmatprep.mubr.bf16.mxu0 %v278
  %368 = vmatmul.mubr.bf16.gmra.mxu0 %v172
  %v369 = vpop.f32.mrf.mxu0
  %v370 = vadd.f32 %v70, %v369
  %v371 = vpop.f32.mrf.mxu0
  %v372 = vpop.f32.mrf.mxu0
  %v373 = vadd.f32 %v70, %v372
  %v374 = vpop.f32.mrf.mxu0
  %375 = vmatprep.mubr.bf16.mxu0 %v281
  %376 = vmatmul.mubr.bf16.gmra.mxu0 %v174
  %v377 = vpop.f32.mrf.mxu0
  %v378 = vadd.f32 %v70, %v377
  %v379 = vpop.f32.mrf.mxu0
  %v380 = vpop.f32.mrf.mxu0
  %v381 = vadd.f32 %v70, %v380
  %v382 = vpop.f32.mrf.mxu0
  %383 = vmatprep.mubr.bf16.mxu0 %v284
  %384 = vmatmul.mubr.bf16.gmra.mxu0 %v176
  %v385 = vpop.f32.mrf.mxu0
  %v386 = vadd.f32 %v70, %v385
  %v387 = vpop.f32.mrf.mxu0
  %v388 = vpop.f32.mrf.mxu0
  %v389 = vadd.f32 %v70, %v388
  %v390 = vpop.f32.mrf.mxu0
  %391 = vmatprep.mubr.bf16.mxu0 %v287
  %392 = vmatmul.mubr.bf16.gmra.mxu0 %v178
  %v393 = vpop.f32.mrf.mxu0
  %v394 = vadd.f32 %v70, %v393
  %v395 = vpop.f32.mrf.mxu0
  %v396 = vpop.f32.mrf.mxu0
  %v397 = vadd.f32 %v70, %v396
  %v398 = vpop.f32.mrf.mxu0
  %399 = vmatprep.mubr.bf16.mxu0 %v290
  %400 = vmatmul.mubr.bf16.gmra.mxu0 %v180
  %v401 = vpop.f32.mrf.mxu0
  %v402 = vadd.f32 %v70, %v401
  %v403 = vpop.f32.mrf.mxu0
  %v404 = vpop.f32.mrf.mxu0
  %v405 = vadd.f32 %v70, %v404
  %v406 = vpop.f32.mrf.mxu0
  %407 = vmatprep.mubr.bf16.mxu0 %v293
  %408 = vmatmul.mubr.bf16.gmra.mxu0 %v182
  %v409 = vpop.f32.mrf.mxu0
  %v410 = vadd.f32 %v70, %v409
  %v411 = vpop.f32.mrf.mxu0
  %v412 = vpop.f32.mrf.mxu0
  %v413 = vadd.f32 %v70, %v412
  %v414 = vpop.f32.mrf.mxu0
  %415 = vmatprep.mubr.bf16.mxu0 %v296
  %416 = vmatmul.mubr.bf16.gmra.mxu0 %v184
  %v417 = vpop.f32.mrf.mxu0
  %v418 = vadd.f32 %v70, %v417
  %v419 = vpop.f32.mrf.mxu0
  %v420 = vpop.f32.mrf.mxu0
  %v421 = vadd.f32 %v70, %v420
  %v422 = vpop.f32.mrf.mxu0
  %423 = vmatprep.mubr.bf16.mxu0 %v299
  %424 = vmatmul.mubr.bf16.gmra.mxu0 %v186
  %v425 = vpop.f32.mrf.mxu0
  %v426 = vadd.f32 %v70, %v425
  %v427 = vpop.f32.mrf.mxu0
  %v428 = vpop.f32.mrf.mxu0
  %v429 = vadd.f32 %v70, %v428
  %v430 = vpop.f32.mrf.mxu0
  %431 = vmatprep.mubr.bf16.mxu0 %v302
  %432 = vmatmul.mubr.bf16.gmra.mxu0 %v188
  %v433 = vpop.f32.mrf.mxu0
  %v434 = vadd.f32 %v70, %v433
  %v435 = vpop.f32.mrf.mxu0
  %v436 = vpop.f32.mrf.mxu0
  %v437 = vadd.f32 %v70, %v436
  %v438 = vpop.f32.mrf.mxu0
  %439 = vmatprep.mubr.bf16.mxu0 %v305
  %440 = vmatmul.mubr.bf16.gmra.mxu0 %v190
  %v441 = vpop.f32.mrf.mxu0
  %v442 = vadd.f32 %v70, %v441
  %v443 = vpop.f32.mrf.mxu0
  %v444 = vpop.f32.mrf.mxu0
  %v445 = vadd.f32 %v70, %v444
  %v446 = vpop.f32.mrf.mxu0
  %447 = vmatprep.mubr.bf16.mxu0 %v308
  %448 = vmatmul.mubr.bf16.gmra.mxu0 %v192
  %v449 = vpop.f32.mrf.mxu0
  %v450 = vadd.f32 %v70, %v449
  %v451 = vpop.f32.mrf.mxu0
  %v452 = vpop.f32.mrf.mxu0
  %v453 = vadd.f32 %v70, %v452
  %v454 = vpop.f32.mrf.mxu0
  %455 = vmatprep.mubr.bf16.mxu0 %v311
  %456 = vmatmul.mubr.bf16.gmra.mxu0 %v194
  %v457 = vpop.f32.mrf.mxu0
  %v458 = vadd.f32 %v70, %v457
  %v459 = vpop.f32.mrf.mxu0
  %v460 = vpop.f32.mrf.mxu0
  %v461 = vadd.f32 %v70, %v460
  %v462 = vpop.f32.mrf.mxu0
  %463 = vmatprep.mubr.bf16.mxu0 %v314
  %464 = vmatmul.mubr.bf16.gmra.mxu0 %v196
  %v465 = vpop.f32.mrf.mxu0
  %v466 = vadd.f32 %v70, %v465
  %v467 = vpop.f32.mrf.mxu0
  %v468 = vpop.f32.mrf.mxu0
  %v469 = vadd.f32 %v70, %v468
  %v470 = vpop.f32.mrf.mxu0
  %471 = vmatprep.mubr.bf16.mxu0 %v317
  %472 = vmatmul.mubr.bf16.gmra.mxu0 %v198
  %v473 = vpop.f32.mrf.mxu0
  %v474 = vadd.f32 %v70, %v473
  %v475 = vpop.f32.mrf.mxu0
  %v476 = vpop.f32.mrf.mxu0
  %v477 = vadd.f32 %v70, %v476
  %v478 = vpop.f32.mrf.mxu0
  %479 = vdwg.mxu0
  %v480 = vmax.f32 %v354, 0.0
  %v481 = vmax.f32 %v357, 0.0
  %v482 = vmax.f32 %v362, 0.0
  %v483 = vmax.f32 %v365, 0.0
  %v484 = vmax.f32 %v370, 0.0
  %v485 = vmax.f32 %v373, 0.0
  %v486 = vmax.f32 %v378, 0.0
  %v487 = vmax.f32 %v381, 0.0
  %v488 = vmax.f32 %v386, 0.0
  %v489 = vmax.f32 %v389, 0.0
  %v490 = vmax.f32 %v394, 0.0
  %v491 = vmax.f32 %v397, 0.0
  %v492 = vmax.f32 %v402, 0.0
  %v493 = vmax.f32 %v405, 0.0
  %v494 = vmax.f32 %v410, 0.0
  %v495 = vmax.f32 %v413, 0.0
  %v496 = vmax.f32 %v418, 0.0
  %v497 = vmax.f32 %v421, 0.0
  %v498 = vmax.f32 %v426, 0.0
  %v499 = vmax.f32 %v429, 0.0
  %v500 = vmax.f32 %v434, 0.0
  %v501 = vmax.f32 %v437, 0.0
  %v502 = vmax.f32 %v442, 0.0
  %v503 = vmax.f32 %v445, 0.0
  %v504 = vmax.f32 %v450, 0.0
  %v505 = vmax.f32 %v453, 0.0
  %v506 = vmax.f32 %v458, 0.0
  %v507 = vmax.f32 %v461, 0.0
  %v508 = vmax.f32 %v466, 0.0
  %v509 = vmax.f32 %v469, 0.0
  %v510 = vmax.f32 %v474, 0.0
  %v511 = vmax.f32 %v477, 0.0
  %v512 = vpack.c.bf16 %v481, %v480
  %v513 = vpack.c.bf16 %v483, %v482
  %v514 = vpack.c.bf16 %v485, %v484
  %v515 = vpack.c.bf16 %v487, %v486
  %v516 = vpack.c.bf16 %v489, %v488
  %v517 = vpack.c.bf16 %v491, %v490
  %v518 = vpack.c.bf16 %v493, %v492
  %v519 = vpack.c.bf16 %v495, %v494
  %v520 = vpack.c.bf16 %v497, %v496
  %v521 = vpack.c.bf16 %v499, %v498
  %v522 = vpack.c.bf16 %v501, %v500
  %v523 = vpack.c.bf16 %v503, %v502
  %v524 = vpack.c.bf16 %v505, %v504
  %v525 = vpack.c.bf16 %v507, %v506
  %v526 = vpack.c.bf16 %v509, %v508
  %v527 = vpack.c.bf16 %v511, %v510
  %v544 = vunpack.c.l.b16 %v512
  %v545 = vunpack.c.h.b16 %v512
  %v546 = vunpack.c.l.b16 %v513
  %v547 = vunpack.c.h.b16 %v513
  %v548 = vunpack.c.l.b16 %v514
  %v549 = vunpack.c.h.b16 %v514
  %v550 = vunpack.c.l.b16 %v515
  %v551 = vunpack.c.h.b16 %v515
  %v552 = vunpack.c.l.b16 %v516
  %v553 = vunpack.c.h.b16 %v516
  %v554 = vunpack.c.l.b16 %v517
  %v555 = vunpack.c.h.b16 %v517
  %v556 = vunpack.c.l.b16 %v518
  %v557 = vunpack.c.h.b16 %v518
  %v558 = vunpack.c.l.b16 %v519
  %v559 = vunpack.c.h.b16 %v519
  %v560 = vunpack.c.l.b16 %v520
  %v561 = vunpack.c.h.b16 %v520
  %v562 = vunpack.c.l.b16 %v521
  %v563 = vunpack.c.h.b16 %v521
  %v564 = vunpack.c.l.b16 %v522
  %v565 = vunpack.c.h.b16 %v522
  %v566 = vunpack.c.l.b16 %v523
  %v567 = vunpack.c.h.b16 %v523
  %v568 = vunpack.c.l.b16 %v524
  %v569 = vunpack.c.h.b16 %v524
  %v570 = vunpack.c.l.b16 %v525
  %v571 = vunpack.c.h.b16 %v525
  %v572 = vunpack.c.l.b16 %v526
  %v573 = vunpack.c.h.b16 %v526
  %v574 = vunpack.c.l.b16 %v527
  %v575 = vunpack.c.h.b16 %v527
  %v576 = vpack.c.b16 %v544, %v544
  %v577 = vpack.c.b16 %v545, %v545
  %v578 = vpack.c.b16 %v546, %v546
  %v579 = vpack.c.b16 %v547, %v547
  %v580 = vpack.c.b16 %v548, %v548
  %v581 = vpack.c.b16 %v549, %v549
  %v582 = vpack.c.b16 %v550, %v550
  %v583 = vpack.c.b16 %v551, %v551
  %v584 = vpack.c.b16 %v552, %v552
  %v585 = vpack.c.b16 %v553, %v553
  %v586 = vpack.c.b16 %v554, %v554
  %v587 = vpack.c.b16 %v555, %v555
  %v588 = vpack.c.b16 %v556, %v556
  %v589 = vpack.c.b16 %v557, %v557
  %v590 = vpack.c.b16 %v558, %v558
  %v591 = vpack.c.b16 %v559, %v559
  %v592 = vpack.c.b16 %v560, %v560
  %v593 = vpack.c.b16 %v561, %v561
  %v594 = vpack.c.b16 %v562, %v562
  %v595 = vpack.c.b16 %v563, %v563
  %v596 = vpack.c.b16 %v564, %v564
  %v597 = vpack.c.b16 %v565, %v565
  %v598 = vpack.c.b16 %v566, %v566
  %v599 = vpack.c.b16 %v567, %v567
  %v600 = vpack.c.b16 %v568, %v568
  %v601 = vpack.c.b16 %v569, %v569
  %v602 = vpack.c.b16 %v570, %v570
  %v603 = vpack.c.b16 %v571, %v571
  %v604 = vpack.c.b16 %v572, %v572
  %v605 = vpack.c.b16 %v573, %v573
  %v606 = vpack.c.b16 %v574, %v574
  %v607 = vpack.c.b16 %v575, %v575
  %640 = vst [vmem:[%s3] sm:$0xf] %v576
  %641 = vst [vmem:[%s3 + $0x4] sm:$0xf] %v577
  %642 = vst [vmem:[%s3 + $0x8] sm:$0xf] %v578
  %643 = vst [vmem:[%s3 + $0xc] sm:$0xf] %v579
  %644 = vst [vmem:[%s3 + $0x10] sm:$0xf] %v580
  %645 = vst [vmem:[%s3 + $0x14] sm:$0xf] %v581
  %646 = vst [vmem:[%s3 + $0x18] sm:$0xf] %v582
  %647 = vst [vmem:[%s3 + $0x1c] sm:$0xf] %v583
  %648 = vst [vmem:[%s3 + $0x20] sm:$0xf] %v584
  %649 = vst [vmem:[%s3 + $0x24] sm:$0xf] %v585
  %650 = vst [vmem:[%s3 + $0x28] sm:$0xf] %v586
  %651 = vst [vmem:[%s3 + $0x2c] sm:$0xf] %v587
  %652 = vst [vmem:[%s3 + $0x30] sm:$0xf] %v588
  %653 = vst [vmem:[%s3 + $0x34] sm:$0xf] %v589
  %654 = vst [vmem:[%s3 + $0x38] sm:$0xf] %v590
  %655 = vst [vmem:[%s3 + $0x3c] sm:$0xf] %v591
  %656 = vst [vmem:[%s3 + $0x40] sm:$0xf] %v592
  %657 = vst [vmem:[%s3 + $0x44] sm:$0xf] %v593
  %658 = vst [vmem:[%s3 + $0x48] sm:$0xf] %v594
  %659 = vst [vmem:[%s3 + $0x4c] sm:$0xf] %v595
  %660 = vst [vmem:[%s3 + $0x50] sm:$0xf] %v596
  %661 = vst [vmem:[%s3 + $0x54] sm:$0xf] %v597
  %662 = vst [vmem:[%s3 + $0x58] sm:$0xf] %v598
  %663 = vst [vmem:[%s3 + $0x5c] sm:$0xf] %v599
  %664 = vst [vmem:[%s3 + $0x60] sm:$0xf] %v600
  %665 = vst [vmem:[%s3 + $0x64] sm:$0xf] %v601
  %666 = vst [vmem:[%s3 + $0x68] sm:$0xf] %v602
  %667 = vst [vmem:[%s3 + $0x6c] sm:$0xf] %v603
  %668 = vst [vmem:[%s3 + $0x70] sm:$0xf] %v604
  %669 = vst [vmem:[%s3 + $0x74] sm:$0xf] %v605
  %670 = vst [vmem:[%s3 + $0x78] sm:$0xf] %v606
  %671 = vst [vmem:[%s3 + $0x7c] sm:$0xf] %v607
  // Predicated region
  $region14: #{_image_metrics_impl.10} parent=0 // pred_check
    _
  $region15: #{_image_metrics_impl.10} parent=0 // pred_check_branch
    %673 = sbr.rel (0) target = $region17
  $region16: #{_image_metrics_impl.10} parent=0 // pred_region
    _
  $region17: #{_image_metrics_impl.10} parent=0 // pred_fallthru
    _
  // Predicated region
  $region18: #{_image_metrics_impl.10} parent=0 // pred_check
    _
  $region19: #{_image_metrics_impl.10} parent=0 // pred_check_branch
    %675 = sbr.rel (0) target = $region21
  $region20: #{_image_metrics_impl.10} parent=0 // pred_region
    _
  $region21: #{_image_metrics_impl.10} parent=0 // pred_fallthru
    _

// kernel: _image_metrics_impl.12
$region0: #{_image_metrics_impl.12}
  #allocation0 [shape = 'u32[]', space=smem, size = 0x4, offset = 0x4, fixed_abs, tag = 'smem constant byte address 0x4 - core index']
  #allocation1 [shape = 'u32[144,128]{1,0:T(1,128)}', space=vmem, size = 0x12000, scoped, tag = 'internal scratch']
  %s0 = inlined_call_operand.vmem [shape: bf16[64,288], index: 0, kind: input, shape index: {}]
  %s1 = inlined_call_operand.vmem [shape: bf16[288,128], index: 1, kind: input, shape index: {}]
  %s2 = inlined_call_operand.vmem [shape: f32[1,128], index: 2, kind: input, shape index: {}]
  %s3 = inlined_call_operand.vmem [shape: bf16[64,128], index: 3, kind: output, shape index: {}]
  %s4 = sld [smem:[#allocation0]]
  $region22: #{_image_metrics_impl.12} parent=0
    _
  %s6 = ssub.s32 1, %s4
  %s7 = scalar_select 0, %s6, %s4
  // Predicated region
  $region2: #{_image_metrics_impl.12} parent=0 // pred_check
    _
  $region3: #{_image_metrics_impl.12} parent=0 // pred_check_branch
    %9 = sbr.rel (0) target = $region5
  $region4: #{_image_metrics_impl.12} parent=0 // pred_region
    _
  $region5: #{_image_metrics_impl.12} parent=0 // pred_fallthru
    _
  // Predicated region
  $region6: #{_image_metrics_impl.12} parent=0 // pred_check
    _
  $region7: #{_image_metrics_impl.12} parent=0 // pred_check_branch
    %11 = sbr.rel (0) target = $region9
  $region8: #{_image_metrics_impl.12} parent=0 // pred_region
    _
  $region9: #{_image_metrics_impl.12} parent=0 // pred_fallthru
    _
  // Predicated region
  $region10: #{_image_metrics_impl.12} parent=0 // pred_check
    _
  $region11: #{_image_metrics_impl.12} parent=0 // pred_check_branch
    %13 = sbr.rel (0) target = $region13
  $region12: #{_image_metrics_impl.12} parent=0 // pred_region
    _
  $region13: #{_image_metrics_impl.12} parent=0 // pred_fallthru
    _
  %v15 = vld [vmem:[%s0] sm:$0xff]
  %v16 = vld [vmem:[%s0 + $0x8] sm:$0xf]
  %v17 = vld [vmem:[%s0 + $0xc] sm:$0xff]
  %v18 = vld [vmem:[%s0 + $0x14] sm:$0xf]
  %v19 = vld [vmem:[%s0 + $0x18] sm:$0xff]
  %v20 = vld [vmem:[%s0 + $0x20] sm:$0xf]
  %v21 = vld [vmem:[%s0 + $0x24] sm:$0xff]
  %v22 = vld [vmem:[%s0 + $0x2c] sm:$0xf]
  %v23 = vld [vmem:[%s0 + $0x30] sm:$0xff]
  %v24 = vld [vmem:[%s0 + $0x38] sm:$0xf]
  %v25 = vld [vmem:[%s0 + $0x3c] sm:$0xff]
  %v26 = vld [vmem:[%s0 + $0x44] sm:$0xf]
  %v27 = vld [vmem:[%s0 + $0x48] sm:$0xff]
  %v28 = vld [vmem:[%s0 + $0x50] sm:$0xf]
  %v29 = vld [vmem:[%s0 + $0x54] sm:$0xff]
  %v30 = vld [vmem:[%s0 + $0x5c] sm:$0xf]
  %v31 = vld [vmem:[%s1] sm:$0xf]
  %v32 = vld [vmem:[%s1 + $0x4] sm:$0xf]
  %v33 = vld [vmem:[%s1 + $0x8] sm:$0xf]
  %v34 = vld [vmem:[%s1 + $0xc] sm:$0xf]
  %v35 = vld [vmem:[%s1 + $0x10] sm:$0xf]
  %v36 = vld [vmem:[%s1 + $0x14] sm:$0xf]
  %v37 = vld [vmem:[%s1 + $0x18] sm:$0xf]
  %v38 = vld [vmem:[%s1 + $0x1c] sm:$0xf]
  %v39 = vld [vmem:[%s1 + $0x20] sm:$0xf]
  %v40 = vld [vmem:[%s1 + $0x24] sm:$0xf]
  %v41 = vld [vmem:[%s1 + $0x28] sm:$0xf]
  %v42 = vld [vmem:[%s1 + $0x2c] sm:$0xf]
  %v43 = vld [vmem:[%s1 + $0x30] sm:$0xf]
  %v44 = vld [vmem:[%s1 + $0x34] sm:$0xf]
  %v45 = vld [vmem:[%s1 + $0x38] sm:$0xf]
  %v46 = vld [vmem:[%s1 + $0x3c] sm:$0xf]
  %v47 = vld [vmem:[%s1 + $0x40] sm:$0xf]
  %v48 = vld [vmem:[%s1 + $0x44] sm:$0xf]
  %v49 = vld [vmem:[%s1 + $0x48] sm:$0xf]
  %v50 = vld [vmem:[%s1 + $0x4c] sm:$0xf]
  %v51 = vld [vmem:[%s1 + $0x50] sm:$0xf]
  %v52 = vld [vmem:[%s1 + $0x54] sm:$0xf]
  %v53 = vld [vmem:[%s1 + $0x58] sm:$0xf]
  %v54 = vld [vmem:[%s1 + $0x5c] sm:$0xf]
  %v55 = vld [vmem:[%s1 + $0x60] sm:$0xf]
  %v56 = vld [vmem:[%s1 + $0x64] sm:$0xf]
  %v57 = vld [vmem:[%s1 + $0x68] sm:$0xf]
  %v58 = vld [vmem:[%s1 + $0x6c] sm:$0xf]
  %v59 = vld [vmem:[%s1 + $0x70] sm:$0xf]
  %v60 = vld [vmem:[%s1 + $0x74] sm:$0xf]
  %v61 = vld [vmem:[%s1 + $0x78] sm:$0xf]
  %v62 = vld [vmem:[%s1 + $0x7c] sm:$0xf]
  %v63 = vld [vmem:[%s1 + $0x80] sm:$0xf]
  %v64 = vld [vmem:[%s1 + $0x84] sm:$0xf]
  %v65 = vld [vmem:[%s1 + $0x88] sm:$0xf]
  %v66 = vld [vmem:[%s1 + $0x8c] sm:$0xf]
  %v67 = vld [vmem:[%s2] sm:$0x1]
  %v69 = vlaneseq
  %v70 = vshrl.u32 %v69, 7
  %v71 = vsub.s32 0, %v70
  %v72 = vrot.slane %v67, %v71
  %v90 = vunpack.c.l.b16 %v15
  %v91 = vunpack.c.h.b16 %v15
  %v92 = vunpack.c.l.b16 %v16
  %v93 = vunpack.c.l.b16 %v17
  %v94 = vunpack.c.h.b16 %v17
  %v95 = vunpack.c.l.b16 %v18
  %v96 = vunpack.c.l.b16 %v19
  %v97 = vunpack.c.h.b16 %v19
  %v98 = vunpack.c.l.b16 %v20
  %v99 = vunpack.c.l.b16 %v21
  %v100 = vunpack.c.h.b16 %v21
  %v101 = vunpack.c.l.b16 %v22
  %v102 = vunpack.c.l.b16 %v23
  %v103 = vunpack.c.h.b16 %v23
  %v104 = vunpack.c.l.b16 %v24
  %v105 = vunpack.c.l.b16 %v25
  %v106 = vunpack.c.h.b16 %v25
  %v107 = vunpack.c.l.b16 %v26
  %v108 = vunpack.c.l.b16 %v27
  %v109 = vunpack.c.h.b16 %v27
  %v110 = vunpack.c.l.b16 %v28
  %v111 = vunpack.c.l.b16 %v29
  %v112 = vunpack.c.h.b16 %v29
  %v113 = vunpack.c.l.b16 %v30
  %v114 = vpack.c.b16 %v93, %v90
  %v115 = vpack.c.b16 %v94, %v91
  %v116 = vpack.c.b16 %v95, %v92
  %v117 = vpack.c.b16 %v99, %v96
  %v118 = vpack.c.b16 %v100, %v97
  %v119 = vpack.c.b16 %v101, %v98
  %v120 = vpack.c.b16 %v105, %v102
  %v121 = vpack.c.b16 %v106, %v103
  %v122 = vpack.c.b16 %v107, %v104
  %v123 = vpack.c.b16 %v111, %v108
  %v124 = vpack.c.b16 %v112, %v109
  %v125 = vpack.c.b16 %v113, %v110
  %v170 = vunpack.c.l.b16 %v31
  %v171 = vunpack.c.l.b16 %v32
  %v172 = vunpack.c.l.b16 %v33
  %v173 = vunpack.c.l.b16 %v34
  %v174 = vunpack.c.l.b16 %v35
  %v175 = vunpack.c.l.b16 %v36
  %v176 = vunpack.c.l.b16 %v37
  %v177 = vunpack.c.l.b16 %v38
  %v178 = vunpack.c.l.b16 %v39
  %v179 = vunpack.c.l.b16 %v40
  %v180 = vunpack.c.l.b16 %v41
  %v181 = vunpack.c.l.b16 %v42
  %v182 = vunpack.c.l.b16 %v43
  %v183 = vunpack.c.l.b16 %v44
  %v184 = vunpack.c.l.b16 %v45
  %v185 = vunpack.c.l.b16 %v46
  %v186 = vunpack.c.l.b16 %v47
  %v187 = vunpack.c.l.b16 %v48
  %v188 = vunpack.c.l.b16 %v49
  %v189 = vunpack.c.l.b16 %v50
  %v190 = vunpack.c.l.b16 %v51
  %v191 = vunpack.c.l.b16 %v52
  %v192 = vunpack.c.l.b16 %v53
  %v193 = vunpack.c.l.b16 %v54
  %v194 = vunpack.c.l.b16 %v55
  %v195 = vunpack.c.l.b16 %v56
  %v196 = vunpack.c.l.b16 %v57
  %v197 = vunpack.c.l.b16 %v58
  %v198 = vunpack.c.l.b16 %v59
  %v199 = vunpack.c.l.b16 %v60
  %v200 = vunpack.c.l.b16 %v61
  %v201 = vunpack.c.l.b16 %v62
  %v202 = vunpack.c.l.b16 %v63
  %v203 = vunpack.c.l.b16 %v64
  %v204 = vunpack.c.l.b16 %v65
  %v205 = vunpack.c.l.b16 %v66
  %v206 = vpack.c.b16 %v171, %v170
  %v207 = vpack.c.b16 %v173, %v172
  %v208 = vpack.c.b16 %v175, %v174
  %v209 = vpack.c.b16 %v177, %v176
  %v210 = vpack.c.b16 %v179, %v178
  %v211 = vpack.c.b16 %v181, %v180
  %v212 = vpack.c.b16 %v183, %v182
  %v213 = vpack.c.b16 %v185, %v184
  %v214 = vpack.c.b16 %v187, %v186
  %v215 = vpack.c.b16 %v189, %v188
  %v216 = vpack.c.b16 %v191, %v190
  %v217 = vpack.c.b16 %v193, %v192
  %v218 = vpack.c.b16 %v195, %v194
  %v219 = vpack.c.b16 %v197, %v196
  %v220 = vpack.c.b16 %v199, %v198
  %v221 = vpack.c.b16 %v201, %v200
  %v222 = vpack.c.b16 %v203, %v202
  %v223 = vpack.c.b16 %v205, %v204
  %vm242 = vcmask 261120
  %v244 = vsel %vm242, %v116, 0
  %v247 = vsel %vm242, %v119, 0
  %v250 = vsel %vm242, %v122, 0
  %v253 = vsel %vm242, %v125, 0
  %255 = vmatprep.subr.bf16.mxu0 0
  %256 = vmatpush1.bf16.msra.mxu0 %v213
  %257 = vmatprep.subr.bf16.mxu0 0
  %258 = vmatpush1.bf16.msra.mxu0 %v212
  %259 = vmatprep.subr.bf16.mxu0 0
  %260 = vmatpush1.bf16.msra.mxu0 %v211
  %261 = vmatprep.subr.bf16.mxu0 0
  %262 = vmatpush1.bf16.msra.mxu0 %v210
  %263 = vmatprep.subr.bf16.mxu0 0
  %264 = vmatpush1.bf16.msra.mxu0 %v209
  %265 = vmatprep.subr.bf16.mxu0 0
  %266 = vmatpush1.bf16.msra.mxu0 %v208
  %267 = vmatprep.subr.bf16.mxu0 0
  %268 = vmatpush1.bf16.msra.mxu0 %v207
  %269 = vmatprep.subr.bf16.mxu0 0
  %270 = vmatpush1.bf16.msra.mxu0 %v206
  %271 = vmatprep.subr.bf16.mxu0 0
  %272 = vmatpush2.bf16.msra.mxu0 %v221
  %273 = vmatprep.subr.bf16.mxu0 0
  %274 = vmatpush2.bf16.msra.mxu0 %v220
  %275 = vmatprep.subr.bf16.mxu0 0
  %276 = vmatpush2.bf16.msra.mxu0 %v219
  %277 = vmatprep.subr.bf16.mxu0 0
  %278 = vmatpush2.bf16.msra.mxu0 %v218
  %279 = vmatprep.subr.bf16.mxu0 0
  %280 = vmatpush2.bf16.msra.mxu0 %v217
  %281 = vmatprep.subr.bf16.mxu0 0
  %282 = vmatpush2.bf16.msra.mxu0 %v216
  %283 = vmatprep.subr.bf16.mxu0 0
  %284 = vmatpush2.bf16.msra.mxu0 %v215
  %285 = vmatprep.subr.bf16.mxu0 0
  %286 = vmatpush2.bf16.msra.mxu0 %v214
  %287 = vmatprep.mubr.bf16.mxu0 %v115
  %288 = vmatmul.mubr.bf16.gmra.mxu0 %v114
  %v289 = vpop.f32.mrf.mxu0
  %v290 = vadd.f32 %v72, %v289
  %v291 = vpop.f32.mrf.mxu0
  %v292 = vpop.f32.mrf.mxu0
  %v293 = vadd.f32 %v72, %v292
  %v294 = vpop.f32.mrf.mxu0
  %295 = vmatprep.mubr.bf16.mxu0 %v118
  %296 = vmatmul.mubr.bf16.gmra.mxu0 %v117
  %v297 = vpop.f32.mrf.mxu0
  %v298 = vadd.f32 %v72, %v297
  %v299 = vpop.f32.mrf.mxu0
  %v300 = vpop.f32.mrf.mxu0
  %v301 = vadd.f32 %v72, %v300
  %v302 = vpop.f32.mrf.mxu0
  %303 = vmatprep.mubr.bf16.mxu0 %v121
  %304 = vmatmul.mubr.bf16.gmra.mxu0 %v120
  %v305 = vpop.f32.mrf.mxu0
  %v306 = vadd.f32 %v72, %v305
  %v307 = vpop.f32.mrf.mxu0
  %v308 = vpop.f32.mrf.mxu0
  %v309 = vadd.f32 %v72, %v308
  %v310 = vpop.f32.mrf.mxu0
  %311 = vmatprep.mubr.bf16.mxu0 %v124
  %312 = vmatmul.mubr.bf16.gmra.mxu0 %v123
  %v313 = vpop.f32.mrf.mxu0
  %v314 = vadd.f32 %v72, %v313
  %v315 = vpop.f32.mrf.mxu0
  %v316 = vpop.f32.mrf.mxu0
  %v317 = vadd.f32 %v72, %v316
  %v318 = vpop.f32.mrf.mxu0
  %319 = vdwg.mxu0
  %320 = vmatprep.subr.bf16.mxu0 0
  %321 = vmatpush1.bf16.msra.mxu0 0
  %322 = vmatprep.subr.bf16.mxu0 0
  %323 = vmatpush1.bf16.msra.mxu0 0
  %324 = vmatprep.subr.bf16.mxu0 0
  %325 = vmatpush1.bf16.msra.mxu0 0
  %326 = vmatprep.subr.bf16.mxu0 0
  %327 = vmatpush1.bf16.msra.mxu0 0
  %328 = vmatprep.subr.bf16.mxu0 0
  %329 = vmatpush1.bf16.msra.mxu0 0
  %330 = vmatprep.subr.bf16.mxu0 0
  %331 = vmatpush1.bf16.msra.mxu0 0
  %332 = vmatprep.subr.bf16.mxu0 0
  %333 = vmatpush1.bf16.msra.mxu0 %v223
  %334 = vmatprep.subr.bf16.mxu0 0
  %335 = vmatpush1.bf16.msra.mxu0 %v222
  %336 = vmatprep.subr.bf16.mxu0 0
  %337 = vmatpush2.bf16.msra.mxu0 0
  %338 = vmatprep.subr.bf16.mxu0 0
  %339 = vmatpush2.bf16.msra.mxu0 0
  %340 = vmatprep.subr.bf16.mxu0 0
  %341 = vmatpush2.bf16.msra.mxu0 0
  %342 = vmatprep.subr.bf16.mxu0 0
  %343 = vmatpush2.bf16.msra.mxu0 0
  %344 = vmatprep.subr.bf16.mxu0 0
  %345 = vmatpush2.bf16.msra.mxu0 0
  %346 = vmatprep.subr.bf16.mxu0 0
  %347 = vmatpush2.bf16.msra.mxu0 0
  %348 = vmatprep.subr.bf16.mxu0 0
  %349 = vmatpush2.bf16.msra.mxu0 0
  %350 = vmatprep.subr.bf16.mxu0 0
  %351 = vmatpush2.bf16.msra.mxu0 0
  %352 = vmatprep.mubr.bf16.mxu0 0
  %353 = vmatmul.mubr.bf16.gmra.mxu0 %v244
  %v354 = vpop.f32.mrf.mxu0
  %v355 = vadd.f32 %v290, %v354
  %v356 = vpop.f32.mrf.mxu0
  %v357 = vpop.f32.mrf.mxu0
  %v358 = vadd.f32 %v293, %v357
  %v359 = vpop.f32.mrf.mxu0
  %360 = vmatprep.mubr.bf16.mxu0 0
  %361 = vmatmul.mubr.bf16.gmra.mxu0 %v247
  %v362 = vpop.f32.mrf.mxu0
  %v363 = vadd.f32 %v298, %v362
  %v364 = vpop.f32.mrf.mxu0
  %v365 = vpop.f32.mrf.mxu0
  %v366 = vadd.f32 %v301, %v365
  %v367 = vpop.f32.mrf.mxu0
  %368 = vmatprep.mubr.bf16.mxu0 0
  %369 = vmatmul.mubr.bf16.gmra.mxu0 %v250
  %v370 = vpop.f32.mrf.mxu0
  %v371 = vadd.f32 %v306, %v370
  %v372 = vpop.f32.mrf.mxu0
  %v373 = vpop.f32.mrf.mxu0
  %v374 = vadd.f32 %v309, %v373
  %v375 = vpop.f32.mrf.mxu0
  %376 = vmatprep.mubr.bf16.mxu0 0
  %377 = vmatmul.mubr.bf16.gmra.mxu0 %v253
  %v378 = vpop.f32.mrf.mxu0
  %v379 = vadd.f32 %v314, %v378
  %v380 = vpop.f32.mrf.mxu0
  %v381 = vpop.f32.mrf.mxu0
  %v382 = vadd.f32 %v317, %v381
  %v383 = vpop.f32.mrf.mxu0
  %384 = vdwg.mxu0
  %v385 = vmax.f32 %v355, 0.0
  %v386 = vmax.f32 %v358, 0.0
  %v387 = vmax.f32 %v363, 0.0
  %v388 = vmax.f32 %v366, 0.0
  %v389 = vmax.f32 %v371, 0.0
  %v390 = vmax.f32 %v374, 0.0
  %v391 = vmax.f32 %v379, 0.0
  %v392 = vmax.f32 %v382, 0.0
  %v393 = vpack.c.bf16 %v386, %v385
  %v394 = vpack.c.bf16 %v388, %v387
  %v395 = vpack.c.bf16 %v390, %v389
  %v396 = vpack.c.bf16 %v392, %v391
  %v401 = vunpack.c.l.b16 %v393
  %v402 = vunpack.c.h.b16 %v393
  %v403 = vunpack.c.l.b16 %v394
  %v404 = vunpack.c.h.b16 %v394
  %v405 = vunpack.c.l.b16 %v395
  %v406 = vunpack.c.h.b16 %v395
  %v407 = vunpack.c.l.b16 %v396
  %v408 = vunpack.c.h.b16 %v396
  %v409 = vpack.c.b16 %v401, %v401
  %v410 = vpack.c.b16 %v402, %v402
  %v411 = vpack.c.b16 %v403, %v403
  %v412 = vpack.c.b16 %v404, %v404
  %v413 = vpack.c.b16 %v405, %v405
  %v414 = vpack.c.b16 %v406, %v406
  %v415 = vpack.c.b16 %v407, %v407
  %v416 = vpack.c.b16 %v408, %v408
  %425 = vst [vmem:[%s3] sm:$0xf] %v409
  %426 = vst [vmem:[%s3 + $0x4] sm:$0xf] %v410
  %427 = vst [vmem:[%s3 + $0x8] sm:$0xf] %v411
  %428 = vst [vmem:[%s3 + $0xc] sm:$0xf] %v412
  %429 = vst [vmem:[%s3 + $0x10] sm:$0xf] %v413
  %430 = vst [vmem:[%s3 + $0x14] sm:$0xf] %v414
  %431 = vst [vmem:[%s3 + $0x18] sm:$0xf] %v415
  %432 = vst [vmem:[%s3 + $0x1c] sm:$0xf] %v416
  // Predicated region
  $region14: #{_image_metrics_impl.12} parent=0 // pred_check
    _
  $region15: #{_image_metrics_impl.12} parent=0 // pred_check_branch
    %434 = sbr.rel (0) target = $region17
  $region16: #{_image_metrics_impl.12} parent=0 // pred_region
    _
  $region17: #{_image_metrics_impl.12} parent=0 // pred_fallthru
    _
  // Predicated region
  $region18: #{_image_metrics_impl.12} parent=0 // pred_check
    _
  $region19: #{_image_metrics_impl.12} parent=0 // pred_check_branch
    %436 = sbr.rel (0) target = $region21
  $region20: #{_image_metrics_impl.12} parent=0 // pred_region
    _
  $region21: #{_image_metrics_impl.12} parent=0 // pred_fallthru
    _

// kernel: _image_metrics_impl.13
$region0: #{_image_metrics_impl.13}
  #allocation0 [shape = 'u32[]', space=smem, size = 0x4, offset = 0x4, fixed_abs, tag = 'smem constant byte address 0x4 - core index']
  #allocation1 [shape = 'u32[144,128]{1,0:T(1,128)}', space=vmem, size = 0x12000, scoped, tag = 'internal scratch']
  %s0 = inlined_call_operand.vmem [shape: bf16[4,16,128], index: 0, kind: input, shape index: {}, may-alias: {0,1}]
  %s1 = inlined_call_operand.vmem [shape: bf16[4,16,128], index: 1, kind: input, shape index: {}, may-alias: {0,1}]
  %s2 = inlined_call_operand.vmem [shape: f32[1,1,128], index: 2, kind: input, shape index: {}]
  %s3 = inlined_call_operand.vmem [shape: f32[1,2,1], index: 3, kind: output, shape index: {}]
  %s4 = sld [smem:[#allocation0]]
  $region26: #{_image_metrics_impl.13} parent=0
    _
  %s6 = ssub.s32 1, %s4
  %s7 = scalar_select 0, %s6, %s4
  // Predicated region
  $region2: #{_image_metrics_impl.13} parent=0 // pred_check
    _
  $region3: #{_image_metrics_impl.13} parent=0 // pred_check_branch
    %9 = sbr.rel (0) target = $region5
  $region4: #{_image_metrics_impl.13} parent=0 // pred_region
    %s10 = sadd.s32 0, 0
    %s11 = smul.u32 2, %s10
    %p12 = scmp.lt.s32.totalorder %s11, 1
    %s13 = scalar_select %p12, %s11, 1
    %s14 = smul.addr %s13, 4
    %s15 = scalar_lea.vmem %s0, %s14
    %s16 = sadd.s32 0, 0
    %s17 = smul.u32 2, %s16
  $region5: #{_image_metrics_impl.13} parent=0 // pred_fallthru
    _
  // Predicated region
  $region6: #{_image_metrics_impl.13} parent=0 // pred_check
    _
  $region7: #{_image_metrics_impl.13} parent=0 // pred_check_branch
    %19 = sbr.rel (0) target = $region9
  $region8: #{_image_metrics_impl.13} parent=0 // pred_region
    %s20 = sadd.s32 0, 0
    %s21 = smul.u32 2, %s20
    %p22 = scmp.lt.s32.totalorder %s21, 1
    %s23 = scalar_select %p22, %s21, 1
    %s24 = sadd.s32 %s23, 4
    %s25 = smul.addr %s24, 4
    %s26 = scalar_lea.vmem %s1, %s25
    %s27 = sadd.s32 0, 0
    %s28 = smul.u32 2, %s27
  $region9: #{_image_metrics_impl.13} parent=0 // pred_fallthru
    _
  // Predicated region
  $region10: #{_image_metrics_impl.13} parent=0 // pred_check
    _
  $region11: #{_image_metrics_impl.13} parent=0 // pred_check_branch
    %30 = sbr.rel (0) target = $region13
  $region12: #{_image_metrics_impl.13} parent=0 // pred_region
    _
  $region13: #{_image_metrics_impl.13} parent=0 // pred_fallthru
    _
  %s31 = sadd.s32 0, 0
  %s32 = smul.u32 2, %s31
  %p33 = scmp.lt.s32.totalorder %s32, 1
  %s34 = scalar_select %p33, %s32, 1
  %s35 = smul.addr %s34, 4
  %s36 = scalar_lea.vmem %s0, %s35
  %s37 = sadd.s32 0, 0
  %s38 = smul.u32 2, %s37
  %p39 = scmp.lt.s32.totalorder %s38, 1
  %s40 = scalar_select %p39, %s38, 1
  %s41 = sadd.s32 %s40, 4
  %s42 = smul.addr %s41, 4
  %s43 = scalar_lea.vmem %s1, %s42
  %s44 = sadd.s32 0, 0
  %s45 = smul.u32 2, %s44
  %p46 = scmp.lt.s32.totalorder %s45, 1
  %s47 = scalar_select %p46, %s45, 1
  %s48 = smul.addr %s47, 4
  %s49 = scalar_lea.vmem %s0, %s48
  %s50 = sadd.s32 0, 0
  %s51 = smul.u32 2, %s50
  %s52 = sadd.s32 0, 0
  %s53 = smul.u32 2, %s52
  %p54 = scmp.lt.s32.totalorder %s53, 1
  %s55 = scalar_select %p54, %s53, 1
  %s56 = sadd.s32 %s55, 4
  %s57 = smul.addr %s56, 4
  %s58 = scalar_lea.vmem %s1, %s57
  %s59 = sadd.s32 0, 0
  %s60 = smul.u32 2, %s59
  %p61 = scmp.eq.s32.totalorder 0, 0
  // Predicated region
  $region14: #{_image_metrics_impl.13} parent=0 // pred_check
    %p62 = pneg %p61
  $region15: #{_image_metrics_impl.13} parent=0 // pred_check_branch
    %64 = sbr.rel (%p62) target = $region17
  $region16: #{_image_metrics_impl.13} parent=0 // pred_region
    %vm65 = vcmask 1024
    %66 = vst.msk [vmem:[%s3] sm:$0x3] %vm65, 0.0
  $region17: #{_image_metrics_impl.13} parent=0 // pred_fallthru
    _
  %v67 = vld [vmem:[%s49] sm:$0xf]
  %v68 = vld [vmem:[%s49 + $0x4] sm:$0xf]
  %v69 = vld [vmem:[%s49 + $0x8] sm:$0xf]
  %v70 = vld [vmem:[%s49 + $0xc] sm:$0xf]
  %v71 = vunpack.c.l.bf16 %v67
  %v72 = vunpack.c.l.bf16 %v68
  %v73 = vunpack.c.l.bf16 %v69
  %v74 = vunpack.c.l.bf16 %v70
  %v75 = vld [vmem:[%s58] sm:$0xf]
  %v76 = vld [vmem:[%s58 + $0x4] sm:$0xf]
  %v77 = vld [vmem:[%s58 + $0x8] sm:$0xf]
  %v78 = vld [vmem:[%s58 + $0xc] sm:$0xf]
  %v79 = vunpack.c.l.bf16 %v75
  %v80 = vunpack.c.l.bf16 %v76
  %v81 = vunpack.c.l.bf16 %v77
  %v82 = vunpack.c.l.bf16 %v78
  %v83 = vmul.f32 %v71, %v71
  %v84 = vmul.f32 %v72, %v72
  %v85 = vmul.f32 %v73, %v73
  %v86 = vmul.f32 %v74, %v74
  %87 = vadd.xlane.f32.xlu0 %v83
  %v88 = vpop.xlane.xlu0 %87
  %89 = vadd.xlane.f32.xlu0 %v84
  %v90 = vpop.xlane.xlu0 %89
  %91 = vadd.xlane.f32.xlu0 %v85
  %v92 = vpop.xlane.xlu0 %91
  %93 = vadd.xlane.f32.xlu0 %v86
  %v94 = vpop.xlane.xlu0 %93
  %v95 = vrsqrt.pop %v88
  %v96 = vmul.f32 %v88, %v95
  %vm97 = vcmp.eq.f32.partialorder %v88, inf
  %v98 = vsel %vm97, %v88, %v96
  %vm99 = vcmp.eq.f32.partialorder %v88, 0.0
  %v100 = vand.u32 %v88, 2147483648
  %v101 = vsel %vm99, %v100, %v98
  %v102 = vrsqrt.pop %v90
  %v103 = vmul.f32 %v90, %v102
  %vm104 = vcmp.eq.f32.partialorder %v90, inf
  %v105 = vsel %vm104, %v90, %v103
  %vm106 = vcmp.eq.f32.partialorder %v90, 0.0
  %v107 = vand.u32 %v90, 2147483648
  %v108 = vsel %vm106, %v107, %v105
  %v109 = vrsqrt.pop %v92
  %v110 = vmul.f32 %v92, %v109
  %vm111 = vcmp.eq.f32.partialorder %v92, inf
  %v112 = vsel %vm111, %v92, %v110
  %vm113 = vcmp.eq.f32.partialorder %v92, 0.0
  %v114 = vand.u32 %v92, 2147483648
  %v115 = vsel %vm113, %v114, %v112
  %v116 = vrsqrt.pop %v94
  %v117 = vmul.f32 %v94, %v116
  %vm118 = vcmp.eq.f32.partialorder %v94, inf
  %v119 = vsel %vm118, %v94, %v117
  %vm120 = vcmp.eq.f32.partialorder %v94, 0.0
  %v121 = vand.u32 %v94, 2147483648
  %v122 = vsel %vm120, %v121, %v119
  %v123 = vadd.f32 %v101, 1e-10
  %v124 = vadd.f32 %v108, 1e-10
  %v125 = vadd.f32 %v115, 1e-10
  %v126 = vadd.f32 %v122, 1e-10
  %v127 = vrcp.pop %v123
  %v128 = vrcp.pop %v124
  %v129 = vrcp.pop %v125
  %v130 = vrcp.pop %v126
  %v131 = vmul.f32 %v79, %v79
  %v132 = vmul.f32 %v80, %v80
  %v133 = vmul.f32 %v81, %v81
  %v134 = vmul.f32 %v82, %v82
  %135 = vadd.xlane.f32.xlu0 %v131
  %v136 = vpop.xlane.xlu0 %135
  %137 = vadd.xlane.f32.xlu0 %v132
  %v138 = vpop.xlane.xlu0 %137
  %139 = vadd.xlane.f32.xlu0 %v133
  %v140 = vpop.xlane.xlu0 %139
  %141 = vadd.xlane.f32.xlu0 %v134
  %v142 = vpop.xlane.xlu0 %141
  %v143 = vrsqrt.pop %v136
  %v144 = vmul.f32 %v136, %v143
  %vm145 = vcmp.eq.f32.partialorder %v136, inf
  %v146 = vsel %vm145, %v136, %v144
  %vm147 = vcmp.eq.f32.partialorder %v136, 0.0
  %v148 = vand.u32 %v136, 2147483648
  %v149 = vsel %vm147, %v148, %v146
  %v150 = vrsqrt.pop %v138
  %v151 = vmul.f32 %v138, %v150
  %vm152 = vcmp.eq.f32.partialorder %v138, inf
  %v153 = vsel %vm152, %v138, %v151
  %vm154 = vcmp.eq.f32.partialorder %v138, 0.0
  %v155 = vand.u32 %v138, 2147483648
  %v156 = vsel %vm154, %v155, %v153
  %v157 = vrsqrt.pop %v140
  %v158 = vmul.f32 %v140, %v157
  %vm159 = vcmp.eq.f32.partialorder %v140, inf
  %v160 = vsel %vm159, %v140, %v158
  %vm161 = vcmp.eq.f32.partialorder %v140, 0.0
  %v162 = vand.u32 %v140, 2147483648
  %v163 = vsel %vm161, %v162, %v160
  %v164 = vrsqrt.pop %v142
  %v165 = vmul.f32 %v142, %v164
  %vm166 = vcmp.eq.f32.partialorder %v142, inf
  %v167 = vsel %vm166, %v142, %v165
  %vm168 = vcmp.eq.f32.partialorder %v142, 0.0
  %v169 = vand.u32 %v142, 2147483648
  %v170 = vsel %vm168, %v169, %v167
  %v171 = vadd.f32 %v149, 1e-10
  %v172 = vadd.f32 %v156, 1e-10
  %v173 = vadd.f32 %v163, 1e-10
  %v174 = vadd.f32 %v170, 1e-10
  %v175 = vrcp.pop %v171
  %v176 = vrcp.pop %v172
  %v177 = vrcp.pop %v173
  %v178 = vrcp.pop %v174
  %v179 = vmul.f32 %v71, %v127
  %v180 = vmul.f32 %v72, %v128
  %v181 = vmul.f32 %v73, %v129
  %v182 = vmul.f32 %v74, %v130
  %v183 = vmul.f32 %v79, %v175
  %v184 = vmul.f32 %v80, %v176
  %v185 = vmul.f32 %v81, %v177
  %v186 = vmul.f32 %v82, %v178
  %v187 = vsub.f32 %v179, %v183
  %v188 = vsub.f32 %v180, %v184
  %v189 = vsub.f32 %v181, %v185
  %v190 = vsub.f32 %v182, %v186
  %v191 = vmul.f32 %v187, %v187
  %v192 = vmul.f32 %v188, %v188
  %v193 = vmul.f32 %v189, %v189
  %v194 = vmul.f32 %v190, %v190
  %v195 = vld [vmem:[%s2] sm:$0x1]
  %v197 = vlaneseq
  %v198 = vshrl.u32 %v197, 7
  %v199 = vsub.s32 0, %v198
  %v200 = vrot.slane %v195, %v199
  %v202 = vmul.f32 %v191, %v200
  %v203 = vmul.f32 %v192, %v200
  %v204 = vmul.f32 %v193, %v200
  %v205 = vmul.f32 %v194, %v200
  %206 = vadd.xlane.f32.xlu0 %v202
  %v207 = vpop.xlane.xlu0 %206
  %208 = vadd.xlane.f32.xlu0 %v203
  %v209 = vpop.xlane.xlu0 %208
  %210 = vadd.xlane.f32.xlu0 %v204
  %v211 = vpop.xlane.xlu0 %210
  %212 = vadd.xlane.f32.xlu0 %v205
  %v213 = vpop.xlane.xlu0 %212
  %v214 = vld [vmem:[%s3] sm:$0x3]
  %v219 = vlaneseq
  %v220 = vand.u32 %v219, 127
  %v221 = vlaneseq
  %v222 = vshrl.u32 %v221, 7
  %v223 = vsub.s32 %v220, %v222
  %v224 = vrot.slane %v207, %v223
  %v225 = vadd.s32 %v220, 4294967288
  %v226 = vlaneseq
  %v227 = vshrl.u32 %v226, 7
  %v228 = vsub.s32 %v225, %v227
  %v229 = vrot.slane %v209, %v228
  %vm230 = vcmask 130112
  %v231 = vsel %vm230, %v229, %v224
  %v232 = vlaneseq
  %v233 = vshrl.u32 %v232, 7
  %v234 = vsub.s32 %v220, %v233
  %v235 = vrot.slane %v211, %v234
  %v236 = vlaneseq
  %v237 = vshrl.u32 %v236, 7
  %v238 = vsub.s32 %v225, %v237
  %v239 = vrot.slane %v213, %v238
  %v240 = vsel %vm230, %v239, %v235
  %vm241 = vcmask 1041409
  %v242 = vsel %vm241, %v240, %v231
  %vm244 = vcmask 123904
  %v245 = vsel %vm244, %v242, 0.0
  %246 = vadd.xlane.f32.xlu0 %v245
  %v247 = vpop.xlane.xlu0 %246
  %v248 = vadd.f32 %v214, %v247
  %vm249 = vcmask 1024
  %250 = vst.msk [vmem:[%s3] sm:$0x3] %vm249, %v248
  // Predicated region
  $region18: #{_image_metrics_impl.13} parent=0 // pred_check
    _
  $region19: #{_image_metrics_impl.13} parent=0 // pred_check_branch
    %252 = sbr.rel (0) target = $region21
  $region20: #{_image_metrics_impl.13} parent=0 // pred_region
    _
  $region21: #{_image_metrics_impl.13} parent=0 // pred_fallthru
    _
  // Predicated region
  $region22: #{_image_metrics_impl.13} parent=0 // pred_check
    _
  $region23: #{_image_metrics_impl.13} parent=0 // pred_check_branch
    %254 = sbr.rel (0) target = $region25
  $region24: #{_image_metrics_impl.13} parent=0 // pred_region
    _
  $region25: #{_image_metrics_impl.13} parent=0 // pred_fallthru
    _

// kernel: _image_metrics_impl.11
$region0: #{_image_metrics_impl.11}
  #allocation0 [shape = 'u32[]', space=smem, size = 0x4, offset = 0x4, fixed_abs, tag = 'smem constant byte address 0x4 - core index']
  #allocation1 [shape = 'u32[144,128]{1,0:T(1,128)}', space=vmem, size = 0x12000, scoped, tag = 'internal scratch']
  %s0 = inlined_call_operand.vmem [shape: bf16[4,64,128], index: 0, kind: input, shape index: {}, may-alias: {0,1}]
  %s1 = inlined_call_operand.vmem [shape: bf16[4,64,128], index: 1, kind: input, shape index: {}, may-alias: {0,1}]
  %s2 = inlined_call_operand.vmem [shape: f32[1,1,128], index: 2, kind: input, shape index: {}]
  %s3 = inlined_call_operand.vmem [shape: f32[1,2,1], index: 3, kind: output, shape index: {}]
  %s4 = sld [smem:[#allocation0]]
  $region26: #{_image_metrics_impl.11} parent=0
    _
  %s6 = ssub.s32 1, %s4
  %s7 = scalar_select 0, %s6, %s4
  // Predicated region
  $region2: #{_image_metrics_impl.11} parent=0 // pred_check
    _
  $region3: #{_image_metrics_impl.11} parent=0 // pred_check_branch
    %9 = sbr.rel (0) target = $region5
  $region4: #{_image_metrics_impl.11} parent=0 // pred_region
    %s10 = sadd.s32 0, 0
    %s11 = smul.u32 8, %s10
    %p12 = scmp.lt.s32.totalorder %s11, 7
    %s13 = scalar_select %p12, %s11, 7
    %s14 = smul.addr %s13, 4
    %s15 = scalar_lea.vmem %s0, %s14
    %s16 = sadd.s32 0, 0
    %s17 = smul.u32 8, %s16
  $region5: #{_image_metrics_impl.11} parent=0 // pred_fallthru
    _
  // Predicated region
  $region6: #{_image_metrics_impl.11} parent=0 // pred_check
    _
  $region7: #{_image_metrics_impl.11} parent=0 // pred_check_branch
    %19 = sbr.rel (0) target = $region9
  $region8: #{_image_metrics_impl.11} parent=0 // pred_region
    %s20 = sadd.s32 0, 0
    %s21 = smul.u32 8, %s20
    %p22 = scmp.lt.s32.totalorder %s21, 7
    %s23 = scalar_select %p22, %s21, 7
    %s24 = sadd.s32 %s23, 16
    %s25 = smul.addr %s24, 4
    %s26 = scalar_lea.vmem %s1, %s25
    %s27 = sadd.s32 0, 0
    %s28 = smul.u32 8, %s27
  $region9: #{_image_metrics_impl.11} parent=0 // pred_fallthru
    _
  // Predicated region
  $region10: #{_image_metrics_impl.11} parent=0 // pred_check
    _
  $region11: #{_image_metrics_impl.11} parent=0 // pred_check_branch
    %30 = sbr.rel (0) target = $region13
  $region12: #{_image_metrics_impl.11} parent=0 // pred_region
    _
  $region13: #{_image_metrics_impl.11} parent=0 // pred_fallthru
    _
  %s31 = sadd.s32 0, 0
  %s32 = smul.u32 8, %s31
  %p33 = scmp.lt.s32.totalorder %s32, 7
  %s34 = scalar_select %p33, %s32, 7
  %s35 = smul.addr %s34, 4
  %s36 = scalar_lea.vmem %s0, %s35
  %s37 = sadd.s32 0, 0
  %s38 = smul.u32 8, %s37
  %p39 = scmp.lt.s32.totalorder %s38, 7
  %s40 = scalar_select %p39, %s38, 7
  %s41 = sadd.s32 %s40, 16
  %s42 = smul.addr %s41, 4
  %s43 = scalar_lea.vmem %s1, %s42
  %s44 = sadd.s32 0, 0
  %s45 = smul.u32 8, %s44
  %p46 = scmp.lt.s32.totalorder %s45, 7
  %s47 = scalar_select %p46, %s45, 7
  %s48 = smul.addr %s47, 4
  %s49 = scalar_lea.vmem %s0, %s48
  %s50 = sadd.s32 0, 0
  %s51 = smul.u32 8, %s50
  %s52 = sadd.s32 0, 0
  %s53 = smul.u32 8, %s52
  %p54 = scmp.lt.s32.totalorder %s53, 7
  %s55 = scalar_select %p54, %s53, 7
  %s56 = sadd.s32 %s55, 16
  %s57 = smul.addr %s56, 4
  %s58 = scalar_lea.vmem %s1, %s57
  %s59 = sadd.s32 0, 0
  %s60 = smul.u32 8, %s59
  %p61 = scmp.eq.s32.totalorder 0, 0
  // Predicated region
  $region14: #{_image_metrics_impl.11} parent=0 // pred_check
    %p62 = pneg %p61
  $region15: #{_image_metrics_impl.11} parent=0 // pred_check_branch
    %64 = sbr.rel (%p62) target = $region17
  $region16: #{_image_metrics_impl.11} parent=0 // pred_region
    %vm65 = vcmask 1024
    %66 = vst.msk [vmem:[%s3] sm:$0x3] %vm65, 0.0
  $region17: #{_image_metrics_impl.11} parent=0 // pred_fallthru
    _
  %v67 = vld [vmem:[%s49] sm:$0xf]
  %v68 = vld [vmem:[%s49 + $0x4] sm:$0xf]
  %v69 = vld [vmem:[%s49 + $0x8] sm:$0xf]
  %v70 = vld [vmem:[%s49 + $0xc] sm:$0xf]
  %v71 = vld [vmem:[%s49 + $0x10] sm:$0xf]
  %v72 = vld [vmem:[%s49 + $0x14] sm:$0xf]
  %v73 = vld [vmem:[%s49 + $0x18] sm:$0xf]
  %v74 = vld [vmem:[%s49 + $0x1c] sm:$0xf]
  %v75 = vld [vmem:[%s49 + $0x20] sm:$0xf]
  %v76 = vld [vmem:[%s49 + $0x24] sm:$0xf]
  %v77 = vld [vmem:[%s49 + $0x28] sm:$0xf]
  %v78 = vld [vmem:[%s49 + $0x2c] sm:$0xf]
  %v79 = vld [vmem:[%s49 + $0x30] sm:$0xf]
  %v80 = vld [vmem:[%s49 + $0x34] sm:$0xf]
  %v81 = vld [vmem:[%s49 + $0x38] sm:$0xf]
  %v82 = vld [vmem:[%s49 + $0x3c] sm:$0xf]
  %v83 = vunpack.c.l.bf16 %v67
  %v84 = vunpack.c.l.bf16 %v68
  %v85 = vunpack.c.l.bf16 %v69
  %v86 = vunpack.c.l.bf16 %v70
  %v87 = vunpack.c.l.bf16 %v71
  %v88 = vunpack.c.l.bf16 %v72
  %v89 = vunpack.c.l.bf16 %v73
  %v90 = vunpack.c.l.bf16 %v74
  %v91 = vunpack.c.l.bf16 %v75
  %v92 = vunpack.c.l.bf16 %v76
  %v93 = vunpack.c.l.bf16 %v77
  %v94 = vunpack.c.l.bf16 %v78
  %v95 = vunpack.c.l.bf16 %v79
  %v96 = vunpack.c.l.bf16 %v80
  %v97 = vunpack.c.l.bf16 %v81
  %v98 = vunpack.c.l.bf16 %v82
  %v99 = vld [vmem:[%s58] sm:$0xf]
  %v100 = vld [vmem:[%s58 + $0x4] sm:$0xf]
  %v101 = vld [vmem:[%s58 + $0x8] sm:$0xf]
  %v102 = vld [vmem:[%s58 + $0xc] sm:$0xf]
  %v103 = vld [vmem:[%s58 + $0x10] sm:$0xf]
  %v104 = vld [vmem:[%s58 + $0x14] sm:$0xf]
  %v105 = vld [vmem:[%s58 + $0x18] sm:$0xf]
  %v106 = vld [vmem:[%s58 + $0x1c] sm:$0xf]
  %v107 = vld [vmem:[%s58 + $0x20] sm:$0xf]
  %v108 = vld [vmem:[%s58 + $0x24] sm:$0xf]
  %v109 = vld [vmem:[%s58 + $0x28] sm:$0xf]
  %v110 = vld [vmem:[%s58 + $0x2c] sm:$0xf]
  %v111 = vld [vmem:[%s58 + $0x30] sm:$0xf]
  %v112 = vld [vmem:[%s58 + $0x34] sm:$0xf]
  %v113 = vld [vmem:[%s58 + $0x38] sm:$0xf]
  %v114 = vld [vmem:[%s58 + $0x3c] sm:$0xf]
  %v115 = vunpack.c.l.bf16 %v99
  %v116 = vunpack.c.l.bf16 %v100
  %v117 = vunpack.c.l.bf16 %v101
  %v118 = vunpack.c.l.bf16 %v102
  %v119 = vunpack.c.l.bf16 %v103
  %v120 = vunpack.c.l.bf16 %v104
  %v121 = vunpack.c.l.bf16 %v105
  %v122 = vunpack.c.l.bf16 %v106
  %v123 = vunpack.c.l.bf16 %v107
  %v124 = vunpack.c.l.bf16 %v108
  %v125 = vunpack.c.l.bf16 %v109
  %v126 = vunpack.c.l.bf16 %v110
  %v127 = vunpack.c.l.bf16 %v111
  %v128 = vunpack.c.l.bf16 %v112
  %v129 = vunpack.c.l.bf16 %v113
  %v130 = vunpack.c.l.bf16 %v114
  %v131 = vmul.f32 %v83, %v83
  %v132 = vmul.f32 %v84, %v84
  %v133 = vmul.f32 %v85, %v85
  %v134 = vmul.f32 %v86, %v86
  %v135 = vmul.f32 %v87, %v87
  %v136 = vmul.f32 %v88, %v88
  %v137 = vmul.f32 %v89, %v89
  %v138 = vmul.f32 %v90, %v90
  %v139 = vmul.f32 %v91, %v91
  %v140 = vmul.f32 %v92, %v92
  %v141 = vmul.f32 %v93, %v93
  %v142 = vmul.f32 %v94, %v94
  %v143 = vmul.f32 %v95, %v95
  %v144 = vmul.f32 %v96, %v96
  %v145 = vmul.f32 %v97, %v97
  %v146 = vmul.f32 %v98, %v98
  %147 = vadd.xlane.f32.xlu0 %v131
  %v148 = vpop.xlane.xlu0 %147
  %149 = vadd.xlane.f32.xlu0 %v132
  %v150 = vpop.xlane.xlu0 %149
  %151 = vadd.xlane.f32.xlu0 %v133
  %v152 = vpop.xlane.xlu0 %151
  %153 = vadd.xlane.f32.xlu0 %v134
  %v154 = vpop.xlane.xlu0 %153
  %155 = vadd.xlane.f32.xlu0 %v135
  %v156 = vpop.xlane.xlu0 %155
  %157 = vadd.xlane.f32.xlu0 %v136
  %v158 = vpop.xlane.xlu0 %157
  %159 = vadd.xlane.f32.xlu0 %v137
  %v160 = vpop.xlane.xlu0 %159
  %161 = vadd.xlane.f32.xlu0 %v138
  %v162 = vpop.xlane.xlu0 %161
  %163 = vadd.xlane.f32.xlu0 %v139
  %v164 = vpop.xlane.xlu0 %163
  %165 = vadd.xlane.f32.xlu0 %v140
  %v166 = vpop.xlane.xlu0 %165
  %167 = vadd.xlane.f32.xlu0 %v141
  %v168 = vpop.xlane.xlu0 %167
  %169 = vadd.xlane.f32.xlu0 %v142
  %v170 = vpop.xlane.xlu0 %169
  %171 = vadd.xlane.f32.xlu0 %v143
  %v172 = vpop.xlane.xlu0 %171
  %173 = vadd.xlane.f32.xlu0 %v144
  %v174 = vpop.xlane.xlu0 %173
  %175 = vadd.xlane.f32.xlu0 %v145
  %v176 = vpop.xlane.xlu0 %175
  %177 = vadd.xlane.f32.xlu0 %v146
  %v178 = vpop.xlane.xlu0 %177
  %v179 = vrsqrt.pop %v148
  %v180 = vmul.f32 %v148, %v179
  %vm181 = vcmp.eq.f32.partialorder %v148, inf
  %v182 = vsel %vm181, %v148, %v180
  %vm183 = vcmp.eq.f32.partialorder %v148, 0.0
  %v184 = vand.u32 %v148, 2147483648
  %v185 = vsel %vm183, %v184, %v182
  %v186 = vrsqrt.pop %v150
  %v187 = vmul.f32 %v150, %v186
  %vm188 = vcmp.eq.f32.partialorder %v150, inf
  %v189 = vsel %vm188, %v150, %v187
  %vm190 = vcmp.eq.f32.partialorder %v150, 0.0
  %v191 = vand.u32 %v150, 2147483648
  %v192 = vsel %vm190, %v191, %v189
  %v193 = vrsqrt.pop %v152
  %v194 = vmul.f32 %v152, %v193
  %vm195 = vcmp.eq.f32.partialorder %v152, inf
  %v196 = vsel %vm195, %v152, %v194
  %vm197 = vcmp.eq.f32.partialorder %v152, 0.0
  %v198 = vand.u32 %v152, 2147483648
  %v199 = vsel %vm197, %v198, %v196
  %v200 = vrsqrt.pop %v154
  %v201 = vmul.f32 %v154, %v200
  %vm202 = vcmp.eq.f32.partialorder %v154, inf
  %v203 = vsel %vm202, %v154, %v201
  %vm204 = vcmp.eq.f32.partialorder %v154, 0.0
  %v205 = vand.u32 %v154, 2147483648
  %v206 = vsel %vm204, %v205, %v203
  %v207 = vrsqrt.pop %v156
  %v208 = vmul.f32 %v156, %v207
  %vm209 = vcmp.eq.f32.partialorder %v156, inf
  %v210 = vsel %vm209, %v156, %v208
  %vm211 = vcmp.eq.f32.partialorder %v156, 0.0
  %v212 = vand.u32 %v156, 2147483648
  %v213 = vsel %vm211, %v212, %v210
  %v214 = vrsqrt.pop %v158
  %v215 = vmul.f32 %v158, %v214
  %vm216 = vcmp.eq.f32.partialorder %v158, inf
  %v217 = vsel %vm216, %v158, %v215
  %vm218 = vcmp.eq.f32.partialorder %v158, 0.0
  %v219 = vand.u32 %v158, 2147483648
  %v220 = vsel %vm218, %v219, %v217
  %v221 = vrsqrt.pop %v160
  %v222 = vmul.f32 %v160, %v221
  %vm223 = vcmp.eq.f32.partialorder %v160, inf
  %v224 = vsel %vm223, %v160, %v222
  %vm225 = vcmp.eq.f32.partialorder %v160, 0.0
  %v226 = vand.u32 %v160, 2147483648
  %v227 = vsel %vm225, %v226, %v224
  %v228 = vrsqrt.pop %v162
  %v229 = vmul.f32 %v162, %v228
  %vm230 = vcmp.eq.f32.partialorder %v162, inf
  %v231 = vsel %vm230, %v162, %v229
  %vm232 = vcmp.eq.f32.partialorder %v162, 0.0
  %v233 = vand.u32 %v162, 2147483648
  %v234 = vsel %vm232, %v233, %v231
  %v235 = vrsqrt.pop %v164
  %v236 = vmul.f32 %v164, %v235
  %vm237 = vcmp.eq.f32.partialorder %v164, inf
  %v238 = vsel %vm237, %v164, %v236
  %vm239 = vcmp.eq.f32.partialorder %v164, 0.0
  %v240 = vand.u32 %v164, 2147483648
  %v241 = vsel %vm239, %v240, %v238
  %v242 = vrsqrt.pop %v166
  %v243 = vmul.f32 %v166, %v242
  %vm244 = vcmp.eq.f32.partialorder %v166, inf
  %v245 = vsel %vm244, %v166, %v243
  %vm246 = vcmp.eq.f32.partialorder %v166, 0.0
  %v247 = vand.u32 %v166, 2147483648
  %v248 = vsel %vm246, %v247, %v245
  %v249 = vrsqrt.pop %v168
  %v250 = vmul.f32 %v168, %v249
  %vm251 = vcmp.eq.f32.partialorder %v168, inf
  %v252 = vsel %vm251, %v168, %v250
  %vm253 = vcmp.eq.f32.partialorder %v168, 0.0
  %v254 = vand.u32 %v168, 2147483648
  %v255 = vsel %vm253, %v254, %v252
  %v256 = vrsqrt.pop %v170
  %v257 = vmul.f32 %v170, %v256
  %vm258 = vcmp.eq.f32.partialorder %v170, inf
  %v259 = vsel %vm258, %v170, %v257
  %vm260 = vcmp.eq.f32.partialorder %v170, 0.0
  %v261 = vand.u32 %v170, 2147483648
  %v262 = vsel %vm260, %v261, %v259
  %v263 = vrsqrt.pop %v172
  %v264 = vmul.f32 %v172, %v263
  %vm265 = vcmp.eq.f32.partialorder %v172, inf
  %v266 = vsel %vm265, %v172, %v264
  %vm267 = vcmp.eq.f32.partialorder %v172, 0.0
  %v268 = vand.u32 %v172, 2147483648
  %v269 = vsel %vm267, %v268, %v266
  %v270 = vrsqrt.pop %v174
  %v271 = vmul.f32 %v174, %v270
  %vm272 = vcmp.eq.f32.partialorder %v174, inf
  %v273 = vsel %vm272, %v174, %v271
  %vm274 = vcmp.eq.f32.partialorder %v174, 0.0
  %v275 = vand.u32 %v174, 2147483648
  %v276 = vsel %vm274, %v275, %v273
  %v277 = vrsqrt.pop %v176
  %v278 = vmul.f32 %v176, %v277
  %vm279 = vcmp.eq.f32.partialorder %v176, inf
  %v280 = vsel %vm279, %v176, %v278
  %vm281 = vcmp.eq.f32.partialorder %v176, 0.0
  %v282 = vand.u32 %v176, 2147483648
  %v283 = vsel %vm281, %v282, %v280
  %v284 = vrsqrt.pop %v178
  %v285 = vmul.f32 %v178, %v284
  %vm286 = vcmp.eq.f32.partialorder %v178, inf
  %v287 = vsel %vm286, %v178, %v285
  %vm288 = vcmp.eq.f32.partialorder %v178, 0.0
  %v289 = vand.u32 %v178, 2147483648
  %v290 = vsel %vm288, %v289, %v287
  %v291 = vadd.f32 %v185, 1e-10
  %v292 = vadd.f32 %v192, 1e-10
  %v293 = vadd.f32 %v199, 1e-10
  %v294 = vadd.f32 %v206, 1e-10
  %v295 = vadd.f32 %v213, 1e-10
  %v296 = vadd.f32 %v220, 1e-10
  %v297 = vadd.f32 %v227, 1e-10
  %v298 = vadd.f32 %v234, 1e-10
  %v299 = vadd.f32 %v241, 1e-10
  %v300 = vadd.f32 %v248, 1e-10
  %v301 = vadd.f32 %v255, 1e-10
  %v302 = vadd.f32 %v262, 1e-10
  %v303 = vadd.f32 %v269, 1e-10
  %v304 = vadd.f32 %v276, 1e-10
  %v305 = vadd.f32 %v283, 1e-10
  %v306 = vadd.f32 %v290, 1e-10
  %v307 = vrcp.pop %v291
  %v308 = vrcp.pop %v292
  %v309 = vrcp.pop %v293
  %v310 = vrcp.pop %v294
  %v311 = vrcp.pop %v295
  %v312 = vrcp.pop %v296
  %v313 = vrcp.pop %v297
  %v314 = vrcp.pop %v298
  %v315 = vrcp.pop %v299
  %v316 = vrcp.pop %v300
  %v317 = vrcp.pop %v301
  %v318 = vrcp.pop %v302
  %v319 = vrcp.pop %v303
  %v320 = vrcp.pop %v304
  %v321 = vrcp.pop %v305
  %v322 = vrcp.pop %v306
  %v323 = vmul.f32 %v115, %v115
  %v324 = vmul.f32 %v116, %v116
  %v325 = vmul.f32 %v117, %v117
  %v326 = vmul.f32 %v118, %v118
  %v327 = vmul.f32 %v119, %v119
  %v328 = vmul.f32 %v120, %v120
  %v329 = vmul.f32 %v121, %v121
  %v330 = vmul.f32 %v122, %v122
  %v331 = vmul.f32 %v123, %v123
  %v332 = vmul.f32 %v124, %v124
  %v333 = vmul.f32 %v125, %v125
  %v334 = vmul.f32 %v126, %v126
  %v335 = vmul.f32 %v127, %v127
  %v336 = vmul.f32 %v128, %v128
  %v337 = vmul.f32 %v129, %v129
  %v338 = vmul.f32 %v130, %v130
  %339 = vadd.xlane.f32.xlu0 %v323
  %v340 = vpop.xlane.xlu0 %339
  %341 = vadd.xlane.f32.xlu0 %v324
  %v342 = vpop.xlane.xlu0 %341
  %343 = vadd.xlane.f32.xlu0 %v325
  %v344 = vpop.xlane.xlu0 %343
  %345 = vadd.xlane.f32.xlu0 %v326
  %v346 = vpop.xlane.xlu0 %345
  %347 = vadd.xlane.f32.xlu0 %v327
  %v348 = vpop.xlane.xlu0 %347
  %349 = vadd.xlane.f32.xlu0 %v328
  %v350 = vpop.xlane.xlu0 %349
  %351 = vadd.xlane.f32.xlu0 %v329
  %v352 = vpop.xlane.xlu0 %351
  %353 = vadd.xlane.f32.xlu0 %v330
  %v354 = vpop.xlane.xlu0 %353
  %355 = vadd.xlane.f32.xlu0 %v331
  %v356 = vpop.xlane.xlu0 %355
  %357 = vadd.xlane.f32.xlu0 %v332
  %v358 = vpop.xlane.xlu0 %357
  %359 = vadd.xlane.f32.xlu0 %v333
  %v360 = vpop.xlane.xlu0 %359
  %361 = vadd.xlane.f32.xlu0 %v334
  %v362 = vpop.xlane.xlu0 %361
  %363 = vadd.xlane.f32.xlu0 %v335
  %v364 = vpop.xlane.xlu0 %363
  %365 = vadd.xlane.f32.xlu0 %v336
  %v366 = vpop.xlane.xlu0 %365
  %367 = vadd.xlane.f32.xlu0 %v337
  %v368 = vpop.xlane.xlu0 %367
  %369 = vadd.xlane.f32.xlu0 %v338
  %v370 = vpop.xlane.xlu0 %369
  %v371 = vrsqrt.pop %v340
  %v372 = vmul.f32 %v340, %v371
  %vm373 = vcmp.eq.f32.partialorder %v340, inf
  %v374 = vsel %vm373, %v340, %v372
  %vm375 = vcmp.eq.f32.partialorder %v340, 0.0
  %v376 = vand.u32 %v340, 2147483648
  %v377 = vsel %vm375, %v376, %v374
  %v378 = vrsqrt.pop %v342
  %v379 = vmul.f32 %v342, %v378
  %vm380 = vcmp.eq.f32.partialorder %v342, inf
  %v381 = vsel %vm380, %v342, %v379
  %vm382 = vcmp.eq.f32.partialorder %v342, 0.0
  %v383 = vand.u32 %v342, 2147483648
  %v384 = vsel %vm382, %v383, %v381
  %v385 = vrsqrt.pop %v344
  %v386 = vmul.f32 %v344, %v385
  %vm387 = vcmp.eq.f32.partialorder %v344, inf
  %v388 = vsel %vm387, %v344, %v386
  %vm389 = vcmp.eq.f32.partialorder %v344, 0.0
  %v390 = vand.u32 %v344, 2147483648
  %v391 = vsel %vm389, %v390, %v388
  %v392 = vrsqrt.pop %v346
  %v393 = vmul.f32 %v346, %v392
  %vm394 = vcmp.eq.f32.partialorder %v346, inf
  %v395 = vsel %vm394, %v346, %v393
  %vm396 = vcmp.eq.f32.partialorder %v346, 0.0
  %v397 = vand.u32 %v346, 2147483648
  %v398 = vsel %vm396, %v397, %v395
  %v399 = vrsqrt.pop %v348
  %v400 = vmul.f32 %v348, %v399
  %vm401 = vcmp.eq.f32.partialorder %v348, inf
  %v402 = vsel %vm401, %v348, %v400
  %vm403 = vcmp.eq.f32.partialorder %v348, 0.0
  %v404 = vand.u32 %v348, 2147483648
  %v405 = vsel %vm403, %v404, %v402
  %v406 = vrsqrt.pop %v350
  %v407 = vmul.f32 %v350, %v406
  %vm408 = vcmp.eq.f32.partialorder %v350, inf
  %v409 = vsel %vm408, %v350, %v407
  %vm410 = vcmp.eq.f32.partialorder %v350, 0.0
  %v411 = vand.u32 %v350, 2147483648
  %v412 = vsel %vm410, %v411, %v409
  %v413 = vrsqrt.pop %v352
  %v414 = vmul.f32 %v352, %v413
  %vm415 = vcmp.eq.f32.partialorder %v352, inf
  %v416 = vsel %vm415, %v352, %v414
  %vm417 = vcmp.eq.f32.partialorder %v352, 0.0
  %v418 = vand.u32 %v352, 2147483648
  %v419 = vsel %vm417, %v418, %v416
  %v420 = vrsqrt.pop %v354
  %v421 = vmul.f32 %v354, %v420
  %vm422 = vcmp.eq.f32.partialorder %v354, inf
  %v423 = vsel %vm422, %v354, %v421
  %vm424 = vcmp.eq.f32.partialorder %v354, 0.0
  %v425 = vand.u32 %v354, 2147483648
  %v426 = vsel %vm424, %v425, %v423
  %v427 = vrsqrt.pop %v356
  %v428 = vmul.f32 %v356, %v427
  %vm429 = vcmp.eq.f32.partialorder %v356, inf
  %v430 = vsel %vm429, %v356, %v428
  %vm431 = vcmp.eq.f32.partialorder %v356, 0.0
  %v432 = vand.u32 %v356, 2147483648
  %v433 = vsel %vm431, %v432, %v430
  %v434 = vrsqrt.pop %v358
  %v435 = vmul.f32 %v358, %v434
  %vm436 = vcmp.eq.f32.partialorder %v358, inf
  %v437 = vsel %vm436, %v358, %v435
  %vm438 = vcmp.eq.f32.partialorder %v358, 0.0
  %v439 = vand.u32 %v358, 2147483648
  %v440 = vsel %vm438, %v439, %v437
  %v441 = vrsqrt.pop %v360
  %v442 = vmul.f32 %v360, %v441
  %vm443 = vcmp.eq.f32.partialorder %v360, inf
  %v444 = vsel %vm443, %v360, %v442
  %vm445 = vcmp.eq.f32.partialorder %v360, 0.0
  %v446 = vand.u32 %v360, 2147483648
  %v447 = vsel %vm445, %v446, %v444
  %v448 = vrsqrt.pop %v362
  %v449 = vmul.f32 %v362, %v448
  %vm450 = vcmp.eq.f32.partialorder %v362, inf
  %v451 = vsel %vm450, %v362, %v449
  %vm452 = vcmp.eq.f32.partialorder %v362, 0.0
  %v453 = vand.u32 %v362, 2147483648
  %v454 = vsel %vm452, %v453, %v451
  %v455 = vrsqrt.pop %v364
  %v456 = vmul.f32 %v364, %v455
  %vm457 = vcmp.eq.f32.partialorder %v364, inf
  %v458 = vsel %vm457, %v364, %v456
  %vm459 = vcmp.eq.f32.partialorder %v364, 0.0
  %v460 = vand.u32 %v364, 2147483648
  %v461 = vsel %vm459, %v460, %v458
  %v462 = vrsqrt.pop %v366
  %v463 = vmul.f32 %v366, %v462
  %vm464 = vcmp.eq.f32.partialorder %v366, inf
  %v465 = vsel %vm464, %v366, %v463
  %vm466 = vcmp.eq.f32.partialorder %v366, 0.0
  %v467 = vand.u32 %v366, 2147483648
  %v468 = vsel %vm466, %v467, %v465
  %v469 = vrsqrt.pop %v368
  %v470 = vmul.f32 %v368, %v469
  %vm471 = vcmp.eq.f32.partialorder %v368, inf
  %v472 = vsel %vm471, %v368, %v470
  %vm473 = vcmp.eq.f32.partialorder %v368, 0.0
  %v474 = vand.u32 %v368, 2147483648
  %v475 = vsel %vm473, %v474, %v472
  %v476 = vrsqrt.pop %v370
  %v477 = vmul.f32 %v370, %v476
  %vm478 = vcmp.eq.f32.partialorder %v370, inf
  %v479 = vsel %vm478, %v370, %v477
  %vm480 = vcmp.eq.f32.partialorder %v370, 0.0
  %v481 = vand.u32 %v370, 2147483648
  %v482 = vsel %vm480, %v481, %v479
  %v483 = vadd.f32 %v377, 1e-10
  %v484 = vadd.f32 %v384, 1e-10
  %v485 = vadd.f32 %v391, 1e-10
  %v486 = vadd.f32 %v398, 1e-10
  %v487 = vadd.f32 %v405, 1e-10
  %v488 = vadd.f32 %v412, 1e-10
  %v489 = vadd.f32 %v419, 1e-10
  %v490 = vadd.f32 %v426, 1e-10
  %v491 = vadd.f32 %v433, 1e-10
  %v492 = vadd.f32 %v440, 1e-10
  %v493 = vadd.f32 %v447, 1e-10
  %v494 = vadd.f32 %v454, 1e-10
  %v495 = vadd.f32 %v461, 1e-10
  %v496 = vadd.f32 %v468, 1e-10
  %v497 = vadd.f32 %v475, 1e-10
  %v498 = vadd.f32 %v482, 1e-10
  %v499 = vrcp.pop %v483
  %v500 = vrcp.pop %v484
  %v501 = vrcp.pop %v485
  %v502 = vrcp.pop %v486
  %v503 = vrcp.pop %v487
  %v504 = vrcp.pop %v488
  %v505 = vrcp.pop %v489
  %v506 = vrcp.pop %v490
  %v507 = vrcp.pop %v491
  %v508 = vrcp.pop %v492
  %v509 = vrcp.pop %v493
  %v510 = vrcp.pop %v494
  %v511 = vrcp.pop %v495
  %v512 = vrcp.pop %v496
  %v513 = vrcp.pop %v497
  %v514 = vrcp.pop %v498
  %v515 = vmul.f32 %v83, %v307
  %v516 = vmul.f32 %v84, %v308
  %v517 = vmul.f32 %v85, %v309
  %v518 = vmul.f32 %v86, %v310
  %v519 = vmul.f32 %v87, %v311
  %v520 = vmul.f32 %v88, %v312
  %v521 = vmul.f32 %v89, %v313
  %v522 = vmul.f32 %v90, %v314
  %v523 = vmul.f32 %v91, %v315
  %v524 = vmul.f32 %v92, %v316
  %v525 = vmul.f32 %v93, %v317
  %v526 = vmul.f32 %v94, %v318
  %v527 = vmul.f32 %v95, %v319
  %v528 = vmul.f32 %v96, %v320
  %v529 = vmul.f32 %v97, %v321
  %v530 = vmul.f32 %v98, %v322
  %v531 = vmul.f32 %v115, %v499
  %v532 = vmul.f32 %v116, %v500
  %v533 = vmul.f32 %v117, %v501
  %v534 = vmul.f32 %v118, %v502
  %v535 = vmul.f32 %v119, %v503
  %v536 = vmul.f32 %v120, %v504
  %v537 = vmul.f32 %v121, %v505
  %v538 = vmul.f32 %v122, %v506
  %v539 = vmul.f32 %v123, %v507
  %v540 = vmul.f32 %v124, %v508
  %v541 = vmul.f32 %v125, %v509
  %v542 = vmul.f32 %v126, %v510
  %v543 = vmul.f32 %v127, %v511
  %v544 = vmul.f32 %v128, %v512
  %v545 = vmul.f32 %v129, %v513
  %v546 = vmul.f32 %v130, %v514
  %v547 = vsub.f32 %v515, %v531
  %v548 = vsub.f32 %v516, %v532
  %v549 = vsub.f32 %v517, %v533
  %v550 = vsub.f32 %v518, %v534
  %v551 = vsub.f32 %v519, %v535
  %v552 = vsub.f32 %v520, %v536
  %v553 = vsub.f32 %v521, %v537
  %v554 = vsub.f32 %v522, %v538
  %v555 = vsub.f32 %v523, %v539
  %v556 = vsub.f32 %v524, %v540
  %v557 = vsub.f32 %v525, %v541
  %v558 = vsub.f32 %v526, %v542
  %v559 = vsub.f32 %v527, %v543
  %v560 = vsub.f32 %v528, %v544
  %v561 = vsub.f32 %v529, %v545
  %v562 = vsub.f32 %v530, %v546
  %v563 = vmul.f32 %v547, %v547
  %v564 = vmul.f32 %v548, %v548
  %v565 = vmul.f32 %v549, %v549
  %v566 = vmul.f32 %v550, %v550
  %v567 = vmul.f32 %v551, %v551
  %v568 = vmul.f32 %v552, %v552
  %v569 = vmul.f32 %v553, %v553
  %v570 = vmul.f32 %v554, %v554
  %v571 = vmul.f32 %v555, %v555
  %v572 = vmul.f32 %v556, %v556
  %v573 = vmul.f32 %v557, %v557
  %v574 = vmul.f32 %v558, %v558
  %v575 = vmul.f32 %v559, %v559
  %v576 = vmul.f32 %v560, %v560
  %v577 = vmul.f32 %v561, %v561
  %v578 = vmul.f32 %v562, %v562
  %v579 = vld [vmem:[%s2] sm:$0x1]
  %v581 = vlaneseq
  %v582 = vshrl.u32 %v581, 7
  %v583 = vsub.s32 0, %v582
  %v584 = vrot.slane %v579, %v583
  %v586 = vmul.f32 %v563, %v584
  %v587 = vmul.f32 %v564, %v584
  %v588 = vmul.f32 %v565, %v584
  %v589 = vmul.f32 %v566, %v584
  %v590 = vmul.f32 %v567, %v584
  %v591 = vmul.f32 %v568, %v584
  %v592 = vmul.f32 %v569, %v584
  %v593 = vmul.f32 %v570, %v584
  %v594 = vmul.f32 %v571, %v584
  %v595 = vmul.f32 %v572, %v584
  %v596 = vmul.f32 %v573, %v584
  %v597 = vmul.f32 %v574, %v584
  %v598 = vmul.f32 %v575, %v584
  %v599 = vmul.f32 %v576, %v584
  %v600 = vmul.f32 %v577, %v584
  %v601 = vmul.f32 %v578, %v584
  %602 = vadd.xlane.f32.xlu0 %v586
  %v603 = vpop.xlane.xlu0 %602
  %604 = vadd.xlane.f32.xlu0 %v587
  %v605 = vpop.xlane.xlu0 %604
  %606 = vadd.xlane.f32.xlu0 %v588
  %v607 = vpop.xlane.xlu0 %606
  %608 = vadd.xlane.f32.xlu0 %v589
  %v609 = vpop.xlane.xlu0 %608
  %610 = vadd.xlane.f32.xlu0 %v590
  %v611 = vpop.xlane.xlu0 %610
  %612 = vadd.xlane.f32.xlu0 %v591
  %v613 = vpop.xlane.xlu0 %612
  %614 = vadd.xlane.f32.xlu0 %v592
  %v615 = vpop.xlane.xlu0 %614
  %616 = vadd.xlane.f32.xlu0 %v593
  %v617 = vpop.xlane.xlu0 %616
  %618 = vadd.xlane.f32.xlu0 %v594
  %v619 = vpop.xlane.xlu0 %618
  %620 = vadd.xlane.f32.xlu0 %v595
  %v621 = vpop.xlane.xlu0 %620
  %622 = vadd.xlane.f32.xlu0 %v596
  %v623 = vpop.xlane.xlu0 %622
  %624 = vadd.xlane.f32.xlu0 %v597
  %v625 = vpop.xlane.xlu0 %624
  %626 = vadd.xlane.f32.xlu0 %v598
  %v627 = vpop.xlane.xlu0 %626
  %628 = vadd.xlane.f32.xlu0 %v599
  %v629 = vpop.xlane.xlu0 %628
  %630 = vadd.xlane.f32.xlu0 %v600
  %v631 = vpop.xlane.xlu0 %630
  %632 = vadd.xlane.f32.xlu0 %v601
  %v633 = vpop.xlane.xlu0 %632
  %v634 = vld [vmem:[%s3] sm:$0x3]
  %v651 = vlaneseq
  %v652 = vand.u32 %v651, 127
  %v653 = vlaneseq
  %v654 = vshrl.u32 %v653, 7
  %v655 = vsub.s32 %v652, %v654
  %v656 = vrot.slane %v603, %v655
  %v657 = vadd.s32 %v652, 4294967288
  %v658 = vlaneseq
  %v659 = vshrl.u32 %v658, 7
  %v660 = vsub.s32 %v657, %v659
  %v661 = vrot.slane %v605, %v660
  %vm662 = vcmask 130112
  %v663 = vsel %vm662, %v661, %v656
  %v664 = vadd.s32 %v652, 4294967280
  %v665 = vlaneseq
  %v666 = vshrl.u32 %v665, 7
  %v667 = vsub.s32 %v664, %v666
  %v668 = vrot.slane %v607, %v667
  %vm669 = vcmask 195712
  %v670 = vsel %vm669, %v668, %v663
  %v671 = vadd.s32 %v652, 4294967272
  %v672 = vlaneseq
  %v673 = vshrl.u32 %v672, 7
  %v674 = vsub.s32 %v671, %v673
  %v675 = vrot.slane %v609, %v674
  %vm676 = vcmask 261312
  %v677 = vsel %vm676, %v675, %v670
  %v678 = vadd.s32 %v652, 4294967264
  %v679 = vlaneseq
  %v680 = vshrl.u32 %v679, 7
  %v681 = vsub.s32 %v678, %v680
  %v682 = vrot.slane %v611, %v681
  %vm683 = vcmask 326912
  %v684 = vsel %vm683, %v682, %v677
  %v685 = vadd.s32 %v652, 4294967256
  %v686 = vlaneseq
  %v687 = vshrl.u32 %v686, 7
  %v688 = vsub.s32 %v685, %v687
  %v689 = vrot.slane %v613, %v688
  %vm690 = vcmask 392512
  %v691 = vsel %vm690, %v689, %v684
  %v692 = vadd.s32 %v652, 4294967248
  %v693 = vlaneseq
  %v694 = vshrl.u32 %v693, 7
  %v695 = vsub.s32 %v692, %v694
  %v696 = vrot.slane %v615, %v695
  %vm697 = vcmask 458112
  %v698 = vsel %vm697, %v696, %v691
  %v699 = vadd.s32 %v652, 4294967240
  %v700 = vlaneseq
  %v701 = vshrl.u32 %v700, 7
  %v702 = vsub.s32 %v699, %v701
  %v703 = vrot.slane %v617, %v702
  %vm704 = vcmask 523712
  %v705 = vsel %vm704, %v703, %v698
  %v706 = vlaneseq
  %v707 = vshrl.u32 %v706, 7
  %v708 = vsub.s32 %v652, %v707
  %v709 = vrot.slane %v619, %v708
  %v710 = vlaneseq
  %v711 = vshrl.u32 %v710, 7
  %v712 = vsub.s32 %v657, %v711
  %v713 = vrot.slane %v621, %v712
  %v714 = vsel %vm662, %v713, %v709
  %v715 = vlaneseq
  %v716 = vshrl.u32 %v715, 7
  %v717 = vsub.s32 %v664, %v716
  %v718 = vrot.slane %v623, %v717
  %v719 = vsel %vm669, %v718, %v714
  %v720 = vlaneseq
  %v721 = vshrl.u32 %v720, 7
  %v722 = vsub.s32 %v671, %v721
  %v723 = vrot.slane %v625, %v722
  %v724 = vsel %vm676, %v723, %v719
  %v725 = vlaneseq
  %v726 = vshrl.u32 %v725, 7
  %v727 = vsub.s32 %v678, %v726
  %v728 = vrot.slane %v627, %v727
  %v729 = vsel %vm683, %v728, %v724
  %v730 = vlaneseq
  %v731 = vshrl.u32 %v730, 7
  %v732 = vsub.s32 %v685, %v731
  %v733 = vrot.slane %v629, %v732
  %v734 = vsel %vm690, %v733, %v729
  %v735 = vlaneseq
  %v736 = vshrl.u32 %v735, 7
  %v737 = vsub.s32 %v692, %v736
  %v738 = vrot.slane %v631, %v737
  %v739 = vsel %vm697, %v738, %v734
  %v740 = vlaneseq
  %v741 = vshrl.u32 %v740, 7
  %v742 = vsub.s32 %v699, %v741
  %v743 = vrot.slane %v633, %v742
  %v744 = vsel %vm704, %v743, %v739
  %vm745 = vcmask 1041409
  %v746 = vsel %vm745, %v744, %v705
  %vm748 = vcmask 517120
  %v749 = vsel %vm748, %v746, 0.0
  %750 = vadd.xlane.f32.xlu0 %v749
  %v751 = vpop.xlane.xlu0 %750
  %v752 = vadd.f32 %v634, %v751
  %vm753 = vcmask 1024
  %754 = vst.msk [vmem:[%s3] sm:$0x3] %vm753, %v752
  // Predicated region
  $region18: #{_image_metrics_impl.11} parent=0 // pred_check
    _
  $region19: #{_image_metrics_impl.11} parent=0 // pred_check_branch
    %756 = sbr.rel (0) target = $region21
  $region20: #{_image_metrics_impl.11} parent=0 // pred_region
    _
  $region21: #{_image_metrics_impl.11} parent=0 // pred_fallthru
    _
  // Predicated region
  $region22: #{_image_metrics_impl.11} parent=0 // pred_check
    _
  $region23: #{_image_metrics_impl.11} parent=0 // pred_check_branch
    %758 = sbr.rel (0) target = $region25
  $region24: #{_image_metrics_impl.11} parent=0 // pred_region
    _
  $region25: #{_image_metrics_impl.11} parent=0 // pred_fallthru
    _

// kernel: _image_metrics_impl.9
$region0: #{_image_metrics_impl.9}
  #allocation0 [shape = 'u32[]', space=smem, size = 0x4, offset = 0x4, fixed_abs, tag = 'smem constant byte address 0x4 - core index']
  #allocation1 [shape = 'u32[144,128]{1,0:T(1,128)}', space=vmem, size = 0x12000, scoped, tag = 'internal scratch']
  %s0 = inlined_call_operand.vmem [shape: bf16[4,256,128], index: 0, kind: input, shape index: {}, may-alias: {0,1}]
  %s1 = inlined_call_operand.vmem [shape: bf16[4,256,128], index: 1, kind: input, shape index: {}, may-alias: {0,1}]
  %s2 = inlined_call_operand.vmem [shape: f32[1,1,128], index: 2, kind: input, shape index: {}]
  %s3 = inlined_call_operand.vmem [shape: f32[1,2,1], index: 3, kind: output, shape index: {}]
  %s4 = sld [smem:[#allocation0]]
  $region26: #{_image_metrics_impl.9} parent=0
    _
  %s6 = ssub.s32 1, %s4
  %s7 = scalar_select 0, %s6, %s4
  // Predicated region
  $region2: #{_image_metrics_impl.9} parent=0 // pred_check
    _
  $region3: #{_image_metrics_impl.9} parent=0 // pred_check_branch
    %9 = sbr.rel (0) target = $region5
  $region4: #{_image_metrics_impl.9} parent=0 // pred_region
    %s10 = sadd.s32 0, 0
    %s11 = smul.u32 32, %s10
    %p12 = scmp.lt.s32.totalorder %s11, 31
    %s13 = scalar_select %p12, %s11, 31
    %s14 = smul.addr %s13, 4
    %s15 = scalar_lea.vmem %s0, %s14
    %s16 = sadd.s32 0, 0
    %s17 = smul.u32 32, %s16
  $region5: #{_image_metrics_impl.9} parent=0 // pred_fallthru
    _
  // Predicated region
  $region6: #{_image_metrics_impl.9} parent=0 // pred_check
    _
  $region7: #{_image_metrics_impl.9} parent=0 // pred_check_branch
    %19 = sbr.rel (0) target = $region9
  $region8: #{_image_metrics_impl.9} parent=0 // pred_region
    %s20 = sadd.s32 0, 0
    %s21 = smul.u32 32, %s20
    %p22 = scmp.lt.s32.totalorder %s21, 31
    %s23 = scalar_select %p22, %s21, 31
    %s24 = sadd.s32 %s23, 64
    %s25 = smul.addr %s24, 4
    %s26 = scalar_lea.vmem %s1, %s25
    %s27 = sadd.s32 0, 0
    %s28 = smul.u32 32, %s27
  $region9: #{_image_metrics_impl.9} parent=0 // pred_fallthru
    _
  // Predicated region
  $region10: #{_image_metrics_impl.9} parent=0 // pred_check
    _
  $region11: #{_image_metrics_impl.9} parent=0 // pred_check_branch
    %30 = sbr.rel (0) target = $region13
  $region12: #{_image_metrics_impl.9} parent=0 // pred_region
    _
  $region13: #{_image_metrics_impl.9} parent=0 // pred_fallthru
    _
  %s31 = sadd.s32 0, 0
  %s32 = smul.u32 32, %s31
  %p33 = scmp.lt.s32.totalorder %s32, 31
  %s34 = scalar_select %p33, %s32, 31
  %s35 = smul.addr %s34, 4
  %s36 = scalar_lea.vmem %s0, %s35
  %s37 = sadd.s32 0, 0
  %s38 = smul.u32 32, %s37
  %p39 = scmp.lt.s32.totalorder %s38, 31
  %s40 = scalar_select %p39, %s38, 31
  %s41 = sadd.s32 %s40, 64
  %s42 = smul.addr %s41, 4
  %s43 = scalar_lea.vmem %s1, %s42
  %s44 = sadd.s32 0, 0
  %s45 = smul.u32 32, %s44
  %p46 = scmp.lt.s32.totalorder %s45, 31
  %s47 = scalar_select %p46, %s45, 31
  %s48 = smul.addr %s47, 4
  %s49 = scalar_lea.vmem %s0, %s48
  %s50 = sadd.s32 0, 0
  %s51 = smul.u32 32, %s50
  %s52 = sadd.s32 0, 0
  %s53 = smul.u32 32, %s52
  %p54 = scmp.lt.s32.totalorder %s53, 31
  %s55 = scalar_select %p54, %s53, 31
  %s56 = sadd.s32 %s55, 64
  %s57 = smul.addr %s56, 4
  %s58 = scalar_lea.vmem %s1, %s57
  %s59 = sadd.s32 0, 0
  %s60 = smul.u32 32, %s59
  %p61 = scmp.eq.s32.totalorder 0, 0
  // Predicated region
  $region14: #{_image_metrics_impl.9} parent=0 // pred_check
    %p62 = pneg %p61
  $region15: #{_image_metrics_impl.9} parent=0 // pred_check_branch
    %64 = sbr.rel (%p62) target = $region17
  $region16: #{_image_metrics_impl.9} parent=0 // pred_region
    %vm65 = vcmask 1024
    %66 = vst.msk [vmem:[%s3] sm:$0x3] %vm65, 0.0
  $region17: #{_image_metrics_impl.9} parent=0 // pred_fallthru
    _
  %v67 = vld [vmem:[%s49] sm:$0xf]
  %v68 = vld [vmem:[%s49 + $0x4] sm:$0xf]
  %v69 = vld [vmem:[%s49 + $0x8] sm:$0xf]
  %v70 = vld [vmem:[%s49 + $0xc] sm:$0xf]
  %v71 = vld [vmem:[%s49 + $0x10] sm:$0xf]
  %v72 = vld [vmem:[%s49 + $0x14] sm:$0xf]
  %v73 = vld [vmem:[%s49 + $0x18] sm:$0xf]
  %v74 = vld [vmem:[%s49 + $0x1c] sm:$0xf]
  %v75 = vld [vmem:[%s49 + $0x20] sm:$0xf]
  %v76 = vld [vmem:[%s49 + $0x24] sm:$0xf]
  %v77 = vld [vmem:[%s49 + $0x28] sm:$0xf]
  %v78 = vld [vmem:[%s49 + $0x2c] sm:$0xf]
  %v79 = vld [vmem:[%s49 + $0x30] sm:$0xf]
  %v80 = vld [vmem:[%s49 + $0x34] sm:$0xf]
  %v81 = vld [vmem:[%s49 + $0x38] sm:$0xf]
  %v82 = vld [vmem:[%s49 + $0x3c] sm:$0xf]
  %v83 = vld [vmem:[%s49 + $0x40] sm:$0xf]
  %v84 = vld [vmem:[%s49 + $0x44] sm:$0xf]
  %v85 = vld [vmem:[%s49 + $0x48] sm:$0xf]
  %v86 = vld [vmem:[%s49 + $0x4c] sm:$0xf]
  %v87 = vld [vmem:[%s49 + $0x50] sm:$0xf]
  %v88 = vld [vmem:[%s49 + $0x54] sm:$0xf]
  %v89 = vld [vmem:[%s49 + $0x58] sm:$0xf]
  %v90 = vld [vmem:[%s49 + $0x5c] sm:$0xf]
  %v91 = vld [vmem:[%s49 + $0x60] sm:$0xf]
  %v92 = vld [vmem:[%s49 + $0x64] sm:$0xf]
  %v93 = vld [vmem:[%s49 + $0x68] sm:$0xf]
  %v94 = vld [vmem:[%s49 + $0x6c] sm:$0xf]
  %v95 = vld [vmem:[%s49 + $0x70] sm:$0xf]
  %v96 = vld [vmem:[%s49 + $0x74] sm:$0xf]
  %v97 = vld [vmem:[%s49 + $0x78] sm:$0xf]
  %v98 = vld [vmem:[%s49 + $0x7c] sm:$0xf]
  %v99 = vld [vmem:[%s49 + $0x80] sm:$0xf]
  %v100 = vld [vmem:[%s49 + $0x84] sm:$0xf]
  %v101 = vld [vmem:[%s49 + $0x88] sm:$0xf]
  %v102 = vld [vmem:[%s49 + $0x8c] sm:$0xf]
  %v103 = vld [vmem:[%s49 + $0x90] sm:$0xf]
  %v104 = vld [vmem:[%s49 + $0x94] sm:$0xf]
  %v105 = vld [vmem:[%s49 + $0x98] sm:$0xf]
  %v106 = vld [vmem:[%s49 + $0x9c] sm:$0xf]
  %v107 = vld [vmem:[%s49 + $0xa0] sm:$0xf]
  %v108 = vld [vmem:[%s49 + $0xa4] sm:$0xf]
  %v109 = vld [vmem:[%s49 + $0xa8] sm:$0xf]
  %v110 = vld [vmem:[%s49 + $0xac] sm:$0xf]
  %v111 = vld [vmem:[%s49 + $0xb0] sm:$0xf]
  %v112 = vld [vmem:[%s49 + $0xb4] sm:$0xf]
  %v113 = vld [vmem:[%s49 + $0xb8] sm:$0xf]
  %v114 = vld [vmem:[%s49 + $0xbc] sm:$0xf]
  %v115 = vld [vmem:[%s49 + $0xc0] sm:$0xf]
  %v116 = vld [vmem:[%s49 + $0xc4] sm:$0xf]
  %v117 = vld [vmem:[%s49 + $0xc8] sm:$0xf]
  %v118 = vld [vmem:[%s49 + $0xcc] sm:$0xf]
  %v119 = vld [vmem:[%s49 + $0xd0] sm:$0xf]
  %v120 = vld [vmem:[%s49 + $0xd4] sm:$0xf]
  %v121 = vld [vmem:[%s49 + $0xd8] sm:$0xf]
  %v122 = vld [vmem:[%s49 + $0xdc] sm:$0xf]
  %v123 = vld [vmem:[%s49 + $0xe0] sm:$0xf]
  %v124 = vld [vmem:[%s49 + $0xe4] sm:$0xf]
  %v125 = vld [vmem:[%s49 + $0xe8] sm:$0xf]
  %v126 = vld [vmem:[%s49 + $0xec] sm:$0xf]
  %v127 = vld [vmem:[%s49 + $0xf0] sm:$0xf]
  %v128 = vld [vmem:[%s49 + $0xf4] sm:$0xf]
  %v129 = vld [vmem:[%s49 + $0xf8] sm:$0xf]
  %v130 = vld [vmem:[%s49 + $0xfc] sm:$0xf]
  %v131 = vunpack.c.l.bf16 %v67
  %v132 = vunpack.c.l.bf16 %v68
  %v133 = vunpack.c.l.bf16 %v69
  %v134 = vunpack.c.l.bf16 %v70
  %v135 = vunpack.c.l.bf16 %v71
  %v136 = vunpack.c.l.bf16 %v72
  %v137 = vunpack.c.l.bf16 %v73
  %v138 = vunpack.c.l.bf16 %v74
  %v139 = vunpack.c.l.bf16 %v75
  %v140 = vunpack.c.l.bf16 %v76
  %v141 = vunpack.c.l.bf16 %v77
  %v142 = vunpack.c.l.bf16 %v78
  %v143 = vunpack.c.l.bf16 %v79
  %v144 = vunpack.c.l.bf16 %v80
  %v145 = vunpack.c.l.bf16 %v81
  %v146 = vunpack.c.l.bf16 %v82
  %v147 = vunpack.c.l.bf16 %v83
  %v148 = vunpack.c.l.bf16 %v84
  %v149 = vunpack.c.l.bf16 %v85
  %v150 = vunpack.c.l.bf16 %v86
  %v151 = vunpack.c.l.bf16 %v87
  %v152 = vunpack.c.l.bf16 %v88
  %v153 = vunpack.c.l.bf16 %v89
  %v154 = vunpack.c.l.bf16 %v90
  %v155 = vunpack.c.l.bf16 %v91
  %v156 = vunpack.c.l.bf16 %v92
  %v157 = vunpack.c.l.bf16 %v93
  %v158 = vunpack.c.l.bf16 %v94
  %v159 = vunpack.c.l.bf16 %v95
  %v160 = vunpack.c.l.bf16 %v96
  %v161 = vunpack.c.l.bf16 %v97
  %v162 = vunpack.c.l.bf16 %v98
  %v163 = vunpack.c.l.bf16 %v99
  %v164 = vunpack.c.l.bf16 %v100
  %v165 = vunpack.c.l.bf16 %v101
  %v166 = vunpack.c.l.bf16 %v102
  %v167 = vunpack.c.l.bf16 %v103
  %v168 = vunpack.c.l.bf16 %v104
  %v169 = vunpack.c.l.bf16 %v105
  %v170 = vunpack.c.l.bf16 %v106
  %v171 = vunpack.c.l.bf16 %v107
  %v172 = vunpack.c.l.bf16 %v108
  %v173 = vunpack.c.l.bf16 %v109
  %v174 = vunpack.c.l.bf16 %v110
  %v175 = vunpack.c.l.bf16 %v111
  %v176 = vunpack.c.l.bf16 %v112
  %v177 = vunpack.c.l.bf16 %v113
  %v178 = vunpack.c.l.bf16 %v114
  %v179 = vunpack.c.l.bf16 %v115
  %v180 = vunpack.c.l.bf16 %v116
  %v181 = vunpack.c.l.bf16 %v117
  %v182 = vunpack.c.l.bf16 %v118
  %v183 = vunpack.c.l.bf16 %v119
  %v184 = vunpack.c.l.bf16 %v120
  %v185 = vunpack.c.l.bf16 %v121
  %v186 = vunpack.c.l.bf16 %v122
  %v187 = vunpack.c.l.bf16 %v123
  %v188 = vunpack.c.l.bf16 %v124
  %v189 = vunpack.c.l.bf16 %v125
  %v190 = vunpack.c.l.bf16 %v126
  %v191 = vunpack.c.l.bf16 %v127
  %v192 = vunpack.c.l.bf16 %v128
  %v193 = vunpack.c.l.bf16 %v129
  %v194 = vunpack.c.l.bf16 %v130
  %v195 = vld [vmem:[%s58] sm:$0xf]
  %v196 = vld [vmem:[%s58 + $0x4] sm:$0xf]
  %v197 = vld [vmem:[%s58 + $0x8] sm:$0xf]
  %v198 = vld [vmem:[%s58 + $0xc] sm:$0xf]
  %v199 = vld [vmem:[%s58 + $0x10] sm:$0xf]
  %v200 = vld [vmem:[%s58 + $0x14] sm:$0xf]
  %v201 = vld [vmem:[%s58 + $0x18] sm:$0xf]
  %v202 = vld [vmem:[%s58 + $0x1c] sm:$0xf]
  %v203 = vld [vmem:[%s58 + $0x20] sm:$0xf]
  %v204 = vld [vmem:[%s58 + $0x24] sm:$0xf]
  %v205 = vld [vmem:[%s58 + $0x28] sm:$0xf]
  %v206 = vld [vmem:[%s58 + $0x2c] sm:$0xf]
  %v207 = vld [vmem:[%s58 + $0x30] sm:$0xf]
  %v208 = vld [vmem:[%s58 + $0x34] sm:$0xf]
  %v209 = vld [vmem:[%s58 + $0x38] sm:$0xf]
  %v210 = vld [vmem:[%s58 + $0x3c] sm:$0xf]
  %v211 = vld [vmem:[%s58 + $0x40] sm:$0xf]
  %v212 = vld [vmem:[%s58 + $0x44] sm:$0xf]
  %v213 = vld [vmem:[%s58 + $0x48] sm:$0xf]
  %v214 = vld [vmem:[%s58 + $0x4c] sm:$0xf]
  %v215 = vld [vmem:[%s58 + $0x50] sm:$0xf]
  %v216 = vld [vmem:[%s58 + $0x54] sm:$0xf]
  %v217 = vld [vmem:[%s58 + $0x58] sm:$0xf]
  %v218 = vld [vmem:[%s58 + $0x5c] sm:$0xf]
  %v219 = vld [vmem:[%s58 + $0x60] sm:$0xf]
  %v220 = vld [vmem:[%s58 + $0x64] sm:$0xf]
  %v221 = vld [vmem:[%s58 + $0x68] sm:$0xf]
  %v222 = vld [vmem:[%s58 + $0x6c] sm:$0xf]
  %v223 = vld [vmem:[%s58 + $0x70] sm:$0xf]
  %v224 = vld [vmem:[%s58 + $0x74] sm:$0xf]
  %v225 = vld [vmem:[%s58 + $0x78] sm:$0xf]
  %v226 = vld [vmem:[%s58 + $0x7c] sm:$0xf]
  %v227 = vld [vmem:[%s58 + $0x80] sm:$0xf]
  %v228 = vld [vmem:[%s58 + $0x84] sm:$0xf]
  %v229 = vld [vmem:[%s58 + $0x88] sm:$0xf]
  %v230 = vld [vmem:[%s58 + $0x8c] sm:$0xf]
  %v231 = vld [vmem:[%s58 + $0x90] sm:$0xf]
  %v232 = vld [vmem:[%s58 + $0x94] sm:$0xf]
  %v233 = vld [vmem:[%s58 + $0x98] sm:$0xf]
  %v234 = vld [vmem:[%s58 + $0x9c] sm:$0xf]
  %v235 = vld [vmem:[%s58 + $0xa0] sm:$0xf]
  %v236 = vld [vmem:[%s58 + $0xa4] sm:$0xf]
  %v237 = vld [vmem:[%s58 + $0xa8] sm:$0xf]
  %v238 = vld [vmem:[%s58 + $0xac] sm:$0xf]
  %v239 = vld [vmem:[%s58 + $0xb0] sm:$0xf]
  %v240 = vld [vmem:[%s58 + $0xb4] sm:$0xf]
  %v241 = vld [vmem:[%s58 + $0xb8] sm:$0xf]
  %v242 = vld [vmem:[%s58 + $0xbc] sm:$0xf]
  %v243 = vld [vmem:[%s58 + $0xc0] sm:$0xf]
  %v244 = vld [vmem:[%s58 + $0xc4] sm:$0xf]
  %v245 = vld [vmem:[%s58 + $0xc8] sm:$0xf]
  %v246 = vld [vmem:[%s58 + $0xcc] sm:$0xf]
  %v247 = vld [vmem:[%s58 + $0xd0] sm:$0xf]
  %v248 = vld [vmem:[%s58 + $0xd4] sm:$0xf]
  %v249 = vld [vmem:[%s58 + $0xd8] sm:$0xf]
  %v250 = vld [vmem:[%s58 + $0xdc] sm:$0xf]
  %v251 = vld [vmem:[%s58 + $0xe0] sm:$0xf]
  %v252 = vld [vmem:[%s58 + $0xe4] sm:$0xf]
  %v253 = vld [vmem:[%s58 + $0xe8] sm:$0xf]
  %v254 = vld [vmem:[%s58 + $0xec] sm:$0xf]
  %v255 = vld [vmem:[%s58 + $0xf0] sm:$0xf]
  %v256 = vld [vmem:[%s58 + $0xf4] sm:$0xf]
  %v257 = vld [vmem:[%s58 + $0xf8] sm:$0xf]
  %v258 = vld [vmem:[%s58 + $0xfc] sm:$0xf]
  %v259 = vunpack.c.l.bf16 %v195
  %v260 = vunpack.c.l.bf16 %v196
  %v261 = vunpack.c.l.bf16 %v197
  %v262 = vunpack.c.l.bf16 %v198
  %v263 = vunpack.c.l.bf16 %v199
  %v264 = vunpack.c.l.bf16 %v200
  %v265 = vunpack.c.l.bf16 %v201
  %v266 = vunpack.c.l.bf16 %v202
  %v267 = vunpack.c.l.bf16 %v203
  %v268 = vunpack.c.l.bf16 %v204
  %v269 = vunpack.c.l.bf16 %v205
  %v270 = vunpack.c.l.bf16 %v206
  %v271 = vunpack.c.l.bf16 %v207
  %v272 = vunpack.c.l.bf16 %v208
  %v273 = vunpack.c.l.bf16 %v209
  %v274 = vunpack.c.l.bf16 %v210
  %v275 = vunpack.c.l.bf16 %v211
  %v276 = vunpack.c.l.bf16 %v212
  %v277 = vunpack.c.l.bf16 %v213
  %v278 = vunpack.c.l.bf16 %v214
  %v279 = vunpack.c.l.bf16 %v215
  %v280 = vunpack.c.l.bf16 %v216
  %v281 = vunpack.c.l.bf16 %v217
  %v282 = vunpack.c.l.bf16 %v218
  %v283 = vunpack.c.l.bf16 %v219
  %v284 = vunpack.c.l.bf16 %v220
  %v285 = vunpack.c.l.bf16 %v221
  %v286 = vunpack.c.l.bf16 %v222
  %v287 = vunpack.c.l.bf16 %v223
  %v288 = vunpack.c.l.bf16 %v224
  %v289 = vunpack.c.l.bf16 %v225
  %v290 = vunpack.c.l.bf16 %v226
  %v291 = vunpack.c.l.bf16 %v227
  %v292 = vunpack.c.l.bf16 %v228
  %v293 = vunpack.c.l.bf16 %v229
  %v294 = vunpack.c.l.bf16 %v230
  %v295 = vunpack.c.l.bf16 %v231
  %v296 = vunpack.c.l.bf16 %v232
  %v297 = vunpack.c.l.bf16 %v233
  %v298 = vunpack.c.l.bf16 %v234
  %v299 = vunpack.c.l.bf16 %v235
  %v300 = vunpack.c.l.bf16 %v236
  %v301 = vunpack.c.l.bf16 %v237
  %v302 = vunpack.c.l.bf16 %v238
  %v303 = vunpack.c.l.bf16 %v239
  %v304 = vunpack.c.l.bf16 %v240
  %v305 = vunpack.c.l.bf16 %v241
  %v306 = vunpack.c.l.bf16 %v242
  %v307 = vunpack.c.l.bf16 %v243
  %v308 = vunpack.c.l.bf16 %v244
  %v309 = vunpack.c.l.bf16 %v245
  %v310 = vunpack.c.l.bf16 %v246
  %v311 = vunpack.c.l.bf16 %v247
  %v312 = vunpack.c.l.bf16 %v248
  %v313 = vunpack.c.l.bf16 %v249
  %v314 = vunpack.c.l.bf16 %v250
  %v315 = vunpack.c.l.bf16 %v251
  %v316 = vunpack.c.l.bf16 %v252
  %v317 = vunpack.c.l.bf16 %v253
  %v318 = vunpack.c.l.bf16 %v254
  %v319 = vunpack.c.l.bf16 %v255
  %v320 = vunpack.c.l.bf16 %v256
  %v321 = vunpack.c.l.bf16 %v257
  %v322 = vunpack.c.l.bf16 %v258
  %v323 = vmul.f32 %v131, %v131
  %v324 = vmul.f32 %v132, %v132
  %v325 = vmul.f32 %v133, %v133
  %v326 = vmul.f32 %v134, %v134
  %v327 = vmul.f32 %v135, %v135
  %v328 = vmul.f32 %v136, %v136
  %v329 = vmul.f32 %v137, %v137
  %v330 = vmul.f32 %v138, %v138
  %v331 = vmul.f32 %v139, %v139
  %v332 = vmul.f32 %v140, %v140
  %v333 = vmul.f32 %v141, %v141
  %v334 = vmul.f32 %v142, %v142
  %v335 = vmul.f32 %v143, %v143
  %v336 = vmul.f32 %v144, %v144
  %v337 = vmul.f32 %v145, %v145
  %v338 = vmul.f32 %v146, %v146
  %v339 = vmul.f32 %v147, %v147
  %v340 = vmul.f32 %v148, %v148
  %v341 = vmul.f32 %v149, %v149
  %v342 = vmul.f32 %v150, %v150
  %v343 = vmul.f32 %v151, %v151
  %v344 = vmul.f32 %v152, %v152
  %v345 = vmul.f32 %v153, %v153
  %v346 = vmul.f32 %v154, %v154
  %v347 = vmul.f32 %v155, %v155
  %v348 = vmul.f32 %v156, %v156
  %v349 = vmul.f32 %v157, %v157
  %v350 = vmul.f32 %v158, %v158
  %v351 = vmul.f32 %v159, %v159
  %v352 = vmul.f32 %v160, %v160
  %v353 = vmul.f32 %v161, %v161
  %v354 = vmul.f32 %v162, %v162
  %v355 = vmul.f32 %v163, %v163
  %v356 = vmul.f32 %v164, %v164
  %v357 = vmul.f32 %v165, %v165
  %v358 = vmul.f32 %v166, %v166
  %v359 = vmul.f32 %v167, %v167
  %v360 = vmul.f32 %v168, %v168
  %v361 = vmul.f32 %v169, %v169
  %v362 = vmul.f32 %v170, %v170
  %v363 = vmul.f32 %v171, %v171
  %v364 = vmul.f32 %v172, %v172
  %v365 = vmul.f32 %v173, %v173
  %v366 = vmul.f32 %v174, %v174
  %v367 = vmul.f32 %v175, %v175
  %v368 = vmul.f32 %v176, %v176
  %v369 = vmul.f32 %v177, %v177
  %v370 = vmul.f32 %v178, %v178
  %v371 = vmul.f32 %v179, %v179
  %v372 = vmul.f32 %v180, %v180
  %v373 = vmul.f32 %v181, %v181
  %v374 = vmul.f32 %v182, %v182
  %v375 = vmul.f32 %v183, %v183
  %v376 = vmul.f32 %v184, %v184
  %v377 = vmul.f32 %v185, %v185
  %v378 = vmul.f32 %v186, %v186
  %v379 = vmul.f32 %v187, %v187
  %v380 = vmul.f32 %v188, %v188
  %v381 = vmul.f32 %v189, %v189
  %v382 = vmul.f32 %v190, %v190
  %v383 = vmul.f32 %v191, %v191
  %v384 = vmul.f32 %v192, %v192
  %v385 = vmul.f32 %v193, %v193
  %v386 = vmul.f32 %v194, %v194
  %387 = vadd.xlane.f32.xlu0 %v323
  %v388 = vpop.xlane.xlu0 %387
  %389 = vadd.xlane.f32.xlu0 %v324
  %v390 = vpop.xlane.xlu0 %389
  %391 = vadd.xlane.f32.xlu0 %v325
  %v392 = vpop.xlane.xlu0 %391
  %393 = vadd.xlane.f32.xlu0 %v326
  %v394 = vpop.xlane.xlu0 %393
  %395 = vadd.xlane.f32.xlu0 %v327
  %v396 = vpop.xlane.xlu0 %395
  %397 = vadd.xlane.f32.xlu0 %v328
  %v398 = vpop.xlane.xlu0 %397
  %399 = vadd.xlane.f32.xlu0 %v329
  %v400 = vpop.xlane.xlu0 %399
  %401 = vadd.xlane.f32.xlu0 %v330
  %v402 = vpop.xlane.xlu0 %401
  %403 = vadd.xlane.f32.xlu0 %v331
  %v404 = vpop.xlane.xlu0 %403
  %405 = vadd.xlane.f32.xlu0 %v332
  %v406 = vpop.xlane.xlu0 %405
  %407 = vadd.xlane.f32.xlu0 %v333
  %v408 = vpop.xlane.xlu0 %407
  %409 = vadd.xlane.f32.xlu0 %v334
  %v410 = vpop.xlane.xlu0 %409
  %411 = vadd.xlane.f32.xlu0 %v335
  %v412 = vpop.xlane.xlu0 %411
  %413 = vadd.xlane.f32.xlu0 %v336
  %v414 = vpop.xlane.xlu0 %413
  %415 = vadd.xlane.f32.xlu0 %v337
  %v416 = vpop.xlane.xlu0 %415
  %417 = vadd.xlane.f32.xlu0 %v338
  %v418 = vpop.xlane.xlu0 %417
  %419 = vadd.xlane.f32.xlu0 %v339
  %v420 = vpop.xlane.xlu0 %419
  %421 = vadd.xlane.f32.xlu0 %v340
  %v422 = vpop.xlane.xlu0 %421
  %423 = vadd.xlane.f32.xlu0 %v341
  %v424 = vpop.xlane.xlu0 %423
  %425 = vadd.xlane.f32.xlu0 %v342
  %v426 = vpop.xlane.xlu0 %425
  %427 = vadd.xlane.f32.xlu0 %v343
  %v428 = vpop.xlane.xlu0 %427
  %429 = vadd.xlane.f32.xlu0 %v344
  %v430 = vpop.xlane.xlu0 %429
  %431 = vadd.xlane.f32.xlu0 %v345
  %v432 = vpop.xlane.xlu0 %431
  %433 = vadd.xlane.f32.xlu0 %v346
  %v434 = vpop.xlane.xlu0 %433
  %435 = vadd.xlane.f32.xlu0 %v347
  %v436 = vpop.xlane.xlu0 %435
  %437 = vadd.xlane.f32.xlu0 %v348
  %v438 = vpop.xlane.xlu0 %437
  %439 = vadd.xlane.f32.xlu0 %v349
  %v440 = vpop.xlane.xlu0 %439
  %441 = vadd.xlane.f32.xlu0 %v350
  %v442 = vpop.xlane.xlu0 %441
  %443 = vadd.xlane.f32.xlu0 %v351
  %v444 = vpop.xlane.xlu0 %443
  %445 = vadd.xlane.f32.xlu0 %v352
  %v446 = vpop.xlane.xlu0 %445
  %447 = vadd.xlane.f32.xlu0 %v353
  %v448 = vpop.xlane.xlu0 %447
  %449 = vadd.xlane.f32.xlu0 %v354
  %v450 = vpop.xlane.xlu0 %449
  %451 = vadd.xlane.f32.xlu0 %v355
  %v452 = vpop.xlane.xlu0 %451
  %453 = vadd.xlane.f32.xlu0 %v356
  %v454 = vpop.xlane.xlu0 %453
  %455 = vadd.xlane.f32.xlu0 %v357
  %v456 = vpop.xlane.xlu0 %455
  %457 = vadd.xlane.f32.xlu0 %v358
  %v458 = vpop.xlane.xlu0 %457
  %459 = vadd.xlane.f32.xlu0 %v359
  %v460 = vpop.xlane.xlu0 %459
  %461 = vadd.xlane.f32.xlu0 %v360
  %v462 = vpop.xlane.xlu0 %461
  %463 = vadd.xlane.f32.xlu0 %v361
  %v464 = vpop.xlane.xlu0 %463
  %465 = vadd.xlane.f32.xlu0 %v362
  %v466 = vpop.xlane.xlu0 %465
  %467 = vadd.xlane.f32.xlu0 %v363
  %v468 = vpop.xlane.xlu0 %467
  %469 = vadd.xlane.f32.xlu0 %v364
  %v470 = vpop.xlane.xlu0 %469
  %471 = vadd.xlane.f32.xlu0 %v365
  %v472 = vpop.xlane.xlu0 %471
  %473 = vadd.xlane.f32.xlu0 %v366
  %v474 = vpop.xlane.xlu0 %473
  %475 = vadd.xlane.f32.xlu0 %v367
  %v476 = vpop.xlane.xlu0 %475
  %477 = vadd.xlane.f32.xlu0 %v368
  %v478 = vpop.xlane.xlu0 %477
  %479 = vadd.xlane.f32.xlu0 %v369
  %v480 = vpop.xlane.xlu0 %479
  %481 = vadd.xlane.f32.xlu0 %v370
  %v482 = vpop.xlane.xlu0 %481
  %483 = vadd.xlane.f32.xlu0 %v371
  %v484 = vpop.xlane.xlu0 %483
  %485 = vadd.xlane.f32.xlu0 %v372
  %v486 = vpop.xlane.xlu0 %485
  %487 = vadd.xlane.f32.xlu0 %v373
  %v488 = vpop.xlane.xlu0 %487
  %489 = vadd.xlane.f32.xlu0 %v374
  %v490 = vpop.xlane.xlu0 %489
  %491 = vadd.xlane.f32.xlu0 %v375
  %v492 = vpop.xlane.xlu0 %491
  %493 = vadd.xlane.f32.xlu0 %v376
  %v494 = vpop.xlane.xlu0 %493
  %495 = vadd.xlane.f32.xlu0 %v377
  %v496 = vpop.xlane.xlu0 %495
  %497 = vadd.xlane.f32.xlu0 %v378
  %v498 = vpop.xlane.xlu0 %497
  %499 = vadd.xlane.f32.xlu0 %v379
  %v500 = vpop.xlane.xlu0 %499
  %501 = vadd.xlane.f32.xlu0 %v380
  %v502 = vpop.xlane.xlu0 %501
  %503 = vadd.xlane.f32.xlu0 %v381
  %v504 = vpop.xlane.xlu0 %503
  %505 = vadd.xlane.f32.xlu0 %v382
  %v506 = vpop.xlane.xlu0 %505
  %507 = vadd.xlane.f32.xlu0 %v383
  %v508 = vpop.xlane.xlu0 %507
  %509 = vadd.xlane.f32.xlu0 %v384
  %v510 = vpop.xlane.xlu0 %509
  %511 = vadd.xlane.f32.xlu0 %v385
  %v512 = vpop.xlane.xlu0 %511
  %513 = vadd.xlane.f32.xlu0 %v386
  %v514 = vpop.xlane.xlu0 %513
  %v515 = vrsqrt.pop %v388
  %v516 = vmul.f32 %v388, %v515
  %vm517 = vcmp.eq.f32.partialorder %v388, inf
  %v518 = vsel %vm517, %v388, %v516
  %vm519 = vcmp.eq.f32.partialorder %v388, 0.0
  %v520 = vand.u32 %v388, 2147483648
  %v521 = vsel %vm519, %v520, %v518
  %v522 = vrsqrt.pop %v390
  %v523 = vmul.f32 %v390, %v522
  %vm524 = vcmp.eq.f32.partialorder %v390, inf
  %v525 = vsel %vm524, %v390, %v523
  %vm526 = vcmp.eq.f32.partialorder %v390, 0.0
  %v527 = vand.u32 %v390, 2147483648
  %v528 = vsel %vm526, %v527, %v525
  %v529 = vrsqrt.pop %v392
  %v530 = vmul.f32 %v392, %v529
  %vm531 = vcmp.eq.f32.partialorder %v392, inf
  %v532 = vsel %vm531, %v392, %v530
  %vm533 = vcmp.eq.f32.partialorder %v392, 0.0
  %v534 = vand.u32 %v392, 2147483648
  %v535 = vsel %vm533, %v534, %v532
  %v536 = vrsqrt.pop %v394
  %v537 = vmul.f32 %v394, %v536
  %vm538 = vcmp.eq.f32.partialorder %v394, inf
  %v539 = vsel %vm538, %v394, %v537
  %vm540 = vcmp.eq.f32.partialorder %v394, 0.0
  %v541 = vand.u32 %v394, 2147483648
  %v542 = vsel %vm540, %v541, %v539
  %v543 = vrsqrt.pop %v396
  %v544 = vmul.f32 %v396, %v543
  %vm545 = vcmp.eq.f32.partialorder %v396, inf
  %v546 = vsel %vm545, %v396, %v544
  %vm547 = vcmp.eq.f32.partialorder %v396, 0.0
  %v548 = vand.u32 %v396, 2147483648
  %v549 = vsel %vm547, %v548, %v546
  %v550 = vrsqrt.pop %v398
  %v551 = vmul.f32 %v398, %v550
  %vm552 = vcmp.eq.f32.partialorder %v398, inf
  %v553 = vsel %vm552, %v398, %v551
  %vm554 = vcmp.eq.f32.partialorder %v398, 0.0
  %v555 = vand.u32 %v398, 2147483648
  %v556 = vsel %vm554, %v555, %v553
  %v557 = vrsqrt.pop %v400
  %v558 = vmul.f32 %v400, %v557
  %vm559 = vcmp.eq.f32.partialorder %v400, inf
  %v560 = vsel %vm559, %v400, %v558
  %vm561 = vcmp.eq.f32.partialorder %v400, 0.0
  %v562 = vand.u32 %v400, 2147483648
  %v563 = vsel %vm561, %v562, %v560
  %v564 = vrsqrt.pop %v402
  %v565 = vmul.f32 %v402, %v564
  %vm566 = vcmp.eq.f32.partialorder %v402, inf
  %v567 = vsel %vm566, %v402, %v565
  %vm568 = vcmp.eq.f32.partialorder %v402, 0.0
  %v569 = vand.u32 %v402, 2147483648
  %v570 = vsel %vm568, %v569, %v567
  %v571 = vrsqrt.pop %v404
  %v572 = vmul.f32 %v404, %v571
  %vm573 = vcmp.eq.f32.partialorder %v404, inf
  %v574 = vsel %vm573, %v404, %v572
  %vm575 = vcmp.eq.f32.partialorder %v404, 0.0
  %v576 = vand.u32 %v404, 2147483648
  %v577 = vsel %vm575, %v576, %v574
  %v578 = vrsqrt.pop %v406
  %v579 = vmul.f32 %v406, %v578
  %vm580 = vcmp.eq.f32.partialorder %v406, inf
  %v581 = vsel %vm580, %v406, %v579
  %vm582 = vcmp.eq.f32.partialorder %v406, 0.0
  %v583 = vand.u32 %v406, 2147483648
  %v584 = vsel %vm582, %v583, %v581
  %v585 = vrsqrt.pop %v408
  %v586 = vmul.f32 %v408, %v585
  %vm587 = vcmp.eq.f32.partialorder %v408, inf
  %v588 = vsel %vm587, %v408, %v586
  %vm589 = vcmp.eq.f32.partialorder %v408, 0.0
  %v590 = vand.u32 %v408, 2147483648
  %v591 = vsel %vm589, %v590, %v588
  %v592 = vrsqrt.pop %v410
  %v593 = vmul.f32 %v410, %v592
  %vm594 = vcmp.eq.f32.partialorder %v410, inf
  %v595 = vsel %vm594, %v410, %v593
  %vm596 = vcmp.eq.f32.partialorder %v410, 0.0
  %v597 = vand.u32 %v410, 2147483648
  %v598 = vsel %vm596, %v597, %v595
  %v599 = vrsqrt.pop %v412
  %v600 = vmul.f32 %v412, %v599
  %vm601 = vcmp.eq.f32.partialorder %v412, inf
  %v602 = vsel %vm601, %v412, %v600
  %vm603 = vcmp.eq.f32.partialorder %v412, 0.0
  %v604 = vand.u32 %v412, 2147483648
  %v605 = vsel %vm603, %v604, %v602
  %v606 = vrsqrt.pop %v414
  %v607 = vmul.f32 %v414, %v606
  %vm608 = vcmp.eq.f32.partialorder %v414, inf
  %v609 = vsel %vm608, %v414, %v607
  %vm610 = vcmp.eq.f32.partialorder %v414, 0.0
  %v611 = vand.u32 %v414, 2147483648
  %v612 = vsel %vm610, %v611, %v609
  %v613 = vrsqrt.pop %v416
  %v614 = vmul.f32 %v416, %v613
  %vm615 = vcmp.eq.f32.partialorder %v416, inf
  %v616 = vsel %vm615, %v416, %v614
  %vm617 = vcmp.eq.f32.partialorder %v416, 0.0
  %v618 = vand.u32 %v416, 2147483648
  %v619 = vsel %vm617, %v618, %v616
  %v620 = vrsqrt.pop %v418
  %v621 = vmul.f32 %v418, %v620
  %vm622 = vcmp.eq.f32.partialorder %v418, inf
  %v623 = vsel %vm622, %v418, %v621
  %vm624 = vcmp.eq.f32.partialorder %v418, 0.0
  %v625 = vand.u32 %v418, 2147483648
  %v626 = vsel %vm624, %v625, %v623
  %v627 = vrsqrt.pop %v420
  %v628 = vmul.f32 %v420, %v627
  %vm629 = vcmp.eq.f32.partialorder %v420, inf
  %v630 = vsel %vm629, %v420, %v628
  %vm631 = vcmp.eq.f32.partialorder %v420, 0.0
  %v632 = vand.u32 %v420, 2147483648
  %v633 = vsel %vm631, %v632, %v630
  %v634 = vrsqrt.pop %v422
  %v635 = vmul.f32 %v422, %v634
  %vm636 = vcmp.eq.f32.partialorder %v422, inf
  %v637 = vsel %vm636, %v422, %v635
  %vm638 = vcmp.eq.f32.partialorder %v422, 0.0
  %v639 = vand.u32 %v422, 2147483648
  %v640 = vsel %vm638, %v639, %v637
  %v641 = vrsqrt.pop %v424
  %v642 = vmul.f32 %v424, %v641
  %vm643 = vcmp.eq.f32.partialorder %v424, inf
  %v644 = vsel %vm643, %v424, %v642
  %vm645 = vcmp.eq.f32.partialorder %v424, 0.0
  %v646 = vand.u32 %v424, 2147483648
  %v647 = vsel %vm645, %v646, %v644
  %v648 = vrsqrt.pop %v426
  %v649 = vmul.f32 %v426, %v648
  %vm650 = vcmp.eq.f32.partialorder %v426, inf
  %v651 = vsel %vm650, %v426, %v649
  %vm652 = vcmp.eq.f32.partialorder %v426, 0.0
  %v653 = vand.u32 %v426, 2147483648
  %v654 = vsel %vm652, %v653, %v651
  %v655 = vrsqrt.pop %v428
  %v656 = vmul.f32 %v428, %v655
  %vm657 = vcmp.eq.f32.partialorder %v428, inf
  %v658 = vsel %vm657, %v428, %v656
  %vm659 = vcmp.eq.f32.partialorder %v428, 0.0
  %v660 = vand.u32 %v428, 2147483648
  %v661 = vsel %vm659, %v660, %v658
  %v662 = vrsqrt.pop %v430
  %v663 = vmul.f32 %v430, %v662
  %vm664 = vcmp.eq.f32.partialorder %v430, inf
  %v665 = vsel %vm664, %v430, %v663
  %vm666 = vcmp.eq.f32.partialorder %v430, 0.0
  %v667 = vand.u32 %v430, 2147483648
  %v668 = vsel %vm666, %v667, %v665
  %v669 = vrsqrt.pop %v432
  %v670 = vmul.f32 %v432, %v669
  %vm671 = vcmp.eq.f32.partialorder %v432, inf
  %v672 = vsel %vm671, %v432, %v670
  %vm673 = vcmp.eq.f32.partialorder %v432, 0.0
  %v674 = vand.u32 %v432, 2147483648
  %v675 = vsel %vm673, %v674, %v672
  %v676 = vrsqrt.pop %v434
  %v677 = vmul.f32 %v434, %v676
  %vm678 = vcmp.eq.f32.partialorder %v434, inf
  %v679 = vsel %vm678, %v434, %v677
  %vm680 = vcmp.eq.f32.partialorder %v434, 0.0
  %v681 = vand.u32 %v434, 2147483648
  %v682 = vsel %vm680, %v681, %v679
  %v683 = vrsqrt.pop %v436
  %v684 = vmul.f32 %v436, %v683
  %vm685 = vcmp.eq.f32.partialorder %v436, inf
  %v686 = vsel %vm685, %v436, %v684
  %vm687 = vcmp.eq.f32.partialorder %v436, 0.0
  %v688 = vand.u32 %v436, 2147483648
  %v689 = vsel %vm687, %v688, %v686
  %v690 = vrsqrt.pop %v438
  %v691 = vmul.f32 %v438, %v690
  %vm692 = vcmp.eq.f32.partialorder %v438, inf
  %v693 = vsel %vm692, %v438, %v691
  %vm694 = vcmp.eq.f32.partialorder %v438, 0.0
  %v695 = vand.u32 %v438, 2147483648
  %v696 = vsel %vm694, %v695, %v693
  %v697 = vrsqrt.pop %v440
  %v698 = vmul.f32 %v440, %v697
  %vm699 = vcmp.eq.f32.partialorder %v440, inf
  %v700 = vsel %vm699, %v440, %v698
  %vm701 = vcmp.eq.f32.partialorder %v440, 0.0
  %v702 = vand.u32 %v440, 2147483648
  %v703 = vsel %vm701, %v702, %v700
  %v704 = vrsqrt.pop %v442
  %v705 = vmul.f32 %v442, %v704
  %vm706 = vcmp.eq.f32.partialorder %v442, inf
  %v707 = vsel %vm706, %v442, %v705
  %vm708 = vcmp.eq.f32.partialorder %v442, 0.0
  %v709 = vand.u32 %v442, 2147483648
  %v710 = vsel %vm708, %v709, %v707
  %v711 = vrsqrt.pop %v444
  %v712 = vmul.f32 %v444, %v711
  %vm713 = vcmp.eq.f32.partialorder %v444, inf
  %v714 = vsel %vm713, %v444, %v712
  %vm715 = vcmp.eq.f32.partialorder %v444, 0.0
  %v716 = vand.u32 %v444, 2147483648
  %v717 = vsel %vm715, %v716, %v714
  %v718 = vrsqrt.pop %v446
  %v719 = vmul.f32 %v446, %v718
  %vm720 = vcmp.eq.f32.partialorder %v446, inf
  %v721 = vsel %vm720, %v446, %v719
  %vm722 = vcmp.eq.f32.partialorder %v446, 0.0
  %v723 = vand.u32 %v446, 2147483648
  %v724 = vsel %vm722, %v723, %v721
  %v725 = vrsqrt.pop %v448
  %v726 = vmul.f32 %v448, %v725
  %vm727 = vcmp.eq.f32.partialorder %v448, inf
  %v728 = vsel %vm727, %v448, %v726
  %vm729 = vcmp.eq.f32.partialorder %v448, 0.0
  %v730 = vand.u32 %v448, 2147483648
  %v731 = vsel %vm729, %v730, %v728
  %v732 = vrsqrt.pop %v450
  %v733 = vmul.f32 %v450, %v732
  %vm734 = vcmp.eq.f32.partialorder %v450, inf
  %v735 = vsel %vm734, %v450, %v733
  %vm736 = vcmp.eq.f32.partialorder %v450, 0.0
  %v737 = vand.u32 %v450, 2147483648
  %v738 = vsel %vm736, %v737, %v735
  %v739 = vrsqrt.pop %v452
  %v740 = vmul.f32 %v452, %v739
  %vm741 = vcmp.eq.f32.partialorder %v452, inf
  %v742 = vsel %vm741, %v452, %v740
  %vm743 = vcmp.eq.f32.partialorder %v452, 0.0
  %v744 = vand.u32 %v452, 2147483648
  %v745 = vsel %vm743, %v744, %v742
  %v746 = vrsqrt.pop %v454
  %v747 = vmul.f32 %v454, %v746
  %vm748 = vcmp.eq.f32.partialorder %v454, inf
  %v749 = vsel %vm748, %v454, %v747
  %vm750 = vcmp.eq.f32.partialorder %v454, 0.0
  %v751 = vand.u32 %v454, 2147483648
  %v752 = vsel %vm750, %v751, %v749
  %v753 = vrsqrt.pop %v456
  %v754 = vmul.f32 %v456, %v753
  %vm755 = vcmp.eq.f32.partialorder %v456, inf
  %v756 = vsel %vm755, %v456, %v754
  %vm757 = vcmp.eq.f32.partialorder %v456, 0.0
  %v758 = vand.u32 %v456, 2147483648
  %v759 = vsel %vm757, %v758, %v756
  %v760 = vrsqrt.pop %v458
  %v761 = vmul.f32 %v458, %v760
  %vm762 = vcmp.eq.f32.partialorder %v458, inf
  %v763 = vsel %vm762, %v458, %v761
  %vm764 = vcmp.eq.f32.partialorder %v458, 0.0
  %v765 = vand.u32 %v458, 2147483648
  %v766 = vsel %vm764, %v765, %v763
  %v767 = vrsqrt.pop %v460
  %v768 = vmul.f32 %v460, %v767
  %vm769 = vcmp.eq.f32.partialorder %v460, inf
  %v770 = vsel %vm769, %v460, %v768
  %vm771 = vcmp.eq.f32.partialorder %v460, 0.0
  %v772 = vand.u32 %v460, 2147483648
  %v773 = vsel %vm771, %v772, %v770
  %v774 = vrsqrt.pop %v462
  %v775 = vmul.f32 %v462, %v774
  %vm776 = vcmp.eq.f32.partialorder %v462, inf
  %v777 = vsel %vm776, %v462, %v775
  %vm778 = vcmp.eq.f32.partialorder %v462, 0.0
  %v779 = vand.u32 %v462, 2147483648
  %v780 = vsel %vm778, %v779, %v777
  %v781 = vrsqrt.pop %v464
  %v782 = vmul.f32 %v464, %v781
  %vm783 = vcmp.eq.f32.partialorder %v464, inf
  %v784 = vsel %vm783, %v464, %v782
  %vm785 = vcmp.eq.f32.partialorder %v464, 0.0
  %v786 = vand.u32 %v464, 2147483648
  %v787 = vsel %vm785, %v786, %v784
  %v788 = vrsqrt.pop %v466
  %v789 = vmul.f32 %v466, %v788
  %vm790 = vcmp.eq.f32.partialorder %v466, inf
  %v791 = vsel %vm790, %v466, %v789
  %vm792 = vcmp.eq.f32.partialorder %v466, 0.0
  %v793 = vand.u32 %v466, 2147483648
  %v794 = vsel %vm792, %v793, %v791
  %v795 = vrsqrt.pop %v468
  %v796 = vmul.f32 %v468, %v795
  %vm797 = vcmp.eq.f32.partialorder %v468, inf
  %v798 = vsel %vm797, %v468, %v796
  %vm799 = vcmp.eq.f32.partialorder %v468, 0.0
  %v800 = vand.u32 %v468, 2147483648
  %v801 = vsel %vm799, %v800, %v798
  %v802 = vrsqrt.pop %v470
  %v803 = vmul.f32 %v470, %v802
  %vm804 = vcmp.eq.f32.partialorder %v470, inf
  %v805 = vsel %vm804, %v470, %v803
  %vm806 = vcmp.eq.f32.partialorder %v470, 0.0
  %v807 = vand.u32 %v470, 2147483648
  %v808 = vsel %vm806, %v807, %v805
  %v809 = vrsqrt.pop %v472
  %v810 = vmul.f32 %v472, %v809
  %vm811 = vcmp.eq.f32.partialorder %v472, inf
  %v812 = vsel %vm811, %v472, %v810
  %vm813 = vcmp.eq.f32.partialorder %v472, 0.0
  %v814 = vand.u32 %v472, 2147483648
  %v815 = vsel %vm813, %v814, %v812
  %v816 = vrsqrt.pop %v474
  %v817 = vmul.f32 %v474, %v816
  %vm818 = vcmp.eq.f32.partialorder %v474, inf
  %v819 = vsel %vm818, %v474, %v817
  %vm820 = vcmp.eq.f32.partialorder %v474, 0.0
  %v821 = vand.u32 %v474, 2147483648
  %v822 = vsel %vm820, %v821, %v819
  %v823 = vrsqrt.pop %v476
  %v824 = vmul.f32 %v476, %v823
  %vm825 = vcmp.eq.f32.partialorder %v476, inf
  %v826 = vsel %vm825, %v476, %v824
  %vm827 = vcmp.eq.f32.partialorder %v476, 0.0
  %v828 = vand.u32 %v476, 2147483648
  %v829 = vsel %vm827, %v828, %v826
  %v830 = vrsqrt.pop %v478
  %v831 = vmul.f32 %v478, %v830
  %vm832 = vcmp.eq.f32.partialorder %v478, inf
  %v833 = vsel %vm832, %v478, %v831
  %vm834 = vcmp.eq.f32.partialorder %v478, 0.0
  %v835 = vand.u32 %v478, 2147483648
  %v836 = vsel %vm834, %v835, %v833
  %v837 = vrsqrt.pop %v480
  %v838 = vmul.f32 %v480, %v837
  %vm839 = vcmp.eq.f32.partialorder %v480, inf
  %v840 = vsel %vm839, %v480, %v838
  %vm841 = vcmp.eq.f32.partialorder %v480, 0.0
  %v842 = vand.u32 %v480, 2147483648
  %v843 = vsel %vm841, %v842, %v840
  %v844 = vrsqrt.pop %v482
  %v845 = vmul.f32 %v482, %v844
  %vm846 = vcmp.eq.f32.partialorder %v482, inf
  %v847 = vsel %vm846, %v482, %v845
  %vm848 = vcmp.eq.f32.partialorder %v482, 0.0
  %v849 = vand.u32 %v482, 2147483648
  %v850 = vsel %vm848, %v849, %v847
  %v851 = vrsqrt.pop %v484
  %v852 = vmul.f32 %v484, %v851
  %vm853 = vcmp.eq.f32.partialorder %v484, inf
  %v854 = vsel %vm853, %v484, %v852
  %vm855 = vcmp.eq.f32.partialorder %v484, 0.0
  %v856 = vand.u32 %v484, 2147483648
  %v857 = vsel %vm855, %v856, %v854
  %v858 = vrsqrt.pop %v486
  %v859 = vmul.f32 %v486, %v858
  %vm860 = vcmp.eq.f32.partialorder %v486, inf
  %v861 = vsel %vm860, %v486, %v859
  %vm862 = vcmp.eq.f32.partialorder %v486, 0.0
  %v863 = vand.u32 %v486, 2147483648
  %v864 = vsel %vm862, %v863, %v861
  %v865 = vrsqrt.pop %v488
  %v866 = vmul.f32 %v488, %v865
  %vm867 = vcmp.eq.f32.partialorder %v488, inf
  %v868 = vsel %vm867, %v488, %v866
  %vm869 = vcmp.eq.f32.partialorder %v488, 0.0
  %v870 = vand.u32 %v488, 2147483648
  %v871 = vsel %vm869, %v870, %v868
  %v872 = vrsqrt.pop %v490
  %v873 = vmul.f32 %v490, %v872
  %vm874 = vcmp.eq.f32.partialorder %v490, inf
  %v875 = vsel %vm874, %v490, %v873
  %vm876 = vcmp.eq.f32.partialorder %v490, 0.0
  %v877 = vand.u32 %v490, 2147483648
  %v878 = vsel %vm876, %v877, %v875
  %v879 = vrsqrt.pop %v492
  %v880 = vmul.f32 %v492, %v879
  %vm881 = vcmp.eq.f32.partialorder %v492, inf
  %v882 = vsel %vm881, %v492, %v880
  %vm883 = vcmp.eq.f32.partialorder %v492, 0.0
  %v884 = vand.u32 %v492, 2147483648
  %v885 = vsel %vm883, %v884, %v882
  %v886 = vrsqrt.pop %v494
  %v887 = vmul.f32 %v494, %v886
  %vm888 = vcmp.eq.f32.partialorder %v494, inf
  %v889 = vsel %vm888, %v494, %v887
  %vm890 = vcmp.eq.f32.partialorder %v494, 0.0
  %v891 = vand.u32 %v494, 2147483648
  %v892 = vsel %vm890, %v891, %v889
  %v893 = vrsqrt.pop %v496
  %v894 = vmul.f32 %v496, %v893
  %vm895 = vcmp.eq.f32.partialorder %v496, inf
  %v896 = vsel %vm895, %v496, %v894
  %vm897 = vcmp.eq.f32.partialorder %v496, 0.0
  %v898 = vand.u32 %v496, 2147483648
  %v899 = vsel %vm897, %v898, %v896
  %v900 = vrsqrt.pop %v498
  %v901 = vmul.f32 %v498, %v900
  %vm902 = vcmp.eq.f32.partialorder %v498, inf
  %v903 = vsel %vm902, %v498, %v901
  %vm904 = vcmp.eq.f32.partialorder %v498, 0.0
  %v905 = vand.u32 %v498, 2147483648
  %v906 = vsel %vm904, %v905, %v903
  %v907 = vrsqrt.pop %v500
  %v908 = vmul.f32 %v500, %v907
  %vm909 = vcmp.eq.f32.partialorder %v500, inf
  %v910 = vsel %vm909, %v500, %v908
  %vm911 = vcmp.eq.f32.partialorder %v500, 0.0
  %v912 = vand.u32 %v500, 2147483648
  %v913 = vsel %vm911, %v912, %v910
  %v914 = vrsqrt.pop %v502
  %v915 = vmul.f32 %v502, %v914
  %vm916 = vcmp.eq.f32.partialorder %v502, inf
  %v917 = vsel %vm916, %v502, %v915
  %vm918 = vcmp.eq.f32.partialorder %v502, 0.0
  %v919 = vand.u32 %v502, 2147483648
  %v920 = vsel %vm918, %v919, %v917
  %v921 = vrsqrt.pop %v504
  %v922 = vmul.f32 %v504, %v921
  %vm923 = vcmp.eq.f32.partialorder %v504, inf
  %v924 = vsel %vm923, %v504, %v922
  %vm925 = vcmp.eq.f32.partialorder %v504, 0.0
  %v926 = vand.u32 %v504, 2147483648
  %v927 = vsel %vm925, %v926, %v924
  %v928 = vrsqrt.pop %v506
  %v929 = vmul.f32 %v506, %v928
  %vm930 = vcmp.eq.f32.partialorder %v506, inf
  %v931 = vsel %vm930, %v506, %v929
  %vm932 = vcmp.eq.f32.partialorder %v506, 0.0
  %v933 = vand.u32 %v506, 2147483648
  %v934 = vsel %vm932, %v933, %v931
  %v935 = vrsqrt.pop %v508
  %v936 = vmul.f32 %v508, %v935
  %vm937 = vcmp.eq.f32.partialorder %v508, inf
  %v938 = vsel %vm937, %v508, %v936
  %vm939 = vcmp.eq.f32.partialorder %v508, 0.0
  %v940 = vand.u32 %v508, 2147483648
  %v941 = vsel %vm939, %v940, %v938
  %v942 = vrsqrt.pop %v510
  %v943 = vmul.f32 %v510, %v942
  %vm944 = vcmp.eq.f32.partialorder %v510, inf
  %v945 = vsel %vm944, %v510, %v943
  %vm946 = vcmp.eq.f32.partialorder %v510, 0.0
  %v947 = vand.u32 %v510, 2147483648
  %v948 = vsel %vm946, %v947, %v945
  %v949 = vrsqrt.pop %v512
  %v950 = vmul.f32 %v512, %v949
  %vm951 = vcmp.eq.f32.partialorder %v512, inf
  %v952 = vsel %vm951, %v512, %v950
  %vm953 = vcmp.eq.f32.partialorder %v512, 0.0
  %v954 = vand.u32 %v512, 2147483648
  %v955 = vsel %vm953, %v954, %v952
  %v956 = vrsqrt.pop %v514
  %v957 = vmul.f32 %v514, %v956
  %vm958 = vcmp.eq.f32.partialorder %v514, inf
  %v959 = vsel %vm958, %v514, %v957
  %vm960 = vcmp.eq.f32.partialorder %v514, 0.0
  %v961 = vand.u32 %v514, 2147483648
  %v962 = vsel %vm960, %v961, %v959
  %v963 = vadd.f32 %v521, 1e-10
  %v964 = vadd.f32 %v528, 1e-10
  %v965 = vadd.f32 %v535, 1e-10
  %v966 = vadd.f32 %v542, 1e-10
  %v967 = vadd.f32 %v549, 1e-10
  %v968 = vadd.f32 %v556, 1e-10
  %v969 = vadd.f32 %v563, 1e-10
  %v970 = vadd.f32 %v570, 1e-10
  %v971 = vadd.f32 %v577, 1e-10
  %v972 = vadd.f32 %v584, 1e-10
  %v973 = vadd.f32 %v591, 1e-10
  %v974 = vadd.f32 %v598, 1e-10
  %v975 = vadd.f32 %v605, 1e-10
  %v976 = vadd.f32 %v612, 1e-10
  %v977 = vadd.f32 %v619, 1e-10
  %v978 = vadd.f32 %v626, 1e-10
  %v979 = vadd.f32 %v633, 1e-10
  %v980 = vadd.f32 %v640, 1e-10
  %v981 = vadd.f32 %v647, 1e-10
  %v982 = vadd.f32 %v654, 1e-10
  %v983 = vadd.f32 %v661, 1e-10
  %v984 = vadd.f32 %v668, 1e-10
  %v985 = vadd.f32 %v675, 1e-10
  %v986 = vadd.f32 %v682, 1e-10
  %v987 = vadd.f32 %v689, 1e-10
  %v988 = vadd.f32 %v696, 1e-10
  %v989 = vadd.f32 %v703, 1e-10
  %v990 = vadd.f32 %v710, 1e-10
  %v991 = vadd.f32 %v717, 1e-10
  %v992 = vadd.f32 %v724, 1e-10
  %v993 = vadd.f32 %v731, 1e-10
  %v994 = vadd.f32 %v738, 1e-10
  %v995 = vadd.f32 %v745, 1e-10
  %v996 = vadd.f32 %v752, 1e-10
  %v997 = vadd.f32 %v759, 1e-10
  %v998 = vadd.f32 %v766, 1e-10
  %v999 = vadd.f32 %v773, 1e-10
  %v1000 = vadd.f32 %v780, 1e-10
  %v1001 = vadd.f32 %v787, 1e-10
  %v1002 = vadd.f32 %v794, 1e-10
  %v1003 = vadd.f32 %v801, 1e-10
  %v1004 = vadd.f32 %v808, 1e-10
  %v1005 = vadd.f32 %v815, 1e-10
  %v1006 = vadd.f32 %v822, 1e-10
  %v1007 = vadd.f32 %v829, 1e-10
  %v1008 = vadd.f32 %v836, 1e-10
  %v1009 = vadd.f32 %v843, 1e-10
  %v1010 = vadd.f32 %v850, 1e-10
  %v1011 = vadd.f32 %v857, 1e-10
  %v1012 = vadd.f32 %v864, 1e-10
  %v1013 = vadd.f32 %v871, 1e-10
  %v1014 = vadd.f32 %v878, 1e-10
  %v1015 = vadd.f32 %v885, 1e-10
  %v1016 = vadd.f32 %v892, 1e-10
  %v1017 = vadd.f32 %v899, 1e-10
  %v1018 = vadd.f32 %v906, 1e-10
  %v1019 = vadd.f32 %v913, 1e-10
  %v1020 = vadd.f32 %v920, 1e-10
  %v1021 = vadd.f32 %v927, 1e-10
  %v1022 = vadd.f32 %v934, 1e-10
  %v1023 = vadd.f32 %v941, 1e-10
  %v1024 = vadd.f32 %v948, 1e-10
  %v1025 = vadd.f32 %v955, 1e-10
  %v1026 = vadd.f32 %v962, 1e-10
  %v1027 = vrcp.pop %v963
  %v1028 = vrcp.pop %v964
  %v1029 = vrcp.pop %v965
  %v1030 = vrcp.pop %v966
  %v1031 = vrcp.pop %v967
  %v1032 = vrcp.pop %v968
  %v1033 = vrcp.pop %v969
  %v1034 = vrcp.pop %v970
  %v1035 = vrcp.pop %v971
  %v1036 = vrcp.pop %v972
  %v1037 = vrcp.pop %v973
  %v1038 = vrcp.pop %v974
  %v1039 = vrcp.pop %v975
  %v1040 = vrcp.pop %v976
  %v1041 = vrcp.pop %v977
  %v1042 = vrcp.pop %v978
  %v1043 = vrcp.pop %v979
  %v1044 = vrcp.pop %v980
  %v1045 = vrcp.pop %v981
  %v1046 = vrcp.pop %v982
  %v1047 = vrcp.pop %v983
  %v1048 = vrcp.pop %v984
  %v1049 = vrcp.pop %v985
  %v1050 = vrcp.pop %v986
  %v1051 = vrcp.pop %v987
  %v1052 = vrcp.pop %v988
  %v1053 = vrcp.pop %v989
  %v1054 = vrcp.pop %v990
  %v1055 = vrcp.pop %v991
  %v1056 = vrcp.pop %v992
  %v1057 = vrcp.pop %v993
  %v1058 = vrcp.pop %v994
  %v1059 = vrcp.pop %v995
  %v1060 = vrcp.pop %v996
  %v1061 = vrcp.pop %v997
  %v1062 = vrcp.pop %v998
  %v1063 = vrcp.pop %v999
  %v1064 = vrcp.pop %v1000
  %v1065 = vrcp.pop %v1001
  %v1066 = vrcp.pop %v1002
  %v1067 = vrcp.pop %v1003
  %v1068 = vrcp.pop %v1004
  %v1069 = vrcp.pop %v1005
  %v1070 = vrcp.pop %v1006
  %v1071 = vrcp.pop %v1007
  %v1072 = vrcp.pop %v1008
  %v1073 = vrcp.pop %v1009
  %v1074 = vrcp.pop %v1010
  %v1075 = vrcp.pop %v1011
  %v1076 = vrcp.pop %v1012
  %v1077 = vrcp.pop %v1013
  %v1078 = vrcp.pop %v1014
  %v1079 = vrcp.pop %v1015
  %v1080 = vrcp.pop %v1016
  %v1081 = vrcp.pop %v1017
  %v1082 = vrcp.pop %v1018
  %v1083 = vrcp.pop %v1019
  %v1084 = vrcp.pop %v1020
  %v1085 = vrcp.pop %v1021
  %v1086 = vrcp.pop %v1022
  %v1087 = vrcp.pop %v1023
  %v1088 = vrcp.pop %v1024
  %v1089 = vrcp.pop %v1025
  %v1090 = vrcp.pop %v1026
  %v1091 = vmul.f32 %v259, %v259
  %v1092 = vmul.f32 %v260, %v260
  %v1093 = vmul.f32 %v261, %v261
  %v1094 = vmul.f32 %v262, %v262
  %v1095 = vmul.f32 %v263, %v263
  %v1096 = vmul.f32 %v264, %v264
  %v1097 = vmul.f32 %v265, %v265
  %v1098 = vmul.f32 %v266, %v266
  %v1099 = vmul.f32 %v267, %v267
  %v1100 = vmul.f32 %v268, %v268
  %v1101 = vmul.f32 %v269, %v269
  %v1102 = vmul.f32 %v270, %v270
  %v1103 = vmul.f32 %v271, %v271
  %v1104 = vmul.f32 %v272, %v272
  %v1105 = vmul.f32 %v273, %v273
  %v1106 = vmul.f32 %v274, %v274
  %v1107 = vmul.f32 %v275, %v275
  %v1108 = vmul.f32 %v276, %v276
  %v1109 = vmul.f32 %v277, %v277
  %v1110 = vmul.f32 %v278, %v278
  %v1111 = vmul.f32 %v279, %v279
  %v1112 = vmul.f32 %v280, %v280
  %v1113 = vmul.f32 %v281, %v281
  %v1114 = vmul.f32 %v282, %v282
  %v1115 = vmul.f32 %v283, %v283
  %v1116 = vmul.f32 %v284, %v284
  %v1117 = vmul.f32 %v285, %v285
  %v1118 = vmul.f32 %v286, %v286
  %v1119 = vmul.f32 %v287, %v287
  %v1120 = vmul.f32 %v288, %v288
  %v1121 = vmul.f32 %v289, %v289
  %v1122 = vmul.f32 %v290, %v290
  %v1123 = vmul.f32 %v291, %v291
  %v1124 = vmul.f32 %v292, %v292
  %v1125 = vmul.f32 %v293, %v293
  %v1126 = vmul.f32 %v294, %v294
  %v1127 = vmul.f32 %v295, %v295
  %v1128 = vmul.f32 %v296, %v296
  %v1129 = vmul.f32 %v297, %v297
  %v1130 = vmul.f32 %v298, %v298
  %v1131 = vmul.f32 %v299, %v299
  %v1132 = vmul.f32 %v300, %v300
  %v1133 = vmul.f32 %v301, %v301
  %v1134 = vmul.f32 %v302, %v302
  %v1135 = vmul.f32 %v303, %v303
  %v1136 = vmul.f32 %v304, %v304
  %v1137 = vmul.f32 %v305, %v305
  %v1138 = vmul.f32 %v306, %v306
  %v1139 = vmul.f32 %v307, %v307
  %v1140 = vmul.f32 %v308, %v308
  %v1141 = vmul.f32 %v309, %v309
  %v1142 = vmul.f32 %v310, %v310
  %v1143 = vmul.f32 %v311, %v311
  %v1144 = vmul.f32 %v312, %v312
  %v1145 = vmul.f32 %v313, %v313
  %v1146 = vmul.f32 %v314, %v314
  %v1147 = vmul.f32 %v315, %v315
  %v1148 = vmul.f32 %v316, %v316
  %v1149 = vmul.f32 %v317, %v317
  %v1150 = vmul.f32 %v318, %v318
  %v1151 = vmul.f32 %v319, %v319
  %v1152 = vmul.f32 %v320, %v320
  %v1153 = vmul.f32 %v321, %v321
  %v1154 = vmul.f32 %v322, %v322
  %1155 = vadd.xlane.f32.xlu0 %v1091
  %v1156 = vpop.xlane.xlu0 %1155
  %1157 = vadd.xlane.f32.xlu0 %v1092
  %v1158 = vpop.xlane.xlu0 %1157
  %1159 = vadd.xlane.f32.xlu0 %v1093
  %v1160 = vpop.xlane.xlu0 %1159
  %1161 = vadd.xlane.f32.xlu0 %v1094
  %v1162 = vpop.xlane.xlu0 %1161
  %1163 = vadd.xlane.f32.xlu0 %v1095
  %v1164 = vpop.xlane.xlu0 %1163
  %1165 = vadd.xlane.f32.xlu0 %v1096
  %v1166 = vpop.xlane.xlu0 %1165
  %1167 = vadd.xlane.f32.xlu0 %v1097
  %v1168 = vpop.xlane.xlu0 %1167
  %1169 = vadd.xlane.f32.xlu0 %v1098
  %v1170 = vpop.xlane.xlu0 %1169
  %1171 = vadd.xlane.f32.xlu0 %v1099
  %v1172 = vpop.xlane.xlu0 %1171
  %1173 = vadd.xlane.f32.xlu0 %v1100
  %v1174 = vpop.xlane.xlu0 %1173
  %1175 = vadd.xlane.f32.xlu0 %v1101
  %v1176 = vpop.xlane.xlu0 %1175
  %1177 = vadd.xlane.f32.xlu0 %v1102
  %v1178 = vpop.xlane.xlu0 %1177
  %1179 = vadd.xlane.f32.xlu0 %v1103
  %v1180 = vpop.xlane.xlu0 %1179
  %1181 = vadd.xlane.f32.xlu0 %v1104
  %v1182 = vpop.xlane.xlu0 %1181
  %1183 = vadd.xlane.f32.xlu0 %v1105
  %v1184 = vpop.xlane.xlu0 %1183
  %1185 = vadd.xlane.f32.xlu0 %v1106
  %v1186 = vpop.xlane.xlu0 %1185
  %1187 = vadd.xlane.f32.xlu0 %v1107
  %v1188 = vpop.xlane.xlu0 %1187
  %1189 = vadd.xlane.f32.xlu0 %v1108
  %v1190 = vpop.xlane.xlu0 %1189
  %1191 = vadd.xlane.f32.xlu0 %v1109
  %v1192 = vpop.xlane.xlu0 %1191
  %1193 = vadd.xlane.f32.xlu0 %v1110
  %v1194 = vpop.xlane.xlu0 %1193
  %1195 = vadd.xlane.f32.xlu0 %v1111
  %v1196 = vpop.xlane.xlu0 %1195
  %1197 = vadd.xlane.f32.xlu0 %v1112
  %v1198 = vpop.xlane.xlu0 %1197
  %1199 = vadd.xlane.f32.xlu0 %v1113
  %v1200 = vpop.xlane.xlu0 %1199
  %1201 = vadd.xlane.f32.xlu0 %v1114
  %v1202 = vpop.xlane.xlu0 %1201
  %1203 = vadd.xlane.f32.xlu0 %v1115
  %v1204 = vpop.xlane.xlu0 %1203
  %1205 = vadd.xlane.f32.xlu0 %v1116
  %v1206 = vpop.xlane.xlu0 %1205
  %1207 = vadd.xlane.f32.xlu0 %v1117
  %v1208 = vpop.xlane.xlu0 %1207
  %1209 = vadd.xlane.f32.xlu0 %v1118
  %v1210 = vpop.xlane.xlu0 %1209
  %1211 = vadd.xlane.f32.xlu0 %v1119
  %v1212 = vpop.xlane.xlu0 %1211
  %1213 = vadd.xlane.f32.xlu0 %v1120
  %v1214 = vpop.xlane.xlu0 %1213
  %1215 = vadd.xlane.f32.xlu0 %v1121
  %v1216 = vpop.xlane.xlu0 %1215
  %1217 = vadd.xlane.f32.xlu0 %v1122
  %v1218 = vpop.xlane.xlu0 %1217
  %1219 = vadd.xlane.f32.xlu0 %v1123
  %v1220 = vpop.xlane.xlu0 %1219
  %1221 = vadd.xlane.f32.xlu0 %v1124
  %v1222 = vpop.xlane.xlu0 %1221
  %1223 = vadd.xlane.f32.xlu0 %v1125
  %v1224 = vpop.xlane.xlu0 %1223
  %1225 = vadd.xlane.f32.xlu0 %v1126
  %v1226 = vpop.xlane.xlu0 %1225
  %1227 = vadd.xlane.f32.xlu0 %v1127
  %v1228 = vpop.xlane.xlu0 %1227
  %1229 = vadd.xlane.f32.xlu0 %v1128
  %v1230 = vpop.xlane.xlu0 %1229
  %1231 = vadd.xlane.f32.xlu0 %v1129
  %v1232 = vpop.xlane.xlu0 %1231
  %1233 = vadd.xlane.f32.xlu0 %v1130
  %v1234 = vpop.xlane.xlu0 %1233
  %1235 = vadd.xlane.f32.xlu0 %v1131
  %v1236 = vpop.xlane.xlu0 %1235
  %1237 = vadd.xlane.f32.xlu0 %v1132
  %v1238 = vpop.xlane.xlu0 %1237
  %1239 = vadd.xlane.f32.xlu0 %v1133
  %v1240 = vpop.xlane.xlu0 %1239
  %1241 = vadd.xlane.f32.xlu0 %v1134
  %v1242 = vpop.xlane.xlu0 %1241
  %1243 = vadd.xlane.f32.xlu0 %v1135
  %v1244 = vpop.xlane.xlu0 %1243
  %1245 = vadd.xlane.f32.xlu0 %v1136
  %v1246 = vpop.xlane.xlu0 %1245
  %1247 = vadd.xlane.f32.xlu0 %v1137
  %v1248 = vpop.xlane.xlu0 %1247
  %1249 = vadd.xlane.f32.xlu0 %v1138
  %v1250 = vpop.xlane.xlu0 %1249
  %1251 = vadd.xlane.f32.xlu0 %v1139
  %v1252 = vpop.xlane.xlu0 %1251
  %1253 = vadd.xlane.f32.xlu0 %v1140
  %v1254 = vpop.xlane.xlu0 %1253
  %1255 = vadd.xlane.f32.xlu0 %v1141
  %v1256 = vpop.xlane.xlu0 %1255
  %1257 = vadd.xlane.f32.xlu0 %v1142
  %v1258 = vpop.xlane.xlu0 %1257
  %1259 = vadd.xlane.f32.xlu0 %v1143
  %v1260 = vpop.xlane.xlu0 %1259
  %1261 = vadd.xlane.f32.xlu0 %v1144
  %v1262 = vpop.xlane.xlu0 %1261
  %1263 = vadd.xlane.f32.xlu0 %v1145
  %v1264 = vpop.xlane.xlu0 %1263
  %1265 = vadd.xlane.f32.xlu0 %v1146
  %v1266 = vpop.xlane.xlu0 %1265
  %1267 = vadd.xlane.f32.xlu0 %v1147
  %v1268 = vpop.xlane.xlu0 %1267
  %1269 = vadd.xlane.f32.xlu0 %v1148
  %v1270 = vpop.xlane.xlu0 %1269
  %1271 = vadd.xlane.f32.xlu0 %v1149
  %v1272 = vpop.xlane.xlu0 %1271
  %1273 = vadd.xlane.f32.xlu0 %v1150
  %v1274 = vpop.xlane.xlu0 %1273
  %1275 = vadd.xlane.f32.xlu0 %v1151
  %v1276 = vpop.xlane.xlu0 %1275
  %1277 = vadd.xlane.f32.xlu0 %v1152
  %v1278 = vpop.xlane.xlu0 %1277
  %1279 = vadd.xlane.f32.xlu0 %v1153
  %v1280 = vpop.xlane.xlu0 %1279
  %1281 = vadd.xlane.f32.xlu0 %v1154
  %v1282 = vpop.xlane.xlu0 %1281
  %v1283 = vrsqrt.pop %v1156
  %v1284 = vmul.f32 %v1156, %v1283
  %vm1285 = vcmp.eq.f32.partialorder %v1156, inf
  %v1286 = vsel %vm1285, %v1156, %v1284
  %vm1287 = vcmp.eq.f32.partialorder %v1156, 0.0
  %v1288 = vand.u32 %v1156, 2147483648
  %v1289 = vsel %vm1287, %v1288, %v1286
  %v1290 = vrsqrt.pop %v1158
  %v1291 = vmul.f32 %v1158, %v1290
  %vm1292 = vcmp.eq.f32.partialorder %v1158, inf
  %v1293 = vsel %vm1292, %v1158, %v1291
  %vm1294 = vcmp.eq.f32.partialorder %v1158, 0.0
  %v1295 = vand.u32 %v1158, 2147483648
  %v1296 = vsel %vm1294, %v1295, %v1293
  %v1297 = vrsqrt.pop %v1160
  %v1298 = vmul.f32 %v1160, %v1297
  %vm1299 = vcmp.eq.f32.partialorder %v1160, inf
  %v1300 = vsel %vm1299, %v1160, %v1298
  %vm1301 = vcmp.eq.f32.partialorder %v1160, 0.0
  %v1302 = vand.u32 %v1160, 2147483648
  %v1303 = vsel %vm1301, %v1302, %v1300
  %v1304 = vrsqrt.pop %v1162
  %v1305 = vmul.f32 %v1162, %v1304
  %vm1306 = vcmp.eq.f32.partialorder %v1162, inf
  %v1307 = vsel %vm1306, %v1162, %v1305
  %vm1308 = vcmp.eq.f32.partialorder %v1162, 0.0
  %v1309 = vand.u32 %v1162, 2147483648
  %v1310 = vsel %vm1308, %v1309, %v1307
  %v1311 = vrsqrt.pop %v1164
  %v1312 = vmul.f32 %v1164, %v1311
  %vm1313 = vcmp.eq.f32.partialorder %v1164, inf
  %v1314 = vsel %vm1313, %v1164, %v1312
  %vm1315 = vcmp.eq.f32.partialorder %v1164, 0.0
  %v1316 = vand.u32 %v1164, 2147483648
  %v1317 = vsel %vm1315, %v1316, %v1314
  %v1318 = vrsqrt.pop %v1166
  %v1319 = vmul.f32 %v1166, %v1318
  %vm1320 = vcmp.eq.f32.partialorder %v1166, inf
  %v1321 = vsel %vm1320, %v1166, %v1319
  %vm1322 = vcmp.eq.f32.partialorder %v1166, 0.0
  %v1323 = vand.u32 %v1166, 2147483648
  %v1324 = vsel %vm1322, %v1323, %v1321
  %v1325 = vrsqrt.pop %v1168
  %v1326 = vmul.f32 %v1168, %v1325
  %vm1327 = vcmp.eq.f32.partialorder %v1168, inf
  %v1328 = vsel %vm1327, %v1168, %v1326
  %vm1329 = vcmp.eq.f32.partialorder %v1168, 0.0
  %v1330 = vand.u32 %v1168, 2147483648
  %v1331 = vsel %vm1329, %v1330, %v1328
  %v1332 = vrsqrt.pop %v1170
  %v1333 = vmul.f32 %v1170, %v1332
  %vm1334 = vcmp.eq.f32.partialorder %v1170, inf
  %v1335 = vsel %vm1334, %v1170, %v1333
  %vm1336 = vcmp.eq.f32.partialorder %v1170, 0.0
  %v1337 = vand.u32 %v1170, 2147483648
  %v1338 = vsel %vm1336, %v1337, %v1335
  %v1339 = vrsqrt.pop %v1172
  %v1340 = vmul.f32 %v1172, %v1339
  %vm1341 = vcmp.eq.f32.partialorder %v1172, inf
  %v1342 = vsel %vm1341, %v1172, %v1340
  %vm1343 = vcmp.eq.f32.partialorder %v1172, 0.0
  %v1344 = vand.u32 %v1172, 2147483648
  %v1345 = vsel %vm1343, %v1344, %v1342
  %v1346 = vrsqrt.pop %v1174
  %v1347 = vmul.f32 %v1174, %v1346
  %vm1348 = vcmp.eq.f32.partialorder %v1174, inf
  %v1349 = vsel %vm1348, %v1174, %v1347
  %vm1350 = vcmp.eq.f32.partialorder %v1174, 0.0
  %v1351 = vand.u32 %v1174, 2147483648
  %v1352 = vsel %vm1350, %v1351, %v1349
  %v1353 = vrsqrt.pop %v1176
  %v1354 = vmul.f32 %v1176, %v1353
  %vm1355 = vcmp.eq.f32.partialorder %v1176, inf
  %v1356 = vsel %vm1355, %v1176, %v1354
  %vm1357 = vcmp.eq.f32.partialorder %v1176, 0.0
  %v1358 = vand.u32 %v1176, 2147483648
  %v1359 = vsel %vm1357, %v1358, %v1356
  %v1360 = vrsqrt.pop %v1178
  %v1361 = vmul.f32 %v1178, %v1360
  %vm1362 = vcmp.eq.f32.partialorder %v1178, inf
  %v1363 = vsel %vm1362, %v1178, %v1361
  %vm1364 = vcmp.eq.f32.partialorder %v1178, 0.0
  %v1365 = vand.u32 %v1178, 2147483648
  %v1366 = vsel %vm1364, %v1365, %v1363
  %v1367 = vrsqrt.pop %v1180
  %v1368 = vmul.f32 %v1180, %v1367
  %vm1369 = vcmp.eq.f32.partialorder %v1180, inf
  %v1370 = vsel %vm1369, %v1180, %v1368
  %vm1371 = vcmp.eq.f32.partialorder %v1180, 0.0
  %v1372 = vand.u32 %v1180, 2147483648
  %v1373 = vsel %vm1371, %v1372, %v1370
  %v1374 = vrsqrt.pop %v1182
  %v1375 = vmul.f32 %v1182, %v1374
  %vm1376 = vcmp.eq.f32.partialorder %v1182, inf
  %v1377 = vsel %vm1376, %v1182, %v1375
  %vm1378 = vcmp.eq.f32.partialorder %v1182, 0.0
  %v1379 = vand.u32 %v1182, 2147483648
  %v1380 = vsel %vm1378, %v1379, %v1377
  %v1381 = vrsqrt.pop %v1184
  %v1382 = vmul.f32 %v1184, %v1381
  %vm1383 = vcmp.eq.f32.partialorder %v1184, inf
  %v1384 = vsel %vm1383, %v1184, %v1382
  %vm1385 = vcmp.eq.f32.partialorder %v1184, 0.0
  %v1386 = vand.u32 %v1184, 2147483648
  %v1387 = vsel %vm1385, %v1386, %v1384
  %v1388 = vrsqrt.pop %v1186
  %v1389 = vmul.f32 %v1186, %v1388
  %vm1390 = vcmp.eq.f32.partialorder %v1186, inf
  %v1391 = vsel %vm1390, %v1186, %v1389
  %vm1392 = vcmp.eq.f32.partialorder %v1186, 0.0
  %v1393 = vand.u32 %v1186, 2147483648
  %v1394 = vsel %vm1392, %v1393, %v1391
  %v1395 = vrsqrt.pop %v1188
  %v1396 = vmul.f32 %v1188, %v1395
  %vm1397 = vcmp.eq.f32.partialorder %v1188, inf
  %v1398 = vsel %vm1397, %v1188, %v1396
  %vm1399 = vcmp.eq.f32.partialorder %v1188, 0.0
  %v1400 = vand.u32 %v1188, 2147483648
  %v1401 = vsel %vm1399, %v1400, %v1398
  %v1402 = vrsqrt.pop %v1190
  %v1403 = vmul.f32 %v1190, %v1402
  %vm1404 = vcmp.eq.f32.partialorder %v1190, inf
  %v1405 = vsel %vm1404, %v1190, %v1403
  %vm1406 = vcmp.eq.f32.partialorder %v1190, 0.0
  %v1407 = vand.u32 %v1190, 2147483648
  %v1408 = vsel %vm1406, %v1407, %v1405
  %v1409 = vrsqrt.pop %v1192
  %v1410 = vmul.f32 %v1192, %v1409
  %vm1411 = vcmp.eq.f32.partialorder %v1192, inf
  %v1412 = vsel %vm1411, %v1192, %v1410
  %vm1413 = vcmp.eq.f32.partialorder %v1192, 0.0
  %v1414 = vand.u32 %v1192, 2147483648
  %v1415 = vsel %vm1413, %v1414, %v1412
  %v1416 = vrsqrt.pop %v1194
  %v1417 = vmul.f32 %v1194, %v1416
  %vm1418 = vcmp.eq.f32.partialorder %v1194, inf
  %v1419 = vsel %vm1418, %v1194, %v1417
  %vm1420 = vcmp.eq.f32.partialorder %v1194, 0.0
  %v1421 = vand.u32 %v1194, 2147483648
  %v1422 = vsel %vm1420, %v1421, %v1419
  %v1423 = vrsqrt.pop %v1196
  %v1424 = vmul.f32 %v1196, %v1423
  %vm1425 = vcmp.eq.f32.partialorder %v1196, inf
  %v1426 = vsel %vm1425, %v1196, %v1424
  %vm1427 = vcmp.eq.f32.partialorder %v1196, 0.0
  %v1428 = vand.u32 %v1196, 2147483648
  %v1429 = vsel %vm1427, %v1428, %v1426
  %v1430 = vrsqrt.pop %v1198
  %v1431 = vmul.f32 %v1198, %v1430
  %vm1432 = vcmp.eq.f32.partialorder %v1198, inf
  %v1433 = vsel %vm1432, %v1198, %v1431
  %vm1434 = vcmp.eq.f32.partialorder %v1198, 0.0
  %v1435 = vand.u32 %v1198, 2147483648
  %v1436 = vsel %vm1434, %v1435, %v1433
  %v1437 = vrsqrt.pop %v1200
  %v1438 = vmul.f32 %v1200, %v1437
  %vm1439 = vcmp.eq.f32.partialorder %v1200, inf
  %v1440 = vsel %vm1439, %v1200, %v1438
  %vm1441 = vcmp.eq.f32.partialorder %v1200, 0.0
  %v1442 = vand.u32 %v1200, 2147483648
  %v1443 = vsel %vm1441, %v1442, %v1440
  %v1444 = vrsqrt.pop %v1202
  %v1445 = vmul.f32 %v1202, %v1444
  %vm1446 = vcmp.eq.f32.partialorder %v1202, inf
  %v1447 = vsel %vm1446, %v1202, %v1445
  %vm1448 = vcmp.eq.f32.partialorder %v1202, 0.0
  %v1449 = vand.u32 %v1202, 2147483648
  %v1450 = vsel %vm1448, %v1449, %v1447
  %v1451 = vrsqrt.pop %v1204
  %v1452 = vmul.f32 %v1204, %v1451
  %vm1453 = vcmp.eq.f32.partialorder %v1204, inf
  %v1454 = vsel %vm1453, %v1204, %v1452
  %vm1455 = vcmp.eq.f32.partialorder %v1204, 0.0
  %v1456 = vand.u32 %v1204, 2147483648
  %v1457 = vsel %vm1455, %v1456, %v1454
  %v1458 = vrsqrt.pop %v1206
  %v1459 = vmul.f32 %v1206, %v1458
  %vm1460 = vcmp.eq.f32.partialorder %v1206, inf
  %v1461 = vsel %vm1460, %v1206, %v1459
  %vm1462 = vcmp.eq.f32.partialorder %v1206, 0.0
  %v1463 = vand.u32 %v1206, 2147483648
  %v1464 = vsel %vm1462, %v1463, %v1461
  %v1465 = vrsqrt.pop %v1208
  %v1466 = vmul.f32 %v1208, %v1465
  %vm1467 = vcmp.eq.f32.partialorder %v1208, inf
  %v1468 = vsel %vm1467, %v1208, %v1466
  %vm1469 = vcmp.eq.f32.partialorder %v1208, 0.0
  %v1470 = vand.u32 %v1208, 2147483648
  %v1471 = vsel %vm1469, %v1470, %v1468
  %v1472 = vrsqrt.pop %v1210
  %v1473 = vmul.f32 %v1210, %v1472
  %vm1474 = vcmp.eq.f32.partialorder %v1210, inf
  %v1475 = vsel %vm1474, %v1210, %v1473
  %vm1476 = vcmp.eq.f32.partialorder %v1210, 0.0
  %v1477 = vand.u32 %v1210, 2147483648
  %v1478 = vsel %vm1476, %v1477, %v1475
  %v1479 = vrsqrt.pop %v1212
  %v1480 = vmul.f32 %v1212, %v1479
  %vm1481 = vcmp.eq.f32.partialorder %v1212, inf
  %v1482 = vsel %vm1481, %v1212, %v1480
  %vm1483 = vcmp.eq.f32.partialorder %v1212, 0.0
  %v1484 = vand.u32 %v1212, 2147483648
  %v1485 = vsel %vm1483, %v1484, %v1482
  %v1486 = vrsqrt.pop %v1214
  %v1487 = vmul.f32 %v1214, %v1486
  %vm1488 = vcmp.eq.f32.partialorder %v1214, inf
  %v1489 = vsel %vm1488, %v1214, %v1487
  %vm1490 = vcmp.eq.f32.partialorder %v1214, 0.0
  %v1491 = vand.u32 %v1214, 2147483648
  %v1492 = vsel %vm1490, %v1491, %v1489
  %v1493 = vrsqrt.pop %v1216
  %v1494 = vmul.f32 %v1216, %v1493
  %vm1495 = vcmp.eq.f32.partialorder %v1216, inf
  %v1496 = vsel %vm1495, %v1216, %v1494
  %vm1497 = vcmp.eq.f32.partialorder %v1216, 0.0
  %v1498 = vand.u32 %v1216, 2147483648
  %v1499 = vsel %vm1497, %v1498, %v1496
  %v1500 = vrsqrt.pop %v1218
  %v1501 = vmul.f32 %v1218, %v1500
  %vm1502 = vcmp.eq.f32.partialorder %v1218, inf
  %v1503 = vsel %vm1502, %v1218, %v1501
  %vm1504 = vcmp.eq.f32.partialorder %v1218, 0.0
  %v1505 = vand.u32 %v1218, 2147483648
  %v1506 = vsel %vm1504, %v1505, %v1503
  %v1507 = vrsqrt.pop %v1220
  %v1508 = vmul.f32 %v1220, %v1507
  %vm1509 = vcmp.eq.f32.partialorder %v1220, inf
  %v1510 = vsel %vm1509, %v1220, %v1508
  %vm1511 = vcmp.eq.f32.partialorder %v1220, 0.0
  %v1512 = vand.u32 %v1220, 2147483648
  %v1513 = vsel %vm1511, %v1512, %v1510
  %v1514 = vrsqrt.pop %v1222
  %v1515 = vmul.f32 %v1222, %v1514
  %vm1516 = vcmp.eq.f32.partialorder %v1222, inf
  %v1517 = vsel %vm1516, %v1222, %v1515
  %vm1518 = vcmp.eq.f32.partialorder %v1222, 0.0
  %v1519 = vand.u32 %v1222, 2147483648
  %v1520 = vsel %vm1518, %v1519, %v1517
  %v1521 = vrsqrt.pop %v1224
  %v1522 = vmul.f32 %v1224, %v1521
  %vm1523 = vcmp.eq.f32.partialorder %v1224, inf
  %v1524 = vsel %vm1523, %v1224, %v1522
  %vm1525 = vcmp.eq.f32.partialorder %v1224, 0.0
  %v1526 = vand.u32 %v1224, 2147483648
  %v1527 = vsel %vm1525, %v1526, %v1524
  %v1528 = vrsqrt.pop %v1226
  %v1529 = vmul.f32 %v1226, %v1528
  %vm1530 = vcmp.eq.f32.partialorder %v1226, inf
  %v1531 = vsel %vm1530, %v1226, %v1529
  %vm1532 = vcmp.eq.f32.partialorder %v1226, 0.0
  %v1533 = vand.u32 %v1226, 2147483648
  %v1534 = vsel %vm1532, %v1533, %v1531
  %v1535 = vrsqrt.pop %v1228
  %v1536 = vmul.f32 %v1228, %v1535
  %vm1537 = vcmp.eq.f32.partialorder %v1228, inf
  %v1538 = vsel %vm1537, %v1228, %v1536
  %vm1539 = vcmp.eq.f32.partialorder %v1228, 0.0
  %v1540 = vand.u32 %v1228, 2147483648
  %v1541 = vsel %vm1539, %v1540, %v1538
  %v1542 = vrsqrt.pop %v1230
  %v1543 = vmul.f32 %v1230, %v1542
  %vm1544 = vcmp.eq.f32.partialorder %v1230, inf
  %v1545 = vsel %vm1544, %v1230, %v1543
  %vm1546 = vcmp.eq.f32.partialorder %v1230, 0.0
  %v1547 = vand.u32 %v1230, 2147483648
  %v1548 = vsel %vm1546, %v1547, %v1545
  %v1549 = vrsqrt.pop %v1232
  %v1550 = vmul.f32 %v1232, %v1549
  %vm1551 = vcmp.eq.f32.partialorder %v1232, inf
  %v1552 = vsel %vm1551, %v1232, %v1550
  %vm1553 = vcmp.eq.f32.partialorder %v1232, 0.0
  %v1554 = vand.u32 %v1232, 2147483648
  %v1555 = vsel %vm1553, %v1554, %v1552
  %v1556 = vrsqrt.pop %v1234
  %v1557 = vmul.f32 %v1234, %v1556
  %vm1558 = vcmp.eq.f32.partialorder %v1234, inf
  %v1559 = vsel %vm1558, %v1234, %v1557
  %vm1560 = vcmp.eq.f32.partialorder %v1234, 0.0
  %v1561 = vand.u32 %v1234, 2147483648
  %v1562 = vsel %vm1560, %v1561, %v1559
  %v1563 = vrsqrt.pop %v1236
  %v1564 = vmul.f32 %v1236, %v1563
  %vm1565 = vcmp.eq.f32.partialorder %v1236, inf
  %v1566 = vsel %vm1565, %v1236, %v1564
  %vm1567 = vcmp.eq.f32.partialorder %v1236, 0.0
  %v1568 = vand.u32 %v1236, 2147483648
  %v1569 = vsel %vm1567, %v1568, %v1566
  %v1570 = vrsqrt.pop %v1238
  %v1571 = vmul.f32 %v1238, %v1570
  %vm1572 = vcmp.eq.f32.partialorder %v1238, inf
  %v1573 = vsel %vm1572, %v1238, %v1571
  %vm1574 = vcmp.eq.f32.partialorder %v1238, 0.0
  %v1575 = vand.u32 %v1238, 2147483648
  %v1576 = vsel %vm1574, %v1575, %v1573
  %v1577 = vrsqrt.pop %v1240
  %v1578 = vmul.f32 %v1240, %v1577
  %vm1579 = vcmp.eq.f32.partialorder %v1240, inf
  %v1580 = vsel %vm1579, %v1240, %v1578
  %vm1581 = vcmp.eq.f32.partialorder %v1240, 0.0
  %v1582 = vand.u32 %v1240, 2147483648
  %v1583 = vsel %vm1581, %v1582, %v1580
  %v1584 = vrsqrt.pop %v1242
  %v1585 = vmul.f32 %v1242, %v1584
  %vm1586 = vcmp.eq.f32.partialorder %v1242, inf
  %v1587 = vsel %vm1586, %v1242, %v1585
  %vm1588 = vcmp.eq.f32.partialorder %v1242, 0.0
  %v1589 = vand.u32 %v1242, 2147483648
  %v1590 = vsel %vm1588, %v1589, %v1587
  %v1591 = vrsqrt.pop %v1244
  %v1592 = vmul.f32 %v1244, %v1591
  %vm1593 = vcmp.eq.f32.partialorder %v1244, inf
  %v1594 = vsel %vm1593, %v1244, %v1592
  %vm1595 = vcmp.eq.f32.partialorder %v1244, 0.0
  %v1596 = vand.u32 %v1244, 2147483648
  %v1597 = vsel %vm1595, %v1596, %v1594
  %v1598 = vrsqrt.pop %v1246
  %v1599 = vmul.f32 %v1246, %v1598
  %vm1600 = vcmp.eq.f32.partialorder %v1246, inf
  %v1601 = vsel %vm1600, %v1246, %v1599
  %vm1602 = vcmp.eq.f32.partialorder %v1246, 0.0
  %v1603 = vand.u32 %v1246, 2147483648
  %v1604 = vsel %vm1602, %v1603, %v1601
  %v1605 = vrsqrt.pop %v1248
  %v1606 = vmul.f32 %v1248, %v1605
  %vm1607 = vcmp.eq.f32.partialorder %v1248, inf
  %v1608 = vsel %vm1607, %v1248, %v1606
  %vm1609 = vcmp.eq.f32.partialorder %v1248, 0.0
  %v1610 = vand.u32 %v1248, 2147483648
  %v1611 = vsel %vm1609, %v1610, %v1608
  %v1612 = vrsqrt.pop %v1250
  %v1613 = vmul.f32 %v1250, %v1612
  %vm1614 = vcmp.eq.f32.partialorder %v1250, inf
  %v1615 = vsel %vm1614, %v1250, %v1613
  %vm1616 = vcmp.eq.f32.partialorder %v1250, 0.0
  %v1617 = vand.u32 %v1250, 2147483648
  %v1618 = vsel %vm1616, %v1617, %v1615
  %v1619 = vrsqrt.pop %v1252
  %v1620 = vmul.f32 %v1252, %v1619
  %vm1621 = vcmp.eq.f32.partialorder %v1252, inf
  %v1622 = vsel %vm1621, %v1252, %v1620
  %vm1623 = vcmp.eq.f32.partialorder %v1252, 0.0
  %v1624 = vand.u32 %v1252, 2147483648
  %v1625 = vsel %vm1623, %v1624, %v1622
  %v1626 = vrsqrt.pop %v1254
  %v1627 = vmul.f32 %v1254, %v1626
  %vm1628 = vcmp.eq.f32.partialorder %v1254, inf
  %v1629 = vsel %vm1628, %v1254, %v1627
  %vm1630 = vcmp.eq.f32.partialorder %v1254, 0.0
  %v1631 = vand.u32 %v1254, 2147483648
  %v1632 = vsel %vm1630, %v1631, %v1629
  %v1633 = vrsqrt.pop %v1256
  %v1634 = vmul.f32 %v1256, %v1633
  %vm1635 = vcmp.eq.f32.partialorder %v1256, inf
  %v1636 = vsel %vm1635, %v1256, %v1634
  %vm1637 = vcmp.eq.f32.partialorder %v1256, 0.0
  %v1638 = vand.u32 %v1256, 2147483648
  %v1639 = vsel %vm1637, %v1638, %v1636
  %v1640 = vrsqrt.pop %v1258
  %v1641 = vmul.f32 %v1258, %v1640
  %vm1642 = vcmp.eq.f32.partialorder %v1258, inf
  %v1643 = vsel %vm1642, %v1258, %v1641
  %vm1644 = vcmp.eq.f32.partialorder %v1258, 0.0
  %v1645 = vand.u32 %v1258, 2147483648
  %v1646 = vsel %vm1644, %v1645, %v1643
  %v1647 = vrsqrt.pop %v1260
  %v1648 = vmul.f32 %v1260, %v1647
  %vm1649 = vcmp.eq.f32.partialorder %v1260, inf
  %v1650 = vsel %vm1649, %v1260, %v1648
  %vm1651 = vcmp.eq.f32.partialorder %v1260, 0.0
  %v1652 = vand.u32 %v1260, 2147483648
  %v1653 = vsel %vm1651, %v1652, %v1650
  %v1654 = vrsqrt.pop %v1262
  %v1655 = vmul.f32 %v1262, %v1654
  %vm1656 = vcmp.eq.f32.partialorder %v1262, inf
  %v1657 = vsel %vm1656, %v1262, %v1655
  %vm1658 = vcmp.eq.f32.partialorder %v1262, 0.0
  %v1659 = vand.u32 %v1262, 2147483648
  %v1660 = vsel %vm1658, %v1659, %v1657
  %v1661 = vrsqrt.pop %v1264
  %v1662 = vmul.f32 %v1264, %v1661
  %vm1663 = vcmp.eq.f32.partialorder %v1264, inf
  %v1664 = vsel %vm1663, %v1264, %v1662
  %vm1665 = vcmp.eq.f32.partialorder %v1264, 0.0
  %v1666 = vand.u32 %v1264, 2147483648
  %v1667 = vsel %vm1665, %v1666, %v1664
  %v1668 = vrsqrt.pop %v1266
  %v1669 = vmul.f32 %v1266, %v1668
  %vm1670 = vcmp.eq.f32.partialorder %v1266, inf
  %v1671 = vsel %vm1670, %v1266, %v1669
  %vm1672 = vcmp.eq.f32.partialorder %v1266, 0.0
  %v1673 = vand.u32 %v1266, 2147483648
  %v1674 = vsel %vm1672, %v1673, %v1671
  %v1675 = vrsqrt.pop %v1268
  %v1676 = vmul.f32 %v1268, %v1675
  %vm1677 = vcmp.eq.f32.partialorder %v1268, inf
  %v1678 = vsel %vm1677, %v1268, %v1676
  %vm1679 = vcmp.eq.f32.partialorder %v1268, 0.0
  %v1680 = vand.u32 %v1268, 2147483648
  %v1681 = vsel %vm1679, %v1680, %v1678
  %v1682 = vrsqrt.pop %v1270
  %v1683 = vmul.f32 %v1270, %v1682
  %vm1684 = vcmp.eq.f32.partialorder %v1270, inf
  %v1685 = vsel %vm1684, %v1270, %v1683
  %vm1686 = vcmp.eq.f32.partialorder %v1270, 0.0
  %v1687 = vand.u32 %v1270, 2147483648
  %v1688 = vsel %vm1686, %v1687, %v1685
  %v1689 = vrsqrt.pop %v1272
  %v1690 = vmul.f32 %v1272, %v1689
  %vm1691 = vcmp.eq.f32.partialorder %v1272, inf
  %v1692 = vsel %vm1691, %v1272, %v1690
  %vm1693 = vcmp.eq.f32.partialorder %v1272, 0.0
  %v1694 = vand.u32 %v1272, 2147483648
  %v1695 = vsel %vm1693, %v1694, %v1692
  %v1696 = vrsqrt.pop %v1274
  %v1697 = vmul.f32 %v1274, %v1696
  %vm1698 = vcmp.eq.f32.partialorder %v1274, inf
  %v1699 = vsel %vm1698, %v1274, %v1697
  %vm1700 = vcmp.eq.f32.partialorder %v1274, 0.0
  %v1701 = vand.u32 %v1274, 2147483648
  %v1702 = vsel %vm1700, %v1701, %v1699
  %v1703 = vrsqrt.pop %v1276
  %v1704 = vmul.f32 %v1276, %v1703
  %vm1705 = vcmp.eq.f32.partialorder %v1276, inf
  %v1706 = vsel %vm1705, %v1276, %v1704
  %vm1707 = vcmp.eq.f32.partialorder %v1276, 0.0
  %v1708 = vand.u32 %v1276, 2147483648
  %v1709 = vsel %vm1707, %v1708, %v1706
  %v1710 = vrsqrt.pop %v1278
  %v1711 = vmul.f32 %v1278, %v1710
  %vm1712 = vcmp.eq.f32.partialorder %v1278, inf
  %v1713 = vsel %vm1712, %v1278, %v1711
  %vm1714 = vcmp.eq.f32.partialorder %v1278, 0.0
  %v1715 = vand.u32 %v1278, 2147483648
  %v1716 = vsel %vm1714, %v1715, %v1713
  %v1717 = vrsqrt.pop %v1280
  %v1718 = vmul.f32 %v1280, %v1717
  %vm1719 = vcmp.eq.f32.partialorder %v1280, inf
  %v1720 = vsel %vm1719, %v1280, %v1718
  %vm1721 = vcmp.eq.f32.partialorder %v1280, 0.0
  %v1722 = vand.u32 %v1280, 2147483648
  %v1723 = vsel %vm1721, %v1722, %v1720
  %v1724 = vrsqrt.pop %v1282
  %v1725 = vmul.f32 %v1282, %v1724
  %vm1726 = vcmp.eq.f32.partialorder %v1282, inf
  %v1727 = vsel %vm1726, %v1282, %v1725
  %vm1728 = vcmp.eq.f32.partialorder %v1282, 0.0
  %v1729 = vand.u32 %v1282, 2147483648
  %v1730 = vsel %vm1728, %v1729, %v1727
  %v1731 = vadd.f32 %v1289, 1e-10
  %v1732 = vadd.f32 %v1296, 1e-10
  %v1733 = vadd.f32 %v1303, 1e-10
  %v1734 = vadd.f32 %v1310, 1e-10
  %v1735 = vadd.f32 %v1317, 1e-10
  %v1736 = vadd.f32 %v1324, 1e-10
  %v1737 = vadd.f32 %v1331, 1e-10
  %v1738 = vadd.f32 %v1338, 1e-10
  %v1739 = vadd.f32 %v1345, 1e-10
  %v1740 = vadd.f32 %v1352, 1e-10
  %v1741 = vadd.f32 %v1359, 1e-10
  %v1742 = vadd.f32 %v1366, 1e-10
  %v1743 = vadd.f32 %v1373, 1e-10
  %v1744 = vadd.f32 %v1380, 1e-10
  %v1745 = vadd.f32 %v1387, 1e-10
  %v1746 = vadd.f32 %v1394, 1e-10
  %v1747 = vadd.f32 %v1401, 1e-10
  %v1748 = vadd.f32 %v1408, 1e-10
  %v1749 = vadd.f32 %v1415, 1e-10
  %v1750 = vadd.f32 %v1422, 1e-10
  %v1751 = vadd.f32 %v1429, 1e-10
  %v1752 = vadd.f32 %v1436, 1e-10
  %v1753 = vadd.f32 %v1443, 1e-10
  %v1754 = vadd.f32 %v1450, 1e-10
  %v1755 = vadd.f32 %v1457, 1e-10
  %v1756 = vadd.f32 %v1464, 1e-10
  %v1757 = vadd.f32 %v1471, 1e-10
  %v1758 = vadd.f32 %v1478, 1e-10
  %v1759 = vadd.f32 %v1485, 1e-10
  %v1760 = vadd.f32 %v1492, 1e-10
  %v1761 = vadd.f32 %v1499, 1e-10
  %v1762 = vadd.f32 %v1506, 1e-10
  %v1763 = vadd.f32 %v1513, 1e-10
  %v1764 = vadd.f32 %v1520, 1e-10
  %v1765 = vadd.f32 %v1527, 1e-10
  %v1766 = vadd.f32 %v1534, 1e-10
  %v1767 = vadd.f32 %v1541, 1e-10
  %v1768 = vadd.f32 %v1548, 1e-10
  %v1769 = vadd.f32 %v1555, 1e-10
  %v1770 = vadd.f32 %v1562, 1e-10
  %v1771 = vadd.f32 %v1569, 1e-10
  %v1772 = vadd.f32 %v1576, 1e-10
  %v1773 = vadd.f32 %v1583, 1e-10
  %v1774 = vadd.f32 %v1590, 1e-10
  %v1775 = vadd.f32 %v1597, 1e-10
  %v1776 = vadd.f32 %v1604, 1e-10
  %v1777 = vadd.f32 %v1611, 1e-10
  %v1778 = vadd.f32 %v1618, 1e-10
  %v1779 = vadd.f32 %v1625, 1e-10
  %v1780 = vadd.f32 %v1632, 1e-10
  %v1781 = vadd.f32 %v1639, 1e-10
  %v1782 = vadd.f32 %v1646, 1e-10
  %v1783 = vadd.f32 %v1653, 1e-10
  %v1784 = vadd.f32 %v1660, 1e-10
  %v1785 = vadd.f32 %v1667, 1e-10
  %v1786 = vadd.f32 %v1674, 1e-10
  %v1787 = vadd.f32 %v1681, 1e-10
  %v1788 = vadd.f32 %v1688, 1e-10
  %v1789 = vadd.f32 %v1695, 1e-10
  %v1790 = vadd.f32 %v1702, 1e-10
  %v1791 = vadd.f32 %v1709, 1e-10
  %v1792 = vadd.f32 %v1716, 1e-10
  %v1793 = vadd.f32 %v1723, 1e-10
  %v1794 = vadd.f32 %v1730, 1e-10
  %v1795 = vrcp.pop %v1731
  %v1796 = vrcp.pop %v1732
  %v1797 = vrcp.pop %v1733
  %v1798 = vrcp.pop %v1734
  %v1799 = vrcp.pop %v1735
  %v1800 = vrcp.pop %v1736
  %v1801 = vrcp.pop %v1737
  %v1802 = vrcp.pop %v1738
  %v1803 = vrcp.pop %v1739
  %v1804 = vrcp.pop %v1740
  %v1805 = vrcp.pop %v1741
  %v1806 = vrcp.pop %v1742
  %v1807 = vrcp.pop %v1743
  %v1808 = vrcp.pop %v1744
  %v1809 = vrcp.pop %v1745
  %v1810 = vrcp.pop %v1746
  %v1811 = vrcp.pop %v1747
  %v1812 = vrcp.pop %v1748
  %v1813 = vrcp.pop %v1749
  %v1814 = vrcp.pop %v1750
  %v1815 = vrcp.pop %v1751
  %v1816 = vrcp.pop %v1752
  %v1817 = vrcp.pop %v1753
  %v1818 = vrcp.pop %v1754
  %v1819 = vrcp.pop %v1755
  %v1820 = vrcp.pop %v1756
  %v1821 = vrcp.pop %v1757
  %v1822 = vrcp.pop %v1758
  %v1823 = vrcp.pop %v1759
  %v1824 = vrcp.pop %v1760
  %v1825 = vrcp.pop %v1761
  %v1826 = vrcp.pop %v1762
  %v1827 = vrcp.pop %v1763
  %v1828 = vrcp.pop %v1764
  %v1829 = vrcp.pop %v1765
  %v1830 = vrcp.pop %v1766
  %v1831 = vrcp.pop %v1767
  %v1832 = vrcp.pop %v1768
  %v1833 = vrcp.pop %v1769
  %v1834 = vrcp.pop %v1770
  %v1835 = vrcp.pop %v1771
  %v1836 = vrcp.pop %v1772
  %v1837 = vrcp.pop %v1773
  %v1838 = vrcp.pop %v1774
  %v1839 = vrcp.pop %v1775
  %v1840 = vrcp.pop %v1776
  %v1841 = vrcp.pop %v1777
  %v1842 = vrcp.pop %v1778
  %v1843 = vrcp.pop %v1779
  %v1844 = vrcp.pop %v1780
  %v1845 = vrcp.pop %v1781
  %v1846 = vrcp.pop %v1782
  %v1847 = vrcp.pop %v1783
  %v1848 = vrcp.pop %v1784
  %v1849 = vrcp.pop %v1785
  %v1850 = vrcp.pop %v1786
  %v1851 = vrcp.pop %v1787
  %v1852 = vrcp.pop %v1788
  %v1853 = vrcp.pop %v1789
  %v1854 = vrcp.pop %v1790
  %v1855 = vrcp.pop %v1791
  %v1856 = vrcp.pop %v1792
  %v1857 = vrcp.pop %v1793
  %v1858 = vrcp.pop %v1794
  %v1859 = vmul.f32 %v131, %v1027
  %v1860 = vmul.f32 %v132, %v1028
  %v1861 = vmul.f32 %v133, %v1029
  %v1862 = vmul.f32 %v134, %v1030
  %v1863 = vmul.f32 %v135, %v1031
  %v1864 = vmul.f32 %v136, %v1032
  %v1865 = vmul.f32 %v137, %v1033
  %v1866 = vmul.f32 %v138, %v1034
  %v1867 = vmul.f32 %v139, %v1035
  %v1868 = vmul.f32 %v140, %v1036
  %v1869 = vmul.f32 %v141, %v1037
  %v1870 = vmul.f32 %v142, %v1038
  %v1871 = vmul.f32 %v143, %v1039
  %v1872 = vmul.f32 %v144, %v1040
  %v1873 = vmul.f32 %v145, %v1041
  %v1874 = vmul.f32 %v146, %v1042
  %v1875 = vmul.f32 %v147, %v1043
  %v1876 = vmul.f32 %v148, %v1044
  %v1877 = vmul.f32 %v149, %v1045
  %v1878 = vmul.f32 %v150, %v1046
  %v1879 = vmul.f32 %v151, %v1047
  %v1880 = vmul.f32 %v152, %v1048
  %v1881 = vmul.f32 %v153, %v1049
  %v1882 = vmul.f32 %v154, %v1050
  %v1883 = vmul.f32 %v155, %v1051
  %v1884 = vmul.f32 %v156, %v1052
  %v1885 = vmul.f32 %v157, %v1053
  %v1886 = vmul.f32 %v158, %v1054
  %v1887 = vmul.f32 %v159, %v1055
  %v1888 = vmul.f32 %v160, %v1056
  %v1889 = vmul.f32 %v161, %v1057
  %v1890 = vmul.f32 %v162, %v1058
  %v1891 = vmul.f32 %v163, %v1059
  %v1892 = vmul.f32 %v164, %v1060
  %v1893 = vmul.f32 %v165, %v1061
  %v1894 = vmul.f32 %v166, %v1062
  %v1895 = vmul.f32 %v167, %v1063
  %v1896 = vmul.f32 %v168, %v1064
  %v1897 = vmul.f32 %v169, %v1065
  %v1898 = vmul.f32 %v170, %v1066
  %v1899 = vmul.f32 %v171, %v1067
  %v1900 = vmul.f32 %v172, %v1068
  %v1901 = vmul.f32 %v173, %v1069
  %v1902 = vmul.f32 %v174, %v1070
  %v1903 = vmul.f32 %v175, %v1071
  %v1904 = vmul.f32 %v176, %v1072
  %v1905 = vmul.f32 %v177, %v1073
  %v1906 = vmul.f32 %v178, %v1074
  %v1907 = vmul.f32 %v179, %v1075
  %v1908 = vmul.f32 %v180, %v1076
  %v1909 = vmul.f32 %v181, %v1077
  %v1910 = vmul.f32 %v182, %v1078
  %v1911 = vmul.f32 %v183, %v1079
  %v1912 = vmul.f32 %v184, %v1080
  %v1913 = vmul.f32 %v185, %v1081
  %v1914 = vmul.f32 %v186, %v1082
  %v1915 = vmul.f32 %v187, %v1083
  %v1916 = vmul.f32 %v188, %v1084
  %v1917 = vmul.f32 %v189, %v1085
  %v1918 = vmul.f32 %v190, %v1086
  %v1919 = vmul.f32 %v191, %v1087
  %v1920 = vmul.f32 %v192, %v1088
  %v1921 = vmul.f32 %v193, %v1089
  %v1922 = vmul.f32 %v194, %v1090
  %v1923 = vmul.f32 %v259, %v1795
  %v1924 = vmul.f32 %v260, %v1796
  %v1925 = vmul.f32 %v261, %v1797
  %v1926 = vmul.f32 %v262, %v1798
  %v1927 = vmul.f32 %v263, %v1799
  %v1928 = vmul.f32 %v264, %v1800
  %v1929 = vmul.f32 %v265, %v1801
  %v1930 = vmul.f32 %v266, %v1802
  %v1931 = vmul.f32 %v267, %v1803
  %v1932 = vmul.f32 %v268, %v1804
  %v1933 = vmul.f32 %v269, %v1805
  %v1934 = vmul.f32 %v270, %v1806
  %v1935 = vmul.f32 %v271, %v1807
  %v1936 = vmul.f32 %v272, %v1808
  %v1937 = vmul.f32 %v273, %v1809
  %v1938 = vmul.f32 %v274, %v1810
  %v1939 = vmul.f32 %v275, %v1811
  %v1940 = vmul.f32 %v276, %v1812
  %v1941 = vmul.f32 %v277, %v1813
  %v1942 = vmul.f32 %v278, %v1814
  %v1943 = vmul.f32 %v279, %v1815
  %v1944 = vmul.f32 %v280, %v1816
  %v1945 = vmul.f32 %v281, %v1817
  %v1946 = vmul.f32 %v282, %v1818
  %v1947 = vmul.f32 %v283, %v1819
  %v1948 = vmul.f32 %v284, %v1820
  %v1949 = vmul.f32 %v285, %v1821
  %v1950 = vmul.f32 %v286, %v1822
  %v1951 = vmul.f32 %v287, %v1823
  %v1952 = vmul.f32 %v288, %v1824
  %v1953 = vmul.f32 %v289, %v1825
  %v1954 = vmul.f32 %v290, %v1826
  %v1955 = vmul.f32 %v291, %v1827
  %v1956 = vmul.f32 %v292, %v1828
  %v1957 = vmul.f32 %v293, %v1829
  %v1958 = vmul.f32 %v294, %v1830
  %v1959 = vmul.f32 %v295, %v1831
  %v1960 = vmul.f32 %v296, %v1832
  %v1961 = vmul.f32 %v297, %v1833
  %v1962 = vmul.f32 %v298, %v1834
  %v1963 = vmul.f32 %v299, %v1835
  %v1964 = vmul.f32 %v300, %v1836
  %v1965 = vmul.f32 %v301, %v1837
  %v1966 = vmul.f32 %v302, %v1838
  %v1967 = vmul.f32 %v303, %v1839
  %v1968 = vmul.f32 %v304, %v1840
  %v1969 = vmul.f32 %v305, %v1841
  %v1970 = vmul.f32 %v306, %v1842
  %v1971 = vmul.f32 %v307, %v1843
  %v1972 = vmul.f32 %v308, %v1844
  %v1973 = vmul.f32 %v309, %v1845
  %v1974 = vmul.f32 %v310, %v1846
  %v1975 = vmul.f32 %v311, %v1847
  %v1976 = vmul.f32 %v312, %v1848
  %v1977 = vmul.f32 %v313, %v1849
  %v1978 = vmul.f32 %v314, %v1850
  %v1979 = vmul.f32 %v315, %v1851
  %v1980 = vmul.f32 %v316, %v1852
  %v1981 = vmul.f32 %v317, %v1853
  %v1982 = vmul.f32 %v318, %v1854
  %v1983 = vmul.f32 %v319, %v1855
  %v1984 = vmul.f32 %v320, %v1856
  %v1985 = vmul.f32 %v321, %v1857
  %v1986 = vmul.f32 %v322, %v1858
  %v1987 = vsub.f32 %v1859, %v1923
  %v1988 = vsub.f32 %v1860, %v1924
  %v1989 = vsub.f32 %v1861, %v1925
  %v1990 = vsub.f32 %v1862, %v1926
  %v1991 = vsub.f32 %v1863, %v1927
  %v1992 = vsub.f32 %v1864, %v1928
  %v1993 = vsub.f32 %v1865, %v1929
  %v1994 = vsub.f32 %v1866, %v1930
  %v1995 = vsub.f32 %v1867, %v1931
  %v1996 = vsub.f32 %v1868, %v1932
  %v1997 = vsub.f32 %v1869, %v1933
  %v1998 = vsub.f32 %v1870, %v1934
  %v1999 = vsub.f32 %v1871, %v1935
  %v2000 = vsub.f32 %v1872, %v1936
  %v2001 = vsub.f32 %v1873, %v1937
  %v2002 = vsub.f32 %v1874, %v1938
  %v2003 = vsub.f32 %v1875, %v1939
  %v2004 = vsub.f32 %v1876, %v1940
  %v2005 = vsub.f32 %v1877, %v1941
  %v2006 = vsub.f32 %v1878, %v1942
  %v2007 = vsub.f32 %v1879, %v1943
  %v2008 = vsub.f32 %v1880, %v1944
  %v2009 = vsub.f32 %v1881, %v1945
  %v2010 = vsub.f32 %v1882, %v1946
  %v2011 = vsub.f32 %v1883, %v1947
  %v2012 = vsub.f32 %v1884, %v1948
  %v2013 = vsub.f32 %v1885, %v1949
  %v2014 = vsub.f32 %v1886, %v1950
  %v2015 = vsub.f32 %v1887, %v1951
  %v2016 = vsub.f32 %v1888, %v1952
  %v2017 = vsub.f32 %v1889, %v1953
  %v2018 = vsub.f32 %v1890, %v1954
  %v2019 = vsub.f32 %v1891, %v1955
  %v2020 = vsub.f32 %v1892, %v1956
  %v2021 = vsub.f32 %v1893, %v1957
  %v2022 = vsub.f32 %v1894, %v1958
  %v2023 = vsub.f32 %v1895, %v1959
  %v2024 = vsub.f32 %v1896, %v1960
  %v2025 = vsub.f32 %v1897, %v1961
  %v2026 = vsub.f32 %v1898, %v1962
  %v2027 = vsub.f32 %v1899, %v1963
  %v2028 = vsub.f32 %v1900, %v1964
  %v2029 = vsub.f32 %v1901, %v1965
  %v2030 = vsub.f32 %v1902, %v1966
  %v2031 = vsub.f32 %v1903, %v1967
  %v2032 = vsub.f32 %v1904, %v1968
  %v2033 = vsub.f32 %v1905, %v1969
  %v2034 = vsub.f32 %v1906, %v1970
  %v2035 = vsub.f32 %v1907, %v1971
  %v2036 = vsub.f32 %v1908, %v1972
  %v2037 = vsub.f32 %v1909, %v1973
  %v2038 = vsub.f32 %v1910, %v1974
  %v2039 = vsub.f32 %v1911, %v1975
  %v2040 = vsub.f32 %v1912, %v1976
  %v2041 = vsub.f32 %v1913, %v1977
  %v2042 = vsub.f32 %v1914, %v1978
  %v2043 = vsub.f32 %v1915, %v1979
  %v2044 = vsub.f32 %v1916, %v1980
  %v2045 = vsub.f32 %v1917, %v1981
  %v2046 = vsub.f32 %v1918, %v1982
  %v2047 = vsub.f32 %v1919, %v1983
  %v2048 = vsub.f32 %v1920, %v1984
  %v2049 = vsub.f32 %v1921, %v1985
  %v2050 = vsub.f32 %v1922, %v1986
  %v2051 = vmul.f32 %v1987, %v1987
  %v2052 = vmul.f32 %v1988, %v1988
  %v2053 = vmul.f32 %v1989, %v1989
  %v2054 = vmul.f32 %v1990, %v1990
  %v2055 = vmul.f32 %v1991, %v1991
  %v2056 = vmul.f32 %v1992, %v1992
  %v2057 = vmul.f32 %v1993, %v1993
  %v2058 = vmul.f32 %v1994, %v1994
  %v2059 = vmul.f32 %v1995, %v1995
  %v2060 = vmul.f32 %v1996, %v1996
  %v2061 = vmul.f32 %v1997, %v1997
  %v2062 = vmul.f32 %v1998, %v1998
  %v2063 = vmul.f32 %v1999, %v1999
  %v2064 = vmul.f32 %v2000, %v2000
  %v2065 = vmul.f32 %v2001, %v2001
  %v2066 = vmul.f32 %v2002, %v2002
  %v2067 = vmul.f32 %v2003, %v2003
  %v2068 = vmul.f32 %v2004, %v2004
  %v2069 = vmul.f32 %v2005, %v2005
  %v2070 = vmul.f32 %v2006, %v2006
  %v2071 = vmul.f32 %v2007, %v2007
  %v2072 = vmul.f32 %v2008, %v2008
  %v2073 = vmul.f32 %v2009, %v2009
  %v2074 = vmul.f32 %v2010, %v2010
  %v2075 = vmul.f32 %v2011, %v2011
  %v2076 = vmul.f32 %v2012, %v2012
  %v2077 = vmul.f32 %v2013, %v2013
  %v2078 = vmul.f32 %v2014, %v2014
  %v2079 = vmul.f32 %v2015, %v2015
  %v2080 = vmul.f32 %v2016, %v2016
  %v2081 = vmul.f32 %v2017, %v2017
  %v2082 = vmul.f32 %v2018, %v2018
  %v2083 = vmul.f32 %v2019, %v2019
  %v2084 = vmul.f32 %v2020, %v2020
  %v2085 = vmul.f32 %v2021, %v2021
  %v2086 = vmul.f32 %v2022, %v2022
  %v2087 = vmul.f32 %v2023, %v2023
  %v2088 = vmul.f32 %v2024, %v2024
  %v2089 = vmul.f32 %v2025, %v2025
  %v2090 = vmul.f32 %v2026, %v2026
  %v2091 = vmul.f32 %v2027, %v2027
  %v2092 = vmul.f32 %v2028, %v2028
  %v2093 = vmul.f32 %v2029, %v2029
  %v2094 = vmul.f32 %v2030, %v2030
  %v2095 = vmul.f32 %v2031, %v2031
  %v2096 = vmul.f32 %v2032, %v2032
  %v2097 = vmul.f32 %v2033, %v2033
  %v2098 = vmul.f32 %v2034, %v2034
  %v2099 = vmul.f32 %v2035, %v2035
  %v2100 = vmul.f32 %v2036, %v2036
  %v2101 = vmul.f32 %v2037, %v2037
  %v2102 = vmul.f32 %v2038, %v2038
  %v2103 = vmul.f32 %v2039, %v2039
  %v2104 = vmul.f32 %v2040, %v2040
  %v2105 = vmul.f32 %v2041, %v2041
  %v2106 = vmul.f32 %v2042, %v2042
  %v2107 = vmul.f32 %v2043, %v2043
  %v2108 = vmul.f32 %v2044, %v2044
  %v2109 = vmul.f32 %v2045, %v2045
  %v2110 = vmul.f32 %v2046, %v2046
  %v2111 = vmul.f32 %v2047, %v2047
  %v2112 = vmul.f32 %v2048, %v2048
  %v2113 = vmul.f32 %v2049, %v2049
  %v2114 = vmul.f32 %v2050, %v2050
  %v2115 = vld [vmem:[%s2] sm:$0x1]
  %v2117 = vlaneseq
  %v2118 = vshrl.u32 %v2117, 7
  %v2119 = vsub.s32 0, %v2118
  %v2120 = vrot.slane %v2115, %v2119
  %v2122 = vmul.f32 %v2051, %v2120
  %v2123 = vmul.f32 %v2052, %v2120
  %v2124 = vmul.f32 %v2053, %v2120
  %v2125 = vmul.f32 %v2054, %v2120
  %v2126 = vmul.f32 %v2055, %v2120
  %v2127 = vmul.f32 %v2056, %v2120
  %v2128 = vmul.f32 %v2057, %v2120
  %v2129 = vmul.f32 %v2058, %v2120
  %v2130 = vmul.f32 %v2059, %v2120
  %v2131 = vmul.f32 %v2060, %v2120
  %v2132 = vmul.f32 %v2061, %v2120
  %v2133 = vmul.f32 %v2062, %v2120
  %v2134 = vmul.f32 %v2063, %v2120
  %v2135 = vmul.f32 %v2064, %v2120
  %v2136 = vmul.f32 %v2065, %v2120
  %v2137 = vmul.f32 %v2066, %v2120
  %v2138 = vmul.f32 %v2067, %v2120
  %v2139 = vmul.f32 %v2068, %v2120
  %v2140 = vmul.f32 %v2069, %v2120
  %v2141 = vmul.f32 %v2070, %v2120
  %v2142 = vmul.f32 %v2071, %v2120
  %v2143 = vmul.f32 %v2072, %v2120
  %v2144 = vmul.f32 %v2073, %v2120
  %v2145 = vmul.f32 %v2074, %v2120
  %v2146 = vmul.f32 %v2075, %v2120
  %v2147 = vmul.f32 %v2076, %v2120
  %v2148 = vmul.f32 %v2077, %v2120
  %v2149 = vmul.f32 %v2078, %v2120
  %v2150 = vmul.f32 %v2079, %v2120
  %v2151 = vmul.f32 %v2080, %v2120
  %v2152 = vmul.f32 %v2081, %v2120
  %v2153 = vmul.f32 %v2082, %v2120
  %v2154 = vmul.f32 %v2083, %v2120
  %v2155 = vmul.f32 %v2084, %v2120
  %v2156 = vmul.f32 %v2085, %v2120
  %v2157 = vmul.f32 %v2086, %v2120
  %v2158 = vmul.f32 %v2087, %v2120
  %v2159 = vmul.f32 %v2088, %v2120
  %v2160 = vmul.f32 %v2089, %v2120
  %v2161 = vmul.f32 %v2090, %v2120
  %v2162 = vmul.f32 %v2091, %v2120
  %v2163 = vmul.f32 %v2092, %v2120
  %v2164 = vmul.f32 %v2093, %v2120
  %v2165 = vmul.f32 %v2094, %v2120
  %v2166 = vmul.f32 %v2095, %v2120
  %v2167 = vmul.f32 %v2096, %v2120
  %v2168 = vmul.f32 %v2097, %v2120
  %v2169 = vmul.f32 %v2098, %v2120
  %v2170 = vmul.f32 %v2099, %v2120
  %v2171 = vmul.f32 %v2100, %v2120
  %v2172 = vmul.f32 %v2101, %v2120
  %v2173 = vmul.f32 %v2102, %v2120
  %v2174 = vmul.f32 %v2103, %v2120
  %v2175 = vmul.f32 %v2104, %v2120
  %v2176 = vmul.f32 %v2105, %v2120
  %v2177 = vmul.f32 %v2106, %v2120
  %v2178 = vmul.f32 %v2107, %v2120
  %v2179 = vmul.f32 %v2108, %v2120
  %v2180 = vmul.f32 %v2109, %v2120
  %v2181 = vmul.f32 %v2110, %v2120
  %v2182 = vmul.f32 %v2111, %v2120
  %v2183 = vmul.f32 %v2112, %v2120
  %v2184 = vmul.f32 %v2113, %v2120
  %v2185 = vmul.f32 %v2114, %v2120
  %2186 = vadd.xlane.f32.xlu0 %v2122
  %v2187 = vpop.xlane.xlu0 %2186
  %2188 = vadd.xlane.f32.xlu0 %v2123
  %v2189 = vpop.xlane.xlu0 %2188
  %2190 = vadd.xlane.f32.xlu0 %v2124
  %v2191 = vpop.xlane.xlu0 %2190
  %2192 = vadd.xlane.f32.xlu0 %v2125
  %v2193 = vpop.xlane.xlu0 %2192
  %2194 = vadd.xlane.f32.xlu0 %v2126
  %v2195 = vpop.xlane.xlu0 %2194
  %2196 = vadd.xlane.f32.xlu0 %v2127
  %v2197 = vpop.xlane.xlu0 %2196
  %2198 = vadd.xlane.f32.xlu0 %v2128
  %v2199 = vpop.xlane.xlu0 %2198
  %2200 = vadd.xlane.f32.xlu0 %v2129
  %v2201 = vpop.xlane.xlu0 %2200
  %2202 = vadd.xlane.f32.xlu0 %v2130
  %v2203 = vpop.xlane.xlu0 %2202
  %2204 = vadd.xlane.f32.xlu0 %v2131
  %v2205 = vpop.xlane.xlu0 %2204
  %2206 = vadd.xlane.f32.xlu0 %v2132
  %v2207 = vpop.xlane.xlu0 %2206
  %2208 = vadd.xlane.f32.xlu0 %v2133
  %v2209 = vpop.xlane.xlu0 %2208
  %2210 = vadd.xlane.f32.xlu0 %v2134
  %v2211 = vpop.xlane.xlu0 %2210
  %2212 = vadd.xlane.f32.xlu0 %v2135
  %v2213 = vpop.xlane.xlu0 %2212
  %2214 = vadd.xlane.f32.xlu0 %v2136
  %v2215 = vpop.xlane.xlu0 %2214
  %2216 = vadd.xlane.f32.xlu0 %v2137
  %v2217 = vpop.xlane.xlu0 %2216
  %2218 = vadd.xlane.f32.xlu0 %v2138
  %v2219 = vpop.xlane.xlu0 %2218
  %2220 = vadd.xlane.f32.xlu0 %v2139
  %v2221 = vpop.xlane.xlu0 %2220
  %2222 = vadd.xlane.f32.xlu0 %v2140
  %v2223 = vpop.xlane.xlu0 %2222
  %2224 = vadd.xlane.f32.xlu0 %v2141
  %v2225 = vpop.xlane.xlu0 %2224
  %2226 = vadd.xlane.f32.xlu0 %v2142
  %v2227 = vpop.xlane.xlu0 %2226
  %2228 = vadd.xlane.f32.xlu0 %v2143
  %v2229 = vpop.xlane.xlu0 %2228
  %2230 = vadd.xlane.f32.xlu0 %v2144
  %v2231 = vpop.xlane.xlu0 %2230
  %2232 = vadd.xlane.f32.xlu0 %v2145
  %v2233 = vpop.xlane.xlu0 %2232
  %2234 = vadd.xlane.f32.xlu0 %v2146
  %v2235 = vpop.xlane.xlu0 %2234
  %2236 = vadd.xlane.f32.xlu0 %v2147
  %v2237 = vpop.xlane.xlu0 %2236
  %2238 = vadd.xlane.f32.xlu0 %v2148
  %v2239 = vpop.xlane.xlu0 %2238
  %2240 = vadd.xlane.f32.xlu0 %v2149
  %v2241 = vpop.xlane.xlu0 %2240
  %2242 = vadd.xlane.f32.xlu0 %v2150
  %v2243 = vpop.xlane.xlu0 %2242
  %2244 = vadd.xlane.f32.xlu0 %v2151
  %v2245 = vpop.xlane.xlu0 %2244
  %2246 = vadd.xlane.f32.xlu0 %v2152
  %v2247 = vpop.xlane.xlu0 %2246
  %2248 = vadd.xlane.f32.xlu0 %v2153
  %v2249 = vpop.xlane.xlu0 %2248
  %2250 = vadd.xlane.f32.xlu0 %v2154
  %v2251 = vpop.xlane.xlu0 %2250
  %2252 = vadd.xlane.f32.xlu0 %v2155
  %v2253 = vpop.xlane.xlu0 %2252
  %2254 = vadd.xlane.f32.xlu0 %v2156
  %v2255 = vpop.xlane.xlu0 %2254
  %2256 = vadd.xlane.f32.xlu0 %v2157
  %v2257 = vpop.xlane.xlu0 %2256
  %2258 = vadd.xlane.f32.xlu0 %v2158
  %v2259 = vpop.xlane.xlu0 %2258
  %2260 = vadd.xlane.f32.xlu0 %v2159
  %v2261 = vpop.xlane.xlu0 %2260
  %2262 = vadd.xlane.f32.xlu0 %v2160
  %v2263 = vpop.xlane.xlu0 %2262
  %2264 = vadd.xlane.f32.xlu0 %v2161
  %v2265 = vpop.xlane.xlu0 %2264
  %2266 = vadd.xlane.f32.xlu0 %v2162
  %v2267 = vpop.xlane.xlu0 %2266
  %2268 = vadd.xlane.f32.xlu0 %v2163
  %v2269 = vpop.xlane.xlu0 %2268
  %2270 = vadd.xlane.f32.xlu0 %v2164
  %v2271 = vpop.xlane.xlu0 %2270
  %2272 = vadd.xlane.f32.xlu0 %v2165
  %v2273 = vpop.xlane.xlu0 %2272
  %2274 = vadd.xlane.f32.xlu0 %v2166
  %v2275 = vpop.xlane.xlu0 %2274
  %2276 = vadd.xlane.f32.xlu0 %v2167
  %v2277 = vpop.xlane.xlu0 %2276
  %2278 = vadd.xlane.f32.xlu0 %v2168
  %v2279 = vpop.xlane.xlu0 %2278
  %2280 = vadd.xlane.f32.xlu0 %v2169
  %v2281 = vpop.xlane.xlu0 %2280
  %2282 = vadd.xlane.f32.xlu0 %v2170
  %v2283 = vpop.xlane.xlu0 %2282
  %2284 = vadd.xlane.f32.xlu0 %v2171
  %v2285 = vpop.xlane.xlu0 %2284
  %2286 = vadd.xlane.f32.xlu0 %v2172
  %v2287 = vpop.xlane.xlu0 %2286
  %2288 = vadd.xlane.f32.xlu0 %v2173
  %v2289 = vpop.xlane.xlu0 %2288
  %2290 = vadd.xlane.f32.xlu0 %v2174
  %v2291 = vpop.xlane.xlu0 %2290
  %2292 = vadd.xlane.f32.xlu0 %v2175
  %v2293 = vpop.xlane.xlu0 %2292
  %2294 = vadd.xlane.f32.xlu0 %v2176
  %v2295 = vpop.xlane.xlu0 %2294
  %2296 = vadd.xlane.f32.xlu0 %v2177
  %v2297 = vpop.xlane.xlu0 %2296
  %2298 = vadd.xlane.f32.xlu0 %v2178
  %v2299 = vpop.xlane.xlu0 %2298
  %2300 = vadd.xlane.f32.xlu0 %v2179
  %v2301 = vpop.xlane.xlu0 %2300
  %2302 = vadd.xlane.f32.xlu0 %v2180
  %v2303 = vpop.xlane.xlu0 %2302
  %2304 = vadd.xlane.f32.xlu0 %v2181
  %v2305 = vpop.xlane.xlu0 %2304
  %2306 = vadd.xlane.f32.xlu0 %v2182
  %v2307 = vpop.xlane.xlu0 %2306
  %2308 = vadd.xlane.f32.xlu0 %v2183
  %v2309 = vpop.xlane.xlu0 %2308
  %2310 = vadd.xlane.f32.xlu0 %v2184
  %v2311 = vpop.xlane.xlu0 %2310
  %2312 = vadd.xlane.f32.xlu0 %v2185
  %v2313 = vpop.xlane.xlu0 %2312
  %v2314 = vld [vmem:[%s3] sm:$0x3]
  %v2379 = vlaneseq
  %v2380 = vand.u32 %v2379, 127
  %v2381 = vlaneseq
  %v2382 = vshrl.u32 %v2381, 7
  %v2383 = vsub.s32 %v2380, %v2382
  %v2384 = vrot.slane %v2187, %v2383
  %v2385 = vadd.s32 %v2380, 4294967288
  %v2386 = vlaneseq
  %v2387 = vshrl.u32 %v2386, 7
  %v2388 = vsub.s32 %v2385, %v2387
  %v2389 = vrot.slane %v2189, %v2388
  %vm2390 = vcmask 130112
  %v2391 = vsel %vm2390, %v2389, %v2384
  %v2392 = vadd.s32 %v2380, 4294967280
  %v2393 = vlaneseq
  %v2394 = vshrl.u32 %v2393, 7
  %v2395 = vsub.s32 %v2392, %v2394
  %v2396 = vrot.slane %v2191, %v2395
  %vm2397 = vcmask 195712
  %v2398 = vsel %vm2397, %v2396, %v2391
  %v2399 = vadd.s32 %v2380, 4294967272
  %v2400 = vlaneseq
  %v2401 = vshrl.u32 %v2400, 7
  %v2402 = vsub.s32 %v2399, %v2401
  %v2403 = vrot.slane %v2193, %v2402
  %vm2404 = vcmask 261312
  %v2405 = vsel %vm2404, %v2403, %v2398
  %v2406 = vadd.s32 %v2380, 4294967264
  %v2407 = vlaneseq
  %v2408 = vshrl.u32 %v2407, 7
  %v2409 = vsub.s32 %v2406, %v2408
  %v2410 = vrot.slane %v2195, %v2409
  %vm2411 = vcmask 326912
  %v2412 = vsel %vm2411, %v2410, %v2405
  %v2413 = vadd.s32 %v2380, 4294967256
  %v2414 = vlaneseq
  %v2415 = vshrl.u32 %v2414, 7
  %v2416 = vsub.s32 %v2413, %v2415
  %v2417 = vrot.slane %v2197, %v2416
  %vm2418 = vcmask 392512
  %v2419 = vsel %vm2418, %v2417, %v2412
  %v2420 = vadd.s32 %v2380, 4294967248
  %v2421 = vlaneseq
  %v2422 = vshrl.u32 %v2421, 7
  %v2423 = vsub.s32 %v2420, %v2422
  %v2424 = vrot.slane %v2199, %v2423
  %vm2425 = vcmask 458112
  %v2426 = vsel %vm2425, %v2424, %v2419
  %v2427 = vadd.s32 %v2380, 4294967240
  %v2428 = vlaneseq
  %v2429 = vshrl.u32 %v2428, 7
  %v2430 = vsub.s32 %v2427, %v2429
  %v2431 = vrot.slane %v2201, %v2430
  %vm2432 = vcmask 523712
  %v2433 = vsel %vm2432, %v2431, %v2426
  %v2434 = vadd.s32 %v2380, 4294967232
  %v2435 = vlaneseq
  %v2436 = vshrl.u32 %v2435, 7
  %v2437 = vsub.s32 %v2434, %v2436
  %v2438 = vrot.slane %v2203, %v2437
  %vm2439 = vcmask 589312
  %v2440 = vsel %vm2439, %v2438, %v2433
  %v2441 = vadd.s32 %v2380, 4294967224
  %v2442 = vlaneseq
  %v2443 = vshrl.u32 %v2442, 7
  %v2444 = vsub.s32 %v2441, %v2443
  %v2445 = vrot.slane %v2205, %v2444
  %vm2446 = vcmask 654912
  %v2447 = vsel %vm2446, %v2445, %v2440
  %v2448 = vadd.s32 %v2380, 4294967216
  %v2449 = vlaneseq
  %v2450 = vshrl.u32 %v2449, 7
  %v2451 = vsub.s32 %v2448, %v2450
  %v2452 = vrot.slane %v2207, %v2451
  %vm2453 = vcmask 720512
  %v2454 = vsel %vm2453, %v2452, %v2447
  %v2455 = vadd.s32 %v2380, 4294967208
  %v2456 = vlaneseq
  %v2457 = vshrl.u32 %v2456, 7
  %v2458 = vsub.s32 %v2455, %v2457
  %v2459 = vrot.slane %v2209, %v2458
  %vm2460 = vcmask 786112
  %v2461 = vsel %vm2460, %v2459, %v2454
  %v2462 = vadd.s32 %v2380, 4294967200
  %v2463 = vlaneseq
  %v2464 = vshrl.u32 %v2463, 7
  %v2465 = vsub.s32 %v2462, %v2464
  %v2466 = vrot.slane %v2211, %v2465
  %vm2467 = vcmask 851712
  %v2468 = vsel %vm2467, %v2466, %v2461
  %v2469 = vadd.s32 %v2380, 4294967192
  %v2470 = vlaneseq
  %v2471 = vshrl.u32 %v2470, 7
  %v2472 = vsub.s32 %v2469, %v2471
  %v2473 = vrot.slane %v2213, %v2472
  %vm2474 = vcmask 917312
  %v2475 = vsel %vm2474, %v2473, %v2468
  %v2476 = vadd.s32 %v2380, 4294967184
  %v2477 = vlaneseq
  %v2478 = vshrl.u32 %v2477, 7
  %v2479 = vsub.s32 %v2476, %v2478
  %v2480 = vrot.slane %v2215, %v2479
  %vm2481 = vcmask 982912
  %v2482 = vsel %vm2481, %v2480, %v2475
  %v2483 = vadd.s32 %v2380, 4294967176
  %v2484 = vlaneseq
  %v2485 = vshrl.u32 %v2484, 7
  %v2486 = vsub.s32 %v2483, %v2485
  %v2487 = vrot.slane %v2217, %v2486
  %vm2488 = vcmask 1048512
  %v2489 = vsel %vm2488, %v2487, %v2482
  %v2490 = vlaneseq
  %v2491 = vshrl.u32 %v2490, 7
  %v2492 = vsub.s32 %v2380, %v2491
  %v2493 = vrot.slane %v2219, %v2492
  %v2494 = vlaneseq
  %v2495 = vshrl.u32 %v2494, 7
  %v2496 = vsub.s32 %v2385, %v2495
  %v2497 = vrot.slane %v2221, %v2496
  %v2498 = vsel %vm2390, %v2497, %v2493
  %v2499 = vlaneseq
  %v2500 = vshrl.u32 %v2499, 7
  %v2501 = vsub.s32 %v2392, %v2500
  %v2502 = vrot.slane %v2223, %v2501
  %v2503 = vsel %vm2397, %v2502, %v2498
  %v2504 = vlaneseq
  %v2505 = vshrl.u32 %v2504, 7
  %v2506 = vsub.s32 %v2399, %v2505
  %v2507 = vrot.slane %v2225, %v2506
  %v2508 = vsel %vm2404, %v2507, %v2503
  %v2509 = vlaneseq
  %v2510 = vshrl.u32 %v2509, 7
  %v2511 = vsub.s32 %v2406, %v2510
  %v2512 = vrot.slane %v2227, %v2511
  %v2513 = vsel %vm2411, %v2512, %v2508
  %v2514 = vlaneseq
  %v2515 = vshrl.u32 %v2514, 7
  %v2516 = vsub.s32 %v2413, %v2515
  %v2517 = vrot.slane %v2229, %v2516
  %v2518 = vsel %vm2418, %v2517, %v2513
  %v2519 = vlaneseq
  %v2520 = vshrl.u32 %v2519, 7
  %v2521 = vsub.s32 %v2420, %v2520
  %v2522 = vrot.slane %v2231, %v2521
  %v2523 = vsel %vm2425, %v2522, %v2518
  %v2524 = vlaneseq
  %v2525 = vshrl.u32 %v2524, 7
  %v2526 = vsub.s32 %v2427, %v2525
  %v2527 = vrot.slane %v2233, %v2526
  %v2528 = vsel %vm2432, %v2527, %v2523
  %v2529 = vlaneseq
  %v2530 = vshrl.u32 %v2529, 7
  %v2531 = vsub.s32 %v2434, %v2530
  %v2532 = vrot.slane %v2235, %v2531
  %v2533 = vsel %vm2439, %v2532, %v2528
  %v2534 = vlaneseq
  %v2535 = vshrl.u32 %v2534, 7
  %v2536 = vsub.s32 %v2441, %v2535
  %v2537 = vrot.slane %v2237, %v2536
  %v2538 = vsel %vm2446, %v2537, %v2533
  %v2539 = vlaneseq
  %v2540 = vshrl.u32 %v2539, 7
  %v2541 = vsub.s32 %v2448, %v2540
  %v2542 = vrot.slane %v2239, %v2541
  %v2543 = vsel %vm2453, %v2542, %v2538
  %v2544 = vlaneseq
  %v2545 = vshrl.u32 %v2544, 7
  %v2546 = vsub.s32 %v2455, %v2545
  %v2547 = vrot.slane %v2241, %v2546
  %v2548 = vsel %vm2460, %v2547, %v2543
  %v2549 = vlaneseq
  %v2550 = vshrl.u32 %v2549, 7
  %v2551 = vsub.s32 %v2462, %v2550
  %v2552 = vrot.slane %v2243, %v2551
  %v2553 = vsel %vm2467, %v2552, %v2548
  %v2554 = vlaneseq
  %v2555 = vshrl.u32 %v2554, 7
  %v2556 = vsub.s32 %v2469, %v2555
  %v2557 = vrot.slane %v2245, %v2556
  %v2558 = vsel %vm2474, %v2557, %v2553
  %v2559 = vlaneseq
  %v2560 = vshrl.u32 %v2559, 7
  %v2561 = vsub.s32 %v2476, %v2560
  %v2562 = vrot.slane %v2247, %v2561
  %v2563 = vsel %vm2481, %v2562, %v2558
  %v2564 = vlaneseq
  %v2565 = vshrl.u32 %v2564, 7
  %v2566 = vsub.s32 %v2483, %v2565
  %v2567 = vrot.slane %v2249, %v2566
  %v2568 = vsel %vm2488, %v2567, %v2563
  %v2569 = vlaneseq
  %v2570 = vshrl.u32 %v2569, 7
  %v2571 = vsub.s32 %v2380, %v2570
  %v2572 = vrot.slane %v2251, %v2571
  %v2573 = vlaneseq
  %v2574 = vshrl.u32 %v2573, 7
  %v2575 = vsub.s32 %v2385, %v2574
  %v2576 = vrot.slane %v2253, %v2575
  %v2577 = vsel %vm2390, %v2576, %v2572
  %v2578 = vlaneseq
  %v2579 = vshrl.u32 %v2578, 7
  %v2580 = vsub.s32 %v2392, %v2579
  %v2581 = vrot.slane %v2255, %v2580
  %v2582 = vsel %vm2397, %v2581, %v2577
  %v2583 = vlaneseq
  %v2584 = vshrl.u32 %v2583, 7
  %v2585 = vsub.s32 %v2399, %v2584
  %v2586 = vrot.slane %v2257, %v2585
  %v2587 = vsel %vm2404, %v2586, %v2582
  %v2588 = vlaneseq
  %v2589 = vshrl.u32 %v2588, 7
  %v2590 = vsub.s32 %v2406, %v2589
  %v2591 = vrot.slane %v2259, %v2590
  %v2592 = vsel %vm2411, %v2591, %v2587
  %v2593 = vlaneseq
  %v2594 = vshrl.u32 %v2593, 7
  %v2595 = vsub.s32 %v2413, %v2594
  %v2596 = vrot.slane %v2261, %v2595
  %v2597 = vsel %vm2418, %v2596, %v2592
  %v2598 = vlaneseq
  %v2599 = vshrl.u32 %v2598, 7
  %v2600 = vsub.s32 %v2420, %v2599
  %v2601 = vrot.slane %v2263, %v2600
  %v2602 = vsel %vm2425, %v2601, %v2597
  %v2603 = vlaneseq
  %v2604 = vshrl.u32 %v2603, 7
  %v2605 = vsub.s32 %v2427, %v2604
  %v2606 = vrot.slane %v2265, %v2605
  %v2607 = vsel %vm2432, %v2606, %v2602
  %v2608 = vlaneseq
  %v2609 = vshrl.u32 %v2608, 7
  %v2610 = vsub.s32 %v2434, %v2609
  %v2611 = vrot.slane %v2267, %v2610
  %v2612 = vsel %vm2439, %v2611, %v2607
  %v2613 = vlaneseq
  %v2614 = vshrl.u32 %v2613, 7
  %v2615 = vsub.s32 %v2441, %v2614
  %v2616 = vrot.slane %v2269, %v2615
  %v2617 = vsel %vm2446, %v2616, %v2612
  %v2618 = vlaneseq
  %v2619 = vshrl.u32 %v2618, 7
  %v2620 = vsub.s32 %v2448, %v2619
  %v2621 = vrot.slane %v2271, %v2620
  %v2622 = vsel %vm2453, %v2621, %v2617
  %v2623 = vlaneseq
  %v2624 = vshrl.u32 %v2623, 7
  %v2625 = vsub.s32 %v2455, %v2624
  %v2626 = vrot.slane %v2273, %v2625
  %v2627 = vsel %vm2460, %v2626, %v2622
  %v2628 = vlaneseq
  %v2629 = vshrl.u32 %v2628, 7
  %v2630 = vsub.s32 %v2462, %v2629
  %v2631 = vrot.slane %v2275, %v2630
  %v2632 = vsel %vm2467, %v2631, %v2627
  %v2633 = vlaneseq
  %v2634 = vshrl.u32 %v2633, 7
  %v2635 = vsub.s32 %v2469, %v2634
  %v2636 = vrot.slane %v2277, %v2635
  %v2637 = vsel %vm2474, %v2636, %v2632
  %v2638 = vlaneseq
  %v2639 = vshrl.u32 %v2638, 7
  %v2640 = vsub.s32 %v2476, %v2639
  %v2641 = vrot.slane %v2279, %v2640
  %v2642 = vsel %vm2481, %v2641, %v2637
  %v2643 = vlaneseq
  %v2644 = vshrl.u32 %v2643, 7
  %v2645 = vsub.s32 %v2483, %v2644
  %v2646 = vrot.slane %v2281, %v2645
  %v2647 = vsel %vm2488, %v2646, %v2642
  %v2648 = vlaneseq
  %v2649 = vshrl.u32 %v2648, 7
  %v2650 = vsub.s32 %v2380, %v2649
  %v2651 = vrot.slane %v2283, %v2650
  %v2652 = vlaneseq
  %v2653 = vshrl.u32 %v2652, 7
  %v2654 = vsub.s32 %v2385, %v2653
  %v2655 = vrot.slane %v2285, %v2654
  %v2656 = vsel %vm2390, %v2655, %v2651
  %v2657 = vlaneseq
  %v2658 = vshrl.u32 %v2657, 7
  %v2659 = vsub.s32 %v2392, %v2658
  %v2660 = vrot.slane %v2287, %v2659
  %v2661 = vsel %vm2397, %v2660, %v2656
  %v2662 = vlaneseq
  %v2663 = vshrl.u32 %v2662, 7
  %v2664 = vsub.s32 %v2399, %v2663
  %v2665 = vrot.slane %v2289, %v2664
  %v2666 = vsel %vm2404, %v2665, %v2661
  %v2667 = vlaneseq
  %v2668 = vshrl.u32 %v2667, 7
  %v2669 = vsub.s32 %v2406, %v2668
  %v2670 = vrot.slane %v2291, %v2669
  %v2671 = vsel %vm2411, %v2670, %v2666
  %v2672 = vlaneseq
  %v2673 = vshrl.u32 %v2672, 7
  %v2674 = vsub.s32 %v2413, %v2673
  %v2675 = vrot.slane %v2293, %v2674
  %v2676 = vsel %vm2418, %v2675, %v2671
  %v2677 = vlaneseq
  %v2678 = vshrl.u32 %v2677, 7
  %v2679 = vsub.s32 %v2420, %v2678
  %v2680 = vrot.slane %v2295, %v2679
  %v2681 = vsel %vm2425, %v2680, %v2676
  %v2682 = vlaneseq
  %v2683 = vshrl.u32 %v2682, 7
  %v2684 = vsub.s32 %v2427, %v2683
  %v2685 = vrot.slane %v2297, %v2684
  %v2686 = vsel %vm2432, %v2685, %v2681
  %v2687 = vlaneseq
  %v2688 = vshrl.u32 %v2687, 7
  %v2689 = vsub.s32 %v2434, %v2688
  %v2690 = vrot.slane %v2299, %v2689
  %v2691 = vsel %vm2439, %v2690, %v2686
  %v2692 = vlaneseq
  %v2693 = vshrl.u32 %v2692, 7
  %v2694 = vsub.s32 %v2441, %v2693
  %v2695 = vrot.slane %v2301, %v2694
  %v2696 = vsel %vm2446, %v2695, %v2691
  %v2697 = vlaneseq
  %v2698 = vshrl.u32 %v2697, 7
  %v2699 = vsub.s32 %v2448, %v2698
  %v2700 = vrot.slane %v2303, %v2699
  %v2701 = vsel %vm2453, %v2700, %v2696
  %v2702 = vlaneseq
  %v2703 = vshrl.u32 %v2702, 7
  %v2704 = vsub.s32 %v2455, %v2703
  %v2705 = vrot.slane %v2305, %v2704
  %v2706 = vsel %vm2460, %v2705, %v2701
  %v2707 = vlaneseq
  %v2708 = vshrl.u32 %v2707, 7
  %v2709 = vsub.s32 %v2462, %v2708
  %v2710 = vrot.slane %v2307, %v2709
  %v2711 = vsel %vm2467, %v2710, %v2706
  %v2712 = vlaneseq
  %v2713 = vshrl.u32 %v2712, 7
  %v2714 = vsub.s32 %v2469, %v2713
  %v2715 = vrot.slane %v2309, %v2714
  %v2716 = vsel %vm2474, %v2715, %v2711
  %v2717 = vlaneseq
  %v2718 = vshrl.u32 %v2717, 7
  %v2719 = vsub.s32 %v2476, %v2718
  %v2720 = vrot.slane %v2311, %v2719
  %v2721 = vsel %vm2481, %v2720, %v2716
  %v2722 = vlaneseq
  %v2723 = vshrl.u32 %v2722, 7
  %v2724 = vsub.s32 %v2483, %v2723
  %v2725 = vrot.slane %v2313, %v2724
  %v2726 = vsel %vm2488, %v2725, %v2721
  %vm2727 = vcmask 1041409
  %v2728 = vsel %vm2727, %v2647, %v2489
  %v2729 = vsel %vm2727, %v2726, %v2568
  %vm2732 = vcmask 1041408
  %v2733 = vsel %vm2732, %v2728, 0.0
  %v2734 = vsel %vm2732, %v2729, 0.0
  %v2735 = vadd.f32 %v2733, %v2734
  %2736 = vadd.xlane.f32.xlu0 %v2735
  %v2737 = vpop.xlane.xlu0 %2736
  %v2738 = vadd.f32 %v2314, %v2737
  %vm2739 = vcmask 1024
  %2740 = vst.msk [vmem:[%s3] sm:$0x3] %vm2739, %v2738
  // Predicated region
  $region18: #{_image_metrics_impl.9} parent=0 // pred_check
    _
  $region19: #{_image_metrics_impl.9} parent=0 // pred_check_branch
    %2742 = sbr.rel (0) target = $region21
  $region20: #{_image_metrics_impl.9} parent=0 // pred_region
    _
  $region21: #{_image_metrics_impl.9} parent=0 // pred_fallthru
    _
  // Predicated region
  $region22: #{_image_metrics_impl.9} parent=0 // pred_check
    _
  $region23: #{_image_metrics_impl.9} parent=0 // pred_check_branch
    %2744 = sbr.rel (0) target = $region25
  $region24: #{_image_metrics_impl.9} parent=0 // pred_region
    _
  $region25: #{_image_metrics_impl.9} parent=0 // pred_fallthru
    _

// kernel: _image_metrics_impl.7
$region0: #{_image_metrics_impl.7}
  #allocation0 [shape = 'u32[]', space=smem, size = 0x4, offset = 0x4, fixed_abs, tag = 'smem constant byte address 0x4 - core index']
  #allocation1 [shape = 'u32[144,128]{1,0:T(1,128)}', space=vmem, size = 0x12000, scoped, tag = 'internal scratch']
  %s0 = inlined_call_operand.vmem [shape: f32[16,96], index: 0, kind: input, shape index: {}]
  %s1 = inlined_call_operand.vmem [shape: f32[16,96], index: 1, kind: input, shape index: {}]
  %s2 = inlined_call_operand.vmem [shape: f32[6,16], index: 2, kind: input, shape index: {}]
  %s3 = inlined_call_operand.vmem [shape: f32[480,180], index: 3, kind: input, shape index: {}]
  %s4 = inlined_call_operand.vmem [shape: f32[1,1,36], index: 4, kind: output, shape index: {0}]
  %s5 = inlined_call_operand.vmem [shape: f32[1,1,96], index: 5, kind: output, shape index: {1}]
  %s6 = inlined_call_operand.vmem [shape: f32[1,1,96], index: 6, kind: output, shape index: {2}]
  %7 = xla_tuple %s4, %s5, %s6
  %s8 = sld [smem:[#allocation0]]
  $region42: #{_image_metrics_impl.7} parent=0
    _
  %s10 = ssub.s32 1, %s8
  %s11 = scalar_select 0, %s10, %s8
  // Predicated region
  $region2: #{_image_metrics_impl.7} parent=0 // pred_check
    _
  $region3: #{_image_metrics_impl.7} parent=0 // pred_check_branch
    %13 = sbr.rel (0) target = $region5
  $region4: #{_image_metrics_impl.7} parent=0 // pred_region
    _
  $region5: #{_image_metrics_impl.7} parent=0 // pred_fallthru
    _
  // Predicated region
  $region6: #{_image_metrics_impl.7} parent=0 // pred_check
    _
  $region7: #{_image_metrics_impl.7} parent=0 // pred_check_branch
    %15 = sbr.rel (0) target = $region9
  $region8: #{_image_metrics_impl.7} parent=0 // pred_region
    _
  $region9: #{_image_metrics_impl.7} parent=0 // pred_fallthru
    _
  // Predicated region
  $region10: #{_image_metrics_impl.7} parent=0 // pred_check
    _
  $region11: #{_image_metrics_impl.7} parent=0 // pred_check_branch
    %17 = sbr.rel (0) target = $region13
  $region12: #{_image_metrics_impl.7} parent=0 // pred_region
    _
  $region13: #{_image_metrics_impl.7} parent=0 // pred_fallthru
    _
  // Predicated region
  $region14: #{_image_metrics_impl.7} parent=0 // pred_check
    _
  $region15: #{_image_metrics_impl.7} parent=0 // pred_check_branch
    %19 = sbr.rel (0) target = $region17
  $region16: #{_image_metrics_impl.7} parent=0 // pred_region
    _
  $region17: #{_image_metrics_impl.7} parent=0 // pred_fallthru
    _
  %v20 = vld [vmem:[%s0] sm:$0xff]
  %v21 = vld [vmem:[%s0 + $0x8] sm:$0xff]
  %v22 = vmul.f32 %v20, 0.5
  %v23 = vmul.f32 %v21, 0.5
  %v24 = vadd.f32 %v22, 0.5
  %v25 = vadd.f32 %v23, 0.5
  %v26 = vld [vmem:[%s1] sm:$0xff]
  %v27 = vld [vmem:[%s1 + $0x8] sm:$0xff]
  %v28 = vmul.f32 %v26, 0.5
  %v29 = vmul.f32 %v27, 0.5
  %v30 = vadd.f32 %v28, 0.5
  %v31 = vadd.f32 %v29, 0.5
  %v32 = vsub.f32 %v30, %v24
  %v33 = vsub.f32 %v31, %v25
  %v34 = vand.u32 2147483647, %v32
  %v35 = vand.u32 2147483647, %v33
  %vm36 = vcmask 785408
  %v37 = vsel %vm36, %v34, 0.0
  %v38 = vsel %vm36, %v35, 0.0
  %v39 = vadd.f32 %v37, %v38
  %v40 = vrot.slane %v39, 4
  %v41 = vadd.f32 %v39, %v40
  %v42 = vrot.slane %v41, 2
  %v43 = vadd.f32 %v41, %v42
  %v44 = vrot.slane %v43, 1
  %v45 = vadd.f32 %v43, %v44
  %vm46 = vcmask 778240
  %47 = vst.msk [vmem:[%s5] sm:$0x1] %vm46, %v45
  %v48 = vmul.f32 %v32, %v32
  %v49 = vmul.f32 %v33, %v33
  %v50 = vsel %vm36, %v48, 0.0
  %v51 = vsel %vm36, %v49, 0.0
  %v52 = vadd.f32 %v50, %v51
  %v53 = vrot.slane %v52, 4
  %v54 = vadd.f32 %v52, %v53
  %v55 = vrot.slane %v54, 2
  %v56 = vadd.f32 %v54, %v55
  %v57 = vrot.slane %v56, 1
  %v58 = vadd.f32 %v56, %v57
  %59 = vst.msk [vmem:[%s6] sm:$0x1] %vm46, %v58
  %v60 = vmul.f32 %v24, %v24
  %v61 = vmul.f32 %v25, %v25
  %v62 = vmul.f32 %v30, %v30
  %v63 = vmul.f32 %v31, %v31
  %v64 = vmul.f32 %v24, %v30
  %v65 = vmul.f32 %v25, %v31
  %68 = vrot.lane.b32.xlu0 %v30, 96
  %v69 = vpop.permute.xlu0 %68
  %70 = vrot.lane.b32.xlu0 %v31, 96
  %v71 = vpop.permute.xlu0 %70
  %76 = vrot.lane.b32.xlu0 %v60, 64
  %v77 = vpop.permute.xlu0 %76
  %78 = vrot.lane.b32.xlu0 %v61, 64
  %v79 = vpop.permute.xlu0 %78
  %84 = vrot.lane.b32.xlu0 %v62, 32
  %v85 = vpop.permute.xlu0 %84
  %86 = vrot.lane.b32.xlu0 %v63, 32
  %v87 = vpop.permute.xlu0 %86
  %v90 = vsel %vm36, %v24, %v69
  %v91 = vsel %vm36, %v25, %v71
  %vm92 = vcmask 523264
  %v93 = vsel %vm92, %v69, %v77
  %v94 = vsel %vm92, %v71, %v79
  %vm95 = vcmask 261120
  %v96 = vsel %vm95, %v77, %v85
  %v97 = vsel %vm95, %v79, %v87
  %v98 = vld [vmem:[%s2] sm:$0x3f]
  %vm99 = vcmask 130048
  %v101 = vsel %vm99, %v98, 0
  %103 = vmatprep.subr.mxu0 0.0
  %104 = vmatpush1.msra.mxu0 0.0
  %105 = vmatprep.subr.mxu0 0.0
  %106 = vmatpush1.msra.mxu0 0.0
  %107 = vmatprep.subr.mxu0 0.0
  %108 = vmatpush1.msra.mxu0 0.0
  %109 = vmatprep.subr.mxu0 0.0
  %110 = vmatpush1.msra.mxu0 0.0
  %111 = vmatprep.subr.mxu0 0.0
  %112 = vmatpush1.msra.mxu0 0.0
  %113 = vmatprep.subr.mxu0 0.0
  %114 = vmatpush1.msra.mxu0 0.0
  %115 = vmatprep.subr.mxu0 0.0
  %116 = vmatpush1.msra.mxu0 0.0
  %117 = vmatprep.subr.mxu0 0.0
  %118 = vmatpush1.msra.mxu0 0.0
  %119 = vmatprep.subr.mxu0 0.0
  %120 = vmatpush1.msra.mxu0 0.0
  %121 = vmatprep.subr.mxu0 0.0
  %122 = vmatpush1.msra.mxu0 0.0
  %123 = vmatprep.subr.mxu0 0.0
  %124 = vmatpush1.msra.mxu0 0.0
  %125 = vmatprep.subr.mxu0 0.0
  %126 = vmatpush1.msra.mxu0 0.0
  %127 = vmatprep.subr.mxu0 0.0
  %128 = vmatpush1.msra.mxu0 0.0
  %129 = vmatprep.subr.mxu0 0.0
  %130 = vmatpush1.msra.mxu0 0.0
  %131 = vmatprep.subr.mxu0 %v94
  %132 = vmatpush1.msra.mxu0 %v91
  %133 = vmatprep.subr.mxu0 %v93
  %134 = vmatpush1.msra.mxu0 %v90
  %135 = vmatprep.subr.mxu0 0.0
  %136 = vmatpush2.msra.mxu0 0.0
  %137 = vmatprep.subr.mxu0 0.0
  %138 = vmatpush2.msra.mxu0 0.0
  %139 = vmatprep.subr.mxu0 0.0
  %140 = vmatpush2.msra.mxu0 0.0
  %141 = vmatprep.subr.mxu0 0.0
  %142 = vmatpush2.msra.mxu0 0.0
  %143 = vmatprep.subr.mxu0 0.0
  %144 = vmatpush2.msra.mxu0 0.0
  %145 = vmatprep.subr.mxu0 0.0
  %146 = vmatpush2.msra.mxu0 0.0
  %147 = vmatprep.subr.mxu0 0.0
  %148 = vmatpush2.msra.mxu0 0.0
  %149 = vmatprep.subr.mxu0 0.0
  %150 = vmatpush2.msra.mxu0 0.0
  %151 = vmatprep.subr.mxu0 0.0
  %152 = vmatpush2.msra.mxu0 0.0
  %153 = vmatprep.subr.mxu0 0.0
  %154 = vmatpush2.msra.mxu0 0.0
  %155 = vmatprep.subr.mxu0 0.0
  %156 = vmatpush2.msra.mxu0 0.0
  %157 = vmatprep.subr.mxu0 0.0
  %158 = vmatpush2.msra.mxu0 0.0
  %159 = vmatprep.subr.mxu0 0.0
  %160 = vmatpush2.msra.mxu0 0.0
  %161 = vmatprep.subr.mxu0 0.0
  %162 = vmatpush2.msra.mxu0 0.0
  %163 = vmatprep.subr.mxu0 0.0
  %164 = vmatpush2.msra.mxu0 0.0
  %165 = vmatprep.subr.mxu0 0.0
  %166 = vmatpush2.msra.mxu0 0.0
  %167 = vmatprep.mubr.f32.mxu0 0.0
  %168 = vmatmul.mubr.f32.gmra.mxu0 %v101
  %v169 = vpop.f32.mrf.mxu0
  %v170 = vadd.f32 0.0, %v169
  %v171 = vpop.f32.mrf.mxu0
  %v172 = vadd.f32 0.0, %v171
  %173 = vdwg.mxu0
  %174 = vmatprep.subr.mxu0 0.0
  %175 = vmatpush1.msra.mxu0 0.0
  %176 = vmatprep.subr.mxu0 0.0
  %177 = vmatpush1.msra.mxu0 0.0
  %178 = vmatprep.subr.mxu0 0.0
  %179 = vmatpush1.msra.mxu0 0.0
  %180 = vmatprep.subr.mxu0 0.0
  %181 = vmatpush1.msra.mxu0 0.0
  %182 = vmatprep.subr.mxu0 0.0
  %183 = vmatpush1.msra.mxu0 0.0
  %184 = vmatprep.subr.mxu0 0.0
  %185 = vmatpush1.msra.mxu0 0.0
  %186 = vmatprep.subr.mxu0 0.0
  %187 = vmatpush1.msra.mxu0 0.0
  %188 = vmatprep.subr.mxu0 0.0
  %189 = vmatpush1.msra.mxu0 0.0
  %190 = vmatprep.subr.mxu0 0.0
  %191 = vmatpush1.msra.mxu0 0.0
  %192 = vmatprep.subr.mxu0 0.0
  %193 = vmatpush1.msra.mxu0 0.0
  %194 = vmatprep.subr.mxu0 0.0
  %195 = vmatpush1.msra.mxu0 0.0
  %196 = vmatprep.subr.mxu0 0.0
  %197 = vmatpush1.msra.mxu0 0.0
  %198 = vmatprep.subr.mxu0 0.0
  %199 = vmatpush1.msra.mxu0 0.0
  %200 = vmatprep.subr.mxu0 0.0
  %201 = vmatpush1.msra.mxu0 0.0
  %202 = vmatprep.subr.mxu0 %v65
  %203 = vmatpush1.msra.mxu0 %v97
  %204 = vmatprep.subr.mxu0 %v64
  %205 = vmatpush1.msra.mxu0 %v96
  %206 = vmatprep.subr.mxu0 0.0
  %207 = vmatpush2.msra.mxu0 0.0
  %208 = vmatprep.subr.mxu0 0.0
  %209 = vmatpush2.msra.mxu0 0.0
  %210 = vmatprep.subr.mxu0 0.0
  %211 = vmatpush2.msra.mxu0 0.0
  %212 = vmatprep.subr.mxu0 0.0
  %213 = vmatpush2.msra.mxu0 0.0
  %214 = vmatprep.subr.mxu0 0.0
  %215 = vmatpush2.msra.mxu0 0.0
  %216 = vmatprep.subr.mxu0 0.0
  %217 = vmatpush2.msra.mxu0 0.0
  %218 = vmatprep.subr.mxu0 0.0
  %219 = vmatpush2.msra.mxu0 0.0
  %220 = vmatprep.subr.mxu0 0.0
  %221 = vmatpush2.msra.mxu0 0.0
  %222 = vmatprep.subr.mxu0 0.0
  %223 = vmatpush2.msra.mxu0 0.0
  %224 = vmatprep.subr.mxu0 0.0
  %225 = vmatpush2.msra.mxu0 0.0
  %226 = vmatprep.subr.mxu0 0.0
  %227 = vmatpush2.msra.mxu0 0.0
  %228 = vmatprep.subr.mxu0 0.0
  %229 = vmatpush2.msra.mxu0 0.0
  %230 = vmatprep.subr.mxu0 0.0
  %231 = vmatpush2.msra.mxu0 0.0
  %232 = vmatprep.subr.mxu0 0.0
  %233 = vmatpush2.msra.mxu0 0.0
  %234 = vmatprep.subr.mxu0 0.0
  %235 = vmatpush2.msra.mxu0 0.0
  %236 = vmatprep.subr.mxu0 0.0
  %237 = vmatpush2.msra.mxu0 0.0
  %238 = vmatprep.mubr.f32.mxu0 0.0
  %239 = vmatmul.mubr.f32.gmra.mxu0 %v101
  %v240 = vpop.f32.mrf.mxu0
  %v241 = vadd.f32 0.0, %v240
  %v242 = vpop.f32.mrf.mxu0
  %v243 = vadd.f32 0.0, %v242
  %244 = vdwg.mxu0
  %v245 = vld [vmem:[%s3] sm:$0xff]
  %v246 = vld [vmem:[%s3 + $0x8] sm:$0xff]
  %v247 = vld [vmem:[%s3 + $0x10] sm:$0xff]
  %v248 = vld [vmem:[%s3 + $0x18] sm:$0xff]
  %v249 = vld [vmem:[%s3 + $0x20] sm:$0xff]
  %v250 = vld [vmem:[%s3 + $0x28] sm:$0xff]
  %v251 = vld [vmem:[%s3 + $0x30] sm:$0xff]
  %v252 = vld [vmem:[%s3 + $0x38] sm:$0xff]
  %v253 = vld [vmem:[%s3 + $0x40] sm:$0xff]
  %v254 = vld [vmem:[%s3 + $0x48] sm:$0xff]
  %v255 = vld [vmem:[%s3 + $0x50] sm:$0xff]
  %v256 = vld [vmem:[%s3 + $0x58] sm:$0xff]
  %v257 = vld [vmem:[%s3 + $0x60] sm:$0xff]
  %v258 = vld [vmem:[%s3 + $0x68] sm:$0xff]
  %v259 = vld [vmem:[%s3 + $0x70] sm:$0xff]
  %v260 = vld [vmem:[%s3 + $0x78] sm:$0xff]
  %v261 = vld [vmem:[%s3 + $0x80] sm:$0xff]
  %v262 = vld [vmem:[%s3 + $0x88] sm:$0xff]
  %v263 = vld [vmem:[%s3 + $0x90] sm:$0xff]
  %v264 = vld [vmem:[%s3 + $0x98] sm:$0xff]
  %v265 = vld [vmem:[%s3 + $0xa0] sm:$0xff]
  %v266 = vld [vmem:[%s3 + $0xa8] sm:$0xff]
  %v267 = vld [vmem:[%s3 + $0xb0] sm:$0xff]
  %v268 = vld [vmem:[%s3 + $0xb8] sm:$0xff]
  %v269 = vld [vmem:[%s3 + $0xc0] sm:$0xff]
  %v270 = vld [vmem:[%s3 + $0xc8] sm:$0xff]
  %v271 = vld [vmem:[%s3 + $0xd0] sm:$0xff]
  %v272 = vld [vmem:[%s3 + $0xd8] sm:$0xff]
  %v273 = vld [vmem:[%s3 + $0xe0] sm:$0xff]
  %v274 = vld [vmem:[%s3 + $0xe8] sm:$0xff]
  %v275 = vld [vmem:[%s3 + $0xf0] sm:$0xff]
  %v276 = vld [vmem:[%s3 + $0xf8] sm:$0xff]
  %v277 = vld [vmem:[%s3 + $0x100] sm:$0xff]
  %v278 = vld [vmem:[%s3 + $0x108] sm:$0xff]
  %v279 = vld [vmem:[%s3 + $0x110] sm:$0xff]
  %v280 = vld [vmem:[%s3 + $0x118] sm:$0xff]
  %v281 = vld [vmem:[%s3 + $0x120] sm:$0xff]
  %v282 = vld [vmem:[%s3 + $0x128] sm:$0xff]
  %v283 = vld [vmem:[%s3 + $0x130] sm:$0xff]
  %v284 = vld [vmem:[%s3 + $0x138] sm:$0xff]
  %v285 = vld [vmem:[%s3 + $0x140] sm:$0xff]
  %v286 = vld [vmem:[%s3 + $0x148] sm:$0xff]
  %v287 = vld [vmem:[%s3 + $0x150] sm:$0xff]
  %v288 = vld [vmem:[%s3 + $0x158] sm:$0xff]
  %v289 = vld [vmem:[%s3 + $0x160] sm:$0xff]
  %v290 = vld [vmem:[%s3 + $0x168] sm:$0xff]
  %v291 = vld [vmem:[%s3 + $0x170] sm:$0xff]
  %v292 = vld [vmem:[%s3 + $0x178] sm:$0xff]
  %v293 = vld [vmem:[%s3 + $0x180] sm:$0xff]
  %v294 = vld [vmem:[%s3 + $0x188] sm:$0xff]
  %v295 = vld [vmem:[%s3 + $0x190] sm:$0xff]
  %v296 = vld [vmem:[%s3 + $0x198] sm:$0xff]
  %v297 = vld [vmem:[%s3 + $0x1a0] sm:$0xff]
  %v298 = vld [vmem:[%s3 + $0x1a8] sm:$0xff]
  %v299 = vld [vmem:[%s3 + $0x1b0] sm:$0xff]
  %v300 = vld [vmem:[%s3 + $0x1b8] sm:$0xff]
  %v301 = vld [vmem:[%s3 + $0x1c0] sm:$0xff]
  %v302 = vld [vmem:[%s3 + $0x1c8] sm:$0xff]
  %v303 = vld [vmem:[%s3 + $0x1d0] sm:$0xff]
  %v304 = vld [vmem:[%s3 + $0x1d8] sm:$0xff]
  %v305 = vld [vmem:[%s3 + $0x1e0] sm:$0xff]
  %v306 = vld [vmem:[%s3 + $0x1e8] sm:$0xff]
  %v307 = vld [vmem:[%s3 + $0x1f0] sm:$0xff]
  %v308 = vld [vmem:[%s3 + $0x1f8] sm:$0xff]
  %v309 = vld [vmem:[%s3 + $0x200] sm:$0xff]
  %v310 = vld [vmem:[%s3 + $0x208] sm:$0xff]
  %v311 = vld [vmem:[%s3 + $0x210] sm:$0xff]
  %v312 = vld [vmem:[%s3 + $0x218] sm:$0xff]
  %v313 = vld [vmem:[%s3 + $0x220] sm:$0xff]
  %v314 = vld [vmem:[%s3 + $0x228] sm:$0xff]
  %v315 = vld [vmem:[%s3 + $0x230] sm:$0xff]
  %v316 = vld [vmem:[%s3 + $0x238] sm:$0xff]
  %v317 = vld [vmem:[%s3 + $0x240] sm:$0xff]
  %v318 = vld [vmem:[%s3 + $0x248] sm:$0xff]
  %v319 = vld [vmem:[%s3 + $0x250] sm:$0xff]
  %v320 = vld [vmem:[%s3 + $0x258] sm:$0xff]
  %v321 = vld [vmem:[%s3 + $0x260] sm:$0xff]
  %v322 = vld [vmem:[%s3 + $0x268] sm:$0xff]
  %v323 = vld [vmem:[%s3 + $0x270] sm:$0xff]
  %v324 = vld [vmem:[%s3 + $0x278] sm:$0xff]
  %v325 = vld [vmem:[%s3 + $0x280] sm:$0xff]
  %v326 = vld [vmem:[%s3 + $0x288] sm:$0xff]
  %v327 = vld [vmem:[%s3 + $0x290] sm:$0xff]
  %v328 = vld [vmem:[%s3 + $0x298] sm:$0xff]
  %v329 = vld [vmem:[%s3 + $0x2a0] sm:$0xff]
  %v330 = vld [vmem:[%s3 + $0x2a8] sm:$0xff]
  %v331 = vld [vmem:[%s3 + $0x2b0] sm:$0xff]
  %v332 = vld [vmem:[%s3 + $0x2b8] sm:$0xff]
  %v333 = vld [vmem:[%s3 + $0x2c0] sm:$0xff]
  %v334 = vld [vmem:[%s3 + $0x2c8] sm:$0xff]
  %v335 = vld [vmem:[%s3 + $0x2d0] sm:$0xff]
  %v336 = vld [vmem:[%s3 + $0x2d8] sm:$0xff]
  %v337 = vld [vmem:[%s3 + $0x2e0] sm:$0xff]
  %v338 = vld [vmem:[%s3 + $0x2e8] sm:$0xff]
  %v339 = vld [vmem:[%s3 + $0x2f0] sm:$0xff]
  %v340 = vld [vmem:[%s3 + $0x2f8] sm:$0xff]
  %v341 = vld [vmem:[%s3 + $0x300] sm:$0xff]
  %v342 = vld [vmem:[%s3 + $0x308] sm:$0xff]
  %v343 = vld [vmem:[%s3 + $0x310] sm:$0xff]
  %v344 = vld [vmem:[%s3 + $0x318] sm:$0xff]
  %v345 = vld [vmem:[%s3 + $0x320] sm:$0xff]
  %v346 = vld [vmem:[%s3 + $0x328] sm:$0xff]
  %v347 = vld [vmem:[%s3 + $0x330] sm:$0xff]
  %v348 = vld [vmem:[%s3 + $0x338] sm:$0xff]
  %v349 = vld [vmem:[%s3 + $0x340] sm:$0xff]
  %v350 = vld [vmem:[%s3 + $0x348] sm:$0xff]
  %v351 = vld [vmem:[%s3 + $0x350] sm:$0xff]
  %v352 = vld [vmem:[%s3 + $0x358] sm:$0xff]
  %v353 = vld [vmem:[%s3 + $0x360] sm:$0xff]
  %v354 = vld [vmem:[%s3 + $0x368] sm:$0xff]
  %v355 = vld [vmem:[%s3 + $0x370] sm:$0xff]
  %v356 = vld [vmem:[%s3 + $0x378] sm:$0xff]
  %v357 = vld [vmem:[%s3 + $0x380] sm:$0xff]
  %v358 = vld [vmem:[%s3 + $0x388] sm:$0xff]
  %v359 = vld [vmem:[%s3 + $0x390] sm:$0xff]
  %v360 = vld [vmem:[%s3 + $0x398] sm:$0xff]
  %v361 = vld [vmem:[%s3 + $0x3a0] sm:$0xff]
  %v362 = vld [vmem:[%s3 + $0x3a8] sm:$0xff]
  %v363 = vld [vmem:[%s3 + $0x3b0] sm:$0xff]
  %v364 = vld [vmem:[%s3 + $0x3b8] sm:$0xff]
  %v366 = vsel %vm36, %v243, 0
  %368 = vmatprep.subr.mxu0 %v276
  %369 = vmatpush1.msra.mxu0 %v275
  %370 = vmatprep.subr.mxu0 %v274
  %371 = vmatpush1.msra.mxu0 %v273
  %372 = vmatprep.subr.mxu0 %v272
  %373 = vmatpush1.msra.mxu0 %v271
  %374 = vmatprep.subr.mxu0 %v270
  %375 = vmatpush1.msra.mxu0 %v269
  %376 = vmatprep.subr.mxu0 %v268
  %377 = vmatpush1.msra.mxu0 %v267
  %378 = vmatprep.subr.mxu0 %v266
  %379 = vmatpush1.msra.mxu0 %v265
  %380 = vmatprep.subr.mxu0 %v264
  %381 = vmatpush1.msra.mxu0 %v263
  %382 = vmatprep.subr.mxu0 %v262
  %383 = vmatpush1.msra.mxu0 %v261
  %384 = vmatprep.subr.mxu0 %v260
  %385 = vmatpush1.msra.mxu0 %v259
  %386 = vmatprep.subr.mxu0 %v258
  %387 = vmatpush1.msra.mxu0 %v257
  %388 = vmatprep.subr.mxu0 %v256
  %389 = vmatpush1.msra.mxu0 %v255
  %390 = vmatprep.subr.mxu0 %v254
  %391 = vmatpush1.msra.mxu0 %v253
  %392 = vmatprep.subr.mxu0 %v252
  %393 = vmatpush1.msra.mxu0 %v251
  %394 = vmatprep.subr.mxu0 %v250
  %395 = vmatpush1.msra.mxu0 %v249
  %396 = vmatprep.subr.mxu0 %v248
  %397 = vmatpush1.msra.mxu0 %v247
  %398 = vmatprep.subr.mxu0 %v246
  %399 = vmatpush1.msra.mxu0 %v245
  %400 = vmatprep.subr.mxu0 %v308
  %401 = vmatpush2.msra.mxu0 %v307
  %402 = vmatprep.subr.mxu0 %v306
  %403 = vmatpush2.msra.mxu0 %v305
  %404 = vmatprep.subr.mxu0 %v304
  %405 = vmatpush2.msra.mxu0 %v303
  %406 = vmatprep.subr.mxu0 %v302
  %407 = vmatpush2.msra.mxu0 %v301
  %408 = vmatprep.subr.mxu0 %v300
  %409 = vmatpush2.msra.mxu0 %v299
  %410 = vmatprep.subr.mxu0 %v298
  %411 = vmatpush2.msra.mxu0 %v297
  %412 = vmatprep.subr.mxu0 %v296
  %413 = vmatpush2.msra.mxu0 %v295
  %414 = vmatprep.subr.mxu0 %v294
  %415 = vmatpush2.msra.mxu0 %v293
  %416 = vmatprep.subr.mxu0 %v292
  %417 = vmatpush2.msra.mxu0 %v291
  %418 = vmatprep.subr.mxu0 %v290
  %419 = vmatpush2.msra.mxu0 %v289
  %420 = vmatprep.subr.mxu0 %v288
  %421 = vmatpush2.msra.mxu0 %v287
  %422 = vmatprep.subr.mxu0 %v286
  %423 = vmatpush2.msra.mxu0 %v285
  %424 = vmatprep.subr.mxu0 %v284
  %425 = vmatpush2.msra.mxu0 %v283
  %426 = vmatprep.subr.mxu0 %v282
  %427 = vmatpush2.msra.mxu0 %v281
  %428 = vmatprep.subr.mxu0 %v280
  %429 = vmatpush2.msra.mxu0 %v279
  %430 = vmatprep.subr.mxu0 %v278
  %431 = vmatpush2.msra.mxu0 %v277
  %432 = vmatprep.mubr.f32.mxu0 %v172
  %433 = vmatmul.mubr.f32.gmra.mxu0 %v170
  %v434 = vpop.f32.mrf.mxu0
  %v435 = vadd.f32 0.0, %v434
  %v436 = vpop.f32.mrf.mxu0
  %v437 = vadd.f32 0.0, %v436
  %438 = vdwg.mxu0
  %439 = vmatprep.subr.mxu0 %v340
  %440 = vmatpush1.msra.mxu0 %v339
  %441 = vmatprep.subr.mxu0 %v338
  %442 = vmatpush1.msra.mxu0 %v337
  %443 = vmatprep.subr.mxu0 %v336
  %444 = vmatpush1.msra.mxu0 %v335
  %445 = vmatprep.subr.mxu0 %v334
  %446 = vmatpush1.msra.mxu0 %v333
  %447 = vmatprep.subr.mxu0 %v332
  %448 = vmatpush1.msra.mxu0 %v331
  %449 = vmatprep.subr.mxu0 %v330
  %450 = vmatpush1.msra.mxu0 %v329
  %451 = vmatprep.subr.mxu0 %v328
  %452 = vmatpush1.msra.mxu0 %v327
  %453 = vmatprep.subr.mxu0 %v326
  %454 = vmatpush1.msra.mxu0 %v325
  %455 = vmatprep.subr.mxu0 %v324
  %456 = vmatpush1.msra.mxu0 %v323
  %457 = vmatprep.subr.mxu0 %v322
  %458 = vmatpush1.msra.mxu0 %v321
  %459 = vmatprep.subr.mxu0 %v320
  %460 = vmatpush1.msra.mxu0 %v319
  %461 = vmatprep.subr.mxu0 %v318
  %462 = vmatpush1.msra.mxu0 %v317
  %463 = vmatprep.subr.mxu0 %v316
  %464 = vmatpush1.msra.mxu0 %v315
  %465 = vmatprep.subr.mxu0 %v314
  %466 = vmatpush1.msra.mxu0 %v313
  %467 = vmatprep.subr.mxu0 %v312
  %468 = vmatpush1.msra.mxu0 %v311
  %469 = vmatprep.subr.mxu0 %v310
  %470 = vmatpush1.msra.mxu0 %v309
  %471 = vmatprep.subr.mxu0 0.0
  %472 = vmatpush2.msra.mxu0 0.0
  %473 = vmatprep.subr.mxu0 0.0
  %474 = vmatpush2.msra.mxu0 0.0
  %475 = vmatprep.subr.mxu0 0.0
  %476 = vmatpush2.msra.mxu0 0.0
  %477 = vmatprep.subr.mxu0 0.0
  %478 = vmatpush2.msra.mxu0 0.0
  %479 = vmatprep.subr.mxu0 %v364
  %480 = vmatpush2.msra.mxu0 %v363
  %481 = vmatprep.subr.mxu0 %v362
  %482 = vmatpush2.msra.mxu0 %v361
  %483 = vmatprep.subr.mxu0 %v360
  %484 = vmatpush2.msra.mxu0 %v359
  %485 = vmatprep.subr.mxu0 %v358
  %486 = vmatpush2.msra.mxu0 %v357
  %487 = vmatprep.subr.mxu0 %v356
  %488 = vmatpush2.msra.mxu0 %v355
  %489 = vmatprep.subr.mxu0 %v354
  %490 = vmatpush2.msra.mxu0 %v353
  %491 = vmatprep.subr.mxu0 %v352
  %492 = vmatpush2.msra.mxu0 %v351
  %493 = vmatprep.subr.mxu0 %v350
  %494 = vmatpush2.msra.mxu0 %v349
  %495 = vmatprep.subr.mxu0 %v348
  %496 = vmatpush2.msra.mxu0 %v347
  %497 = vmatprep.subr.mxu0 %v346
  %498 = vmatpush2.msra.mxu0 %v345
  %499 = vmatprep.subr.mxu0 %v344
  %500 = vmatpush2.msra.mxu0 %v343
  %501 = vmatprep.subr.mxu0 %v342
  %502 = vmatpush2.msra.mxu0 %v341
  %503 = vmatprep.mubr.f32.mxu0 %v366
  %504 = vmatmul.mubr.f32.gmra.mxu0 %v241
  %v505 = vpop.f32.mrf.mxu0
  %v506 = vadd.f32 %v435, %v505
  %v507 = vpop.f32.mrf.mxu0
  %v508 = vadd.f32 %v437, %v507
  %509 = vdwg.mxu0
  %v510 = vmul.f32 %v506, %v506
  %512 = vrot.lane.b32.xlu0 %v506, 92
  %v513 = vpop.permute.xlu0 %512
  %v515 = vmul.f32 %v506, %v513
  %517 = vrot.lane.b32.xlu0 %v515, 16
  %v518 = vpop.permute.xlu0 %517
  %v520 = vsub.f32 %v508, %v518
  %v521 = vmul.f32 %v520, 2.0
  %v522 = vadd.f32 %v521, 0.0009
  %524 = vrot.lane.b32.xlu0 %v510, 72
  %v525 = vpop.permute.xlu0 %524
  %v527 = vsub.f32 %v506, %v525
  %v528 = vsub.f32 %v508, %v525
  %531 = vrot.lane.b32.xlu0 %v527, 92
  %v532 = vpop.permute.xlu0 %531
  %533 = vrot.lane.b32.xlu0 %v528, 92
  %v534 = vpop.permute.xlu0 %533
  %vm535 = vcmask 752640
  %v536 = vsel %vm535, %v532, %v534
  %v538 = vadd.f32 %v527, %v536
  %v539 = vadd.f32 %v538, 0.0009
  %541 = vrot.lane.b32.xlu0 %v539, 72
  %v542 = vpop.permute.xlu0 %541
  %v544 = vrcp.pop %v542
  %v545 = vmul.f32 %v522, %v544
  %v546 = vmul.f32 %v515, 2.0
  %v547 = vadd.f32 %v546, 0.0001
  %548 = vrot.lane.b32.xlu0 %v510, 92
  %v549 = vpop.permute.xlu0 %548
  %v551 = vadd.f32 %v510, %v549
  %v552 = vadd.f32 %v551, 0.0001
  %v553 = vrcp.pop %v552
  %v554 = vmul.f32 %v547, %v553
  %556 = vrot.lane.b32.xlu0 %v545, 112
  %v557 = vpop.permute.xlu0 %556
  %v559 = vmul.f32 %v554, %v557
  %vm560 = vcmask 291840
  %v561 = vsel %vm560, %v559, 0.0
  %v562 = vrot.slane %v561, 4
  %v563 = vadd.f32 %v561, %v562
  %v564 = vrot.slane %v563, 2
  %v565 = vadd.f32 %v563, %v564
  %v566 = vrot.slane %v565, 1
  %v567 = vadd.f32 %v565, %v566
  %vm568 = vcmask 286720
  %569 = vst.msk [vmem:[%s4] sm:$0x1] %vm568, %v567
  // Predicated region
  $region18: #{_image_metrics_impl.7} parent=0 // pred_check
    _
  $region19: #{_image_metrics_impl.7} parent=0 // pred_check_branch
    %571 = sbr.rel (0) target = $region21
  $region20: #{_image_metrics_impl.7} parent=0 // pred_region
    _
  $region21: #{_image_metrics_impl.7} parent=0 // pred_fallthru
    _
  // Predicated region
  $region22: #{_image_metrics_impl.7} parent=0 // pred_check
    _
  $region23: #{_image_metrics_impl.7} parent=0 // pred_check_branch
    %573 = sbr.rel (0) target = $region25
  $region24: #{_image_metrics_impl.7} parent=0 // pred_region
    _
  $region25: #{_image_metrics_impl.7} parent=0 // pred_fallthru
    _
  // Predicated region
  $region26: #{_image_metrics_impl.7} parent=0 // pred_check
    _
  $region27: #{_image_metrics_impl.7} parent=0 // pred_check_branch
    %575 = sbr.rel (0) target = $region29
  $region28: #{_image_metrics_impl.7} parent=0 // pred_region
    _
  $region29: #{_image_metrics_impl.7} parent=0 // pred_fallthru
    _
  // Predicated region
  $region30: #{_image_metrics_impl.7} parent=0 // pred_check
    _
  $region31: #{_image_metrics_impl.7} parent=0 // pred_check_branch
    %577 = sbr.rel (0) target = $region33
  $region32: #{_image_metrics_impl.7} parent=0 // pred_region
    _
  $region33: #{_image_metrics_impl.7} parent=0 // pred_fallthru
    _
  // Predicated region
  $region34: #{_image_metrics_impl.7} parent=0 // pred_check
    _
  $region35: #{_image_metrics_impl.7} parent=0 // pred_check_branch
    %579 = sbr.rel (0) target = $region37
  $region36: #{_image_metrics_impl.7} parent=0 // pred_region
    _
  $region37: #{_image_metrics_impl.7} parent=0 // pred_fallthru
    _
  // Predicated region
  $region38: #{_image_metrics_impl.7} parent=0 // pred_check
    _
  $region39: #{_image_metrics_impl.7} parent=0 // pred_check_branch
    %581 = sbr.rel (0) target = $region41
  $region40: #{_image_metrics_impl.7} parent=0 // pred_region
    _
  $region41: #{_image_metrics_impl.7} parent=0 // pred_fallthru
    _

</llo_original>
